<compile_context>
chip_gen: v5e
topology: v5e:2x2
jax: 0.10.0
libtpu: 0.0.40
codegen_flags: <defaults>
</compile_context>

<pallas_src>
import jax
import jax.numpy as jnp
from jax.experimental import pallas as pl
from jax.experimental.pallas import tpu as pltpu

CP = 128          # channel lanes: all conv channel dims are zero-padded to 128
OFS = 19          # guard rows above/below the padded-activation region (>= max Wp + 1)
XP_ROWS = 368     # guarded padded-activation scratch rows (>= OFS + 18*18 + OFS)
CB_ROWS = 324     # conv-output / pool scratch rows (>= max padded spatial size 18*18)


# ---------------------------------------------------------------------------
# Fused kernel: the whole CNN forward for one image per grid step
# ---------------------------------------------------------------------------
def _fused_cnn_kernel(x_ref,
                      cw1, cb1, cw2, cb2, cw3, cb3, cw4, cb4,
                      wfc1, bfc1, wfc2, bfc2,
                      out_ref,
                      xp, cbuf, pbuf):
    f32 = jnp.float32
    bf16 = jnp.bfloat16

    def run_conv(w_ref, b_ref, H, W):
        """3x3 same-pad conv + bias + ReLU on the padded activation that lives in
        xp[OFS : OFS + (H+2)*(W+2)).  Output (all padded positions; border rows are
        don't-care) is written to cbuf[0 : (H+2)*(W+2))."""
        Wp = W + 2
        P = (H + 2) * Wp
        acc = None
        for kh in range(3):
            for kw in range(3):
                d = (kh - 1) * Wp + (kw - 1)
                xs = xp[pl.ds(OFS + d, P), :].astype(bf16)
                part = jnp.dot(xs, w_ref[kh * 3 + kw],
                               preferred_element_type=f32)
                acc = part if acc is None else acc + part
        cbuf[pl.ds(0, P), :] = jnp.maximum(acc + b_ref[...], 0.0)

    def zero_next_region(P_next):
        # The next layer's padding ring must be zero; wipe the whole region first.
        xp[pl.ds(OFS, P_next), :] = jnp.zeros((P_next, CP), f32)

    def vertical_pair_max(H, W):
        """pbuf[p] = max(cbuf[p], cbuf[p + Wp]) for every row that pooling reads."""
        Wp = W + 2
        nv = (H + 2) * Wp - Wp
        pbuf[pl.ds(0, nv), :] = jnp.maximum(cbuf[pl.ds(0, nv), :],
                                            cbuf[pl.ds(Wp, nv), :])

    def pooled_row(i, j, Wp):
        # max over the 2x2 window whose top-left conv output is (2i, 2j)
        p00 = (2 * i + 1) * Wp + (2 * j + 1)
        return jnp.maximum(pbuf[pl.ds(p00, 1), :], pbuf[pl.ds(p00 + 1, 1), :])

    def pool_into_xp(H, W, Wp_next):
        """2x2 / stride-2 max-pool of the conv output in cbuf; scatter the pooled
        rows directly into the interior of the next layer's padded region in xp."""
        Wp = W + 2
        vertical_pair_max(H, W)
        for i in range(H // 2):
            for j in range(W // 2):
                dst = OFS + (i + 1) * Wp_next + (1 + j)
                xp[pl.ds(dst, 1), :] = pooled_row(i, j, Wp)

    def copy_interior_into_xp(H, W):
        """No-pool handoff (conv2 -> conv3): copy interior rows of cbuf into xp."""
        Wp = W + 2
        for h in range(H):
            src = (h + 1) * Wp + 1
            xp[pl.ds(OFS + src, W), :] = cbuf[pl.ds(src, W), :]

    # ---- stage the (already zero-padded, 18x18) input image into lane 0 ----
    xp[...] = jnp.zeros((XP_ROWS, CP), f32)
    xp[pl.ds(OFS, 18 * 18), pl.ds(0, 1)] = x_ref[0]

    # ---- conv1 (1 -> 8) + pool : 16x16 -> 8x8 ----
    run_conv(cw1, cb1, 16, 16)
    zero_next_region(10 * 10)
    pool_into_xp(16, 16, Wp_next=10)

    # ---- conv2 (8 -> 16), no pool : 8x8 ----
    run_conv(cw2, cb2, 8, 8)
    zero_next_region(10 * 10)
    copy_interior_into_xp(8, 8)

    # ---- conv3 (16 -> 32) + pool : 8x8 -> 4x4 ----
    run_conv(cw3, cb3, 8, 8)
    zero_next_region(6 * 6)
    pool_into_xp(8, 8, Wp_next=6)

    # ---- conv4 (32 -> 64) + pool : 4x4 -> 2x2 -> 4 feature rows of 128 lanes ----
    run_conv(cw4, cb4, 4, 4)
    vertical_pair_max(4, 4)
    feats = [pooled_row(i, j, 6) for i in range(2) for j in range(2)]  # r = i*2 + j

    # ---- fc1 (256 -> fc_1_output) + ReLU, fc2 (-> 10, lane-padded to 128) ----
    # dropout is eval-mode identity.  TODO(synk): train-mode stochastic dropout.
    acc1 = bfc1[...]                                  # (1, FC1P) f32
    for r in range(4):
        acc1 = acc1 + jnp.dot(feats[r].astype(bf16), wfc1[r],
                              preferred_element_type=f32)
    h1 = jnp.maximum(acc1, 0.0)
    logits = jnp.dot(h1.astype(bf16), wfc2[...],
                     preferred_element_type=f32) + bfc2[...]
    out_ref[...] = logits.reshape(1, 1, CP)


def _const_spec(shape):
    nd = len(shape)
    return pl.BlockSpec(shape, lambda n, _nd=nd: (0,) * _nd)


# ---------------------------------------------------------------------------
# Public forward (eval mode), matching CNN_USPS.forward
# ---------------------------------------------------------------------------
def cnn_usps_forward(x_nchw, prepped):
    N = x_nchw.shape[0]
    x = x_nchw.reshape(N, 16, 16).astype(jnp.float32)
    xpad = jnp.pad(x, ((0, 0), (1, 1), (1, 1))).reshape(N, 18 * 18, 1)

    weight_names = ["cw1", "cb1", "cw2", "cb2", "cw3", "cb3", "cw4", "cb4",
                    "wfc1", "bfc1", "wfc2", "bfc2"]
    weights = [prepped[k] for k in weight_names]

    out = pl.pallas_call(
        _fused_cnn_kernel,
        out_shape=jax.ShapeDtypeStruct((N, 1, CP), jnp.float32),
        grid_spec=pltpu.PrefetchScalarGridSpec(
            num_scalar_prefetch=0,
            grid=(N,),
            in_specs=[pl.BlockSpec((1, 18 * 18, 1), lambda n: (n, 0, 0))]
                     + [_const_spec(w.shape) for w in weights],
            out_specs=pl.BlockSpec((1, 1, CP), lambda n: (n, 0, 0)),
            scratch_shapes=[
                pltpu.VMEM((XP_ROWS, CP), jnp.float32),   # padded activations
                pltpu.VMEM((CB_ROWS, CP), jnp.float32),   # conv output
                pltpu.VMEM((CB_ROWS, CP), jnp.float32),   # vertical pool max
            ],
        ),
        compiler_params=pltpu.CompilerParams(
            dimension_semantics=("parallel",)),
    )(xpad, *weights)
    return out[:, 0, :10]


# ---------------------------------------------------------------------------
# Parameters: deterministic init mimicking torch's uniform(-1/sqrt(fan_in), ...)
# ---------------------------------------------------------------------------
def init_params(key, fc_1_output):
    def uni(k, shape, fan_in):
        bound = 1.0 / jnp.sqrt(float(fan_in))
        return jax.random.uniform(k, shape, jnp.float32, -bound, bound)

    keys = jax.random.split(key, 12)
    p = {}
    # conv weights stored HWIO: (3, 3, Cin, Cout)
    p["w1"] = uni(keys[0], (3, 3, 1, 8), 1 * 9);    p["b1"] = uni(keys[1], (8,), 1 * 9)
    p["w2"] = uni(keys[2], (3, 3, 8, 16), 8 * 9);   p["b2"] = uni(keys[3], (16,), 8 * 9)
    p["w3"] = uni(keys[4], (3, 3, 16, 32), 16 * 9); p["b3"] = uni(keys[5], (32,), 16 * 9)
    p["w4"] = uni(keys[6], (3, 3, 32, 64), 32 * 9); p["b4"] = uni(keys[7], (64,), 32 * 9)
    # linear weights stored torch-style (out, in)
    p["wfc1"] = uni(keys[8], (fc_1_output, 64 * 2 * 2), 64 * 2 * 2)
    p["bfc1"] = uni(keys[9], (fc_1_output,), 64 * 2 * 2)
    p["wfc2"] = uni(keys[10], (10, fc_1_output), fc_1_output)
    p["bfc2"] = uni(keys[11], (10,), fc_1_output)
    return p


def prepare_params(params, fc_1_output):
    """One-time (outside the hot path) reshape/pad of weights to kernel layout:
    conv taps -> (9, 128, 128) bf16; fc1 -> (4, 128, FC1P) bf16 pre-permuted to
    torch's NCHW flatten order; fc2 -> (FC1P, 128) bf16; biases f32 lane-padded."""
    FC1P = ((fc_1_output + 127) // 128) * 128

    def conv_w(w_hwio):
        _, _, cin, cout = w_hwio.shape
        w = w_hwio.reshape(9, cin, cout)
        return jnp.zeros((9, CP, CP), jnp.float32).at[:, :cin, :cout].set(w) \
                  .astype(jnp.bfloat16)

    def pad_bias(b, width):
        return jnp.zeros((1, width), jnp.float32).at[0, :b.shape[0]].set(b)

    prepped = {
        "cw1": conv_w(params["w1"]), "cb1": pad_bias(params["b1"], CP),
        "cw2": conv_w(params["w2"]), "cb2": pad_bias(params["b2"], CP),
        "cw3": conv_w(params["w3"]), "cb3": pad_bias(params["b3"], CP),
        "cw4": conv_w(params["w4"]), "cb4": pad_bias(params["b4"], CP),
    }
    # fc1: torch weight (F1, 256); torch flatten feature f = c*4 + i*2 + j = c*4 + r
    wfc1 = params["wfc1"]
    F1 = wfc1.shape[0]
    w1blk = jnp.transpose(wfc1.reshape(F1, 64, 4), (2, 1, 0))        # [r, c, o]
    prepped["wfc1"] = jnp.zeros((4, CP, FC1P), jnp.float32) \
                         .at[:, :64, :F1].set(w1blk).astype(jnp.bfloat16)
    prepped["bfc1"] = pad_bias(params["bfc1"], FC1P)
    # fc2: torch weight (10, F1) -> (FC1P, 128), logits in lanes [0, 10)
    prepped["wfc2"] = jnp.zeros((FC1P, CP), jnp.float32) \
                         .at[:F1, :10].set(params["wfc2"].T).astype(jnp.bfloat16)
    prepped["bfc2"] = pad_bias(params["bfc2"], CP)
    return prepped


# ---------------------------------------------------------------------------
# Pure-JAX reference (f32) for correctness checking
# ---------------------------------------------------------------------------
def reference_forward(x_nchw, params):
    x = jnp.transpose(x_nchw, (0, 2, 3, 1)).astype(jnp.float32)       # NHWC

    def conv(x, w, b):
        y = jax.lax.conv_general_dilated(
            x, w, (1, 1), "SAME", dimension_numbers=("NHWC", "HWIO", "NHWC"))
        return jax.nn.relu(y + b)

    def pool(x):
        return jax.lax.reduce_window(x, -jnp.inf, jax.lax.max,
                                     (1, 2, 2, 1), (1, 2, 2, 1), "VALID")

    x = pool(conv(x, params["w1"], params["b1"]))
    x = conv(x, params["w2"], params["b2"])
    x = pool(conv(x, params["w3"], params["b3"]))
    x = pool(conv(x, params["w4"], params["b4"]))
    N = x.shape[0]
    x = jnp.transpose(x, (0, 3, 1, 2)).reshape(N, 64 * 2 * 2)          # NCHW flatten
    x = jax.nn.relu(x @ params["wfc1"].T + params["bfc1"])
    return x @ params["wfc2"].T + params["bfc2"]


if __name__ == "__main__":
    fc_1_output = 128
    dropout_prob = 0.5  # unused in eval-mode forward

    key = jax.random.PRNGKey(0)
    k_x, k_p = jax.random.split(key)
    x = jax.random.normal(k_x, (2, 1, 16, 16), dtype=jnp.float32)     # USPS: 1x16x16
    params = init_params(k_p, fc_1_output)
    prepped = prepare_params(params, fc_1_output)

    fwd = jax.jit(cnn_usps_forward)
    out = jax.block_until_ready(fwd(x, prepped))
    assert out.shape == (2, 10), out.shape

    ref = jax.block_until_ready(jax.jit(reference_forward)(x, params))
    max_diff = float(jnp.max(jnp.abs(out - ref)))
    assert max_diff < 5e-2, f"kernel/reference mismatch, max |diff| = {max_diff}"

    print("KERNEL_OK")
</pallas_src>

<mosaic_0001>
module attributes {stable_mosaic.version = 11 : i64} {
  func.func @_fused_cnn_kernel(%arg0: i32, %arg1: memref<1x324x1xf32, #tpu.memory_space<vmem>>, %arg2: memref<9x128x128xbf16, #tpu.memory_space<vmem>>, %arg3: memref<1x128xf32, #tpu.memory_space<vmem>>, %arg4: memref<9x128x128xbf16, #tpu.memory_space<vmem>>, %arg5: memref<1x128xf32, #tpu.memory_space<vmem>>, %arg6: memref<9x128x128xbf16, #tpu.memory_space<vmem>>, %arg7: memref<1x128xf32, #tpu.memory_space<vmem>>, %arg8: memref<9x128x128xbf16, #tpu.memory_space<vmem>>, %arg9: memref<1x128xf32, #tpu.memory_space<vmem>>, %arg10: memref<4x128x128xbf16, #tpu.memory_space<vmem>>, %arg11: memref<1x128xf32, #tpu.memory_space<vmem>>, %arg12: memref<128x128xbf16, #tpu.memory_space<vmem>>, %arg13: memref<1x128xf32, #tpu.memory_space<vmem>>, %arg14: memref<1x1x128xf32, #tpu.memory_space<vmem>>, %arg15: memref<368x128xf32, #tpu.memory_space<vmem>>, %arg16: memref<324x128xf32, #tpu.memory_space<vmem>>, %arg17: memref<324x128xf32, #tpu.memory_space<vmem>>) attributes {dimension_semantics = [#tpu.dimension_semantics<parallel>], iteration_bounds = array<i64: 2>, scalar_prefetch = 0 : i64, scratch_operands = 3 : i64, tpu.core_type = #tpu.core_type<tc>, window_params = [{transform_indices = @transform_0, window_bounds = array<i64: 1, 324, 1>}, {pipeline_mode = #tpu.pipeline_mode<synchronous>, transform_indices = @transform_1, window_bounds = array<i64: 9, 128, 128>}, {pipeline_mode = #tpu.pipeline_mode<synchronous>, transform_indices = @transform_2, window_bounds = array<i64: 1, 128>}, {pipeline_mode = #tpu.pipeline_mode<synchronous>, transform_indices = @transform_3, window_bounds = array<i64: 9, 128, 128>}, {pipeline_mode = #tpu.pipeline_mode<synchronous>, transform_indices = @transform_4, window_bounds = array<i64: 1, 128>}, {pipeline_mode = #tpu.pipeline_mode<synchronous>, transform_indices = @transform_5, window_bounds = array<i64: 9, 128, 128>}, {pipeline_mode = #tpu.pipeline_mode<synchronous>, transform_indices = @transform_6, window_bounds = array<i64: 1, 128>}, {pipeline_mode = #tpu.pipeline_mode<synchronous>, transform_indices = @transform_7, window_bounds = array<i64: 9, 128, 128>}, {pipeline_mode = #tpu.pipeline_mode<synchronous>, transform_indices = @transform_8, window_bounds = array<i64: 1, 128>}, {pipeline_mode = #tpu.pipeline_mode<synchronous>, transform_indices = @transform_9, window_bounds = array<i64: 4, 128, 128>}, {pipeline_mode = #tpu.pipeline_mode<synchronous>, transform_indices = @transform_10, window_bounds = array<i64: 1, 128>}, {pipeline_mode = #tpu.pipeline_mode<synchronous>, transform_indices = @transform_11, window_bounds = array<i64: 128, 128>}, {pipeline_mode = #tpu.pipeline_mode<synchronous>, transform_indices = @transform_12, window_bounds = array<i64: 1, 128>}, {transform_indices = @transform_13, window_bounds = array<i64: 1, 1, 128>}]} {
    %cst = arith.constant 0.000000e+00 : f32
    %0 = vector.broadcast %cst : f32 to vector<368x128xf32>
    %c0 = arith.constant 0 : index
    %c0_0 = arith.constant 0 : index
    %1 = vector.load %arg15[%c0, %c0_0] : memref<368x128xf32, #tpu.memory_space<vmem>>, vector<368x128xf32>
    tpu.vector_store %arg15[%c0, %c0_0], %0 {strides = array<i32>} : memref<368x128xf32, #tpu.memory_space<vmem>>, vector<368x128xf32>,
    %c0_1 = arith.constant 0 : index
    %c0_2 = arith.constant 0 : index
    %c0_3 = arith.constant 0 : index
    %2 = vector.load %arg1[%c0_1, %c0_2, %c0_3] : memref<1x324x1xf32, #tpu.memory_space<vmem>>, vector<1x324x1xf32>
    %3 = vector.shape_cast %2 : vector<1x324x1xf32> to vector<324x1xf32>
    %c19 = arith.constant 19 : index
    %c0_4 = arith.constant 0 : index
    %4 = vector.load %arg15[%c19, %c0_4] : memref<368x128xf32, #tpu.memory_space<vmem>>, vector<324x1xf32>
    tpu.vector_store %arg15[%c19, %c0_4], %3 {strides = array<i32>} : memref<368x128xf32, #tpu.memory_space<vmem>>, vector<324x1xf32>,
    %c0_5 = arith.constant 0 : index
    %c0_6 = arith.constant 0 : index
    %5 = vector.load %arg15[%c0_5, %c0_6] : memref<368x128xf32, #tpu.memory_space<vmem>>, vector<324x128xf32>
    %6 = arith.truncf %5 : vector<324x128xf32> to vector<324x128xbf16>
    %c0_7 = arith.constant 0 : index
    %c0_8 = arith.constant 0 : index
    %c0_9 = arith.constant 0 : index
    %7 = vector.load %arg2[%c0_7, %c0_8, %c0_9] : memref<9x128x128xbf16, #tpu.memory_space<vmem>>, vector<1x128x128xbf16>
    %8 = vector.shape_cast %7 : vector<1x128x128xbf16> to vector<128x128xbf16>
    %cst_10 = arith.constant dense<0.000000e+00> : vector<324x128xf32>
    %9 = tpu.matmul %6, %8, %cst_10 {dimension_numbers = #tpu.dot_dimension_numbers<[1], [0], [0], [1], [0, 0, 1, 1], [], []>} : vector<324x128xbf16>, vector<128x128xbf16>, vector<324x128xf32> -> vector<324x128xf32>
    %c1 = arith.constant 1 : index
    %c0_11 = arith.constant 0 : index
    %10 = vector.load %arg15[%c1, %c0_11] : memref<368x128xf32, #tpu.memory_space<vmem>>, vector<324x128xf32>
    %11 = arith.truncf %10 : vector<324x128xf32> to vector<324x128xbf16>
    %c1_12 = arith.constant 1 : index
    %c0_13 = arith.constant 0 : index
    %c0_14 = arith.constant 0 : index
    %12 = vector.load %arg2[%c1_12, %c0_13, %c0_14] : memref<9x128x128xbf16, #tpu.memory_space<vmem>>, vector<1x128x128xbf16>
    %13 = vector.shape_cast %12 : vector<1x128x128xbf16> to vector<128x128xbf16>
    %cst_15 = arith.constant dense<0.000000e+00> : vector<324x128xf32>
    %14 = tpu.matmul %11, %13, %cst_15 {dimension_numbers = #tpu.dot_dimension_numbers<[1], [0], [0], [1], [0, 0, 1, 1], [], []>} : vector<324x128xbf16>, vector<128x128xbf16>, vector<324x128xf32> -> vector<324x128xf32>
    %15 = arith.addf %9, %14 : vector<324x128xf32>
    %c2 = arith.constant 2 : index
    %c0_16 = arith.constant 0 : index
    %16 = vector.load %arg15[%c2, %c0_16] : memref<368x128xf32, #tpu.memory_space<vmem>>, vector<324x128xf32>
    %17 = arith.truncf %16 : vector<324x128xf32> to vector<324x128xbf16>
    %c2_17 = arith.constant 2 : index
    %c0_18 = arith.constant 0 : index
    %c0_19 = arith.constant 0 : index
    %18 = vector.load %arg2[%c2_17, %c0_18, %c0_19] : memref<9x128x128xbf16, #tpu.memory_space<vmem>>, vector<1x128x128xbf16>
    %19 = vector.shape_cast %18 : vector<1x128x128xbf16> to vector<128x128xbf16>
    %cst_20 = arith.constant dense<0.000000e+00> : vector<324x128xf32>
    %20 = tpu.matmul %17, %19, %cst_20 {dimension_numbers = #tpu.dot_dimension_numbers<[1], [0], [0], [1], [0, 0, 1, 1], [], []>} : vector<324x128xbf16>, vector<128x128xbf16>, vector<324x128xf32> -> vector<324x128xf32>
    %21 = arith.addf %15, %20 : vector<324x128xf32>
    %c18 = arith.constant 18 : index
    %c0_21 = arith.constant 0 : index
    %22 = vector.load %arg15[%c18, %c0_21] : memref<368x128xf32, #tpu.memory_space<vmem>>, vector<324x128xf32>
    %23 = arith.truncf %22 : vector<324x128xf32> to vector<324x128xbf16>
    %c3 = arith.constant 3 : index
    %c0_22 = arith.constant 0 : index
    %c0_23 = arith.constant 0 : index
    %24 = vector.load %arg2[%c3, %c0_22, %c0_23] : memref<9x128x128xbf16, #tpu.memory_space<vmem>>, vector<1x128x128xbf16>
    %25 = vector.shape_cast %24 : vector<1x128x128xbf16> to vector<128x128xbf16>
    %cst_24 = arith.constant dense<0.000000e+00> : vector<324x128xf32>
    %26 = tpu.matmul %23, %25, %cst_24 {dimension_numbers = #tpu.dot_dimension_numbers<[1], [0], [0], [1], [0, 0, 1, 1], [], []>} : vector<324x128xbf16>, vector<128x128xbf16>, vector<324x128xf32> -> vector<324x128xf32>
    %27 = arith.addf %21, %26 : vector<324x128xf32>
    %c19_25 = arith.constant 19 : index
    %c0_26 = arith.constant 0 : index
    %28 = vector.load %arg15[%c19_25, %c0_26] : memref<368x128xf32, #tpu.memory_space<vmem>>, vector<324x128xf32>
    %29 = arith.truncf %28 : vector<324x128xf32> to vector<324x128xbf16>
    %c4 = arith.constant 4 : index
    %c0_27 = arith.constant 0 : index
    %c0_28 = arith.constant 0 : index
    %30 = vector.load %arg2[%c4, %c0_27, %c0_28] : memref<9x128x128xbf16, #tpu.memory_space<vmem>>, vector<1x128x128xbf16>
    %31 = vector.shape_cast %30 : vector<1x128x128xbf16> to vector<128x128xbf16>
    %cst_29 = arith.constant dense<0.000000e+00> : vector<324x128xf32>
    %32 = tpu.matmul %29, %31, %cst_29 {dimension_numbers = #tpu.dot_dimension_numbers<[1], [0], [0], [1], [0, 0, 1, 1], [], []>} : vector<324x128xbf16>, vector<128x128xbf16>, vector<324x128xf32> -> vector<324x128xf32>
    %33 = arith.addf %27, %32 : vector<324x128xf32>
    %c20 = arith.constant 20 : index
    %c0_30 = arith.constant 0 : index
    %34 = vector.load %arg15[%c20, %c0_30] : memref<368x128xf32, #tpu.memory_space<vmem>>, vector<324x128xf32>
    %35 = arith.truncf %34 : vector<324x128xf32> to vector<324x128xbf16>
    %c5 = arith.constant 5 : index
    %c0_31 = arith.constant 0 : index
    %c0_32 = arith.constant 0 : index
    %36 = vector.load %arg2[%c5, %c0_31, %c0_32] : memref<9x128x128xbf16, #tpu.memory_space<vmem>>, vector<1x128x128xbf16>
    %37 = vector.shape_cast %36 : vector<1x128x128xbf16> to vector<128x128xbf16>
    %cst_33 = arith.constant dense<0.000000e+00> : vector<324x128xf32>
    %38 = tpu.matmul %35, %37, %cst_33 {dimension_numbers = #tpu.dot_dimension_numbers<[1], [0], [0], [1], [0, 0, 1, 1], [], []>} : vector<324x128xbf16>, vector<128x128xbf16>, vector<324x128xf32> -> vector<324x128xf32>
    %39 = arith.addf %33, %38 : vector<324x128xf32>
    %c36 = arith.constant 36 : index
    %c0_34 = arith.constant 0 : index
    %40 = vector.load %arg15[%c36, %c0_34] : memref<368x128xf32, #tpu.memory_space<vmem>>, vector<324x128xf32>
    %41 = arith.truncf %40 : vector<324x128xf32> to vector<324x128xbf16>
    %c6 = arith.constant 6 : index
    %c0_35 = arith.constant 0 : index
    %c0_36 = arith.constant 0 : index
    %42 = vector.load %arg2[%c6, %c0_35, %c0_36] : memref<9x128x128xbf16, #tpu.memory_space<vmem>>, vector<1x128x128xbf16>
    %43 = vector.shape_cast %42 : vector<1x128x128xbf16> to vector<128x128xbf16>
    %cst_37 = arith.constant dense<0.000000e+00> : vector<324x128xf32>
    %44 = tpu.matmul %41, %43, %cst_37 {dimension_numbers = #tpu.dot_dimension_numbers<[1], [0], [0], [1], [0, 0, 1, 1], [], []>} : vector<324x128xbf16>, vector<128x128xbf16>, vector<324x128xf32> -> vector<324x128xf32>
    %45 = arith.addf %39, %44 : vector<324x128xf32>
    %c37 = arith.constant 37 : index
    %c0_38 = arith.constant 0 : index
    %46 = vector.load %arg15[%c37, %c0_38] : memref<368x128xf32, #tpu.memory_space<vmem>>, vector<324x128xf32>
    %47 = arith.truncf %46 : vector<324x128xf32> to vector<324x128xbf16>
    %c7 = arith.constant 7 : index
    %c0_39 = arith.constant 0 : index
    %c0_40 = arith.constant 0 : index
    %48 = vector.load %arg2[%c7, %c0_39, %c0_40] : memref<9x128x128xbf16, #tpu.memory_space<vmem>>, vector<1x128x128xbf16>
    %49 = vector.shape_cast %48 : vector<1x128x128xbf16> to vector<128x128xbf16>
    %cst_41 = arith.constant dense<0.000000e+00> : vector<324x128xf32>
    %50 = tpu.matmul %47, %49, %cst_41 {dimension_numbers = #tpu.dot_dimension_numbers<[1], [0], [0], [1], [0, 0, 1, 1], [], []>} : vector<324x128xbf16>, vector<128x128xbf16>, vector<324x128xf32> -> vector<324x128xf32>
    %51 = arith.addf %45, %50 : vector<324x128xf32>
    %c38 = arith.constant 38 : index
    %c0_42 = arith.constant 0 : index
    %52 = vector.load %arg15[%c38, %c0_42] : memref<368x128xf32, #tpu.memory_space<vmem>>, vector<324x128xf32>
    %53 = arith.truncf %52 : vector<324x128xf32> to vector<324x128xbf16>
    %c8 = arith.constant 8 : index
    %c0_43 = arith.constant 0 : index
    %c0_44 = arith.constant 0 : index
    %54 = vector.load %arg2[%c8, %c0_43, %c0_44] : memref<9x128x128xbf16, #tpu.memory_space<vmem>>, vector<1x128x128xbf16>
    %55 = vector.shape_cast %54 : vector<1x128x128xbf16> to vector<128x128xbf16>
    %cst_45 = arith.constant dense<0.000000e+00> : vector<324x128xf32>
    %56 = tpu.matmul %53, %55, %cst_45 {dimension_numbers = #tpu.dot_dimension_numbers<[1], [0], [0], [1], [0, 0, 1, 1], [], []>} : vector<324x128xbf16>, vector<128x128xbf16>, vector<324x128xf32> -> vector<324x128xf32>
    %57 = arith.addf %51, %56 : vector<324x128xf32>
    %c0_46 = arith.constant 0 : index
    %c0_47 = arith.constant 0 : index
    %58 = vector.load %arg3[%c0_46, %c0_47] : memref<1x128xf32, #tpu.memory_space<vmem>>, vector<1x128xf32>
    %59 = vector.broadcast %58 : vector<1x128xf32> to vector<324x128xf32>
    %60 = arith.addf %57, %59 : vector<324x128xf32>
    %cst_48 = arith.constant 0.000000e+00 : f32
    %61 = vector.broadcast %cst_48 : f32 to vector<324x128xf32>
    %62 = arith.maximumf %60, %61 : vector<324x128xf32>
    %c0_49 = arith.constant 0 : index
    %c0_50 = arith.constant 0 : index
    %63 = vector.load %arg16[%c0_49, %c0_50] : memref<324x128xf32, #tpu.memory_space<vmem>>, vector<324x128xf32>
    tpu.vector_store %arg16[%c0_49, %c0_50], %62 {strides = array<i32>} : memref<324x128xf32, #tpu.memory_space<vmem>>, vector<324x128xf32>,
    %cst_51 = arith.constant 0.000000e+00 : f32
    %64 = vector.broadcast %cst_51 : f32 to vector<100x128xf32>
    %c19_52 = arith.constant 19 : index
    %c0_53 = arith.constant 0 : index
    %65 = vector.load %arg15[%c19_52, %c0_53] : memref<368x128xf32, #tpu.memory_space<vmem>>, vector<100x128xf32>
    tpu.vector_store %arg15[%c19_52, %c0_53], %64 {strides = array<i32>} : memref<368x128xf32, #tpu.memory_space<vmem>>, vector<100x128xf32>,
    %c0_54 = arith.constant 0 : index
    %c0_55 = arith.constant 0 : index
    %66 = vector.load %arg16[%c0_54, %c0_55] : memref<324x128xf32, #tpu.memory_space<vmem>>, vector<306x128xf32>
    %c18_56 = arith.constant 18 : index
    %c0_57 = arith.constant 0 : index
    %67 = vector.load %arg16[%c18_56, %c0_57] : memref<324x128xf32, #tpu.memory_space<vmem>>, vector<306x128xf32>
    %68 = arith.maximumf %66, %67 : vector<306x128xf32>
    %c0_58 = arith.constant 0 : index
    %c0_59 = arith.constant 0 : index
    %69 = vector.load %arg17[%c0_58, %c0_59] : memref<324x128xf32, #tpu.memory_space<vmem>>, vector<306x128xf32>
    tpu.vector_store %arg17[%c0_58, %c0_59], %68 {strides = array<i32>} : memref<324x128xf32, #tpu.memory_space<vmem>>, vector<306x128xf32>,
    %c19_60 = arith.constant 19 : index
    %c0_61 = arith.constant 0 : index
    %70 = vector.load %arg17[%c19_60, %c0_61] : memref<324x128xf32, #tpu.memory_space<vmem>>, vector<1x128xf32>
    %c20_62 = arith.constant 20 : index
    %c0_63 = arith.constant 0 : index
    %71 = vector.load %arg17[%c20_62, %c0_63] : memref<324x128xf32, #tpu.memory_space<vmem>>, vector<1x128xf32>
    %72 = arith.maximumf %70, %71 : vector<1x128xf32>
    %c30 = arith.constant 30 : index
    %c0_64 = arith.constant 0 : index
    %73 = vector.load %arg15[%c30, %c0_64] : memref<368x128xf32, #tpu.memory_space<vmem>>, vector<1x128xf32>
    tpu.vector_store %arg15[%c30, %c0_64], %72 {strides = array<i32>} : memref<368x128xf32, #tpu.memory_space<vmem>>, vector<1x128xf32>,
    %c21 = arith.constant 21 : index
    %c0_65 = arith.constant 0 : index
    %74 = vector.load %arg17[%c21, %c0_65] : memref<324x128xf32, #tpu.memory_space<vmem>>, vector<1x128xf32>
    %c22 = arith.constant 22 : index
    %c0_66 = arith.constant 0 : index
    %75 = vector.load %arg17[%c22, %c0_66] : memref<324x128xf32, #tpu.memory_space<vmem>>, vector<1x128xf32>
    %76 = arith.maximumf %74, %75 : vector<1x128xf32>
    %c31 = arith.constant 31 : index
    %c0_67 = arith.constant 0 : index
    %77 = vector.load %arg15[%c31, %c0_67] : memref<368x128xf32, #tpu.memory_space<vmem>>, vector<1x128xf32>
    tpu.vector_store %arg15[%c31, %c0_67], %76 {strides = array<i32>} : memref<368x128xf32, #tpu.memory_space<vmem>>, vector<1x128xf32>,
    %c23 = arith.constant 23 : index
    %c0_68 = arith.constant 0 : index
    %78 = vector.load %arg17[%c23, %c0_68] : memref<324x128xf32, #tpu.memory_space<vmem>>, vector<1x128xf32>
    %c24 = arith.constant 24 : index
    %c0_69 = arith.constant 0 : index
    %79 = vector.load %arg17[%c24, %c0_69] : memref<324x128xf32, #tpu.memory_space<vmem>>, vector<1x128xf32>
    %80 = arith.maximumf %78, %79 : vector<1x128xf32>
    %c32 = arith.constant 32 : index
    %c0_70 = arith.constant 0 : index
    %81 = vector.load %arg15[%c32, %c0_70] : memref<368x128xf32, #tpu.memory_space<vmem>>, vector<1x128xf32>
    tpu.vector_store %arg15[%c32, %c0_70], %80 {strides = array<i32>} : memref<368x128xf32, #tpu.memory_space<vmem>>, vector<1x128xf32>,
    %c25 = arith.constant 25 : index
    %c0_71 = arith.constant 0 : index
    %82 = vector.load %arg17[%c25, %c0_71] : memref<324x128xf32, #tpu.memory_space<vmem>>, vector<1x128xf32>
    %c26 = arith.constant 26 : index
    %c0_72 = arith.constant 0 : index
    %83 = vector.load %arg17[%c26, %c0_72] : memref<324x128xf32, #tpu.memory_space<vmem>>, vector<1x128xf32>
    %84 = arith.maximumf %82, %83 : vector<1x128xf32>
    %c33 = arith.constant 33 : index
    %c0_73 = arith.constant 0 : index
    %85 = vector.load %arg15[%c33, %c0_73] : memref<368x128xf32, #tpu.memory_space<vmem>>, vector<1x128xf32>
    tpu.vector_store %arg15[%c33, %c0_73], %84 {strides = array<i32>} : memref<368x128xf32, #tpu.memory_space<vmem>>, vector<1x128xf32>,
    %c27 = arith.constant 27 : index
    %c0_74 = arith.constant 0 : index
    %86 = vector.load %arg17[%c27, %c0_74] : memref<324x128xf32, #tpu.memory_space<vmem>>, vector<1x128xf32>
    %c28 = arith.constant 28 : index
    %c0_75 = arith.constant 0 : index
    %87 = vector.load %arg17[%c28, %c0_75] : memref<324x128xf32, #tpu.memory_space<vmem>>, vector<1x128xf32>
    %88 = arith.maximumf %86, %87 : vector<1x128xf32>
    %c34 = arith.constant 34 : index
    %c0_76 = arith.constant 0 : index
    %89 = vector.load %arg15[%c34, %c0_76] : memref<368x128xf32, #tpu.memory_space<vmem>>, vector<1x128xf32>
    tpu.vector_store %arg15[%c34, %c0_76], %88 {strides = array<i32>} : memref<368x128xf32, #tpu.memory_space<vmem>>, vector<1x128xf32>,
    %c29 = arith.constant 29 : index
    %c0_77 = arith.constant 0 : index
    %90 = vector.load %arg17[%c29, %c0_77] : memref<324x128xf32, #tpu.memory_space<vmem>>, vector<1x128xf32>
    %c30_78 = arith.constant 30 : index
    %c0_79 = arith.constant 0 : index
    %91 = vector.load %arg17[%c30_78, %c0_79] : memref<324x128xf32, #tpu.memory_space<vmem>>, vector<1x128xf32>
    %92 = arith.maximumf %90, %91 : vector<1x128xf32>
    %c35 = arith.constant 35 : index
    %c0_80 = arith.constant 0 : index
    %93 = vector.load %arg15[%c35, %c0_80] : memref<368x128xf32, #tpu.memory_space<vmem>>, vector<1x128xf32>
    tpu.vector_store %arg15[%c35, %c0_80], %92 {strides = array<i32>} : memref<368x128xf32, #tpu.memory_space<vmem>>, vector<1x128xf32>,
    %c31_81 = arith.constant 31 : index
    %c0_82 = arith.constant 0 : index
    %94 = vector.load %arg17[%c31_81, %c0_82] : memref<324x128xf32, #tpu.memory_space<vmem>>, vector<1x128xf32>
    %c32_83 = arith.constant 32 : index
    %c0_84 = arith.constant 0 : index
    %95 = vector.load %arg17[%c32_83, %c0_84] : memref<324x128xf32, #tpu.memory_space<vmem>>, vector<1x128xf32>
    %96 = arith.maximumf %94, %95 : vector<1x128xf32>
    %c36_85 = arith.constant 36 : index
    %c0_86 = arith.constant 0 : index
    %97 = vector.load %arg15[%c36_85, %c0_86] : memref<368x128xf32, #tpu.memory_space<vmem>>, vector<1x128xf32>
    tpu.vector_store %arg15[%c36_85, %c0_86], %96 {strides = array<i32>} : memref<368x128xf32, #tpu.memory_space<vmem>>, vector<1x128xf32>,
    %c33_87 = arith.constant 33 : index
    %c0_88 = arith.constant 0 : index
    %98 = vector.load %arg17[%c33_87, %c0_88] : memref<324x128xf32, #tpu.memory_space<vmem>>, vector<1x128xf32>
    %c34_89 = arith.constant 34 : index
    %c0_90 = arith.constant 0 : index
    %99 = vector.load %arg17[%c34_89, %c0_90] : memref<324x128xf32, #tpu.memory_space<vmem>>, vector<1x128xf32>
    %100 = arith.maximumf %98, %99 : vector<1x128xf32>
    %c37_91 = arith.constant 37 : index
    %c0_92 = arith.constant 0 : index
    %101 = vector.load %arg15[%c37_91, %c0_92] : memref<368x128xf32, #tpu.memory_space<vmem>>, vector<1x128xf32>
    tpu.vector_store %arg15[%c37_91, %c0_92], %100 {strides = array<i32>} : memref<368x128xf32, #tpu.memory_space<vmem>>, vector<1x128xf32>,
    %c55 = arith.constant 55 : index
    %c0_93 = arith.constant 0 : index
    %102 = vector.load %arg17[%c55, %c0_93] : memref<324x128xf32, #tpu.memory_space<vmem>>, vector<1x128xf32>
    %c56 = arith.constant 56 : index
    %c0_94 = arith.constant 0 : index
    %103 = vector.load %arg17[%c56, %c0_94] : memref<324x128xf32, #tpu.memory_space<vmem>>, vector<1x128xf32>
    %104 = arith.maximumf %102, %103 : vector<1x128xf32>
    %c40 = arith.constant 40 : index
    %c0_95 = arith.constant 0 : index
    %105 = vector.load %arg15[%c40, %c0_95] : memref<368x128xf32, #tpu.memory_space<vmem>>, vector<1x128xf32>
    tpu.vector_store %arg15[%c40, %c0_95], %104 {strides = array<i32>} : memref<368x128xf32, #tpu.memory_space<vmem>>, vector<1x128xf32>,
    %c57 = arith.constant 57 : index
    %c0_96 = arith.constant 0 : index
    %106 = vector.load %arg17[%c57, %c0_96] : memref<324x128xf32, #tpu.memory_space<vmem>>, vector<1x128xf32>
    %c58 = arith.constant 58 : index
    %c0_97 = arith.constant 0 : index
    %107 = vector.load %arg17[%c58, %c0_97] : memref<324x128xf32, #tpu.memory_space<vmem>>, vector<1x128xf32>
    %108 = arith.maximumf %106, %107 : vector<1x128xf32>
    %c41 = arith.constant 41 : index
    %c0_98 = arith.constant 0 : index
    %109 = vector.load %arg15[%c41, %c0_98] : memref<368x128xf32, #tpu.memory_space<vmem>>, vector<1x128xf32>
    tpu.vector_store %arg15[%c41, %c0_98], %108 {strides = array<i32>} : memref<368x128xf32, #tpu.memory_space<vmem>>, vector<1x128xf32>,
    %c59 = arith.constant 59 : index
    %c0_99 = arith.constant 0 : index
    %110 = vector.load %arg17[%c59, %c0_99] : memref<324x128xf32, #tpu.memory_space<vmem>>, vector<1x128xf32>
    %c60 = arith.constant 60 : index
    %c0_100 = arith.constant 0 : index
    %111 = vector.load %arg17[%c60, %c0_100] : memref<324x128xf32, #tpu.memory_space<vmem>>, vector<1x128xf32>
    %112 = arith.maximumf %110, %111 : vector<1x128xf32>
    %c42 = arith.constant 42 : index
    %c0_101 = arith.constant 0 : index
    %113 = vector.load %arg15[%c42, %c0_101] : memref<368x128xf32, #tpu.memory_space<vmem>>, vector<1x128xf32>
    tpu.vector_store %arg15[%c42, %c0_101], %112 {strides = array<i32>} : memref<368x128xf32, #tpu.memory_space<vmem>>, vector<1x128xf32>,
    %c61 = arith.constant 61 : index
    %c0_102 = arith.constant 0 : index
    %114 = vector.load %arg17[%c61, %c0_102] : memref<324x128xf32, #tpu.memory_space<vmem>>, vector<1x128xf32>
    %c62 = arith.constant 62 : index
    %c0_103 = arith.constant 0 : index
    %115 = vector.load %arg17[%c62, %c0_103] : memref<324x128xf32, #tpu.memory_space<vmem>>, vector<1x128xf32>
    %116 = arith.maximumf %114, %115 : vector<1x128xf32>
    %c43 = arith.constant 43 : index
    %c0_104 = arith.constant 0 : index
    %117 = vector.load %arg15[%c43, %c0_104] : memref<368x128xf32, #tpu.memory_space<vmem>>, vector<1x128xf32>
    tpu.vector_store %arg15[%c43, %c0_104], %116 {strides = array<i32>} : memref<368x128xf32, #tpu.memory_space<vmem>>, vector<1x128xf32>,
    %c63 = arith.constant 63 : index
    %c0_105 = arith.constant 0 : index
    %118 = vector.load %arg17[%c63, %c0_105] : memref<324x128xf32, #tpu.memory_space<vmem>>, vector<1x128xf32>
    %c64 = arith.constant 64 : index
    %c0_106 = arith.constant 0 : index
    %119 = vector.load %arg17[%c64, %c0_106] : memref<324x128xf32, #tpu.memory_space<vmem>>, vector<1x128xf32>
    %120 = arith.maximumf %118, %119 : vector<1x128xf32>
    %c44 = arith.constant 44 : index
    %c0_107 = arith.constant 0 : index
    %121 = vector.load %arg15[%c44, %c0_107] : memref<368x128xf32, #tpu.memory_space<vmem>>, vector<1x128xf32>
    tpu.vector_store %arg15[%c44, %c0_107], %120 {strides = array<i32>} : memref<368x128xf32, #tpu.memory_space<vmem>>, vector<1x128xf32>,
    %c65 = arith.constant 65 : index
    %c0_108 = arith.constant 0 : index
    %122 = vector.load %arg17[%c65, %c0_108] : memref<324x128xf32, #tpu.memory_space<vmem>>, vector<1x128xf32>
    %c66 = arith.constant 66 : index
    %c0_109 = arith.constant 0 : index
    %123 = vector.load %arg17[%c66, %c0_109] : memref<324x128xf32, #tpu.memory_space<vmem>>, vector<1x128xf32>
    %124 = arith.maximumf %122, %123 : vector<1x128xf32>
    %c45 = arith.constant 45 : index
    %c0_110 = arith.constant 0 : index
    %125 = vector.load %arg15[%c45, %c0_110] : memref<368x128xf32, #tpu.memory_space<vmem>>, vector<1x128xf32>
    tpu.vector_store %arg15[%c45, %c0_110], %124 {strides = array<i32>} : memref<368x128xf32, #tpu.memory_space<vmem>>, vector<1x128xf32>,
    %c67 = arith.constant 67 : index
    %c0_111 = arith.constant 0 : index
    %126 = vector.load %arg17[%c67, %c0_111] : memref<324x128xf32, #tpu.memory_space<vmem>>, vector<1x128xf32>
    %c68 = arith.constant 68 : index
    %c0_112 = arith.constant 0 : index
    %127 = vector.load %arg17[%c68, %c0_112] : memref<324x128xf32, #tpu.memory_space<vmem>>, vector<1x128xf32>
    %128 = arith.maximumf %126, %127 : vector<1x128xf32>
    %c46 = arith.constant 46 : index
    %c0_113 = arith.constant 0 : index
    %129 = vector.load %arg15[%c46, %c0_113] : memref<368x128xf32, #tpu.memory_space<vmem>>, vector<1x128xf32>
    tpu.vector_store %arg15[%c46, %c0_113], %128 {strides = array<i32>} : memref<368x128xf32, #tpu.memory_space<vmem>>, vector<1x128xf32>,
    %c69 = arith.constant 69 : index
    %c0_114 = arith.constant 0 : index
    %130 = vector.load %arg17[%c69, %c0_114] : memref<324x128xf32, #tpu.memory_space<vmem>>, vector<1x128xf32>
    %c70 = arith.constant 70 : index
    %c0_115 = arith.constant 0 : index
    %131 = vector.load %arg17[%c70, %c0_115] : memref<324x128xf32, #tpu.memory_space<vmem>>, vector<1x128xf32>
    %132 = arith.maximumf %130, %131 : vector<1x128xf32>
    %c47 = arith.constant 47 : index
    %c0_116 = arith.constant 0 : index
    %133 = vector.load %arg15[%c47, %c0_116] : memref<368x128xf32, #tpu.memory_space<vmem>>, vector<1x128xf32>
    tpu.vector_store %arg15[%c47, %c0_116], %132 {strides = array<i32>} : memref<368x128xf32, #tpu.memory_space<vmem>>, vector<1x128xf32>,
    %c91 = arith.constant 91 : index
    %c0_117 = arith.constant 0 : index
    %134 = vector.load %arg17[%c91, %c0_117] : memref<324x128xf32, #tpu.memory_space<vmem>>, vector<1x128xf32>
    %c92 = arith.constant 92 : index
    %c0_118 = arith.constant 0 : index
    %135 = vector.load %arg17[%c92, %c0_118] : memref<324x128xf32, #tpu.memory_space<vmem>>, vector<1x128xf32>
    %136 = arith.maximumf %134, %135 : vector<1x128xf32>
    %c50 = arith.constant 50 : index
    %c0_119 = arith.constant 0 : index
    %137 = vector.load %arg15[%c50, %c0_119] : memref<368x128xf32, #tpu.memory_space<vmem>>, vector<1x128xf32>
    tpu.vector_store %arg15[%c50, %c0_119], %136 {strides = array<i32>} : memref<368x128xf32, #tpu.memory_space<vmem>>, vector<1x128xf32>,
    %c93 = arith.constant 93 : index
    %c0_120 = arith.constant 0 : index
    %138 = vector.load %arg17[%c93, %c0_120] : memref<324x128xf32, #tpu.memory_space<vmem>>, vector<1x128xf32>
    %c94 = arith.constant 94 : index
    %c0_121 = arith.constant 0 : index
    %139 = vector.load %arg17[%c94, %c0_121] : memref<324x128xf32, #tpu.memory_space<vmem>>, vector<1x128xf32>
    %140 = arith.maximumf %138, %139 : vector<1x128xf32>
    %c51 = arith.constant 51 : index
    %c0_122 = arith.constant 0 : index
    %141 = vector.load %arg15[%c51, %c0_122] : memref<368x128xf32, #tpu.memory_space<vmem>>, vector<1x128xf32>
    tpu.vector_store %arg15[%c51, %c0_122], %140 {strides = array<i32>} : memref<368x128xf32, #tpu.memory_space<vmem>>, vector<1x128xf32>,
    %c95 = arith.constant 95 : index
    %c0_123 = arith.constant 0 : index
    %142 = vector.load %arg17[%c95, %c0_123] : memref<324x128xf32, #tpu.memory_space<vmem>>, vector<1x128xf32>
    %c96 = arith.constant 96 : index
    %c0_124 = arith.constant 0 : index
    %143 = vector.load %arg17[%c96, %c0_124] : memref<324x128xf32, #tpu.memory_space<vmem>>, vector<1x128xf32>
    %144 = arith.maximumf %142, %143 : vector<1x128xf32>
    %c52 = arith.constant 52 : index
    %c0_125 = arith.constant 0 : index
    %145 = vector.load %arg15[%c52, %c0_125] : memref<368x128xf32, #tpu.memory_space<vmem>>, vector<1x128xf32>
    tpu.vector_store %arg15[%c52, %c0_125], %144 {strides = array<i32>} : memref<368x128xf32, #tpu.memory_space<vmem>>, vector<1x128xf32>,
    %c97 = arith.constant 97 : index
    %c0_126 = arith.constant 0 : index
    %146 = vector.load %arg17[%c97, %c0_126] : memref<324x128xf32, #tpu.memory_space<vmem>>, vector<1x128xf32>
    %c98 = arith.constant 98 : index
    %c0_127 = arith.constant 0 : index
    %147 = vector.load %arg17[%c98, %c0_127] : memref<324x128xf32, #tpu.memory_space<vmem>>, vector<1x128xf32>
    %148 = arith.maximumf %146, %147 : vector<1x128xf32>
    %c53 = arith.constant 53 : index
    %c0_128 = arith.constant 0 : index
    %149 = vector.load %arg15[%c53, %c0_128] : memref<368x128xf32, #tpu.memory_space<vmem>>, vector<1x128xf32>
    tpu.vector_store %arg15[%c53, %c0_128], %148 {strides = array<i32>} : memref<368x128xf32, #tpu.memory_space<vmem>>, vector<1x128xf32>,
    %c99 = arith.constant 99 : index
    %c0_129 = arith.constant 0 : index
    %150 = vector.load %arg17[%c99, %c0_129] : memref<324x128xf32, #tpu.memory_space<vmem>>, vector<1x128xf32>
    %c100 = arith.constant 100 : index
    %c0_130 = arith.constant 0 : index
    %151 = vector.load %arg17[%c100, %c0_130] : memref<324x128xf32, #tpu.memory_space<vmem>>, vector<1x128xf32>
    %152 = arith.maximumf %150, %151 : vector<1x128xf32>
    %c54 = arith.constant 54 : index
    %c0_131 = arith.constant 0 : index
    %153 = vector.load %arg15[%c54, %c0_131] : memref<368x128xf32, #tpu.memory_space<vmem>>, vector<1x128xf32>
    tpu.vector_store %arg15[%c54, %c0_131], %152 {strides = array<i32>} : memref<368x128xf32, #tpu.memory_space<vmem>>, vector<1x128xf32>,
    %c101 = arith.constant 101 : index
    %c0_132 = arith.constant 0 : index
    %154 = vector.load %arg17[%c101, %c0_132] : memref<324x128xf32, #tpu.memory_space<vmem>>, vector<1x128xf32>
    %c102 = arith.constant 102 : index
    %c0_133 = arith.constant 0 : index
    %155 = vector.load %arg17[%c102, %c0_133] : memref<324x128xf32, #tpu.memory_space<vmem>>, vector<1x128xf32>
    %156 = arith.maximumf %154, %155 : vector<1x128xf32>
    %c55_134 = arith.constant 55 : index
    %c0_135 = arith.constant 0 : index
    %157 = vector.load %arg15[%c55_134, %c0_135] : memref<368x128xf32, #tpu.memory_space<vmem>>, vector<1x128xf32>
    tpu.vector_store %arg15[%c55_134, %c0_135], %156 {strides = array<i32>} : memref<368x128xf32, #tpu.memory_space<vmem>>, vector<1x128xf32>,
    %c103 = arith.constant 103 : index
    %c0_136 = arith.constant 0 : index
    %158 = vector.load %arg17[%c103, %c0_136] : memref<324x128xf32, #tpu.memory_space<vmem>>, vector<1x128xf32>
    %c104 = arith.constant 104 : index
    %c0_137 = arith.constant 0 : index
    %159 = vector.load %arg17[%c104, %c0_137] : memref<324x128xf32, #tpu.memory_space<vmem>>, vector<1x128xf32>
    %160 = arith.maximumf %158, %159 : vector<1x128xf32>
    %c56_138 = arith.constant 56 : index
    %c0_139 = arith.constant 0 : index
    %161 = vector.load %arg15[%c56_138, %c0_139] : memref<368x128xf32, #tpu.memory_space<vmem>>, vector<1x128xf32>
    tpu.vector_store %arg15[%c56_138, %c0_139], %160 {strides = array<i32>} : memref<368x128xf32, #tpu.memory_space<vmem>>, vector<1x128xf32>,
    %c105 = arith.constant 105 : index
    %c0_140 = arith.constant 0 : index
    %162 = vector.load %arg17[%c105, %c0_140] : memref<324x128xf32, #tpu.memory_space<vmem>>, vector<1x128xf32>
    %c106 = arith.constant 106 : index
    %c0_141 = arith.constant 0 : index
    %163 = vector.load %arg17[%c106, %c0_141] : memref<324x128xf32, #tpu.memory_space<vmem>>, vector<1x128xf32>
    %164 = arith.maximumf %162, %163 : vector<1x128xf32>
    %c57_142 = arith.constant 57 : index
    %c0_143 = arith.constant 0 : index
    %165 = vector.load %arg15[%c57_142, %c0_143] : memref<368x128xf32, #tpu.memory_space<vmem>>, vector<1x128xf32>
    tpu.vector_store %arg15[%c57_142, %c0_143], %164 {strides = array<i32>} : memref<368x128xf32, #tpu.memory_space<vmem>>, vector<1x128xf32>,
    %c127 = arith.constant 127 : index
    %c0_144 = arith.constant 0 : index
    %166 = vector.load %arg17[%c127, %c0_144] : memref<324x128xf32, #tpu.memory_space<vmem>>, vector<1x128xf32>
    %c128 = arith.constant 128 : index
    %c0_145 = arith.constant 0 : index
    %167 = vector.load %arg17[%c128, %c0_145] : memref<324x128xf32, #tpu.memory_space<vmem>>, vector<1x128xf32>
    %168 = arith.maximumf %166, %167 : vector<1x128xf32>
    %c60_146 = arith.constant 60 : index
    %c0_147 = arith.constant 0 : index
    %169 = vector.load %arg15[%c60_146, %c0_147] : memref<368x128xf32, #tpu.memory_space<vmem>>, vector<1x128xf32>
    tpu.vector_store %arg15[%c60_146, %c0_147], %168 {strides = array<i32>} : memref<368x128xf32, #tpu.memory_space<vmem>>, vector<1x128xf32>,
    %c129 = arith.constant 129 : index
    %c0_148 = arith.constant 0 : index
    %170 = vector.load %arg17[%c129, %c0_148] : memref<324x128xf32, #tpu.memory_space<vmem>>, vector<1x128xf32>
    %c130 = arith.constant 130 : index
    %c0_149 = arith.constant 0 : index
    %171 = vector.load %arg17[%c130, %c0_149] : memref<324x128xf32, #tpu.memory_space<vmem>>, vector<1x128xf32>
    %172 = arith.maximumf %170, %171 : vector<1x128xf32>
    %c61_150 = arith.constant 61 : index
    %c0_151 = arith.constant 0 : index
    %173 = vector.load %arg15[%c61_150, %c0_151] : memref<368x128xf32, #tpu.memory_space<vmem>>, vector<1x128xf32>
    tpu.vector_store %arg15[%c61_150, %c0_151], %172 {strides = array<i32>} : memref<368x128xf32, #tpu.memory_space<vmem>>, vector<1x128xf32>,
    %c131 = arith.constant 131 : index
    %c0_152 = arith.constant 0 : index
    %174 = vector.load %arg17[%c131, %c0_152] : memref<324x128xf32, #tpu.memory_space<vmem>>, vector<1x128xf32>
    %c132 = arith.constant 132 : index
    %c0_153 = arith.constant 0 : index
    %175 = vector.load %arg17[%c132, %c0_153] : memref<324x128xf32, #tpu.memory_space<vmem>>, vector<1x128xf32>
    %176 = arith.maximumf %174, %175 : vector<1x128xf32>
    %c62_154 = arith.constant 62 : index
    %c0_155 = arith.constant 0 : index
    %177 = vector.load %arg15[%c62_154, %c0_155] : memref<368x128xf32, #tpu.memory_space<vmem>>, vector<1x128xf32>
    tpu.vector_store %arg15[%c62_154, %c0_155], %176 {strides = array<i32>} : memref<368x128xf32, #tpu.memory_space<vmem>>, vector<1x128xf32>,
    %c133 = arith.constant 133 : index
    %c0_156 = arith.constant 0 : index
    %178 = vector.load %arg17[%c133, %c0_156] : memref<324x128xf32, #tpu.memory_space<vmem>>, vector<1x128xf32>
    %c134 = arith.constant 134 : index
    %c0_157 = arith.constant 0 : index
    %179 = vector.load %arg17[%c134, %c0_157] : memref<324x128xf32, #tpu.memory_space<vmem>>, vector<1x128xf32>
    %180 = arith.maximumf %178, %179 : vector<1x128xf32>
    %c63_158 = arith.constant 63 : index
    %c0_159 = arith.constant 0 : index
    %181 = vector.load %arg15[%c63_158, %c0_159] : memref<368x128xf32, #tpu.memory_space<vmem>>, vector<1x128xf32>
    tpu.vector_store %arg15[%c63_158, %c0_159], %180 {strides = array<i32>} : memref<368x128xf32, #tpu.memory_space<vmem>>, vector<1x128xf32>,
    %c135 = arith.constant 135 : index
    %c0_160 = arith.constant 0 : index
    %182 = vector.load %arg17[%c135, %c0_160] : memref<324x128xf32, #tpu.memory_space<vmem>>, vector<1x128xf32>
    %c136 = arith.constant 136 : index
    %c0_161 = arith.constant 0 : index
    %183 = vector.load %arg17[%c136, %c0_161] : memref<324x128xf32, #tpu.memory_space<vmem>>, vector<1x128xf32>
    %184 = arith.maximumf %182, %183 : vector<1x128xf32>
    %c64_162 = arith.constant 64 : index
    %c0_163 = arith.constant 0 : index
    %185 = vector.load %arg15[%c64_162, %c0_163] : memref<368x128xf32, #tpu.memory_space<vmem>>, vector<1x128xf32>
    tpu.vector_store %arg15[%c64_162, %c0_163], %184 {strides = array<i32>} : memref<368x128xf32, #tpu.memory_space<vmem>>, vector<1x128xf32>,
    %c137 = arith.constant 137 : index
    %c0_164 = arith.constant 0 : index
    %186 = vector.load %arg17[%c137, %c0_164] : memref<324x128xf32, #tpu.memory_space<vmem>>, vector<1x128xf32>
    %c138 = arith.constant 138 : index
    %c0_165 = arith.constant 0 : index
    %187 = vector.load %arg17[%c138, %c0_165] : memref<324x128xf32, #tpu.memory_space<vmem>>, vector<1x128xf32>
    %188 = arith.maximumf %186, %187 : vector<1x128xf32>
    %c65_166 = arith.constant 65 : index
    %c0_167 = arith.constant 0 : index
    %189 = vector.load %arg15[%c65_166, %c0_167] : memref<368x128xf32, #tpu.memory_space<vmem>>, vector<1x128xf32>
    tpu.vector_store %arg15[%c65_166, %c0_167], %188 {strides = array<i32>} : memref<368x128xf32, #tpu.memory_space<vmem>>, vector<1x128xf32>,
    %c139 = arith.constant 139 : index
    %c0_168 = arith.constant 0 : index
    %190 = vector.load %arg17[%c139, %c0_168] : memref<324x128xf32, #tpu.memory_space<vmem>>, vector<1x128xf32>
    %c140 = arith.constant 140 : index
    %c0_169 = arith.constant 0 : index
    %191 = vector.load %arg17[%c140, %c0_169] : memref<324x128xf32, #tpu.memory_space<vmem>>, vector<1x128xf32>
    %192 = arith.maximumf %190, %191 : vector<1x128xf32>
    %c66_170 = arith.constant 66 : index
    %c0_171 = arith.constant 0 : index
    %193 = vector.load %arg15[%c66_170, %c0_171] : memref<368x128xf32, #tpu.memory_space<vmem>>, vector<1x128xf32>
    tpu.vector_store %arg15[%c66_170, %c0_171], %192 {strides = array<i32>} : memref<368x128xf32, #tpu.memory_space<vmem>>, vector<1x128xf32>,
    %c141 = arith.constant 141 : index
    %c0_172 = arith.constant 0 : index
    %194 = vector.load %arg17[%c141, %c0_172] : memref<324x128xf32, #tpu.memory_space<vmem>>, vector<1x128xf32>
    %c142 = arith.constant 142 : index
    %c0_173 = arith.constant 0 : index
    %195 = vector.load %arg17[%c142, %c0_173] : memref<324x128xf32, #tpu.memory_space<vmem>>, vector<1x128xf32>
    %196 = arith.maximumf %194, %195 : vector<1x128xf32>
    %c67_174 = arith.constant 67 : index
    %c0_175 = arith.constant 0 : index
    %197 = vector.load %arg15[%c67_174, %c0_175] : memref<368x128xf32, #tpu.memory_space<vmem>>, vector<1x128xf32>
    tpu.vector_store %arg15[%c67_174, %c0_175], %196 {strides = array<i32>} : memref<368x128xf32, #tpu.memory_space<vmem>>, vector<1x128xf32>,
    %c163 = arith.constant 163 : index
    %c0_176 = arith.constant 0 : index
    %198 = vector.load %arg17[%c163, %c0_176] : memref<324x128xf32, #tpu.memory_space<vmem>>, vector<1x128xf32>
    %c164 = arith.constant 164 : index
    %c0_177 = arith.constant 0 : index
    %199 = vector.load %arg17[%c164, %c0_177] : memref<324x128xf32, #tpu.memory_space<vmem>>, vector<1x128xf32>
    %200 = arith.maximumf %198, %199 : vector<1x128xf32>
    %c70_178 = arith.constant 70 : index
    %c0_179 = arith.constant 0 : index
    %201 = vector.load %arg15[%c70_178, %c0_179] : memref<368x128xf32, #tpu.memory_space<vmem>>, vector<1x128xf32>
    tpu.vector_store %arg15[%c70_178, %c0_179], %200 {strides = array<i32>} : memref<368x128xf32, #tpu.memory_space<vmem>>, vector<1x128xf32>,
    %c165 = arith.constant 165 : index
    %c0_180 = arith.constant 0 : index
    %202 = vector.load %arg17[%c165, %c0_180] : memref<324x128xf32, #tpu.memory_space<vmem>>, vector<1x128xf32>
    %c166 = arith.constant 166 : index
    %c0_181 = arith.constant 0 : index
    %203 = vector.load %arg17[%c166, %c0_181] : memref<324x128xf32, #tpu.memory_space<vmem>>, vector<1x128xf32>
    %204 = arith.maximumf %202, %203 : vector<1x128xf32>
    %c71 = arith.constant 71 : index
    %c0_182 = arith.constant 0 : index
    %205 = vector.load %arg15[%c71, %c0_182] : memref<368x128xf32, #tpu.memory_space<vmem>>, vector<1x128xf32>
    tpu.vector_store %arg15[%c71, %c0_182], %204 {strides = array<i32>} : memref<368x128xf32, #tpu.memory_space<vmem>>, vector<1x128xf32>,
    %c167 = arith.constant 167 : index
    %c0_183 = arith.constant 0 : index
    %206 = vector.load %arg17[%c167, %c0_183] : memref<324x128xf32, #tpu.memory_space<vmem>>, vector<1x128xf32>
    %c168 = arith.constant 168 : index
    %c0_184 = arith.constant 0 : index
    %207 = vector.load %arg17[%c168, %c0_184] : memref<324x128xf32, #tpu.memory_space<vmem>>, vector<1x128xf32>
    %208 = arith.maximumf %206, %207 : vector<1x128xf32>
    %c72 = arith.constant 72 : index
    %c0_185 = arith.constant 0 : index
    %209 = vector.load %arg15[%c72, %c0_185] : memref<368x128xf32, #tpu.memory_space<vmem>>, vector<1x128xf32>
    tpu.vector_store %arg15[%c72, %c0_185], %208 {strides = array<i32>} : memref<368x128xf32, #tpu.memory_space<vmem>>, vector<1x128xf32>,
    %c169 = arith.constant 169 : index
    %c0_186 = arith.constant 0 : index
    %210 = vector.load %arg17[%c169, %c0_186] : memref<324x128xf32, #tpu.memory_space<vmem>>, vector<1x128xf32>
    %c170 = arith.constant 170 : index
    %c0_187 = arith.constant 0 : index
    %211 = vector.load %arg17[%c170, %c0_187] : memref<324x128xf32, #tpu.memory_space<vmem>>, vector<1x128xf32>
    %212 = arith.maximumf %210, %211 : vector<1x128xf32>
    %c73 = arith.constant 73 : index
    %c0_188 = arith.constant 0 : index
    %213 = vector.load %arg15[%c73, %c0_188] : memref<368x128xf32, #tpu.memory_space<vmem>>, vector<1x128xf32>
    tpu.vector_store %arg15[%c73, %c0_188], %212 {strides = array<i32>} : memref<368x128xf32, #tpu.memory_space<vmem>>, vector<1x128xf32>,
    %c171 = arith.constant 171 : index
    %c0_189 = arith.constant 0 : index
    %214 = vector.load %arg17[%c171, %c0_189] : memref<324x128xf32, #tpu.memory_space<vmem>>, vector<1x128xf32>
    %c172 = arith.constant 172 : index
    %c0_190 = arith.constant 0 : index
    %215 = vector.load %arg17[%c172, %c0_190] : memref<324x128xf32, #tpu.memory_space<vmem>>, vector<1x128xf32>
    %216 = arith.maximumf %214, %215 : vector<1x128xf32>
    %c74 = arith.constant 74 : index
    %c0_191 = arith.constant 0 : index
    %217 = vector.load %arg15[%c74, %c0_191] : memref<368x128xf32, #tpu.memory_space<vmem>>, vector<1x128xf32>
    tpu.vector_store %arg15[%c74, %c0_191], %216 {strides = array<i32>} : memref<368x128xf32, #tpu.memory_space<vmem>>, vector<1x128xf32>,
    %c173 = arith.constant 173 : index
    %c0_192 = arith.constant 0 : index
    %218 = vector.load %arg17[%c173, %c0_192] : memref<324x128xf32, #tpu.memory_space<vmem>>, vector<1x128xf32>
    %c174 = arith.constant 174 : index
    %c0_193 = arith.constant 0 : index
    %219 = vector.load %arg17[%c174, %c0_193] : memref<324x128xf32, #tpu.memory_space<vmem>>, vector<1x128xf32>
    %220 = arith.maximumf %218, %219 : vector<1x128xf32>
    %c75 = arith.constant 75 : index
    %c0_194 = arith.constant 0 : index
    %221 = vector.load %arg15[%c75, %c0_194] : memref<368x128xf32, #tpu.memory_space<vmem>>, vector<1x128xf32>
    tpu.vector_store %arg15[%c75, %c0_194], %220 {strides = array<i32>} : memref<368x128xf32, #tpu.memory_space<vmem>>, vector<1x128xf32>,
    %c175 = arith.constant 175 : index
    %c0_195 = arith.constant 0 : index
    %222 = vector.load %arg17[%c175, %c0_195] : memref<324x128xf32, #tpu.memory_space<vmem>>, vector<1x128xf32>
    %c176 = arith.constant 176 : index
    %c0_196 = arith.constant 0 : index
    %223 = vector.load %arg17[%c176, %c0_196] : memref<324x128xf32, #tpu.memory_space<vmem>>, vector<1x128xf32>
    %224 = arith.maximumf %222, %223 : vector<1x128xf32>
    %c76 = arith.constant 76 : index
    %c0_197 = arith.constant 0 : index
    %225 = vector.load %arg15[%c76, %c0_197] : memref<368x128xf32, #tpu.memory_space<vmem>>, vector<1x128xf32>
    tpu.vector_store %arg15[%c76, %c0_197], %224 {strides = array<i32>} : memref<368x128xf32, #tpu.memory_space<vmem>>, vector<1x128xf32>,
    %c177 = arith.constant 177 : index
    %c0_198 = arith.constant 0 : index
    %226 = vector.load %arg17[%c177, %c0_198] : memref<324x128xf32, #tpu.memory_space<vmem>>, vector<1x128xf32>
    %c178 = arith.constant 178 : index
    %c0_199 = arith.constant 0 : index
    %227 = vector.load %arg17[%c178, %c0_199] : memref<324x128xf32, #tpu.memory_space<vmem>>, vector<1x128xf32>
    %228 = arith.maximumf %226, %227 : vector<1x128xf32>
    %c77 = arith.constant 77 : index
    %c0_200 = arith.constant 0 : index
    %229 = vector.load %arg15[%c77, %c0_200] : memref<368x128xf32, #tpu.memory_space<vmem>>, vector<1x128xf32>
    tpu.vector_store %arg15[%c77, %c0_200], %228 {strides = array<i32>} : memref<368x128xf32, #tpu.memory_space<vmem>>, vector<1x128xf32>,
    %c199 = arith.constant 199 : index
    %c0_201 = arith.constant 0 : index
    %230 = vector.load %arg17[%c199, %c0_201] : memref<324x128xf32, #tpu.memory_space<vmem>>, vector<1x128xf32>
    %c200 = arith.constant 200 : index
    %c0_202 = arith.constant 0 : index
    %231 = vector.load %arg17[%c200, %c0_202] : memref<324x128xf32, #tpu.memory_space<vmem>>, vector<1x128xf32>
    %232 = arith.maximumf %230, %231 : vector<1x128xf32>
    %c80 = arith.constant 80 : index
    %c0_203 = arith.constant 0 : index
    %233 = vector.load %arg15[%c80, %c0_203] : memref<368x128xf32, #tpu.memory_space<vmem>>, vector<1x128xf32>
    tpu.vector_store %arg15[%c80, %c0_203], %232 {strides = array<i32>} : memref<368x128xf32, #tpu.memory_space<vmem>>, vector<1x128xf32>,
    %c201 = arith.constant 201 : index
    %c0_204 = arith.constant 0 : index
    %234 = vector.load %arg17[%c201, %c0_204] : memref<324x128xf32, #tpu.memory_space<vmem>>, vector<1x128xf32>
    %c202 = arith.constant 202 : index
    %c0_205 = arith.constant 0 : index
    %235 = vector.load %arg17[%c202, %c0_205] : memref<324x128xf32, #tpu.memory_space<vmem>>, vector<1x128xf32>
    %236 = arith.maximumf %234, %235 : vector<1x128xf32>
    %c81 = arith.constant 81 : index
    %c0_206 = arith.constant 0 : index
    %237 = vector.load %arg15[%c81, %c0_206] : memref<368x128xf32, #tpu.memory_space<vmem>>, vector<1x128xf32>
    tpu.vector_store %arg15[%c81, %c0_206], %236 {strides = array<i32>} : memref<368x128xf32, #tpu.memory_space<vmem>>, vector<1x128xf32>,
    %c203 = arith.constant 203 : index
    %c0_207 = arith.constant 0 : index
    %238 = vector.load %arg17[%c203, %c0_207] : memref<324x128xf32, #tpu.memory_space<vmem>>, vector<1x128xf32>
    %c204 = arith.constant 204 : index
    %c0_208 = arith.constant 0 : index
    %239 = vector.load %arg17[%c204, %c0_208] : memref<324x128xf32, #tpu.memory_space<vmem>>, vector<1x128xf32>
    %240 = arith.maximumf %238, %239 : vector<1x128xf32>
    %c82 = arith.constant 82 : index
    %c0_209 = arith.constant 0 : index
    %241 = vector.load %arg15[%c82, %c0_209] : memref<368x128xf32, #tpu.memory_space<vmem>>, vector<1x128xf32>
    tpu.vector_store %arg15[%c82, %c0_209], %240 {strides = array<i32>} : memref<368x128xf32, #tpu.memory_space<vmem>>, vector<1x128xf32>,
    %c205 = arith.constant 205 : index
    %c0_210 = arith.constant 0 : index
    %242 = vector.load %arg17[%c205, %c0_210] : memref<324x128xf32, #tpu.memory_space<vmem>>, vector<1x128xf32>
    %c206 = arith.constant 206 : index
    %c0_211 = arith.constant 0 : index
    %243 = vector.load %arg17[%c206, %c0_211] : memref<324x128xf32, #tpu.memory_space<vmem>>, vector<1x128xf32>
    %244 = arith.maximumf %242, %243 : vector<1x128xf32>
    %c83 = arith.constant 83 : index
    %c0_212 = arith.constant 0 : index
    %245 = vector.load %arg15[%c83, %c0_212] : memref<368x128xf32, #tpu.memory_space<vmem>>, vector<1x128xf32>
    tpu.vector_store %arg15[%c83, %c0_212], %244 {strides = array<i32>} : memref<368x128xf32, #tpu.memory_space<vmem>>, vector<1x128xf32>,
    %c207 = arith.constant 207 : index
    %c0_213 = arith.constant 0 : index
    %246 = vector.load %arg17[%c207, %c0_213] : memref<324x128xf32, #tpu.memory_space<vmem>>, vector<1x128xf32>
    %c208 = arith.constant 208 : index
    %c0_214 = arith.constant 0 : index
    %247 = vector.load %arg17[%c208, %c0_214] : memref<324x128xf32, #tpu.memory_space<vmem>>, vector<1x128xf32>
    %248 = arith.maximumf %246, %247 : vector<1x128xf32>
    %c84 = arith.constant 84 : index
    %c0_215 = arith.constant 0 : index
    %249 = vector.load %arg15[%c84, %c0_215] : memref<368x128xf32, #tpu.memory_space<vmem>>, vector<1x128xf32>
    tpu.vector_store %arg15[%c84, %c0_215], %248 {strides = array<i32>} : memref<368x128xf32, #tpu.memory_space<vmem>>, vector<1x128xf32>,
    %c209 = arith.constant 209 : index
    %c0_216 = arith.constant 0 : index
    %250 = vector.load %arg17[%c209, %c0_216] : memref<324x128xf32, #tpu.memory_space<vmem>>, vector<1x128xf32>
    %c210 = arith.constant 210 : index
    %c0_217 = arith.constant 0 : index
    %251 = vector.load %arg17[%c210, %c0_217] : memref<324x128xf32, #tpu.memory_space<vmem>>, vector<1x128xf32>
    %252 = arith.maximumf %250, %251 : vector<1x128xf32>
    %c85 = arith.constant 85 : index
    %c0_218 = arith.constant 0 : index
    %253 = vector.load %arg15[%c85, %c0_218] : memref<368x128xf32, #tpu.memory_space<vmem>>, vector<1x128xf32>
    tpu.vector_store %arg15[%c85, %c0_218], %252 {strides = array<i32>} : memref<368x128xf32, #tpu.memory_space<vmem>>, vector<1x128xf32>,
    %c211 = arith.constant 211 : index
    %c0_219 = arith.constant 0 : index
    %254 = vector.load %arg17[%c211, %c0_219] : memref<324x128xf32, #tpu.memory_space<vmem>>, vector<1x128xf32>
    %c212 = arith.constant 212 : index
    %c0_220 = arith.constant 0 : index
    %255 = vector.load %arg17[%c212, %c0_220] : memref<324x128xf32, #tpu.memory_space<vmem>>, vector<1x128xf32>
    %256 = arith.maximumf %254, %255 : vector<1x128xf32>
    %c86 = arith.constant 86 : index
    %c0_221 = arith.constant 0 : index
    %257 = vector.load %arg15[%c86, %c0_221] : memref<368x128xf32, #tpu.memory_space<vmem>>, vector<1x128xf32>
    tpu.vector_store %arg15[%c86, %c0_221], %256 {strides = array<i32>} : memref<368x128xf32, #tpu.memory_space<vmem>>, vector<1x128xf32>,
    %c213 = arith.constant 213 : index
    %c0_222 = arith.constant 0 : index
    %258 = vector.load %arg17[%c213, %c0_222] : memref<324x128xf32, #tpu.memory_space<vmem>>, vector<1x128xf32>
    %c214 = arith.constant 214 : index
    %c0_223 = arith.constant 0 : index
    %259 = vector.load %arg17[%c214, %c0_223] : memref<324x128xf32, #tpu.memory_space<vmem>>, vector<1x128xf32>
    %260 = arith.maximumf %258, %259 : vector<1x128xf32>
    %c87 = arith.constant 87 : index
    %c0_224 = arith.constant 0 : index
    %261 = vector.load %arg15[%c87, %c0_224] : memref<368x128xf32, #tpu.memory_space<vmem>>, vector<1x128xf32>
    tpu.vector_store %arg15[%c87, %c0_224], %260 {strides = array<i32>} : memref<368x128xf32, #tpu.memory_space<vmem>>, vector<1x128xf32>,
    %c235 = arith.constant 235 : index
    %c0_225 = arith.constant 0 : index
    %262 = vector.load %arg17[%c235, %c0_225] : memref<324x128xf32, #tpu.memory_space<vmem>>, vector<1x128xf32>
    %c236 = arith.constant 236 : index
    %c0_226 = arith.constant 0 : index
    %263 = vector.load %arg17[%c236, %c0_226] : memref<324x128xf32, #tpu.memory_space<vmem>>, vector<1x128xf32>
    %264 = arith.maximumf %262, %263 : vector<1x128xf32>
    %c90 = arith.constant 90 : index
    %c0_227 = arith.constant 0 : index
    %265 = vector.load %arg15[%c90, %c0_227] : memref<368x128xf32, #tpu.memory_space<vmem>>, vector<1x128xf32>
    tpu.vector_store %arg15[%c90, %c0_227], %264 {strides = array<i32>} : memref<368x128xf32, #tpu.memory_space<vmem>>, vector<1x128xf32>,
    %c237 = arith.constant 237 : index
    %c0_228 = arith.constant 0 : index
    %266 = vector.load %arg17[%c237, %c0_228] : memref<324x128xf32, #tpu.memory_space<vmem>>, vector<1x128xf32>
    %c238 = arith.constant 238 : index
    %c0_229 = arith.constant 0 : index
    %267 = vector.load %arg17[%c238, %c0_229] : memref<324x128xf32, #tpu.memory_space<vmem>>, vector<1x128xf32>
    %268 = arith.maximumf %266, %267 : vector<1x128xf32>
    %c91_230 = arith.constant 91 : index
    %c0_231 = arith.constant 0 : index
    %269 = vector.load %arg15[%c91_230, %c0_231] : memref<368x128xf32, #tpu.memory_space<vmem>>, vector<1x128xf32>
    tpu.vector_store %arg15[%c91_230, %c0_231], %268 {strides = array<i32>} : memref<368x128xf32, #tpu.memory_space<vmem>>, vector<1x128xf32>,
    %c239 = arith.constant 239 : index
    %c0_232 = arith.constant 0 : index
    %270 = vector.load %arg17[%c239, %c0_232] : memref<324x128xf32, #tpu.memory_space<vmem>>, vector<1x128xf32>
    %c240 = arith.constant 240 : index
    %c0_233 = arith.constant 0 : index
    %271 = vector.load %arg17[%c240, %c0_233] : memref<324x128xf32, #tpu.memory_space<vmem>>, vector<1x128xf32>
    %272 = arith.maximumf %270, %271 : vector<1x128xf32>
    %c92_234 = arith.constant 92 : index
    %c0_235 = arith.constant 0 : index
    %273 = vector.load %arg15[%c92_234, %c0_235] : memref<368x128xf32, #tpu.memory_space<vmem>>, vector<1x128xf32>
    tpu.vector_store %arg15[%c92_234, %c0_235], %272 {strides = array<i32>} : memref<368x128xf32, #tpu.memory_space<vmem>>, vector<1x128xf32>,
    %c241 = arith.constant 241 : index
    %c0_236 = arith.constant 0 : index
    %274 = vector.load %arg17[%c241, %c0_236] : memref<324x128xf32, #tpu.memory_space<vmem>>, vector<1x128xf32>
    %c242 = arith.constant 242 : index
    %c0_237 = arith.constant 0 : index
    %275 = vector.load %arg17[%c242, %c0_237] : memref<324x128xf32, #tpu.memory_space<vmem>>, vector<1x128xf32>
    %276 = arith.maximumf %274, %275 : vector<1x128xf32>
    %c93_238 = arith.constant 93 : index
    %c0_239 = arith.constant 0 : index
    %277 = vector.load %arg15[%c93_238, %c0_239] : memref<368x128xf32, #tpu.memory_space<vmem>>, vector<1x128xf32>
    tpu.vector_store %arg15[%c93_238, %c0_239], %276 {strides = array<i32>} : memref<368x128xf32, #tpu.memory_space<vmem>>, vector<1x128xf32>,
    %c243 = arith.constant 243 : index
    %c0_240 = arith.constant 0 : index
    %278 = vector.load %arg17[%c243, %c0_240] : memref<324x128xf32, #tpu.memory_space<vmem>>, vector<1x128xf32>
    %c244 = arith.constant 244 : index
    %c0_241 = arith.constant 0 : index
    %279 = vector.load %arg17[%c244, %c0_241] : memref<324x128xf32, #tpu.memory_space<vmem>>, vector<1x128xf32>
    %280 = arith.maximumf %278, %279 : vector<1x128xf32>
    %c94_242 = arith.constant 94 : index
    %c0_243 = arith.constant 0 : index
    %281 = vector.load %arg15[%c94_242, %c0_243] : memref<368x128xf32, #tpu.memory_space<vmem>>, vector<1x128xf32>
    tpu.vector_store %arg15[%c94_242, %c0_243], %280 {strides = array<i32>} : memref<368x128xf32, #tpu.memory_space<vmem>>, vector<1x128xf32>,
    %c245 = arith.constant 245 : index
    %c0_244 = arith.constant 0 : index
    %282 = vector.load %arg17[%c245, %c0_244] : memref<324x128xf32, #tpu.memory_space<vmem>>, vector<1x128xf32>
    %c246 = arith.constant 246 : index
    %c0_245 = arith.constant 0 : index
    %283 = vector.load %arg17[%c246, %c0_245] : memref<324x128xf32, #tpu.memory_space<vmem>>, vector<1x128xf32>
    %284 = arith.maximumf %282, %283 : vector<1x128xf32>
    %c95_246 = arith.constant 95 : index
    %c0_247 = arith.constant 0 : index
    %285 = vector.load %arg15[%c95_246, %c0_247] : memref<368x128xf32, #tpu.memory_space<vmem>>, vector<1x128xf32>
    tpu.vector_store %arg15[%c95_246, %c0_247], %284 {strides = array<i32>} : memref<368x128xf32, #tpu.memory_space<vmem>>, vector<1x128xf32>,
    %c247 = arith.constant 247 : index
    %c0_248 = arith.constant 0 : index
    %286 = vector.load %arg17[%c247, %c0_248] : memref<324x128xf32, #tpu.memory_space<vmem>>, vector<1x128xf32>
    %c248 = arith.constant 248 : index
    %c0_249 = arith.constant 0 : index
    %287 = vector.load %arg17[%c248, %c0_249] : memref<324x128xf32, #tpu.memory_space<vmem>>, vector<1x128xf32>
    %288 = arith.maximumf %286, %287 : vector<1x128xf32>
    %c96_250 = arith.constant 96 : index
    %c0_251 = arith.constant 0 : index
    %289 = vector.load %arg15[%c96_250, %c0_251] : memref<368x128xf32, #tpu.memory_space<vmem>>, vector<1x128xf32>
    tpu.vector_store %arg15[%c96_250, %c0_251], %288 {strides = array<i32>} : memref<368x128xf32, #tpu.memory_space<vmem>>, vector<1x128xf32>,
    %c249 = arith.constant 249 : index
    %c0_252 = arith.constant 0 : index
    %290 = vector.load %arg17[%c249, %c0_252] : memref<324x128xf32, #tpu.memory_space<vmem>>, vector<1x128xf32>
    %c250 = arith.constant 250 : index
    %c0_253 = arith.constant 0 : index
    %291 = vector.load %arg17[%c250, %c0_253] : memref<324x128xf32, #tpu.memory_space<vmem>>, vector<1x128xf32>
    %292 = arith.maximumf %290, %291 : vector<1x128xf32>
    %c97_254 = arith.constant 97 : index
    %c0_255 = arith.constant 0 : index
    %293 = vector.load %arg15[%c97_254, %c0_255] : memref<368x128xf32, #tpu.memory_space<vmem>>, vector<1x128xf32>
    tpu.vector_store %arg15[%c97_254, %c0_255], %292 {strides = array<i32>} : memref<368x128xf32, #tpu.memory_space<vmem>>, vector<1x128xf32>,
    %c271 = arith.constant 271 : index
    %c0_256 = arith.constant 0 : index
    %294 = vector.load %arg17[%c271, %c0_256] : memref<324x128xf32, #tpu.memory_space<vmem>>, vector<1x128xf32>
    %c272 = arith.constant 272 : index
    %c0_257 = arith.constant 0 : index
    %295 = vector.load %arg17[%c272, %c0_257] : memref<324x128xf32, #tpu.memory_space<vmem>>, vector<1x128xf32>
    %296 = arith.maximumf %294, %295 : vector<1x128xf32>
    %c100_258 = arith.constant 100 : index
    %c0_259 = arith.constant 0 : index
    %297 = vector.load %arg15[%c100_258, %c0_259] : memref<368x128xf32, #tpu.memory_space<vmem>>, vector<1x128xf32>
    tpu.vector_store %arg15[%c100_258, %c0_259], %296 {strides = array<i32>} : memref<368x128xf32, #tpu.memory_space<vmem>>, vector<1x128xf32>,
    %c273 = arith.constant 273 : index
    %c0_260 = arith.constant 0 : index
    %298 = vector.load %arg17[%c273, %c0_260] : memref<324x128xf32, #tpu.memory_space<vmem>>, vector<1x128xf32>
    %c274 = arith.constant 274 : index
    %c0_261 = arith.constant 0 : index
    %299 = vector.load %arg17[%c274, %c0_261] : memref<324x128xf32, #tpu.memory_space<vmem>>, vector<1x128xf32>
    %300 = arith.maximumf %298, %299 : vector<1x128xf32>
    %c101_262 = arith.constant 101 : index
    %c0_263 = arith.constant 0 : index
    %301 = vector.load %arg15[%c101_262, %c0_263] : memref<368x128xf32, #tpu.memory_space<vmem>>, vector<1x128xf32>
    tpu.vector_store %arg15[%c101_262, %c0_263], %300 {strides = array<i32>} : memref<368x128xf32, #tpu.memory_space<vmem>>, vector<1x128xf32>,
    %c275 = arith.constant 275 : index
    %c0_264 = arith.constant 0 : index
    %302 = vector.load %arg17[%c275, %c0_264] : memref<324x128xf32, #tpu.memory_space<vmem>>, vector<1x128xf32>
    %c276 = arith.constant 276 : index
    %c0_265 = arith.constant 0 : index
    %303 = vector.load %arg17[%c276, %c0_265] : memref<324x128xf32, #tpu.memory_space<vmem>>, vector<1x128xf32>
    %304 = arith.maximumf %302, %303 : vector<1x128xf32>
    %c102_266 = arith.constant 102 : index
    %c0_267 = arith.constant 0 : index
    %305 = vector.load %arg15[%c102_266, %c0_267] : memref<368x128xf32, #tpu.memory_space<vmem>>, vector<1x128xf32>
    tpu.vector_store %arg15[%c102_266, %c0_267], %304 {strides = array<i32>} : memref<368x128xf32, #tpu.memory_space<vmem>>, vector<1x128xf32>,
    %c277 = arith.constant 277 : index
    %c0_268 = arith.constant 0 : index
    %306 = vector.load %arg17[%c277, %c0_268] : memref<324x128xf32, #tpu.memory_space<vmem>>, vector<1x128xf32>
    %c278 = arith.constant 278 : index
    %c0_269 = arith.constant 0 : index
    %307 = vector.load %arg17[%c278, %c0_269] : memref<324x128xf32, #tpu.memory_space<vmem>>, vector<1x128xf32>
    %308 = arith.maximumf %306, %307 : vector<1x128xf32>
    %c103_270 = arith.constant 103 : index
    %c0_271 = arith.constant 0 : index
    %309 = vector.load %arg15[%c103_270, %c0_271] : memref<368x128xf32, #tpu.memory_space<vmem>>, vector<1x128xf32>
    tpu.vector_store %arg15[%c103_270, %c0_271], %308 {strides = array<i32>} : memref<368x128xf32, #tpu.memory_space<vmem>>, vector<1x128xf32>,
    %c279 = arith.constant 279 : index
    %c0_272 = arith.constant 0 : index
    %310 = vector.load %arg17[%c279, %c0_272] : memref<324x128xf32, #tpu.memory_space<vmem>>, vector<1x128xf32>
    %c280 = arith.constant 280 : index
    %c0_273 = arith.constant 0 : index
    %311 = vector.load %arg17[%c280, %c0_273] : memref<324x128xf32, #tpu.memory_space<vmem>>, vector<1x128xf32>
    %312 = arith.maximumf %310, %311 : vector<1x128xf32>
    %c104_274 = arith.constant 104 : index
    %c0_275 = arith.constant 0 : index
    %313 = vector.load %arg15[%c104_274, %c0_275] : memref<368x128xf32, #tpu.memory_space<vmem>>, vector<1x128xf32>
    tpu.vector_store %arg15[%c104_274, %c0_275], %312 {strides = array<i32>} : memref<368x128xf32, #tpu.memory_space<vmem>>, vector<1x128xf32>,
    %c281 = arith.constant 281 : index
    %c0_276 = arith.constant 0 : index
    %314 = vector.load %arg17[%c281, %c0_276] : memref<324x128xf32, #tpu.memory_space<vmem>>, vector<1x128xf32>
    %c282 = arith.constant 282 : index
    %c0_277 = arith.constant 0 : index
    %315 = vector.load %arg17[%c282, %c0_277] : memref<324x128xf32, #tpu.memory_space<vmem>>, vector<1x128xf32>
    %316 = arith.maximumf %314, %315 : vector<1x128xf32>
    %c105_278 = arith.constant 105 : index
    %c0_279 = arith.constant 0 : index
    %317 = vector.load %arg15[%c105_278, %c0_279] : memref<368x128xf32, #tpu.memory_space<vmem>>, vector<1x128xf32>
    tpu.vector_store %arg15[%c105_278, %c0_279], %316 {strides = array<i32>} : memref<368x128xf32, #tpu.memory_space<vmem>>, vector<1x128xf32>,
    %c283 = arith.constant 283 : index
    %c0_280 = arith.constant 0 : index
    %318 = vector.load %arg17[%c283, %c0_280] : memref<324x128xf32, #tpu.memory_space<vmem>>, vector<1x128xf32>
    %c284 = arith.constant 284 : index
    %c0_281 = arith.constant 0 : index
    %319 = vector.load %arg17[%c284, %c0_281] : memref<324x128xf32, #tpu.memory_space<vmem>>, vector<1x128xf32>
    %320 = arith.maximumf %318, %319 : vector<1x128xf32>
    %c106_282 = arith.constant 106 : index
    %c0_283 = arith.constant 0 : index
    %321 = vector.load %arg15[%c106_282, %c0_283] : memref<368x128xf32, #tpu.memory_space<vmem>>, vector<1x128xf32>
    tpu.vector_store %arg15[%c106_282, %c0_283], %320 {strides = array<i32>} : memref<368x128xf32, #tpu.memory_space<vmem>>, vector<1x128xf32>,
    %c285 = arith.constant 285 : index
    %c0_284 = arith.constant 0 : index
    %322 = vector.load %arg17[%c285, %c0_284] : memref<324x128xf32, #tpu.memory_space<vmem>>, vector<1x128xf32>
    %c286 = arith.constant 286 : index
    %c0_285 = arith.constant 0 : index
    %323 = vector.load %arg17[%c286, %c0_285] : memref<324x128xf32, #tpu.memory_space<vmem>>, vector<1x128xf32>
    %324 = arith.maximumf %322, %323 : vector<1x128xf32>
    %c107 = arith.constant 107 : index
    %c0_286 = arith.constant 0 : index
    %325 = vector.load %arg15[%c107, %c0_286] : memref<368x128xf32, #tpu.memory_space<vmem>>, vector<1x128xf32>
    tpu.vector_store %arg15[%c107, %c0_286], %324 {strides = array<i32>} : memref<368x128xf32, #tpu.memory_space<vmem>>, vector<1x128xf32>,
    %c8_287 = arith.constant 8 : index
    %c0_288 = arith.constant 0 : index
    %326 = vector.load %arg15[%c8_287, %c0_288] : memref<368x128xf32, #tpu.memory_space<vmem>>, vector<100x128xf32>
    %327 = arith.truncf %326 : vector<100x128xf32> to vector<100x128xbf16>
    %c0_289 = arith.constant 0 : index
    %c0_290 = arith.constant 0 : index
    %c0_291 = arith.constant 0 : index
    %328 = vector.load %arg4[%c0_289, %c0_290, %c0_291] : memref<9x128x128xbf16, #tpu.memory_space<vmem>>, vector<1x128x128xbf16>
    %329 = vector.shape_cast %328 : vector<1x128x128xbf16> to vector<128x128xbf16>
    %cst_292 = arith.constant dense<0.000000e+00> : vector<100x128xf32>
    %330 = tpu.matmul %327, %329, %cst_292 {dimension_numbers = #tpu.dot_dimension_numbers<[1], [0], [0], [1], [0, 0, 1, 1], [], []>} : vector<100x128xbf16>, vector<128x128xbf16>, vector<100x128xf32> -> vector<100x128xf32>
    %c9 = arith.constant 9 : index
    %c0_293 = arith.constant 0 : index
    %331 = vector.load %arg15[%c9, %c0_293] : memref<368x128xf32, #tpu.memory_space<vmem>>, vector<100x128xf32>
    %332 = arith.truncf %331 : vector<100x128xf32> to vector<100x128xbf16>
    %c1_294 = arith.constant 1 : index
    %c0_295 = arith.constant 0 : index
    %c0_296 = arith.constant 0 : index
    %333 = vector.load %arg4[%c1_294, %c0_295, %c0_296] : memref<9x128x128xbf16, #tpu.memory_space<vmem>>, vector<1x128x128xbf16>
    %334 = vector.shape_cast %333 : vector<1x128x128xbf16> to vector<128x128xbf16>
    %cst_297 = arith.constant dense<0.000000e+00> : vector<100x128xf32>
    %335 = tpu.matmul %332, %334, %cst_297 {dimension_numbers = #tpu.dot_dimension_numbers<[1], [0], [0], [1], [0, 0, 1, 1], [], []>} : vector<100x128xbf16>, vector<128x128xbf16>, vector<100x128xf32> -> vector<100x128xf32>
    %336 = arith.addf %330, %335 : vector<100x128xf32>
    %c10 = arith.constant 10 : index
    %c0_298 = arith.constant 0 : index
    %337 = vector.load %arg15[%c10, %c0_298] : memref<368x128xf32, #tpu.memory_space<vmem>>, vector<100x128xf32>
    %338 = arith.truncf %337 : vector<100x128xf32> to vector<100x128xbf16>
    %c2_299 = arith.constant 2 : index
    %c0_300 = arith.constant 0 : index
    %c0_301 = arith.constant 0 : index
    %339 = vector.load %arg4[%c2_299, %c0_300, %c0_301] : memref<9x128x128xbf16, #tpu.memory_space<vmem>>, vector<1x128x128xbf16>
    %340 = vector.shape_cast %339 : vector<1x128x128xbf16> to vector<128x128xbf16>
    %cst_302 = arith.constant dense<0.000000e+00> : vector<100x128xf32>
    %341 = tpu.matmul %338, %340, %cst_302 {dimension_numbers = #tpu.dot_dimension_numbers<[1], [0], [0], [1], [0, 0, 1, 1], [], []>} : vector<100x128xbf16>, vector<128x128xbf16>, vector<100x128xf32> -> vector<100x128xf32>
    %342 = arith.addf %336, %341 : vector<100x128xf32>
    %c18_303 = arith.constant 18 : index
    %c0_304 = arith.constant 0 : index
    %343 = vector.load %arg15[%c18_303, %c0_304] : memref<368x128xf32, #tpu.memory_space<vmem>>, vector<100x128xf32>
    %344 = arith.truncf %343 : vector<100x128xf32> to vector<100x128xbf16>
    %c3_305 = arith.constant 3 : index
    %c0_306 = arith.constant 0 : index
    %c0_307 = arith.constant 0 : index
    %345 = vector.load %arg4[%c3_305, %c0_306, %c0_307] : memref<9x128x128xbf16, #tpu.memory_space<vmem>>, vector<1x128x128xbf16>
    %346 = vector.shape_cast %345 : vector<1x128x128xbf16> to vector<128x128xbf16>
    %cst_308 = arith.constant dense<0.000000e+00> : vector<100x128xf32>
    %347 = tpu.matmul %344, %346, %cst_308 {dimension_numbers = #tpu.dot_dimension_numbers<[1], [0], [0], [1], [0, 0, 1, 1], [], []>} : vector<100x128xbf16>, vector<128x128xbf16>, vector<100x128xf32> -> vector<100x128xf32>
    %348 = arith.addf %342, %347 : vector<100x128xf32>
    %c19_309 = arith.constant 19 : index
    %c0_310 = arith.constant 0 : index
    %349 = vector.load %arg15[%c19_309, %c0_310] : memref<368x128xf32, #tpu.memory_space<vmem>>, vector<100x128xf32>
    %350 = arith.truncf %349 : vector<100x128xf32> to vector<100x128xbf16>
    %c4_311 = arith.constant 4 : index
    %c0_312 = arith.constant 0 : index
    %c0_313 = arith.constant 0 : index
    %351 = vector.load %arg4[%c4_311, %c0_312, %c0_313] : memref<9x128x128xbf16, #tpu.memory_space<vmem>>, vector<1x128x128xbf16>
    %352 = vector.shape_cast %351 : vector<1x128x128xbf16> to vector<128x128xbf16>
    %cst_314 = arith.constant dense<0.000000e+00> : vector<100x128xf32>
    %353 = tpu.matmul %350, %352, %cst_314 {dimension_numbers = #tpu.dot_dimension_numbers<[1], [0], [0], [1], [0, 0, 1, 1], [], []>} : vector<100x128xbf16>, vector<128x128xbf16>, vector<100x128xf32> -> vector<100x128xf32>
    %354 = arith.addf %348, %353 : vector<100x128xf32>
    %c20_315 = arith.constant 20 : index
    %c0_316 = arith.constant 0 : index
    %355 = vector.load %arg15[%c20_315, %c0_316] : memref<368x128xf32, #tpu.memory_space<vmem>>, vector<100x128xf32>
    %356 = arith.truncf %355 : vector<100x128xf32> to vector<100x128xbf16>
    %c5_317 = arith.constant 5 : index
    %c0_318 = arith.constant 0 : index
    %c0_319 = arith.constant 0 : index
    %357 = vector.load %arg4[%c5_317, %c0_318, %c0_319] : memref<9x128x128xbf16, #tpu.memory_space<vmem>>, vector<1x128x128xbf16>
    %358 = vector.shape_cast %357 : vector<1x128x128xbf16> to vector<128x128xbf16>
    %cst_320 = arith.constant dense<0.000000e+00> : vector<100x128xf32>
    %359 = tpu.matmul %356, %358, %cst_320 {dimension_numbers = #tpu.dot_dimension_numbers<[1], [0], [0], [1], [0, 0, 1, 1], [], []>} : vector<100x128xbf16>, vector<128x128xbf16>, vector<100x128xf32> -> vector<100x128xf32>
    %360 = arith.addf %354, %359 : vector<100x128xf32>
    %c28_321 = arith.constant 28 : index
    %c0_322 = arith.constant 0 : index
    %361 = vector.load %arg15[%c28_321, %c0_322] : memref<368x128xf32, #tpu.memory_space<vmem>>, vector<100x128xf32>
    %362 = arith.truncf %361 : vector<100x128xf32> to vector<100x128xbf16>
    %c6_323 = arith.constant 6 : index
    %c0_324 = arith.constant 0 : index
    %c0_325 = arith.constant 0 : index
    %363 = vector.load %arg4[%c6_323, %c0_324, %c0_325] : memref<9x128x128xbf16, #tpu.memory_space<vmem>>, vector<1x128x128xbf16>
    %364 = vector.shape_cast %363 : vector<1x128x128xbf16> to vector<128x128xbf16>
    %cst_326 = arith.constant dense<0.000000e+00> : vector<100x128xf32>
    %365 = tpu.matmul %362, %364, %cst_326 {dimension_numbers = #tpu.dot_dimension_numbers<[1], [0], [0], [1], [0, 0, 1, 1], [], []>} : vector<100x128xbf16>, vector<128x128xbf16>, vector<100x128xf32> -> vector<100x128xf32>
    %366 = arith.addf %360, %365 : vector<100x128xf32>
    %c29_327 = arith.constant 29 : index
    %c0_328 = arith.constant 0 : index
    %367 = vector.load %arg15[%c29_327, %c0_328] : memref<368x128xf32, #tpu.memory_space<vmem>>, vector<100x128xf32>
    %368 = arith.truncf %367 : vector<100x128xf32> to vector<100x128xbf16>
    %c7_329 = arith.constant 7 : index
    %c0_330 = arith.constant 0 : index
    %c0_331 = arith.constant 0 : index
    %369 = vector.load %arg4[%c7_329, %c0_330, %c0_331] : memref<9x128x128xbf16, #tpu.memory_space<vmem>>, vector<1x128x128xbf16>
    %370 = vector.shape_cast %369 : vector<1x128x128xbf16> to vector<128x128xbf16>
    %cst_332 = arith.constant dense<0.000000e+00> : vector<100x128xf32>
    %371 = tpu.matmul %368, %370, %cst_332 {dimension_numbers = #tpu.dot_dimension_numbers<[1], [0], [0], [1], [0, 0, 1, 1], [], []>} : vector<100x128xbf16>, vector<128x128xbf16>, vector<100x128xf32> -> vector<100x128xf32>
    %372 = arith.addf %366, %371 : vector<100x128xf32>
    %c30_333 = arith.constant 30 : index
    %c0_334 = arith.constant 0 : index
    %373 = vector.load %arg15[%c30_333, %c0_334] : memref<368x128xf32, #tpu.memory_space<vmem>>, vector<100x128xf32>
    %374 = arith.truncf %373 : vector<100x128xf32> to vector<100x128xbf16>
    %c8_335 = arith.constant 8 : index
    %c0_336 = arith.constant 0 : index
    %c0_337 = arith.constant 0 : index
    %375 = vector.load %arg4[%c8_335, %c0_336, %c0_337] : memref<9x128x128xbf16, #tpu.memory_space<vmem>>, vector<1x128x128xbf16>
    %376 = vector.shape_cast %375 : vector<1x128x128xbf16> to vector<128x128xbf16>
    %cst_338 = arith.constant dense<0.000000e+00> : vector<100x128xf32>
    %377 = tpu.matmul %374, %376, %cst_338 {dimension_numbers = #tpu.dot_dimension_numbers<[1], [0], [0], [1], [0, 0, 1, 1], [], []>} : vector<100x128xbf16>, vector<128x128xbf16>, vector<100x128xf32> -> vector<100x128xf32>
    %378 = arith.addf %372, %377 : vector<100x128xf32>
    %c0_339 = arith.constant 0 : index
    %c0_340 = arith.constant 0 : index
    %379 = vector.load %arg5[%c0_339, %c0_340] : memref<1x128xf32, #tpu.memory_space<vmem>>, vector<1x128xf32>
    %380 = vector.broadcast %379 : vector<1x128xf32> to vector<100x128xf32>
    %381 = arith.addf %378, %380 : vector<100x128xf32>
    %cst_341 = arith.constant 0.000000e+00 : f32
    %382 = vector.broadcast %cst_341 : f32 to vector<100x128xf32>
    %383 = arith.maximumf %381, %382 : vector<100x128xf32>
    %c0_342 = arith.constant 0 : index
    %c0_343 = arith.constant 0 : index
    %384 = vector.load %arg16[%c0_342, %c0_343] : memref<324x128xf32, #tpu.memory_space<vmem>>, vector<100x128xf32>
    tpu.vector_store %arg16[%c0_342, %c0_343], %383 {strides = array<i32>} : memref<324x128xf32, #tpu.memory_space<vmem>>, vector<100x128xf32>,
    %cst_344 = arith.constant 0.000000e+00 : f32
    %385 = vector.broadcast %cst_344 : f32 to vector<100x128xf32>
    %c19_345 = arith.constant 19 : index
    %c0_346 = arith.constant 0 : index
    %386 = vector.load %arg15[%c19_345, %c0_346] : memref<368x128xf32, #tpu.memory_space<vmem>>, vector<100x128xf32>
    tpu.vector_store %arg15[%c19_345, %c0_346], %385 {strides = array<i32>} : memref<368x128xf32, #tpu.memory_space<vmem>>, vector<100x128xf32>,
    %c11 = arith.constant 11 : index
    %c0_347 = arith.constant 0 : index
    %387 = vector.load %arg16[%c11, %c0_347] : memref<324x128xf32, #tpu.memory_space<vmem>>, vector<8x128xf32>
    %c30_348 = arith.constant 30 : index
    %c0_349 = arith.constant 0 : index
    %388 = vector.load %arg15[%c30_348, %c0_349] : memref<368x128xf32, #tpu.memory_space<vmem>>, vector<8x128xf32>
    tpu.vector_store %arg15[%c30_348, %c0_349], %387 {strides = array<i32>} : memref<368x128xf32, #tpu.memory_space<vmem>>, vector<8x128xf32>,
    %c21_350 = arith.constant 21 : index
    %c0_351 = arith.constant 0 : index
    %389 = vector.load %arg16[%c21_350, %c0_351] : memref<324x128xf32, #tpu.memory_space<vmem>>, vector<8x128xf32>
    %c40_352 = arith.constant 40 : index
    %c0_353 = arith.constant 0 : index
    %390 = vector.load %arg15[%c40_352, %c0_353] : memref<368x128xf32, #tpu.memory_space<vmem>>, vector<8x128xf32>
    tpu.vector_store %arg15[%c40_352, %c0_353], %389 {strides = array<i32>} : memref<368x128xf32, #tpu.memory_space<vmem>>, vector<8x128xf32>,
    %c31_354 = arith.constant 31 : index
    %c0_355 = arith.constant 0 : index
    %391 = vector.load %arg16[%c31_354, %c0_355] : memref<324x128xf32, #tpu.memory_space<vmem>>, vector<8x128xf32>
    %c50_356 = arith.constant 50 : index
    %c0_357 = arith.constant 0 : index
    %392 = vector.load %arg15[%c50_356, %c0_357] : memref<368x128xf32, #tpu.memory_space<vmem>>, vector<8x128xf32>
    tpu.vector_store %arg15[%c50_356, %c0_357], %391 {strides = array<i32>} : memref<368x128xf32, #tpu.memory_space<vmem>>, vector<8x128xf32>,
    %c41_358 = arith.constant 41 : index
    %c0_359 = arith.constant 0 : index
    %393 = vector.load %arg16[%c41_358, %c0_359] : memref<324x128xf32, #tpu.memory_space<vmem>>, vector<8x128xf32>
    %c60_360 = arith.constant 60 : index
    %c0_361 = arith.constant 0 : index
    %394 = vector.load %arg15[%c60_360, %c0_361] : memref<368x128xf32, #tpu.memory_space<vmem>>, vector<8x128xf32>
    tpu.vector_store %arg15[%c60_360, %c0_361], %393 {strides = array<i32>} : memref<368x128xf32, #tpu.memory_space<vmem>>, vector<8x128xf32>,
    %c51_362 = arith.constant 51 : index
    %c0_363 = arith.constant 0 : index
    %395 = vector.load %arg16[%c51_362, %c0_363] : memref<324x128xf32, #tpu.memory_space<vmem>>, vector<8x128xf32>
    %c70_364 = arith.constant 70 : index
    %c0_365 = arith.constant 0 : index
    %396 = vector.load %arg15[%c70_364, %c0_365] : memref<368x128xf32, #tpu.memory_space<vmem>>, vector<8x128xf32>
    tpu.vector_store %arg15[%c70_364, %c0_365], %395 {strides = array<i32>} : memref<368x128xf32, #tpu.memory_space<vmem>>, vector<8x128xf32>,
    %c61_366 = arith.constant 61 : index
    %c0_367 = arith.constant 0 : index
    %397 = vector.load %arg16[%c61_366, %c0_367] : memref<324x128xf32, #tpu.memory_space<vmem>>, vector<8x128xf32>
    %c80_368 = arith.constant 80 : index
    %c0_369 = arith.constant 0 : index
    %398 = vector.load %arg15[%c80_368, %c0_369] : memref<368x128xf32, #tpu.memory_space<vmem>>, vector<8x128xf32>
    tpu.vector_store %arg15[%c80_368, %c0_369], %397 {strides = array<i32>} : memref<368x128xf32, #tpu.memory_space<vmem>>, vector<8x128xf32>,
    %c71_370 = arith.constant 71 : index
    %c0_371 = arith.constant 0 : index
    %399 = vector.load %arg16[%c71_370, %c0_371] : memref<324x128xf32, #tpu.memory_space<vmem>>, vector<8x128xf32>
    %c90_372 = arith.constant 90 : index
    %c0_373 = arith.constant 0 : index
    %400 = vector.load %arg15[%c90_372, %c0_373] : memref<368x128xf32, #tpu.memory_space<vmem>>, vector<8x128xf32>
    tpu.vector_store %arg15[%c90_372, %c0_373], %399 {strides = array<i32>} : memref<368x128xf32, #tpu.memory_space<vmem>>, vector<8x128xf32>,
    %c81_374 = arith.constant 81 : index
    %c0_375 = arith.constant 0 : index
    %401 = vector.load %arg16[%c81_374, %c0_375] : memref<324x128xf32, #tpu.memory_space<vmem>>, vector<8x128xf32>
    %c100_376 = arith.constant 100 : index
    %c0_377 = arith.constant 0 : index
    %402 = vector.load %arg15[%c100_376, %c0_377] : memref<368x128xf32, #tpu.memory_space<vmem>>, vector<8x128xf32>
    tpu.vector_store %arg15[%c100_376, %c0_377], %401 {strides = array<i32>} : memref<368x128xf32, #tpu.memory_space<vmem>>, vector<8x128xf32>,
    %c8_378 = arith.constant 8 : index
    %c0_379 = arith.constant 0 : index
    %403 = vector.load %arg15[%c8_378, %c0_379] : memref<368x128xf32, #tpu.memory_space<vmem>>, vector<100x128xf32>
    %404 = arith.truncf %403 : vector<100x128xf32> to vector<100x128xbf16>
    %c0_380 = arith.constant 0 : index
    %c0_381 = arith.constant 0 : index
    %c0_382 = arith.constant 0 : index
    %405 = vector.load %arg6[%c0_380, %c0_381, %c0_382] : memref<9x128x128xbf16, #tpu.memory_space<vmem>>, vector<1x128x128xbf16>
    %406 = vector.shape_cast %405 : vector<1x128x128xbf16> to vector<128x128xbf16>
    %cst_383 = arith.constant dense<0.000000e+00> : vector<100x128xf32>
    %407 = tpu.matmul %404, %406, %cst_383 {dimension_numbers = #tpu.dot_dimension_numbers<[1], [0], [0], [1], [0, 0, 1, 1], [], []>} : vector<100x128xbf16>, vector<128x128xbf16>, vector<100x128xf32> -> vector<100x128xf32>
    %c9_384 = arith.constant 9 : index
    %c0_385 = arith.constant 0 : index
    %408 = vector.load %arg15[%c9_384, %c0_385] : memref<368x128xf32, #tpu.memory_space<vmem>>, vector<100x128xf32>
    %409 = arith.truncf %408 : vector<100x128xf32> to vector<100x128xbf16>
    %c1_386 = arith.constant 1 : index
    %c0_387 = arith.constant 0 : index
    %c0_388 = arith.constant 0 : index
    %410 = vector.load %arg6[%c1_386, %c0_387, %c0_388] : memref<9x128x128xbf16, #tpu.memory_space<vmem>>, vector<1x128x128xbf16>
    %411 = vector.shape_cast %410 : vector<1x128x128xbf16> to vector<128x128xbf16>
    %cst_389 = arith.constant dense<0.000000e+00> : vector<100x128xf32>
    %412 = tpu.matmul %409, %411, %cst_389 {dimension_numbers = #tpu.dot_dimension_numbers<[1], [0], [0], [1], [0, 0, 1, 1], [], []>} : vector<100x128xbf16>, vector<128x128xbf16>, vector<100x128xf32> -> vector<100x128xf32>
    %413 = arith.addf %407, %412 : vector<100x128xf32>
    %c10_390 = arith.constant 10 : index
    %c0_391 = arith.constant 0 : index
    %414 = vector.load %arg15[%c10_390, %c0_391] : memref<368x128xf32, #tpu.memory_space<vmem>>, vector<100x128xf32>
    %415 = arith.truncf %414 : vector<100x128xf32> to vector<100x128xbf16>
    %c2_392 = arith.constant 2 : index
    %c0_393 = arith.constant 0 : index
    %c0_394 = arith.constant 0 : index
    %416 = vector.load %arg6[%c2_392, %c0_393, %c0_394] : memref<9x128x128xbf16, #tpu.memory_space<vmem>>, vector<1x128x128xbf16>
    %417 = vector.shape_cast %416 : vector<1x128x128xbf16> to vector<128x128xbf16>
    %cst_395 = arith.constant dense<0.000000e+00> : vector<100x128xf32>
    %418 = tpu.matmul %415, %417, %cst_395 {dimension_numbers = #tpu.dot_dimension_numbers<[1], [0], [0], [1], [0, 0, 1, 1], [], []>} : vector<100x128xbf16>, vector<128x128xbf16>, vector<100x128xf32> -> vector<100x128xf32>
    %419 = arith.addf %413, %418 : vector<100x128xf32>
    %c18_396 = arith.constant 18 : index
    %c0_397 = arith.constant 0 : index
    %420 = vector.load %arg15[%c18_396, %c0_397] : memref<368x128xf32, #tpu.memory_space<vmem>>, vector<100x128xf32>
    %421 = arith.truncf %420 : vector<100x128xf32> to vector<100x128xbf16>
    %c3_398 = arith.constant 3 : index
    %c0_399 = arith.constant 0 : index
    %c0_400 = arith.constant 0 : index
    %422 = vector.load %arg6[%c3_398, %c0_399, %c0_400] : memref<9x128x128xbf16, #tpu.memory_space<vmem>>, vector<1x128x128xbf16>
    %423 = vector.shape_cast %422 : vector<1x128x128xbf16> to vector<128x128xbf16>
    %cst_401 = arith.constant dense<0.000000e+00> : vector<100x128xf32>
    %424 = tpu.matmul %421, %423, %cst_401 {dimension_numbers = #tpu.dot_dimension_numbers<[1], [0], [0], [1], [0, 0, 1, 1], [], []>} : vector<100x128xbf16>, vector<128x128xbf16>, vector<100x128xf32> -> vector<100x128xf32>
    %425 = arith.addf %419, %424 : vector<100x128xf32>
    %c19_402 = arith.constant 19 : index
    %c0_403 = arith.constant 0 : index
    %426 = vector.load %arg15[%c19_402, %c0_403] : memref<368x128xf32, #tpu.memory_space<vmem>>, vector<100x128xf32>
    %427 = arith.truncf %426 : vector<100x128xf32> to vector<100x128xbf16>
    %c4_404 = arith.constant 4 : index
    %c0_405 = arith.constant 0 : index
    %c0_406 = arith.constant 0 : index
    %428 = vector.load %arg6[%c4_404, %c0_405, %c0_406] : memref<9x128x128xbf16, #tpu.memory_space<vmem>>, vector<1x128x128xbf16>
    %429 = vector.shape_cast %428 : vector<1x128x128xbf16> to vector<128x128xbf16>
    %cst_407 = arith.constant dense<0.000000e+00> : vector<100x128xf32>
    %430 = tpu.matmul %427, %429, %cst_407 {dimension_numbers = #tpu.dot_dimension_numbers<[1], [0], [0], [1], [0, 0, 1, 1], [], []>} : vector<100x128xbf16>, vector<128x128xbf16>, vector<100x128xf32> -> vector<100x128xf32>
    %431 = arith.addf %425, %430 : vector<100x128xf32>
    %c20_408 = arith.constant 20 : index
    %c0_409 = arith.constant 0 : index
    %432 = vector.load %arg15[%c20_408, %c0_409] : memref<368x128xf32, #tpu.memory_space<vmem>>, vector<100x128xf32>
    %433 = arith.truncf %432 : vector<100x128xf32> to vector<100x128xbf16>
    %c5_410 = arith.constant 5 : index
    %c0_411 = arith.constant 0 : index
    %c0_412 = arith.constant 0 : index
    %434 = vector.load %arg6[%c5_410, %c0_411, %c0_412] : memref<9x128x128xbf16, #tpu.memory_space<vmem>>, vector<1x128x128xbf16>
    %435 = vector.shape_cast %434 : vector<1x128x128xbf16> to vector<128x128xbf16>
    %cst_413 = arith.constant dense<0.000000e+00> : vector<100x128xf32>
    %436 = tpu.matmul %433, %435, %cst_413 {dimension_numbers = #tpu.dot_dimension_numbers<[1], [0], [0], [1], [0, 0, 1, 1], [], []>} : vector<100x128xbf16>, vector<128x128xbf16>, vector<100x128xf32> -> vector<100x128xf32>
    %437 = arith.addf %431, %436 : vector<100x128xf32>
    %c28_414 = arith.constant 28 : index
    %c0_415 = arith.constant 0 : index
    %438 = vector.load %arg15[%c28_414, %c0_415] : memref<368x128xf32, #tpu.memory_space<vmem>>, vector<100x128xf32>
    %439 = arith.truncf %438 : vector<100x128xf32> to vector<100x128xbf16>
    %c6_416 = arith.constant 6 : index
    %c0_417 = arith.constant 0 : index
    %c0_418 = arith.constant 0 : index
    %440 = vector.load %arg6[%c6_416, %c0_417, %c0_418] : memref<9x128x128xbf16, #tpu.memory_space<vmem>>, vector<1x128x128xbf16>
    %441 = vector.shape_cast %440 : vector<1x128x128xbf16> to vector<128x128xbf16>
    %cst_419 = arith.constant dense<0.000000e+00> : vector<100x128xf32>
    %442 = tpu.matmul %439, %441, %cst_419 {dimension_numbers = #tpu.dot_dimension_numbers<[1], [0], [0], [1], [0, 0, 1, 1], [], []>} : vector<100x128xbf16>, vector<128x128xbf16>, vector<100x128xf32> -> vector<100x128xf32>
    %443 = arith.addf %437, %442 : vector<100x128xf32>
    %c29_420 = arith.constant 29 : index
    %c0_421 = arith.constant 0 : index
    %444 = vector.load %arg15[%c29_420, %c0_421] : memref<368x128xf32, #tpu.memory_space<vmem>>, vector<100x128xf32>
    %445 = arith.truncf %444 : vector<100x128xf32> to vector<100x128xbf16>
    %c7_422 = arith.constant 7 : index
    %c0_423 = arith.constant 0 : index
    %c0_424 = arith.constant 0 : index
    %446 = vector.load %arg6[%c7_422, %c0_423, %c0_424] : memref<9x128x128xbf16, #tpu.memory_space<vmem>>, vector<1x128x128xbf16>
    %447 = vector.shape_cast %446 : vector<1x128x128xbf16> to vector<128x128xbf16>
    %cst_425 = arith.constant dense<0.000000e+00> : vector<100x128xf32>
    %448 = tpu.matmul %445, %447, %cst_425 {dimension_numbers = #tpu.dot_dimension_numbers<[1], [0], [0], [1], [0, 0, 1, 1], [], []>} : vector<100x128xbf16>, vector<128x128xbf16>, vector<100x128xf32> -> vector<100x128xf32>
    %449 = arith.addf %443, %448 : vector<100x128xf32>
    %c30_426 = arith.constant 30 : index
    %c0_427 = arith.constant 0 : index
    %450 = vector.load %arg15[%c30_426, %c0_427] : memref<368x128xf32, #tpu.memory_space<vmem>>, vector<100x128xf32>
    %451 = arith.truncf %450 : vector<100x128xf32> to vector<100x128xbf16>
    %c8_428 = arith.constant 8 : index
    %c0_429 = arith.constant 0 : index
    %c0_430 = arith.constant 0 : index
    %452 = vector.load %arg6[%c8_428, %c0_429, %c0_430] : memref<9x128x128xbf16, #tpu.memory_space<vmem>>, vector<1x128x128xbf16>
    %453 = vector.shape_cast %452 : vector<1x128x128xbf16> to vector<128x128xbf16>
    %cst_431 = arith.constant dense<0.000000e+00> : vector<100x128xf32>
    %454 = tpu.matmul %451, %453, %cst_431 {dimension_numbers = #tpu.dot_dimension_numbers<[1], [0], [0], [1], [0, 0, 1, 1], [], []>} : vector<100x128xbf16>, vector<128x128xbf16>, vector<100x128xf32> -> vector<100x128xf32>
    %455 = arith.addf %449, %454 : vector<100x128xf32>
    %c0_432 = arith.constant 0 : index
    %c0_433 = arith.constant 0 : index
    %456 = vector.load %arg7[%c0_432, %c0_433] : memref<1x128xf32, #tpu.memory_space<vmem>>, vector<1x128xf32>
    %457 = vector.broadcast %456 : vector<1x128xf32> to vector<100x128xf32>
    %458 = arith.addf %455, %457 : vector<100x128xf32>
    %cst_434 = arith.constant 0.000000e+00 : f32
    %459 = vector.broadcast %cst_434 : f32 to vector<100x128xf32>
    %460 = arith.maximumf %458, %459 : vector<100x128xf32>
    %c0_435 = arith.constant 0 : index
    %c0_436 = arith.constant 0 : index
    %461 = vector.load %arg16[%c0_435, %c0_436] : memref<324x128xf32, #tpu.memory_space<vmem>>, vector<100x128xf32>
    tpu.vector_store %arg16[%c0_435, %c0_436], %460 {strides = array<i32>} : memref<324x128xf32, #tpu.memory_space<vmem>>, vector<100x128xf32>,
    %cst_437 = arith.constant 0.000000e+00 : f32
    %462 = vector.broadcast %cst_437 : f32 to vector<36x128xf32>
    %c19_438 = arith.constant 19 : index
    %c0_439 = arith.constant 0 : index
    %463 = vector.load %arg15[%c19_438, %c0_439] : memref<368x128xf32, #tpu.memory_space<vmem>>, vector<36x128xf32>
    tpu.vector_store %arg15[%c19_438, %c0_439], %462 {strides = array<i32>} : memref<368x128xf32, #tpu.memory_space<vmem>>, vector<36x128xf32>,
    %c0_440 = arith.constant 0 : index
    %c0_441 = arith.constant 0 : index
    %464 = vector.load %arg16[%c0_440, %c0_441] : memref<324x128xf32, #tpu.memory_space<vmem>>, vector<90x128xf32>
    %c10_442 = arith.constant 10 : index
    %c0_443 = arith.constant 0 : index
    %465 = vector.load %arg16[%c10_442, %c0_443] : memref<324x128xf32, #tpu.memory_space<vmem>>, vector<90x128xf32>
    %466 = arith.maximumf %464, %465 : vector<90x128xf32>
    %c0_444 = arith.constant 0 : index
    %c0_445 = arith.constant 0 : index
    %467 = vector.load %arg17[%c0_444, %c0_445] : memref<324x128xf32, #tpu.memory_space<vmem>>, vector<90x128xf32>
    tpu.vector_store %arg17[%c0_444, %c0_445], %466 {strides = array<i32>} : memref<324x128xf32, #tpu.memory_space<vmem>>, vector<90x128xf32>,
    %c11_446 = arith.constant 11 : index
    %c0_447 = arith.constant 0 : index
    %468 = vector.load %arg17[%c11_446, %c0_447] : memref<324x128xf32, #tpu.memory_space<vmem>>, vector<1x128xf32>
    %c12 = arith.constant 12 : index
    %c0_448 = arith.constant 0 : index
    %469 = vector.load %arg17[%c12, %c0_448] : memref<324x128xf32, #tpu.memory_space<vmem>>, vector<1x128xf32>
    %470 = arith.maximumf %468, %469 : vector<1x128xf32>
    %c26_449 = arith.constant 26 : index
    %c0_450 = arith.constant 0 : index
    %471 = vector.load %arg15[%c26_449, %c0_450] : memref<368x128xf32, #tpu.memory_space<vmem>>, vector<1x128xf32>
    tpu.vector_store %arg15[%c26_449, %c0_450], %470 {strides = array<i32>} : memref<368x128xf32, #tpu.memory_space<vmem>>, vector<1x128xf32>,
    %c13 = arith.constant 13 : index
    %c0_451 = arith.constant 0 : index
    %472 = vector.load %arg17[%c13, %c0_451] : memref<324x128xf32, #tpu.memory_space<vmem>>, vector<1x128xf32>
    %c14 = arith.constant 14 : index
    %c0_452 = arith.constant 0 : index
    %473 = vector.load %arg17[%c14, %c0_452] : memref<324x128xf32, #tpu.memory_space<vmem>>, vector<1x128xf32>
    %474 = arith.maximumf %472, %473 : vector<1x128xf32>
    %c27_453 = arith.constant 27 : index
    %c0_454 = arith.constant 0 : index
    %475 = vector.load %arg15[%c27_453, %c0_454] : memref<368x128xf32, #tpu.memory_space<vmem>>, vector<1x128xf32>
    tpu.vector_store %arg15[%c27_453, %c0_454], %474 {strides = array<i32>} : memref<368x128xf32, #tpu.memory_space<vmem>>, vector<1x128xf32>,
    %c15 = arith.constant 15 : index
    %c0_455 = arith.constant 0 : index
    %476 = vector.load %arg17[%c15, %c0_455] : memref<324x128xf32, #tpu.memory_space<vmem>>, vector<1x128xf32>
    %c16 = arith.constant 16 : index
    %c0_456 = arith.constant 0 : index
    %477 = vector.load %arg17[%c16, %c0_456] : memref<324x128xf32, #tpu.memory_space<vmem>>, vector<1x128xf32>
    %478 = arith.maximumf %476, %477 : vector<1x128xf32>
    %c28_457 = arith.constant 28 : index
    %c0_458 = arith.constant 0 : index
    %479 = vector.load %arg15[%c28_457, %c0_458] : memref<368x128xf32, #tpu.memory_space<vmem>>, vector<1x128xf32>
    tpu.vector_store %arg15[%c28_457, %c0_458], %478 {strides = array<i32>} : memref<368x128xf32, #tpu.memory_space<vmem>>, vector<1x128xf32>,
    %c17 = arith.constant 17 : index
    %c0_459 = arith.constant 0 : index
    %480 = vector.load %arg17[%c17, %c0_459] : memref<324x128xf32, #tpu.memory_space<vmem>>, vector<1x128xf32>
    %c18_460 = arith.constant 18 : index
    %c0_461 = arith.constant 0 : index
    %481 = vector.load %arg17[%c18_460, %c0_461] : memref<324x128xf32, #tpu.memory_space<vmem>>, vector<1x128xf32>
    %482 = arith.maximumf %480, %481 : vector<1x128xf32>
    %c29_462 = arith.constant 29 : index
    %c0_463 = arith.constant 0 : index
    %483 = vector.load %arg15[%c29_462, %c0_463] : memref<368x128xf32, #tpu.memory_space<vmem>>, vector<1x128xf32>
    tpu.vector_store %arg15[%c29_462, %c0_463], %482 {strides = array<i32>} : memref<368x128xf32, #tpu.memory_space<vmem>>, vector<1x128xf32>,
    %c31_464 = arith.constant 31 : index
    %c0_465 = arith.constant 0 : index
    %484 = vector.load %arg17[%c31_464, %c0_465] : memref<324x128xf32, #tpu.memory_space<vmem>>, vector<1x128xf32>
    %c32_466 = arith.constant 32 : index
    %c0_467 = arith.constant 0 : index
    %485 = vector.load %arg17[%c32_466, %c0_467] : memref<324x128xf32, #tpu.memory_space<vmem>>, vector<1x128xf32>
    %486 = arith.maximumf %484, %485 : vector<1x128xf32>
    %c32_468 = arith.constant 32 : index
    %c0_469 = arith.constant 0 : index
    %487 = vector.load %arg15[%c32_468, %c0_469] : memref<368x128xf32, #tpu.memory_space<vmem>>, vector<1x128xf32>
    tpu.vector_store %arg15[%c32_468, %c0_469], %486 {strides = array<i32>} : memref<368x128xf32, #tpu.memory_space<vmem>>, vector<1x128xf32>,
    %c33_470 = arith.constant 33 : index
    %c0_471 = arith.constant 0 : index
    %488 = vector.load %arg17[%c33_470, %c0_471] : memref<324x128xf32, #tpu.memory_space<vmem>>, vector<1x128xf32>
    %c34_472 = arith.constant 34 : index
    %c0_473 = arith.constant 0 : index
    %489 = vector.load %arg17[%c34_472, %c0_473] : memref<324x128xf32, #tpu.memory_space<vmem>>, vector<1x128xf32>
    %490 = arith.maximumf %488, %489 : vector<1x128xf32>
    %c33_474 = arith.constant 33 : index
    %c0_475 = arith.constant 0 : index
    %491 = vector.load %arg15[%c33_474, %c0_475] : memref<368x128xf32, #tpu.memory_space<vmem>>, vector<1x128xf32>
    tpu.vector_store %arg15[%c33_474, %c0_475], %490 {strides = array<i32>} : memref<368x128xf32, #tpu.memory_space<vmem>>, vector<1x128xf32>,
    %c35_476 = arith.constant 35 : index
    %c0_477 = arith.constant 0 : index
    %492 = vector.load %arg17[%c35_476, %c0_477] : memref<324x128xf32, #tpu.memory_space<vmem>>, vector<1x128xf32>
    %c36_478 = arith.constant 36 : index
    %c0_479 = arith.constant 0 : index
    %493 = vector.load %arg17[%c36_478, %c0_479] : memref<324x128xf32, #tpu.memory_space<vmem>>, vector<1x128xf32>
    %494 = arith.maximumf %492, %493 : vector<1x128xf32>
    %c34_480 = arith.constant 34 : index
    %c0_481 = arith.constant 0 : index
    %495 = vector.load %arg15[%c34_480, %c0_481] : memref<368x128xf32, #tpu.memory_space<vmem>>, vector<1x128xf32>
    tpu.vector_store %arg15[%c34_480, %c0_481], %494 {strides = array<i32>} : memref<368x128xf32, #tpu.memory_space<vmem>>, vector<1x128xf32>,
    %c37_482 = arith.constant 37 : index
    %c0_483 = arith.constant 0 : index
    %496 = vector.load %arg17[%c37_482, %c0_483] : memref<324x128xf32, #tpu.memory_space<vmem>>, vector<1x128xf32>
    %c38_484 = arith.constant 38 : index
    %c0_485 = arith.constant 0 : index
    %497 = vector.load %arg17[%c38_484, %c0_485] : memref<324x128xf32, #tpu.memory_space<vmem>>, vector<1x128xf32>
    %498 = arith.maximumf %496, %497 : vector<1x128xf32>
    %c35_486 = arith.constant 35 : index
    %c0_487 = arith.constant 0 : index
    %499 = vector.load %arg15[%c35_486, %c0_487] : memref<368x128xf32, #tpu.memory_space<vmem>>, vector<1x128xf32>
    tpu.vector_store %arg15[%c35_486, %c0_487], %498 {strides = array<i32>} : memref<368x128xf32, #tpu.memory_space<vmem>>, vector<1x128xf32>,
    %c51_488 = arith.constant 51 : index
    %c0_489 = arith.constant 0 : index
    %500 = vector.load %arg17[%c51_488, %c0_489] : memref<324x128xf32, #tpu.memory_space<vmem>>, vector<1x128xf32>
    %c52_490 = arith.constant 52 : index
    %c0_491 = arith.constant 0 : index
    %501 = vector.load %arg17[%c52_490, %c0_491] : memref<324x128xf32, #tpu.memory_space<vmem>>, vector<1x128xf32>
    %502 = arith.maximumf %500, %501 : vector<1x128xf32>
    %c38_492 = arith.constant 38 : index
    %c0_493 = arith.constant 0 : index
    %503 = vector.load %arg15[%c38_492, %c0_493] : memref<368x128xf32, #tpu.memory_space<vmem>>, vector<1x128xf32>
    tpu.vector_store %arg15[%c38_492, %c0_493], %502 {strides = array<i32>} : memref<368x128xf32, #tpu.memory_space<vmem>>, vector<1x128xf32>,
    %c53_494 = arith.constant 53 : index
    %c0_495 = arith.constant 0 : index
    %504 = vector.load %arg17[%c53_494, %c0_495] : memref<324x128xf32, #tpu.memory_space<vmem>>, vector<1x128xf32>
    %c54_496 = arith.constant 54 : index
    %c0_497 = arith.constant 0 : index
    %505 = vector.load %arg17[%c54_496, %c0_497] : memref<324x128xf32, #tpu.memory_space<vmem>>, vector<1x128xf32>
    %506 = arith.maximumf %504, %505 : vector<1x128xf32>
    %c39 = arith.constant 39 : index
    %c0_498 = arith.constant 0 : index
    %507 = vector.load %arg15[%c39, %c0_498] : memref<368x128xf32, #tpu.memory_space<vmem>>, vector<1x128xf32>
    tpu.vector_store %arg15[%c39, %c0_498], %506 {strides = array<i32>} : memref<368x128xf32, #tpu.memory_space<vmem>>, vector<1x128xf32>,
    %c55_499 = arith.constant 55 : index
    %c0_500 = arith.constant 0 : index
    %508 = vector.load %arg17[%c55_499, %c0_500] : memref<324x128xf32, #tpu.memory_space<vmem>>, vector<1x128xf32>
    %c56_501 = arith.constant 56 : index
    %c0_502 = arith.constant 0 : index
    %509 = vector.load %arg17[%c56_501, %c0_502] : memref<324x128xf32, #tpu.memory_space<vmem>>, vector<1x128xf32>
    %510 = arith.maximumf %508, %509 : vector<1x128xf32>
    %c40_503 = arith.constant 40 : index
    %c0_504 = arith.constant 0 : index
    %511 = vector.load %arg15[%c40_503, %c0_504] : memref<368x128xf32, #tpu.memory_space<vmem>>, vector<1x128xf32>
    tpu.vector_store %arg15[%c40_503, %c0_504], %510 {strides = array<i32>} : memref<368x128xf32, #tpu.memory_space<vmem>>, vector<1x128xf32>,
    %c57_505 = arith.constant 57 : index
    %c0_506 = arith.constant 0 : index
    %512 = vector.load %arg17[%c57_505, %c0_506] : memref<324x128xf32, #tpu.memory_space<vmem>>, vector<1x128xf32>
    %c58_507 = arith.constant 58 : index
    %c0_508 = arith.constant 0 : index
    %513 = vector.load %arg17[%c58_507, %c0_508] : memref<324x128xf32, #tpu.memory_space<vmem>>, vector<1x128xf32>
    %514 = arith.maximumf %512, %513 : vector<1x128xf32>
    %c41_509 = arith.constant 41 : index
    %c0_510 = arith.constant 0 : index
    %515 = vector.load %arg15[%c41_509, %c0_510] : memref<368x128xf32, #tpu.memory_space<vmem>>, vector<1x128xf32>
    tpu.vector_store %arg15[%c41_509, %c0_510], %514 {strides = array<i32>} : memref<368x128xf32, #tpu.memory_space<vmem>>, vector<1x128xf32>,
    %c71_511 = arith.constant 71 : index
    %c0_512 = arith.constant 0 : index
    %516 = vector.load %arg17[%c71_511, %c0_512] : memref<324x128xf32, #tpu.memory_space<vmem>>, vector<1x128xf32>
    %c72_513 = arith.constant 72 : index
    %c0_514 = arith.constant 0 : index
    %517 = vector.load %arg17[%c72_513, %c0_514] : memref<324x128xf32, #tpu.memory_space<vmem>>, vector<1x128xf32>
    %518 = arith.maximumf %516, %517 : vector<1x128xf32>
    %c44_515 = arith.constant 44 : index
    %c0_516 = arith.constant 0 : index
    %519 = vector.load %arg15[%c44_515, %c0_516] : memref<368x128xf32, #tpu.memory_space<vmem>>, vector<1x128xf32>
    tpu.vector_store %arg15[%c44_515, %c0_516], %518 {strides = array<i32>} : memref<368x128xf32, #tpu.memory_space<vmem>>, vector<1x128xf32>,
    %c73_517 = arith.constant 73 : index
    %c0_518 = arith.constant 0 : index
    %520 = vector.load %arg17[%c73_517, %c0_518] : memref<324x128xf32, #tpu.memory_space<vmem>>, vector<1x128xf32>
    %c74_519 = arith.constant 74 : index
    %c0_520 = arith.constant 0 : index
    %521 = vector.load %arg17[%c74_519, %c0_520] : memref<324x128xf32, #tpu.memory_space<vmem>>, vector<1x128xf32>
    %522 = arith.maximumf %520, %521 : vector<1x128xf32>
    %c45_521 = arith.constant 45 : index
    %c0_522 = arith.constant 0 : index
    %523 = vector.load %arg15[%c45_521, %c0_522] : memref<368x128xf32, #tpu.memory_space<vmem>>, vector<1x128xf32>
    tpu.vector_store %arg15[%c45_521, %c0_522], %522 {strides = array<i32>} : memref<368x128xf32, #tpu.memory_space<vmem>>, vector<1x128xf32>,
    %c75_523 = arith.constant 75 : index
    %c0_524 = arith.constant 0 : index
    %524 = vector.load %arg17[%c75_523, %c0_524] : memref<324x128xf32, #tpu.memory_space<vmem>>, vector<1x128xf32>
    %c76_525 = arith.constant 76 : index
    %c0_526 = arith.constant 0 : index
    %525 = vector.load %arg17[%c76_525, %c0_526] : memref<324x128xf32, #tpu.memory_space<vmem>>, vector<1x128xf32>
    %526 = arith.maximumf %524, %525 : vector<1x128xf32>
    %c46_527 = arith.constant 46 : index
    %c0_528 = arith.constant 0 : index
    %527 = vector.load %arg15[%c46_527, %c0_528] : memref<368x128xf32, #tpu.memory_space<vmem>>, vector<1x128xf32>
    tpu.vector_store %arg15[%c46_527, %c0_528], %526 {strides = array<i32>} : memref<368x128xf32, #tpu.memory_space<vmem>>, vector<1x128xf32>,
    %c77_529 = arith.constant 77 : index
    %c0_530 = arith.constant 0 : index
    %528 = vector.load %arg17[%c77_529, %c0_530] : memref<324x128xf32, #tpu.memory_space<vmem>>, vector<1x128xf32>
    %c78 = arith.constant 78 : index
    %c0_531 = arith.constant 0 : index
    %529 = vector.load %arg17[%c78, %c0_531] : memref<324x128xf32, #tpu.memory_space<vmem>>, vector<1x128xf32>
    %530 = arith.maximumf %528, %529 : vector<1x128xf32>
    %c47_532 = arith.constant 47 : index
    %c0_533 = arith.constant 0 : index
    %531 = vector.load %arg15[%c47_532, %c0_533] : memref<368x128xf32, #tpu.memory_space<vmem>>, vector<1x128xf32>
    tpu.vector_store %arg15[%c47_532, %c0_533], %530 {strides = array<i32>} : memref<368x128xf32, #tpu.memory_space<vmem>>, vector<1x128xf32>,
    %c12_534 = arith.constant 12 : index
    %c0_535 = arith.constant 0 : index
    %532 = vector.load %arg15[%c12_534, %c0_535] : memref<368x128xf32, #tpu.memory_space<vmem>>, vector<36x128xf32>
    %533 = arith.truncf %532 : vector<36x128xf32> to vector<36x128xbf16>
    %c0_536 = arith.constant 0 : index
    %c0_537 = arith.constant 0 : index
    %c0_538 = arith.constant 0 : index
    %534 = vector.load %arg8[%c0_536, %c0_537, %c0_538] : memref<9x128x128xbf16, #tpu.memory_space<vmem>>, vector<1x128x128xbf16>
    %535 = vector.shape_cast %534 : vector<1x128x128xbf16> to vector<128x128xbf16>
    %cst_539 = arith.constant dense<0.000000e+00> : vector<36x128xf32>
    %536 = tpu.matmul %533, %535, %cst_539 {dimension_numbers = #tpu.dot_dimension_numbers<[1], [0], [0], [1], [0, 0, 1, 1], [], []>} : vector<36x128xbf16>, vector<128x128xbf16>, vector<36x128xf32> -> vector<36x128xf32>
    %c13_540 = arith.constant 13 : index
    %c0_541 = arith.constant 0 : index
    %537 = vector.load %arg15[%c13_540, %c0_541] : memref<368x128xf32, #tpu.memory_space<vmem>>, vector<36x128xf32>
    %538 = arith.truncf %537 : vector<36x128xf32> to vector<36x128xbf16>
    %c1_542 = arith.constant 1 : index
    %c0_543 = arith.constant 0 : index
    %c0_544 = arith.constant 0 : index
    %539 = vector.load %arg8[%c1_542, %c0_543, %c0_544] : memref<9x128x128xbf16, #tpu.memory_space<vmem>>, vector<1x128x128xbf16>
    %540 = vector.shape_cast %539 : vector<1x128x128xbf16> to vector<128x128xbf16>
    %cst_545 = arith.constant dense<0.000000e+00> : vector<36x128xf32>
    %541 = tpu.matmul %538, %540, %cst_545 {dimension_numbers = #tpu.dot_dimension_numbers<[1], [0], [0], [1], [0, 0, 1, 1], [], []>} : vector<36x128xbf16>, vector<128x128xbf16>, vector<36x128xf32> -> vector<36x128xf32>
    %542 = arith.addf %536, %541 : vector<36x128xf32>
    %c14_546 = arith.constant 14 : index
    %c0_547 = arith.constant 0 : index
    %543 = vector.load %arg15[%c14_546, %c0_547] : memref<368x128xf32, #tpu.memory_space<vmem>>, vector<36x128xf32>
    %544 = arith.truncf %543 : vector<36x128xf32> to vector<36x128xbf16>
    %c2_548 = arith.constant 2 : index
    %c0_549 = arith.constant 0 : index
    %c0_550 = arith.constant 0 : index
    %545 = vector.load %arg8[%c2_548, %c0_549, %c0_550] : memref<9x128x128xbf16, #tpu.memory_space<vmem>>, vector<1x128x128xbf16>
    %546 = vector.shape_cast %545 : vector<1x128x128xbf16> to vector<128x128xbf16>
    %cst_551 = arith.constant dense<0.000000e+00> : vector<36x128xf32>
    %547 = tpu.matmul %544, %546, %cst_551 {dimension_numbers = #tpu.dot_dimension_numbers<[1], [0], [0], [1], [0, 0, 1, 1], [], []>} : vector<36x128xbf16>, vector<128x128xbf16>, vector<36x128xf32> -> vector<36x128xf32>
    %548 = arith.addf %542, %547 : vector<36x128xf32>
    %c18_552 = arith.constant 18 : index
    %c0_553 = arith.constant 0 : index
    %549 = vector.load %arg15[%c18_552, %c0_553] : memref<368x128xf32, #tpu.memory_space<vmem>>, vector<36x128xf32>
    %550 = arith.truncf %549 : vector<36x128xf32> to vector<36x128xbf16>
    %c3_554 = arith.constant 3 : index
    %c0_555 = arith.constant 0 : index
    %c0_556 = arith.constant 0 : index
    %551 = vector.load %arg8[%c3_554, %c0_555, %c0_556] : memref<9x128x128xbf16, #tpu.memory_space<vmem>>, vector<1x128x128xbf16>
    %552 = vector.shape_cast %551 : vector<1x128x128xbf16> to vector<128x128xbf16>
    %cst_557 = arith.constant dense<0.000000e+00> : vector<36x128xf32>
    %553 = tpu.matmul %550, %552, %cst_557 {dimension_numbers = #tpu.dot_dimension_numbers<[1], [0], [0], [1], [0, 0, 1, 1], [], []>} : vector<36x128xbf16>, vector<128x128xbf16>, vector<36x128xf32> -> vector<36x128xf32>
    %554 = arith.addf %548, %553 : vector<36x128xf32>
    %c19_558 = arith.constant 19 : index
    %c0_559 = arith.constant 0 : index
    %555 = vector.load %arg15[%c19_558, %c0_559] : memref<368x128xf32, #tpu.memory_space<vmem>>, vector<36x128xf32>
    %556 = arith.truncf %555 : vector<36x128xf32> to vector<36x128xbf16>
    %c4_560 = arith.constant 4 : index
    %c0_561 = arith.constant 0 : index
    %c0_562 = arith.constant 0 : index
    %557 = vector.load %arg8[%c4_560, %c0_561, %c0_562] : memref<9x128x128xbf16, #tpu.memory_space<vmem>>, vector<1x128x128xbf16>
    %558 = vector.shape_cast %557 : vector<1x128x128xbf16> to vector<128x128xbf16>
    %cst_563 = arith.constant dense<0.000000e+00> : vector<36x128xf32>
    %559 = tpu.matmul %556, %558, %cst_563 {dimension_numbers = #tpu.dot_dimension_numbers<[1], [0], [0], [1], [0, 0, 1, 1], [], []>} : vector<36x128xbf16>, vector<128x128xbf16>, vector<36x128xf32> -> vector<36x128xf32>
    %560 = arith.addf %554, %559 : vector<36x128xf32>
    %c20_564 = arith.constant 20 : index
    %c0_565 = arith.constant 0 : index
    %561 = vector.load %arg15[%c20_564, %c0_565] : memref<368x128xf32, #tpu.memory_space<vmem>>, vector<36x128xf32>
    %562 = arith.truncf %561 : vector<36x128xf32> to vector<36x128xbf16>
    %c5_566 = arith.constant 5 : index
    %c0_567 = arith.constant 0 : index
    %c0_568 = arith.constant 0 : index
    %563 = vector.load %arg8[%c5_566, %c0_567, %c0_568] : memref<9x128x128xbf16, #tpu.memory_space<vmem>>, vector<1x128x128xbf16>
    %564 = vector.shape_cast %563 : vector<1x128x128xbf16> to vector<128x128xbf16>
    %cst_569 = arith.constant dense<0.000000e+00> : vector<36x128xf32>
    %565 = tpu.matmul %562, %564, %cst_569 {dimension_numbers = #tpu.dot_dimension_numbers<[1], [0], [0], [1], [0, 0, 1, 1], [], []>} : vector<36x128xbf16>, vector<128x128xbf16>, vector<36x128xf32> -> vector<36x128xf32>
    %566 = arith.addf %560, %565 : vector<36x128xf32>
    %c24_570 = arith.constant 24 : index
    %c0_571 = arith.constant 0 : index
    %567 = vector.load %arg15[%c24_570, %c0_571] : memref<368x128xf32, #tpu.memory_space<vmem>>, vector<36x128xf32>
    %568 = arith.truncf %567 : vector<36x128xf32> to vector<36x128xbf16>
    %c6_572 = arith.constant 6 : index
    %c0_573 = arith.constant 0 : index
    %c0_574 = arith.constant 0 : index
    %569 = vector.load %arg8[%c6_572, %c0_573, %c0_574] : memref<9x128x128xbf16, #tpu.memory_space<vmem>>, vector<1x128x128xbf16>
    %570 = vector.shape_cast %569 : vector<1x128x128xbf16> to vector<128x128xbf16>
    %cst_575 = arith.constant dense<0.000000e+00> : vector<36x128xf32>
    %571 = tpu.matmul %568, %570, %cst_575 {dimension_numbers = #tpu.dot_dimension_numbers<[1], [0], [0], [1], [0, 0, 1, 1], [], []>} : vector<36x128xbf16>, vector<128x128xbf16>, vector<36x128xf32> -> vector<36x128xf32>
    %572 = arith.addf %566, %571 : vector<36x128xf32>
    %c25_576 = arith.constant 25 : index
    %c0_577 = arith.constant 0 : index
    %573 = vector.load %arg15[%c25_576, %c0_577] : memref<368x128xf32, #tpu.memory_space<vmem>>, vector<36x128xf32>
    %574 = arith.truncf %573 : vector<36x128xf32> to vector<36x128xbf16>
    %c7_578 = arith.constant 7 : index
    %c0_579 = arith.constant 0 : index
    %c0_580 = arith.constant 0 : index
    %575 = vector.load %arg8[%c7_578, %c0_579, %c0_580] : memref<9x128x128xbf16, #tpu.memory_space<vmem>>, vector<1x128x128xbf16>
    %576 = vector.shape_cast %575 : vector<1x128x128xbf16> to vector<128x128xbf16>
    %cst_581 = arith.constant dense<0.000000e+00> : vector<36x128xf32>
    %577 = tpu.matmul %574, %576, %cst_581 {dimension_numbers = #tpu.dot_dimension_numbers<[1], [0], [0], [1], [0, 0, 1, 1], [], []>} : vector<36x128xbf16>, vector<128x128xbf16>, vector<36x128xf32> -> vector<36x128xf32>
    %578 = arith.addf %572, %577 : vector<36x128xf32>
    %c26_582 = arith.constant 26 : index
    %c0_583 = arith.constant 0 : index
    %579 = vector.load %arg15[%c26_582, %c0_583] : memref<368x128xf32, #tpu.memory_space<vmem>>, vector<36x128xf32>
    %580 = arith.truncf %579 : vector<36x128xf32> to vector<36x128xbf16>
    %c8_584 = arith.constant 8 : index
    %c0_585 = arith.constant 0 : index
    %c0_586 = arith.constant 0 : index
    %581 = vector.load %arg8[%c8_584, %c0_585, %c0_586] : memref<9x128x128xbf16, #tpu.memory_space<vmem>>, vector<1x128x128xbf16>
    %582 = vector.shape_cast %581 : vector<1x128x128xbf16> to vector<128x128xbf16>
    %cst_587 = arith.constant dense<0.000000e+00> : vector<36x128xf32>
    %583 = tpu.matmul %580, %582, %cst_587 {dimension_numbers = #tpu.dot_dimension_numbers<[1], [0], [0], [1], [0, 0, 1, 1], [], []>} : vector<36x128xbf16>, vector<128x128xbf16>, vector<36x128xf32> -> vector<36x128xf32>
    %584 = arith.addf %578, %583 : vector<36x128xf32>
    %c0_588 = arith.constant 0 : index
    %c0_589 = arith.constant 0 : index
    %585 = vector.load %arg9[%c0_588, %c0_589] : memref<1x128xf32, #tpu.memory_space<vmem>>, vector<1x128xf32>
    %586 = vector.broadcast %585 : vector<1x128xf32> to vector<36x128xf32>
    %587 = arith.addf %584, %586 : vector<36x128xf32>
    %cst_590 = arith.constant 0.000000e+00 : f32
    %588 = vector.broadcast %cst_590 : f32 to vector<36x128xf32>
    %589 = arith.maximumf %587, %588 : vector<36x128xf32>
    %c0_591 = arith.constant 0 : index
    %c0_592 = arith.constant 0 : index
    %590 = vector.load %arg16[%c0_591, %c0_592] : memref<324x128xf32, #tpu.memory_space<vmem>>, vector<36x128xf32>
    tpu.vector_store %arg16[%c0_591, %c0_592], %589 {strides = array<i32>} : memref<324x128xf32, #tpu.memory_space<vmem>>, vector<36x128xf32>,
    %c0_593 = arith.constant 0 : index
    %c0_594 = arith.constant 0 : index
    %591 = vector.load %arg16[%c0_593, %c0_594] : memref<324x128xf32, #tpu.memory_space<vmem>>, vector<30x128xf32>
    %c6_595 = arith.constant 6 : index
    %c0_596 = arith.constant 0 : index
    %592 = vector.load %arg16[%c6_595, %c0_596] : memref<324x128xf32, #tpu.memory_space<vmem>>, vector<30x128xf32>
    %593 = arith.maximumf %591, %592 : vector<30x128xf32>
    %c0_597 = arith.constant 0 : index
    %c0_598 = arith.constant 0 : index
    %594 = vector.load %arg17[%c0_597, %c0_598] : memref<324x128xf32, #tpu.memory_space<vmem>>, vector<30x128xf32>
    tpu.vector_store %arg17[%c0_597, %c0_598], %593 {strides = array<i32>} : memref<324x128xf32, #tpu.memory_space<vmem>>, vector<30x128xf32>,
    %c7_599 = arith.constant 7 : index
    %c0_600 = arith.constant 0 : index
    %595 = vector.load %arg17[%c7_599, %c0_600] : memref<324x128xf32, #tpu.memory_space<vmem>>, vector<1x128xf32>
    %c8_601 = arith.constant 8 : index
    %c0_602 = arith.constant 0 : index
    %596 = vector.load %arg17[%c8_601, %c0_602] : memref<324x128xf32, #tpu.memory_space<vmem>>, vector<1x128xf32>
    %597 = arith.maximumf %595, %596 : vector<1x128xf32>
    %c9_603 = arith.constant 9 : index
    %c0_604 = arith.constant 0 : index
    %598 = vector.load %arg17[%c9_603, %c0_604] : memref<324x128xf32, #tpu.memory_space<vmem>>, vector<1x128xf32>
    %c10_605 = arith.constant 10 : index
    %c0_606 = arith.constant 0 : index
    %599 = vector.load %arg17[%c10_605, %c0_606] : memref<324x128xf32, #tpu.memory_space<vmem>>, vector<1x128xf32>
    %600 = arith.maximumf %598, %599 : vector<1x128xf32>
    %c19_607 = arith.constant 19 : index
    %c0_608 = arith.constant 0 : index
    %601 = vector.load %arg17[%c19_607, %c0_608] : memref<324x128xf32, #tpu.memory_space<vmem>>, vector<1x128xf32>
    %c20_609 = arith.constant 20 : index
    %c0_610 = arith.constant 0 : index
    %602 = vector.load %arg17[%c20_609, %c0_610] : memref<324x128xf32, #tpu.memory_space<vmem>>, vector<1x128xf32>
    %603 = arith.maximumf %601, %602 : vector<1x128xf32>
    %c21_611 = arith.constant 21 : index
    %c0_612 = arith.constant 0 : index
    %604 = vector.load %arg17[%c21_611, %c0_612] : memref<324x128xf32, #tpu.memory_space<vmem>>, vector<1x128xf32>
    %c22_613 = arith.constant 22 : index
    %c0_614 = arith.constant 0 : index
    %605 = vector.load %arg17[%c22_613, %c0_614] : memref<324x128xf32, #tpu.memory_space<vmem>>, vector<1x128xf32>
    %606 = arith.maximumf %604, %605 : vector<1x128xf32>
    %c0_615 = arith.constant 0 : index
    %c0_616 = arith.constant 0 : index
    %607 = vector.load %arg11[%c0_615, %c0_616] : memref<1x128xf32, #tpu.memory_space<vmem>>, vector<1x128xf32>
    %608 = arith.truncf %597 : vector<1x128xf32> to vector<1x128xbf16>
    %c0_617 = arith.constant 0 : index
    %c0_618 = arith.constant 0 : index
    %c0_619 = arith.constant 0 : index
    %609 = vector.load %arg10[%c0_617, %c0_618, %c0_619] : memref<4x128x128xbf16, #tpu.memory_space<vmem>>, vector<1x128x128xbf16>
    %610 = vector.shape_cast %609 : vector<1x128x128xbf16> to vector<128x128xbf16>
    %cst_620 = arith.constant dense<0.000000e+00> : vector<1x128xf32>
    %611 = tpu.matmul %608, %610, %cst_620 {dimension_numbers = #tpu.dot_dimension_numbers<[1], [0], [0], [1], [0, 0, 1, 1], [], []>} : vector<1x128xbf16>, vector<128x128xbf16>, vector<1x128xf32> -> vector<1x128xf32>
    %612 = arith.addf %607, %611 : vector<1x128xf32>
    %613 = arith.truncf %600 : vector<1x128xf32> to vector<1x128xbf16>
    %c1_621 = arith.constant 1 : index
    %c0_622 = arith.constant 0 : index
    %c0_623 = arith.constant 0 : index
    %614 = vector.load %arg10[%c1_621, %c0_622, %c0_623] : memref<4x128x128xbf16, #tpu.memory_space<vmem>>, vector<1x128x128xbf16>
    %615 = vector.shape_cast %614 : vector<1x128x128xbf16> to vector<128x128xbf16>
    %cst_624 = arith.constant dense<0.000000e+00> : vector<1x128xf32>
    %616 = tpu.matmul %613, %615, %cst_624 {dimension_numbers = #tpu.dot_dimension_numbers<[1], [0], [0], [1], [0, 0, 1, 1], [], []>} : vector<1x128xbf16>, vector<128x128xbf16>, vector<1x128xf32> -> vector<1x128xf32>
    %617 = arith.addf %612, %616 : vector<1x128xf32>
    %618 = arith.truncf %603 : vector<1x128xf32> to vector<1x128xbf16>
    %c2_625 = arith.constant 2 : index
    %c0_626 = arith.constant 0 : index
    %c0_627 = arith.constant 0 : index
    %619 = vector.load %arg10[%c2_625, %c0_626, %c0_627] : memref<4x128x128xbf16, #tpu.memory_space<vmem>>, vector<1x128x128xbf16>
    %620 = vector.shape_cast %619 : vector<1x128x128xbf16> to vector<128x128xbf16>
    %cst_628 = arith.constant dense<0.000000e+00> : vector<1x128xf32>
    %621 = tpu.matmul %618, %620, %cst_628 {dimension_numbers = #tpu.dot_dimension_numbers<[1], [0], [0], [1], [0, 0, 1, 1], [], []>} : vector<1x128xbf16>, vector<128x128xbf16>, vector<1x128xf32> -> vector<1x128xf32>
    %622 = arith.addf %617, %621 : vector<1x128xf32>
    %623 = arith.truncf %606 : vector<1x128xf32> to vector<1x128xbf16>
    %c3_629 = arith.constant 3 : index
    %c0_630 = arith.constant 0 : index
    %c0_631 = arith.constant 0 : index
    %624 = vector.load %arg10[%c3_629, %c0_630, %c0_631] : memref<4x128x128xbf16, #tpu.memory_space<vmem>>, vector<1x128x128xbf16>
    %625 = vector.shape_cast %624 : vector<1x128x128xbf16> to vector<128x128xbf16>
    %cst_632 = arith.constant dense<0.000000e+00> : vector<1x128xf32>
    %626 = tpu.matmul %623, %625, %cst_632 {dimension_numbers = #tpu.dot_dimension_numbers<[1], [0], [0], [1], [0, 0, 1, 1], [], []>} : vector<1x128xbf16>, vector<128x128xbf16>, vector<1x128xf32> -> vector<1x128xf32>
    %627 = arith.addf %622, %626 : vector<1x128xf32>
    %cst_633 = arith.constant 0.000000e+00 : f32
    %628 = vector.broadcast %cst_633 : f32 to vector<1x128xf32>
    %629 = arith.maximumf %627, %628 : vector<1x128xf32>
    %630 = arith.truncf %629 : vector<1x128xf32> to vector<1x128xbf16>
    %c0_634 = arith.constant 0 : index
    %c0_635 = arith.constant 0 : index
    %631 = vector.load %arg12[%c0_634, %c0_635] : memref<128x128xbf16, #tpu.memory_space<vmem>>, vector<128x128xbf16>
    %cst_636 = arith.constant dense<0.000000e+00> : vector<1x128xf32>
    %632 = tpu.matmul %630, %631, %cst_636 {dimension_numbers = #tpu.dot_dimension_numbers<[1], [0], [0], [1], [0, 0, 1, 1], [], []>} : vector<1x128xbf16>, vector<128x128xbf16>, vector<1x128xf32> -> vector<1x128xf32>
    %c0_637 = arith.constant 0 : index
    %c0_638 = arith.constant 0 : index
    %633 = vector.load %arg13[%c0_637, %c0_638] : memref<1x128xf32, #tpu.memory_space<vmem>>, vector<1x128xf32>
    %634 = arith.addf %632, %633 : vector<1x128xf32>
    %635 = vector.shape_cast %634 : vector<1x128xf32> to vector<1x1x128xf32>
    %c0_639 = arith.constant 0 : index
    %c0_640 = arith.constant 0 : index
    %c0_641 = arith.constant 0 : index
    %636 = vector.load %arg14[%c0_639, %c0_640, %c0_641] : memref<1x1x128xf32, #tpu.memory_space<vmem>>, vector<1x1x128xf32>
    tpu.vector_store %arg14[%c0_639, %c0_640, %c0_641], %635 {strides = array<i32>} : memref<1x1x128xf32, #tpu.memory_space<vmem>>, vector<1x1x128xf32>,
    return
  }
  func.func @transform_0(%arg0: i32) -> (i32, i32, i32) {
    %c0_i32 = arith.constant 0 : i32
    %c0_i32_0 = arith.constant 0 : i32
    %c0_i32_1 = arith.constant 0 : i32
    return %arg0, %c0_i32, %c0_i32_0 : i32, i32, i32
  }
  func.func @transform_1(%arg0: i32) -> (i32, i32, i32) {
    %c0_i32 = arith.constant 0 : i32
    %c0_i32_0 = arith.constant 0 : i32
    %c0_i32_1 = arith.constant 0 : i32
    %c0_i32_2 = arith.constant 0 : i32
    return %c0_i32, %c0_i32_0, %c0_i32_1 : i32, i32, i32
  }
  func.func @transform_2(%arg0: i32) -> (i32, i32) {
    %c0_i32 = arith.constant 0 : i32
    %c0_i32_0 = arith.constant 0 : i32
    %c0_i32_1 = arith.constant 0 : i32
    return %c0_i32, %c0_i32_0 : i32, i32
  }
  func.func @transform_3(%arg0: i32) -> (i32, i32, i32) {
    %c0_i32 = arith.constant 0 : i32
    %c0_i32_0 = arith.constant 0 : i32
    %c0_i32_1 = arith.constant 0 : i32
    %c0_i32_2 = arith.constant 0 : i32
    return %c0_i32, %c0_i32_0, %c0_i32_1 : i32, i32, i32
  }
  func.func @transform_4(%arg0: i32) -> (i32, i32) {
    %c0_i32 = arith.constant 0 : i32
    %c0_i32_0 = arith.constant 0 : i32
    %c0_i32_1 = arith.constant 0 : i32
    return %c0_i32, %c0_i32_0 : i32, i32
  }
  func.func @transform_5(%arg0: i32) -> (i32, i32, i32) {
    %c0_i32 = arith.constant 0 : i32
    %c0_i32_0 = arith.constant 0 : i32
    %c0_i32_1 = arith.constant 0 : i32
    %c0_i32_2 = arith.constant 0 : i32
    return %c0_i32, %c0_i32_0, %c0_i32_1 : i32, i32, i32
  }
  func.func @transform_6(%arg0: i32) -> (i32, i32) {
    %c0_i32 = arith.constant 0 : i32
    %c0_i32_0 = arith.constant 0 : i32
    %c0_i32_1 = arith.constant 0 : i32
    return %c0_i32, %c0_i32_0 : i32, i32
  }
  func.func @transform_7(%arg0: i32) -> (i32, i32, i32) {
    %c0_i32 = arith.constant 0 : i32
    %c0_i32_0 = arith.constant 0 : i32
    %c0_i32_1 = arith.constant 0 : i32
    %c0_i32_2 = arith.constant 0 : i32
    return %c0_i32, %c0_i32_0, %c0_i32_1 : i32, i32, i32
  }
  func.func @transform_8(%arg0: i32) -> (i32, i32) {
    %c0_i32 = arith.constant 0 : i32
    %c0_i32_0 = arith.constant 0 : i32
    %c0_i32_1 = arith.constant 0 : i32
    return %c0_i32, %c0_i32_0 : i32, i32
  }
  func.func @transform_9(%arg0: i32) -> (i32, i32, i32) {
    %c0_i32 = arith.constant 0 : i32
    %c0_i32_0 = arith.constant 0 : i32
    %c0_i32_1 = arith.constant 0 : i32
    %c0_i32_2 = arith.constant 0 : i32
    return %c0_i32, %c0_i32_0, %c0_i32_1 : i32, i32, i32
  }
  func.func @transform_10(%arg0: i32) -> (i32, i32) {
    %c0_i32 = arith.constant 0 : i32
    %c0_i32_0 = arith.constant 0 : i32
    %c0_i32_1 = arith.constant 0 : i32
    return %c0_i32, %c0_i32_0 : i32, i32
  }
  func.func @transform_11(%arg0: i32) -> (i32, i32) {
    %c0_i32 = arith.constant 0 : i32
    %c0_i32_0 = arith.constant 0 : i32
    %c0_i32_1 = arith.constant 0 : i32
    return %c0_i32, %c0_i32_0 : i32, i32
  }
  func.func @transform_12(%arg0: i32) -> (i32, i32) {
    %c0_i32 = arith.constant 0 : i32
    %c0_i32_0 = arith.constant 0 : i32
    %c0_i32_1 = arith.constant 0 : i32
    return %c0_i32, %c0_i32_0 : i32, i32
  }
  func.func @transform_13(%arg0: i32) -> (i32, i32, i32) {
    %c0_i32 = arith.constant 0 : i32
    %c0_i32_0 = arith.constant 0 : i32
    %c0_i32_1 = arith.constant 0 : i32
    return %arg0, %c0_i32, %c0_i32_0 : i32, i32, i32
  }
}

</mosaic_0001>

<llo_original>
// kernel: cnn_usps_forward.1
$region0: #{cnn_usps_forward.1}
  #allocation0 [shape = 'u32[]', space=smem, size = 0x4, offset = 0x4, fixed_abs, tag = 'smem constant byte address 0x4 - core index']
  #allocation1 [shape = 'u32[72,128]{1,0:T(1,128)}', space=vmem, size = 0x9000, scoped, tag = 'internal scratch']
  #allocation2 [shape = 'f32[368,128]{1,0:T(8,128)}', space=vmem, size = 0x2e000, scoped, tag = 'scratch operand']
  #allocation3 [shape = 'f32[324,128]{1,0:T(8,128)}', space=vmem, size = 0x29000, scoped, tag = 'scratch operand']
  #allocation4 [shape = 'f32[324,128]{1,0:T(8,128)}', space=vmem, size = 0x29000, scoped, tag = 'scratch operand']
  %s0 = inlined_call_operand.vmem [shape: f32[2,324,1], index: 0, kind: input, shape index: {}]
  %s1 = inlined_call_operand.vmem [shape: bf16[9,128,128], index: 1, kind: input, shape index: {}]
  %s2 = inlined_call_operand.vmem [shape: f32[1,128], index: 2, kind: input, shape index: {}]
  %s3 = inlined_call_operand.hbm [shape: bf16[9,128,128], index: 3, kind: input, shape index: {}]
  %s4 = inlined_call_operand.vmem [shape: f32[1,128], index: 4, kind: input, shape index: {}]
  %s5 = inlined_call_operand.hbm [shape: bf16[9,128,128], index: 5, kind: input, shape index: {}]
  %s6 = inlined_call_operand.vmem [shape: f32[1,128], index: 6, kind: input, shape index: {}]
  %s7 = inlined_call_operand.hbm [shape: bf16[9,128,128], index: 7, kind: input, shape index: {}]
  %s8 = inlined_call_operand.vmem [shape: f32[1,128], index: 8, kind: input, shape index: {}]
  %s9 = inlined_call_operand.hbm [shape: bf16[4,128,128], index: 9, kind: input, shape index: {}]
  %s10 = inlined_call_operand.vmem [shape: f32[1,128], index: 10, kind: input, shape index: {}]
  %s11 = inlined_call_operand.vmem [shape: bf16[128,128], index: 11, kind: input, shape index: {}]
  %s12 = inlined_call_operand.vmem [shape: f32[1,128], index: 12, kind: input, shape index: {}]
  %s13 = inlined_call_operand.hbm [shape: f32[2,1,128], index: 13, kind: output, shape index: {}]
  %s14 = sld [smem:[#allocation0]]
  $region101: #{cnn_usps_forward.1} parent=0
    _
  %s16 = ssub.s32 1, %s14
  %s17 = scalar_select 0, %s16, %s14
  $region1: #{cnn_usps_forward.1} parent=0
    #allocation5 [shape = 'u8[294912]{0}', space=vmem, size = 0x48000, scoped, tag = 'input window, operand 3, single buffered']
    #allocation6 [shape = 's32[2]{0}', space=sflag, size = 0x8, scoped, tag = 'scoped memory for cnn_usps_forward.1']
    #allocation7 [shape = 's32[2]{0}', space=sflag, size = 0x8, scoped, tag = 'scoped memory for cnn_usps_forward.1']
    #allocation8 [shape = 'u8[294912]{0}', space=vmem, size = 0x48000, scoped, tag = 'input window, operand 5, single buffered']
    #allocation9 [shape = 's32[1]{0}', space=sflag, size = 0x4, scoped, tag = 'scoped memory for cnn_usps_forward.1']
    #allocation10 [shape = 'u8[294912]{0}', space=vmem, size = 0x48000, scoped, tag = 'input window, operand 7, single buffered']
    #allocation11 [shape = 'u8[131072]{0}', space=vmem, size = 0x20000, scoped, tag = 'input window, operand 9, single buffered']
    #allocation12 [shape = 's32[1]{0}', space=sflag, size = 0x4, scoped, tag = 'scoped memory for cnn_usps_forward.1']
    #allocation13 [shape = 'u8[1024]{0}', space=vmem, size = 0x400, scoped, tag = 'output window, operand 0']
    %18 = vsyncpa [#allocation6], 0
    %19 = vsyncpa [#allocation9], 0
    %20 = vsyncpa [#allocation12], 0
    %21 = vsyncpa [#allocation7], 0
    %s22 = scalar_lea.sflag [#allocation7], 1
    %23 = vsyncpa %s22, 0
    loop: start=0, step=1, limit=4
    $region2: #{cnn_usps_forward.1} parent=1 // loop_pre_header
      _
    $region3: #{cnn_usps_forward.1} parent=1 // loop_header
      %s25 = sphi 0, %s29
      %p26 = scmp.ge.s32.totalorder %s25, 4
      %s35 = sphi 0, %s37
      %s38 = sphi 0, %s35
      %s39 = sphi 0, %s38
      %s55 = sphi 0, %s39
      %s59 = sphi 0, %s59
      %s61 = sphi 0, %s59
      %s62 = sphi 0, %s61
      %s76 = sphi 0, %s62
      %s80 = sphi 0, %s80
      %s82 = sphi 0, %s80
      %s83 = sphi 0, %s82
      %s97 = sphi 0, %s83
      %s101 = sphi 0, %s101
      %s103 = sphi 0, %s101
      %s104 = sphi 0, %s103
      %s118 = sphi 0, %s104
      %s122 = sphi 0, %s122
      %s124 = sphi 0, %s122
      %s125 = sphi 0, %s124
      %s139 = sphi 0, %s125
      %s143 = sphi 0, %s143
      %s145 = sphi 0, %s143
      %s146 = sphi 0, %s145
      %s160 = sphi 0, %s146
      %s164 = sphi 0, %s164
      %s166 = sphi 0, %s164
      %s167 = sphi 0, %s166
      %s181 = sphi 0, %s167
      %s185 = sphi 0, %s185
      %s187 = sphi 0, %s185
      %s188 = sphi 0, %s187
      %s202 = sphi 0, %s188
      %s206 = sphi 0, %s206
      %s208 = sphi 0, %s206
      %s209 = sphi 0, %s208
      %s223 = sphi 0, %s209
      %s227 = sphi 0, %s227
      %s229 = sphi 0, %s227
      %s230 = sphi 0, %s229
      %s244 = sphi 0, %s230
      %s248 = sphi 0, %s248
      %s250 = sphi 0, %s248
      %s251 = sphi 0, %s250
      %s265 = sphi 0, %s251
      %s269 = sphi 0, %s269
      %s271 = sphi 0, %s269
      %s272 = sphi 0, %s271
      %s286 = sphi 0, %s272
      %s290 = sphi 0, %s290
      %s292 = sphi 0, %s290
      %s293 = sphi 0, %s292
      %s307 = sphi 0, %s293
      %s313 = sphi 0, %s315
      %s316 = sphi 0, %s313
      %s317 = sphi 0, %s316
      %s333 = sphi 0, %s317
    $region4: #{cnn_usps_forward.1} parent=1 // loop_header_branch
      %28 = sbr.rel (%p26) target = $region8
    $region5: #{cnn_usps_forward.1} parent=1 // loop_body
      %s30 = ssub.s32 %s25, 1
      %s31 = ssub.s32 %s25, 2
      %s32 = sadd.s32 %s25, 1
      %s33 = ssub.s32 %s25, %s32
      %p34 = scmp.eq.s32.totalorder %s33, 0
      %s36 = sadd.s32 %s35, 1
      %s37 = scalar_select %p34, %s35, %s36
      %p40 = pneg %p34
      %p41 = scmp.eq.s32.totalorder %s25, 1
      %p42 = por %p40, %p41
      %p43 = scmp.ne.s32.totalorder %s35, %s38
      %p44 = scmp.eq.s32.totalorder %s25, 0
      %p45 = por %p43, %p44
      %p46 = scmp.ne.s32.totalorder %s35, %s38
      %p47 = scmp.eq.s32.totalorder %s30, 1
      %p48 = por %p46, %p47
      %p49 = scmp.ne.s32.totalorder %s38, %s39
      %p50 = scmp.eq.s32.totalorder %s30, 0
      %p51 = por %p49, %p50
      %p52 = scmp.ne.s32.totalorder %s38, %s39
      %p53 = scmp.eq.s32.totalorder %s31, 1
      %p54 = por %p52, %p53
      %p56 = scmp.ne.s32.totalorder %s39, %s55
      %p57 = scmp.eq.s32.totalorder %s31, 0
      %p58 = por %p56, %p57
      %s60 = sadd.s32 %s59, 1
      %p63 = scmp.eq.s32.totalorder %s25, 1
      %p64 = scmp.ne.s32.totalorder %s59, %s61
      %p65 = scmp.eq.s32.totalorder %s25, 0
      %p66 = por %p64, %p65
      %p67 = scmp.ne.s32.totalorder %s59, %s61
      %p68 = scmp.eq.s32.totalorder %s30, 1
      %p69 = por %p67, %p68
      %p70 = scmp.ne.s32.totalorder %s61, %s62
      %p71 = scmp.eq.s32.totalorder %s30, 0
      %p72 = por %p70, %p71
      %p73 = scmp.ne.s32.totalorder %s61, %s62
      %p74 = scmp.eq.s32.totalorder %s31, 1
      %p75 = por %p73, %p74
      %p77 = scmp.ne.s32.totalorder %s62, %s76
      %p78 = scmp.eq.s32.totalorder %s31, 0
      %p79 = por %p77, %p78
      %s81 = sadd.s32 %s80, 1
      %p84 = scmp.eq.s32.totalorder %s25, 1
      %p85 = scmp.ne.s32.totalorder %s80, %s82
      %p86 = scmp.eq.s32.totalorder %s25, 0
      %p87 = por %p85, %p86
      %p88 = scmp.ne.s32.totalorder %s80, %s82
      %p89 = scmp.eq.s32.totalorder %s30, 1
      %p90 = por %p88, %p89
      %p91 = scmp.ne.s32.totalorder %s82, %s83
      %p92 = scmp.eq.s32.totalorder %s30, 0
      %p93 = por %p91, %p92
      %p94 = scmp.ne.s32.totalorder %s82, %s83
      %p95 = scmp.eq.s32.totalorder %s31, 1
      %p96 = por %p94, %p95
      %p98 = scmp.ne.s32.totalorder %s83, %s97
      %p99 = scmp.eq.s32.totalorder %s31, 0
      %p100 = por %p98, %p99
      %s102 = sadd.s32 %s101, 1
      %p105 = scmp.eq.s32.totalorder %s25, 1
      %p106 = scmp.ne.s32.totalorder %s101, %s103
      %p107 = scmp.eq.s32.totalorder %s25, 0
      %p108 = por %p106, %p107
      %p109 = scmp.ne.s32.totalorder %s101, %s103
      %p110 = scmp.eq.s32.totalorder %s30, 1
      %p111 = por %p109, %p110
      %p112 = scmp.ne.s32.totalorder %s103, %s104
      %p113 = scmp.eq.s32.totalorder %s30, 0
      %p114 = por %p112, %p113
      %p115 = scmp.ne.s32.totalorder %s103, %s104
      %p116 = scmp.eq.s32.totalorder %s31, 1
      %p117 = por %p115, %p116
      %p119 = scmp.ne.s32.totalorder %s104, %s118
      %p120 = scmp.eq.s32.totalorder %s31, 0
      %p121 = por %p119, %p120
      %s123 = sadd.s32 %s122, 1
      %p126 = scmp.eq.s32.totalorder %s25, 1
      %p127 = scmp.ne.s32.totalorder %s122, %s124
      %p128 = scmp.eq.s32.totalorder %s25, 0
      %p129 = por %p127, %p128
      %p130 = scmp.ne.s32.totalorder %s122, %s124
      %p131 = scmp.eq.s32.totalorder %s30, 1
      %p132 = por %p130, %p131
      %p133 = scmp.ne.s32.totalorder %s124, %s125
      %p134 = scmp.eq.s32.totalorder %s30, 0
      %p135 = por %p133, %p134
      %p136 = scmp.ne.s32.totalorder %s124, %s125
      %p137 = scmp.eq.s32.totalorder %s31, 1
      %p138 = por %p136, %p137
      %p140 = scmp.ne.s32.totalorder %s125, %s139
      %p141 = scmp.eq.s32.totalorder %s31, 0
      %p142 = por %p140, %p141
      %s144 = sadd.s32 %s143, 1
      %p147 = scmp.eq.s32.totalorder %s25, 1
      %p148 = scmp.ne.s32.totalorder %s143, %s145
      %p149 = scmp.eq.s32.totalorder %s25, 0
      %p150 = por %p148, %p149
      %p151 = scmp.ne.s32.totalorder %s143, %s145
      %p152 = scmp.eq.s32.totalorder %s30, 1
      %p153 = por %p151, %p152
      %p154 = scmp.ne.s32.totalorder %s145, %s146
      %p155 = scmp.eq.s32.totalorder %s30, 0
      %p156 = por %p154, %p155
      %p157 = scmp.ne.s32.totalorder %s145, %s146
      %p158 = scmp.eq.s32.totalorder %s31, 1
      %p159 = por %p157, %p158
      %p161 = scmp.ne.s32.totalorder %s146, %s160
      %p162 = scmp.eq.s32.totalorder %s31, 0
      %p163 = por %p161, %p162
      %s165 = sadd.s32 %s164, 1
      %p168 = scmp.eq.s32.totalorder %s25, 1
      %p169 = scmp.ne.s32.totalorder %s164, %s166
      %p170 = scmp.eq.s32.totalorder %s25, 0
      %p171 = por %p169, %p170
      %p172 = scmp.ne.s32.totalorder %s164, %s166
      %p173 = scmp.eq.s32.totalorder %s30, 1
      %p174 = por %p172, %p173
      %p175 = scmp.ne.s32.totalorder %s166, %s167
      %p176 = scmp.eq.s32.totalorder %s30, 0
      %p177 = por %p175, %p176
      %p178 = scmp.ne.s32.totalorder %s166, %s167
      %p179 = scmp.eq.s32.totalorder %s31, 1
      %p180 = por %p178, %p179
      %p182 = scmp.ne.s32.totalorder %s167, %s181
      %p183 = scmp.eq.s32.totalorder %s31, 0
      %p184 = por %p182, %p183
      %s186 = sadd.s32 %s185, 1
      %p189 = scmp.eq.s32.totalorder %s25, 1
      %p190 = scmp.ne.s32.totalorder %s185, %s187
      %p191 = scmp.eq.s32.totalorder %s25, 0
      %p192 = por %p190, %p191
      %p193 = scmp.ne.s32.totalorder %s185, %s187
      %p194 = scmp.eq.s32.totalorder %s30, 1
      %p195 = por %p193, %p194
      %p196 = scmp.ne.s32.totalorder %s187, %s188
      %p197 = scmp.eq.s32.totalorder %s30, 0
      %p198 = por %p196, %p197
      %p199 = scmp.ne.s32.totalorder %s187, %s188
      %p200 = scmp.eq.s32.totalorder %s31, 1
      %p201 = por %p199, %p200
      %p203 = scmp.ne.s32.totalorder %s188, %s202
      %p204 = scmp.eq.s32.totalorder %s31, 0
      %p205 = por %p203, %p204
      %s207 = sadd.s32 %s206, 1
      %p210 = scmp.eq.s32.totalorder %s25, 1
      %p211 = scmp.ne.s32.totalorder %s206, %s208
      %p212 = scmp.eq.s32.totalorder %s25, 0
      %p213 = por %p211, %p212
      %p214 = scmp.ne.s32.totalorder %s206, %s208
      %p215 = scmp.eq.s32.totalorder %s30, 1
      %p216 = por %p214, %p215
      %p217 = scmp.ne.s32.totalorder %s208, %s209
      %p218 = scmp.eq.s32.totalorder %s30, 0
      %p219 = por %p217, %p218
      %p220 = scmp.ne.s32.totalorder %s208, %s209
      %p221 = scmp.eq.s32.totalorder %s31, 1
      %p222 = por %p220, %p221
      %p224 = scmp.ne.s32.totalorder %s209, %s223
      %p225 = scmp.eq.s32.totalorder %s31, 0
      %p226 = por %p224, %p225
      %s228 = sadd.s32 %s227, 1
      %p231 = scmp.eq.s32.totalorder %s25, 1
      %p232 = scmp.ne.s32.totalorder %s227, %s229
      %p233 = scmp.eq.s32.totalorder %s25, 0
      %p234 = por %p232, %p233
      %p235 = scmp.ne.s32.totalorder %s227, %s229
      %p236 = scmp.eq.s32.totalorder %s30, 1
      %p237 = por %p235, %p236
      %p238 = scmp.ne.s32.totalorder %s229, %s230
      %p239 = scmp.eq.s32.totalorder %s30, 0
      %p240 = por %p238, %p239
      %p241 = scmp.ne.s32.totalorder %s229, %s230
      %p242 = scmp.eq.s32.totalorder %s31, 1
      %p243 = por %p241, %p242
      %p245 = scmp.ne.s32.totalorder %s230, %s244
      %p246 = scmp.eq.s32.totalorder %s31, 0
      %p247 = por %p245, %p246
      %s249 = sadd.s32 %s248, 1
      %p252 = scmp.eq.s32.totalorder %s25, 1
      %p253 = scmp.ne.s32.totalorder %s248, %s250
      %p254 = scmp.eq.s32.totalorder %s25, 0
      %p255 = por %p253, %p254
      %p256 = scmp.ne.s32.totalorder %s248, %s250
      %p257 = scmp.eq.s32.totalorder %s30, 1
      %p258 = por %p256, %p257
      %p259 = scmp.ne.s32.totalorder %s250, %s251
      %p260 = scmp.eq.s32.totalorder %s30, 0
      %p261 = por %p259, %p260
      %p262 = scmp.ne.s32.totalorder %s250, %s251
      %p263 = scmp.eq.s32.totalorder %s31, 1
      %p264 = por %p262, %p263
      %p266 = scmp.ne.s32.totalorder %s251, %s265
      %p267 = scmp.eq.s32.totalorder %s31, 0
      %p268 = por %p266, %p267
      %s270 = sadd.s32 %s269, 1
      %p273 = scmp.eq.s32.totalorder %s25, 1
      %p274 = scmp.ne.s32.totalorder %s269, %s271
      %p275 = scmp.eq.s32.totalorder %s25, 0
      %p276 = por %p274, %p275
      %p277 = scmp.ne.s32.totalorder %s269, %s271
      %p278 = scmp.eq.s32.totalorder %s30, 1
      %p279 = por %p277, %p278
      %p280 = scmp.ne.s32.totalorder %s271, %s272
      %p281 = scmp.eq.s32.totalorder %s30, 0
      %p282 = por %p280, %p281
      %p283 = scmp.ne.s32.totalorder %s271, %s272
      %p284 = scmp.eq.s32.totalorder %s31, 1
      %p285 = por %p283, %p284
      %p287 = scmp.ne.s32.totalorder %s272, %s286
      %p288 = scmp.eq.s32.totalorder %s31, 0
      %p289 = por %p287, %p288
      %s291 = sadd.s32 %s290, 1
      %p294 = scmp.eq.s32.totalorder %s25, 1
      %p295 = scmp.ne.s32.totalorder %s290, %s292
      %p296 = scmp.eq.s32.totalorder %s25, 0
      %p297 = por %p295, %p296
      %p298 = scmp.ne.s32.totalorder %s290, %s292
      %p299 = scmp.eq.s32.totalorder %s30, 1
      %p300 = por %p298, %p299
      %p301 = scmp.ne.s32.totalorder %s292, %s293
      %p302 = scmp.eq.s32.totalorder %s30, 0
      %p303 = por %p301, %p302
      %p304 = scmp.ne.s32.totalorder %s292, %s293
      %p305 = scmp.eq.s32.totalorder %s31, 1
      %p306 = por %p304, %p305
      %p308 = scmp.ne.s32.totalorder %s293, %s307
      %p309 = scmp.eq.s32.totalorder %s31, 0
      %p310 = por %p308, %p309
      %s311 = ssub.s32 %s25, %s32
      %p312 = scmp.eq.s32.totalorder %s311, 0
      %s314 = sadd.s32 %s313, 1
      %s315 = scalar_select %p312, %s313, %s314
      %p318 = pneg %p312
      %p319 = scmp.eq.s32.totalorder %s25, 1
      %p320 = por %p318, %p319
      %p321 = scmp.ne.s32.totalorder %s313, %s316
      %p322 = scmp.eq.s32.totalorder %s25, 0
      %p323 = por %p321, %p322
      %p324 = scmp.ne.s32.totalorder %s313, %s316
      %p325 = scmp.eq.s32.totalorder %s30, 1
      %p326 = por %p324, %p325
      %p327 = scmp.ne.s32.totalorder %s316, %s317
      %p328 = scmp.eq.s32.totalorder %s30, 0
      %p329 = por %p327, %p328
      %p330 = scmp.ne.s32.totalorder %s316, %s317
      %p331 = scmp.eq.s32.totalorder %s31, 1
      %p332 = por %p330, %p331
      %p334 = scmp.ne.s32.totalorder %s317, %s333
      %p335 = scmp.eq.s32.totalorder %s31, 0
      %p336 = por %p334, %p335
      %p337 = scmp.le.s32.totalorder 1, %s25
      %p338 = scmp.lt.s32.totalorder %s25, 3
      %p339 = pnand %p337, %p338
      %p340 = pneg %p339
      // Predicated region
      $region9: #{cnn_usps_forward.1} parent=5 // pred_check
        _
      $region10: #{cnn_usps_forward.1} parent=5 // pred_check_branch
        %342 = sbr.rel (%p339) target = $region12
      $region11: #{cnn_usps_forward.1} parent=5 // pred_region
        %s343 = ssub.s32 %s25, 1
        // Predicated region
        $region13: #{cnn_usps_forward.1} parent=11 // pred_check
          %p344 = pneg %p72
        $region14: #{cnn_usps_forward.1} parent=11 // pred_check_branch
          %346 = sbr.rel (%p344) target = $region16
        $region15: #{cnn_usps_forward.1} parent=11 // pred_region
          _
        $region16: #{cnn_usps_forward.1} parent=11 // pred_fallthru
          _
        // Predicated region
        $region17: #{cnn_usps_forward.1} parent=11 // pred_check
          %p347 = pneg %p93
        $region18: #{cnn_usps_forward.1} parent=11 // pred_check_branch
          %349 = sbr.rel (%p347) target = $region20
        $region19: #{cnn_usps_forward.1} parent=11 // pred_region
          _
        $region20: #{cnn_usps_forward.1} parent=11 // pred_fallthru
          _
        // Predicated region
        $region21: #{cnn_usps_forward.1} parent=11 // pred_check
          %p350 = pneg %p114
        $region22: #{cnn_usps_forward.1} parent=11 // pred_check_branch
          %352 = sbr.rel (%p350) target = $region24
        $region23: #{cnn_usps_forward.1} parent=11 // pred_region
          %354 = vsyncadd [#allocation6], 0
          %s355 = sshll.u32 %s3, 4
          %s356 = int_to_ptr.hbm [resolvable:$true] %s355
          %s357 = sshll.u32 [#allocation5], 4
          %s358 = int_to_ptr.vmem [resolvable:$true] %s357
          %363 = dma.hbm_to_vmem [thread:$0]  %s356, 9216, %s358, [#allocation6], 64, 64, 4
        $region24: #{cnn_usps_forward.1} parent=11 // pred_fallthru
          _
        // Predicated region
        $region25: #{cnn_usps_forward.1} parent=11 // pred_check
          %p364 = pneg %p135
        $region26: #{cnn_usps_forward.1} parent=11 // pred_check_branch
          %366 = sbr.rel (%p364) target = $region28
        $region27: #{cnn_usps_forward.1} parent=11 // pred_region
          _
        $region28: #{cnn_usps_forward.1} parent=11 // pred_fallthru
          _
        // Predicated region
        $region29: #{cnn_usps_forward.1} parent=11 // pred_check
          %p367 = pneg %p156
        $region30: #{cnn_usps_forward.1} parent=11 // pred_check_branch
          %369 = sbr.rel (%p367) target = $region32
        $region31: #{cnn_usps_forward.1} parent=11 // pred_region
          %371 = vsyncadd [#allocation9], 0
          %s372 = sshll.u32 %s5, 4
          %s373 = int_to_ptr.hbm [resolvable:$true] %s372
          %s374 = sshll.u32 [#allocation8], 4
          %s375 = int_to_ptr.vmem [resolvable:$true] %s374
          %380 = dma.hbm_to_vmem [thread:$0]  %s373, 9216, %s375, [#allocation9], 64, 64, 4
        $region32: #{cnn_usps_forward.1} parent=11 // pred_fallthru
          _
        // Predicated region
        $region33: #{cnn_usps_forward.1} parent=11 // pred_check
          %p381 = pneg %p177
        $region34: #{cnn_usps_forward.1} parent=11 // pred_check_branch
          %383 = sbr.rel (%p381) target = $region36
        $region35: #{cnn_usps_forward.1} parent=11 // pred_region
          _
        $region36: #{cnn_usps_forward.1} parent=11 // pred_fallthru
          _
        // Predicated region
        $region37: #{cnn_usps_forward.1} parent=11 // pred_check
          %p384 = pneg %p198
        $region38: #{cnn_usps_forward.1} parent=11 // pred_check_branch
          %386 = sbr.rel (%p384) target = $region40
        $region39: #{cnn_usps_forward.1} parent=11 // pred_region
          %388 = vsyncadd [#allocation9], 0
          %s389 = sshll.u32 %s7, 4
          %s390 = int_to_ptr.hbm [resolvable:$true] %s389
          %s391 = sshll.u32 [#allocation10], 4
          %s392 = int_to_ptr.vmem [resolvable:$true] %s391
          %397 = dma.hbm_to_vmem [thread:$0]  %s390, 9216, %s392, [#allocation9], 64, 64, 4
        $region40: #{cnn_usps_forward.1} parent=11 // pred_fallthru
          _
        // Predicated region
        $region41: #{cnn_usps_forward.1} parent=11 // pred_check
          %p398 = pneg %p219
        $region42: #{cnn_usps_forward.1} parent=11 // pred_check_branch
          %400 = sbr.rel (%p398) target = $region44
        $region43: #{cnn_usps_forward.1} parent=11 // pred_region
          _
        $region44: #{cnn_usps_forward.1} parent=11 // pred_fallthru
          _
        // Predicated region
        $region45: #{cnn_usps_forward.1} parent=11 // pred_check
          %p401 = pneg %p240
        $region46: #{cnn_usps_forward.1} parent=11 // pred_check_branch
          %403 = sbr.rel (%p401) target = $region48
        $region47: #{cnn_usps_forward.1} parent=11 // pred_region
          %405 = vsyncadd [#allocation12], 0
          %s406 = sshll.u32 %s9, 4
          %s407 = int_to_ptr.hbm [resolvable:$true] %s406
          %s408 = sshll.u32 [#allocation11], 4
          %s409 = int_to_ptr.vmem [resolvable:$true] %s408
          %414 = dma.hbm_to_vmem [thread:$0]  %s407, 4096, %s409, [#allocation12], 64, 64, 4
        $region48: #{cnn_usps_forward.1} parent=11 // pred_fallthru
          _
        // Predicated region
        $region49: #{cnn_usps_forward.1} parent=11 // pred_check
          %p415 = pneg %p261
        $region50: #{cnn_usps_forward.1} parent=11 // pred_check_branch
          %417 = sbr.rel (%p415) target = $region52
        $region51: #{cnn_usps_forward.1} parent=11 // pred_region
          _
        $region52: #{cnn_usps_forward.1} parent=11 // pred_fallthru
          _
        // Predicated region
        $region53: #{cnn_usps_forward.1} parent=11 // pred_check
          %p418 = pneg %p282
        $region54: #{cnn_usps_forward.1} parent=11 // pred_check_branch
          %420 = sbr.rel (%p418) target = $region56
        $region55: #{cnn_usps_forward.1} parent=11 // pred_region
          _
        $region56: #{cnn_usps_forward.1} parent=11 // pred_fallthru
          _
        // Predicated region
        $region57: #{cnn_usps_forward.1} parent=11 // pred_check
          %p421 = pneg %p303
        $region58: #{cnn_usps_forward.1} parent=11 // pred_check_branch
          %423 = sbr.rel (%p421) target = $region60
        $region59: #{cnn_usps_forward.1} parent=11 // pred_region
          _
        $region60: #{cnn_usps_forward.1} parent=11 // pred_fallthru
          _
      $region12: #{cnn_usps_forward.1} parent=5 // pred_fallthru
        _
      %p424 = scmp.lt.s32.totalorder %s25, 2
      // Predicated region
      $region61: #{cnn_usps_forward.1} parent=5 // pred_check
        %p425 = pneg %p424
      $region62: #{cnn_usps_forward.1} parent=5 // pred_check_branch
        %427 = sbr.rel (%p425) target = $region64
      $region63: #{cnn_usps_forward.1} parent=5 // pred_region
        // Predicated region
        $region65: #{cnn_usps_forward.1} parent=63 // pred_check
          %p428 = pneg %p45
        $region66: #{cnn_usps_forward.1} parent=63 // pred_check_branch
          %430 = sbr.rel (%p428) target = $region68
        $region67: #{cnn_usps_forward.1} parent=63 // pred_region
          %p431 = scmp.lt.s32.totalorder %s25, 1
          %s432 = scalar_select %p431, %s25, 1
          %s433 = smul.addr %s432, 41
          %s434 = smul.addr %s433, 8
          %s435 = scalar_lea.vmem %s0, %s434
        $region68: #{cnn_usps_forward.1} parent=63 // pred_fallthru
          _
      $region64: #{cnn_usps_forward.1} parent=5 // pred_fallthru
        _
      %p436 = scmp.le.s32.totalorder 1, %s25
      %p437 = scmp.lt.s32.totalorder %s25, 3
      %p438 = pnand %p436, %p437
      %p439 = pneg %p438
      // Predicated region
      $region69: #{cnn_usps_forward.1} parent=5 // pred_check
        _
      $region70: #{cnn_usps_forward.1} parent=5 // pred_check_branch
        %441 = sbr.rel (%p438) target = $region72
      $region71: #{cnn_usps_forward.1} parent=5 // pred_region
        %s442 = ssub.s32 %s25, 1
        // Predicated region
        $region73: #{cnn_usps_forward.1} parent=71 // pred_check
          %p443 = pneg %p114
        $region74: #{cnn_usps_forward.1} parent=71 // pred_check_branch
          %445 = sbr.rel (%p443) target = $region76
        $region75: #{cnn_usps_forward.1} parent=71 // pred_region
          %447 = dma.done [#allocation6], 9216
        $region76: #{cnn_usps_forward.1} parent=71 // pred_fallthru
          _
        // Predicated region
        $region77: #{cnn_usps_forward.1} parent=71 // pred_check
          %p448 = pneg %p156
        $region78: #{cnn_usps_forward.1} parent=71 // pred_check_branch
          %450 = sbr.rel (%p448) target = $region80
        $region79: #{cnn_usps_forward.1} parent=71 // pred_region
          %452 = dma.done [#allocation9], 9216
        $region80: #{cnn_usps_forward.1} parent=71 // pred_fallthru
          _
        // Predicated region
        $region81: #{cnn_usps_forward.1} parent=71 // pred_check
          %p453 = pneg %p198
        $region82: #{cnn_usps_forward.1} parent=71 // pred_check_branch
          %455 = sbr.rel (%p453) target = $region84
        $region83: #{cnn_usps_forward.1} parent=71 // pred_region
          %457 = dma.done [#allocation9], 9216
        $region84: #{cnn_usps_forward.1} parent=71 // pred_fallthru
          _
        // Predicated region
        $region85: #{cnn_usps_forward.1} parent=71 // pred_check
          %p458 = pneg %p240
        $region86: #{cnn_usps_forward.1} parent=71 // pred_check_branch
          %460 = sbr.rel (%p458) target = $region88
        $region87: #{cnn_usps_forward.1} parent=71 // pred_region
          %462 = dma.done [#allocation12], 4096
        $region88: #{cnn_usps_forward.1} parent=71 // pred_fallthru
          _
        %p463 = scmp.lt.s32.totalorder %s30, 1
        %s464 = scalar_select %p463, %s30, 1
        %s465 = smul.addr %s464, 41
        %s466 = smul.addr %s465, 8
        %s467 = scalar_lea.vmem %s0, %s466
        %p468 = pneg %p51
        %p469 = pneg %p48
        %p470 = pneg %p72
        %p471 = pneg %p69
        %p472 = pneg %p93
        %p473 = pneg %p90
        %p474 = pneg %p114
        %p475 = pneg %p111
        %p476 = pneg %p135
        %p477 = pneg %p132
        %p478 = pneg %p156
        %p479 = pneg %p153
        %p480 = pneg %p177
        %p481 = pneg %p174
        %p482 = pneg %p198
        %p483 = pneg %p195
        %p484 = pneg %p219
        %p485 = pneg %p216
        %p486 = pneg %p240
        %p487 = pneg %p237
        %p488 = pneg %p261
        %p489 = pneg %p258
        %p490 = pneg %p282
        %p491 = pneg %p279
        %p492 = pneg %p303
        %p493 = pneg %p300
        %p494 = pneg %p329
        %p495 = pneg %p326
        %s496 = sand.u32 %s316, 1
        %s497 = scalar_lea.sflag [#allocation7], %s496
        %s498 = sand.u32 %s316, 1
        %s499 = scalar_lea.vmem [#allocation13], %s498
        %p500 = scmp.lt.s32.totalorder %s30, 1
        %s501 = scalar_select %p500, %s30, 1
        %s502 = smul.addr %s501, 41
        %s503 = smul.addr %s502, 8
        %s504 = scalar_lea.vmem %s0, %s503
        %505 = vst [vmem:[#allocation2] sm:$0xff] 0.0
        %506 = vst [vmem:[#allocation2 + $0x8] sm:$0xff] 0.0
        %507 = vst [vmem:[#allocation2 + $0x10] sm:$0xff] 0.0
        %508 = vst [vmem:[#allocation2 + $0x18] sm:$0xff] 0.0
        %509 = vst [vmem:[#allocation2 + $0x20] sm:$0xff] 0.0
        %510 = vst [vmem:[#allocation2 + $0x28] sm:$0xff] 0.0
        %511 = vst [vmem:[#allocation2 + $0x30] sm:$0xff] 0.0
        %512 = vst [vmem:[#allocation2 + $0x38] sm:$0xff] 0.0
        %513 = vst [vmem:[#allocation2 + $0x40] sm:$0xff] 0.0
        %514 = vst [vmem:[#allocation2 + $0x48] sm:$0xff] 0.0
        %515 = vst [vmem:[#allocation2 + $0x50] sm:$0xff] 0.0
        %516 = vst [vmem:[#allocation2 + $0x58] sm:$0xff] 0.0
        %517 = vst [vmem:[#allocation2 + $0x60] sm:$0xff] 0.0
        %518 = vst [vmem:[#allocation2 + $0x68] sm:$0xff] 0.0
        %519 = vst [vmem:[#allocation2 + $0x70] sm:$0xff] 0.0
        %520 = vst [vmem:[#allocation2 + $0x78] sm:$0xff] 0.0
        %521 = vst [vmem:[#allocation2 + $0x80] sm:$0xff] 0.0
        %522 = vst [vmem:[#allocation2 + $0x88] sm:$0xff] 0.0
        %523 = vst [vmem:[#allocation2 + $0x90] sm:$0xff] 0.0
        %524 = vst [vmem:[#allocation2 + $0x98] sm:$0xff] 0.0
        %525 = vst [vmem:[#allocation2 + $0xa0] sm:$0xff] 0.0
        %526 = vst [vmem:[#allocation2 + $0xa8] sm:$0xff] 0.0
        %527 = vst [vmem:[#allocation2 + $0xb0] sm:$0xff] 0.0
        %528 = vst [vmem:[#allocation2 + $0xb8] sm:$0xff] 0.0
        %529 = vst [vmem:[#allocation2 + $0xc0] sm:$0xff] 0.0
        %530 = vst [vmem:[#allocation2 + $0xc8] sm:$0xff] 0.0
        %531 = vst [vmem:[#allocation2 + $0xd0] sm:$0xff] 0.0
        %532 = vst [vmem:[#allocation2 + $0xd8] sm:$0xff] 0.0
        %533 = vst [vmem:[#allocation2 + $0xe0] sm:$0xff] 0.0
        %534 = vst [vmem:[#allocation2 + $0xe8] sm:$0xff] 0.0
        %535 = vst [vmem:[#allocation2 + $0xf0] sm:$0xff] 0.0
        %536 = vst [vmem:[#allocation2 + $0xf8] sm:$0xff] 0.0
        %537 = vst [vmem:[#allocation2 + $0x100] sm:$0xff] 0.0
        %538 = vst [vmem:[#allocation2 + $0x108] sm:$0xff] 0.0
        %539 = vst [vmem:[#allocation2 + $0x110] sm:$0xff] 0.0
        %540 = vst [vmem:[#allocation2 + $0x118] sm:$0xff] 0.0
        %541 = vst [vmem:[#allocation2 + $0x120] sm:$0xff] 0.0
        %542 = vst [vmem:[#allocation2 + $0x128] sm:$0xff] 0.0
        %543 = vst [vmem:[#allocation2 + $0x130] sm:$0xff] 0.0
        %544 = vst [vmem:[#allocation2 + $0x138] sm:$0xff] 0.0
        %545 = vst [vmem:[#allocation2 + $0x140] sm:$0xff] 0.0
        %546 = vst [vmem:[#allocation2 + $0x148] sm:$0xff] 0.0
        %547 = vst [vmem:[#allocation2 + $0x150] sm:$0xff] 0.0
        %548 = vst [vmem:[#allocation2 + $0x158] sm:$0xff] 0.0
        %549 = vst [vmem:[#allocation2 + $0x160] sm:$0xff] 0.0
        %550 = vst [vmem:[#allocation2 + $0x168] sm:$0xff] 0.0
        %v551 = vld [vmem:[%s504] sm:$0xff]
        %v552 = vld [vmem:[%s504 + $0x8] sm:$0xff]
        %v553 = vld [vmem:[%s504 + $0x10] sm:$0xff]
        %v554 = vld [vmem:[%s504 + $0x18] sm:$0xff]
        %v555 = vld [vmem:[%s504 + $0x20] sm:$0xff]
        %v556 = vld [vmem:[%s504 + $0x28] sm:$0xff]
        %v557 = vld [vmem:[%s504 + $0x30] sm:$0xff]
        %v558 = vld [vmem:[%s504 + $0x38] sm:$0xff]
        %v559 = vld [vmem:[%s504 + $0x40] sm:$0xff]
        %v560 = vld [vmem:[%s504 + $0x48] sm:$0xff]
        %v561 = vld [vmem:[%s504 + $0x50] sm:$0xff]
        %v562 = vld [vmem:[%s504 + $0x58] sm:$0xff]
        %v563 = vld [vmem:[%s504 + $0x60] sm:$0xff]
        %v564 = vld [vmem:[%s504 + $0x68] sm:$0xff]
        %v565 = vld [vmem:[%s504 + $0x70] sm:$0xff]
        %v566 = vld [vmem:[%s504 + $0x78] sm:$0xff]
        %v567 = vld [vmem:[%s504 + $0x80] sm:$0xff]
        %v568 = vld [vmem:[%s504 + $0x88] sm:$0xff]
        %v569 = vld [vmem:[%s504 + $0x90] sm:$0xff]
        %v570 = vld [vmem:[%s504 + $0x98] sm:$0xff]
        %v571 = vld [vmem:[%s504 + $0xa0] sm:$0xff]
        %v572 = vld [vmem:[%s504 + $0xa8] sm:$0xff]
        %v573 = vld [vmem:[%s504 + $0xb0] sm:$0xff]
        %v574 = vld [vmem:[%s504 + $0xb8] sm:$0xff]
        %v575 = vld [vmem:[%s504 + $0xc0] sm:$0xff]
        %v576 = vld [vmem:[%s504 + $0xc8] sm:$0xff]
        %v577 = vld [vmem:[%s504 + $0xd0] sm:$0xff]
        %v578 = vld [vmem:[%s504 + $0xd8] sm:$0xff]
        %v579 = vld [vmem:[%s504 + $0xe0] sm:$0xff]
        %v580 = vld [vmem:[%s504 + $0xe8] sm:$0xff]
        %v581 = vld [vmem:[%s504 + $0xf0] sm:$0xff]
        %v582 = vld [vmem:[%s504 + $0xf8] sm:$0xff]
        %v583 = vld [vmem:[%s504 + $0x100] sm:$0xff]
        %v584 = vld [vmem:[%s504 + $0x108] sm:$0xff]
        %v585 = vld [vmem:[%s504 + $0x110] sm:$0xff]
        %v586 = vld [vmem:[%s504 + $0x118] sm:$0xff]
        %v587 = vld [vmem:[%s504 + $0x120] sm:$0xff]
        %v588 = vld [vmem:[%s504 + $0x128] sm:$0xff]
        %v589 = vld [vmem:[%s504 + $0x130] sm:$0xff]
        %v590 = vld [vmem:[%s504 + $0x138] sm:$0xff]
        %v591 = vld [vmem:[%s504 + $0x140] sm:$0xf]
        %vm592 = vcmask 7168
        %593 = vst.msk [vmem:[#allocation2 + $0x13] sm:$0xff] %vm592, %v551
        %594 = vst.msk [vmem:[#allocation2 + $0x1b] sm:$0xff] %vm592, %v552
        %595 = vst.msk [vmem:[#allocation2 + $0x23] sm:$0xff] %vm592, %v553
        %596 = vst.msk [vmem:[#allocation2 + $0x2b] sm:$0xff] %vm592, %v554
        %597 = vst.msk [vmem:[#allocation2 + $0x33] sm:$0xff] %vm592, %v555
        %598 = vst.msk [vmem:[#allocation2 + $0x3b] sm:$0xff] %vm592, %v556
        %599 = vst.msk [vmem:[#allocation2 + $0x43] sm:$0xff] %vm592, %v557
        %600 = vst.msk [vmem:[#allocation2 + $0x4b] sm:$0xff] %vm592, %v558
        %601 = vst.msk [vmem:[#allocation2 + $0x53] sm:$0xff] %vm592, %v559
        %602 = vst.msk [vmem:[#allocation2 + $0x5b] sm:$0xff] %vm592, %v560
        %603 = vst.msk [vmem:[#allocation2 + $0x63] sm:$0xff] %vm592, %v561
        %604 = vst.msk [vmem:[#allocation2 + $0x6b] sm:$0xff] %vm592, %v562
        %605 = vst.msk [vmem:[#allocation2 + $0x73] sm:$0xff] %vm592, %v563
        %606 = vst.msk [vmem:[#allocation2 + $0x7b] sm:$0xff] %vm592, %v564
        %607 = vst.msk [vmem:[#allocation2 + $0x83] sm:$0xff] %vm592, %v565
        %608 = vst.msk [vmem:[#allocation2 + $0x8b] sm:$0xff] %vm592, %v566
        %609 = vst.msk [vmem:[#allocation2 + $0x93] sm:$0xff] %vm592, %v567
        %610 = vst.msk [vmem:[#allocation2 + $0x9b] sm:$0xff] %vm592, %v568
        %611 = vst.msk [vmem:[#allocation2 + $0xa3] sm:$0xff] %vm592, %v569
        %612 = vst.msk [vmem:[#allocation2 + $0xab] sm:$0xff] %vm592, %v570
        %613 = vst.msk [vmem:[#allocation2 + $0xb3] sm:$0xff] %vm592, %v571
        %614 = vst.msk [vmem:[#allocation2 + $0xbb] sm:$0xff] %vm592, %v572
        %615 = vst.msk [vmem:[#allocation2 + $0xc3] sm:$0xff] %vm592, %v573
        %616 = vst.msk [vmem:[#allocation2 + $0xcb] sm:$0xff] %vm592, %v574
        %617 = vst.msk [vmem:[#allocation2 + $0xd3] sm:$0xff] %vm592, %v575
        %618 = vst.msk [vmem:[#allocation2 + $0xdb] sm:$0xff] %vm592, %v576
        %619 = vst.msk [vmem:[#allocation2 + $0xe3] sm:$0xff] %vm592, %v577
        %620 = vst.msk [vmem:[#allocation2 + $0xeb] sm:$0xff] %vm592, %v578
        %621 = vst.msk [vmem:[#allocation2 + $0xf3] sm:$0xff] %vm592, %v579
        %622 = vst.msk [vmem:[#allocation2 + $0xfb] sm:$0xff] %vm592, %v580
        %623 = vst.msk [vmem:[#allocation2 + $0x103] sm:$0xff] %vm592, %v581
        %624 = vst.msk [vmem:[#allocation2 + $0x10b] sm:$0xff] %vm592, %v582
        %625 = vst.msk [vmem:[#allocation2 + $0x113] sm:$0xff] %vm592, %v583
        %626 = vst.msk [vmem:[#allocation2 + $0x11b] sm:$0xff] %vm592, %v584
        %627 = vst.msk [vmem:[#allocation2 + $0x123] sm:$0xff] %vm592, %v585
        %628 = vst.msk [vmem:[#allocation2 + $0x12b] sm:$0xff] %vm592, %v586
        %629 = vst.msk [vmem:[#allocation2 + $0x133] sm:$0xff] %vm592, %v587
        %630 = vst.msk [vmem:[#allocation2 + $0x13b] sm:$0xff] %vm592, %v588
        %631 = vst.msk [vmem:[#allocation2 + $0x143] sm:$0xff] %vm592, %v589
        %632 = vst.msk [vmem:[#allocation2 + $0x14b] sm:$0xff] %vm592, %v590
        %vm633 = vcmask 3072
        %634 = vst.msk [vmem:[#allocation2 + $0x153] sm:$0xf] %vm633, %v591
        %v635 = vld [vmem:[#allocation2] sm:$0xff]
        %v636 = vld [vmem:[#allocation2 + $0x8] sm:$0xff]
        %v637 = vld [vmem:[#allocation2 + $0x10] sm:$0xff]
        %v638 = vld [vmem:[#allocation2 + $0x18] sm:$0xff]
        %v639 = vld [vmem:[#allocation2 + $0x20] sm:$0xff]
        %v640 = vld [vmem:[#allocation2 + $0x28] sm:$0xff]
        %v641 = vld [vmem:[#allocation2 + $0x30] sm:$0xff]
        %v642 = vld [vmem:[#allocation2 + $0x38] sm:$0xff]
        %v643 = vld [vmem:[#allocation2 + $0x40] sm:$0xff]
        %v644 = vld [vmem:[#allocation2 + $0x48] sm:$0xff]
        %v645 = vld [vmem:[#allocation2 + $0x50] sm:$0xff]
        %v646 = vld [vmem:[#allocation2 + $0x58] sm:$0xff]
        %v647 = vld [vmem:[#allocation2 + $0x60] sm:$0xff]
        %v648 = vld [vmem:[#allocation2 + $0x68] sm:$0xff]
        %v649 = vld [vmem:[#allocation2 + $0x70] sm:$0xff]
        %v650 = vld [vmem:[#allocation2 + $0x78] sm:$0xff]
        %v651 = vld [vmem:[#allocation2 + $0x80] sm:$0xff]
        %v652 = vld [vmem:[#allocation2 + $0x88] sm:$0xff]
        %v653 = vld [vmem:[#allocation2 + $0x90] sm:$0xff]
        %v654 = vld [vmem:[#allocation2 + $0x98] sm:$0xff]
        %v655 = vld [vmem:[#allocation2 + $0xa0] sm:$0xff]
        %v656 = vld [vmem:[#allocation2 + $0xa8] sm:$0xff]
        %v657 = vld [vmem:[#allocation2 + $0xb0] sm:$0xff]
        %v658 = vld [vmem:[#allocation2 + $0xb8] sm:$0xff]
        %v659 = vld [vmem:[#allocation2 + $0xc0] sm:$0xff]
        %v660 = vld [vmem:[#allocation2 + $0xc8] sm:$0xff]
        %v661 = vld [vmem:[#allocation2 + $0xd0] sm:$0xff]
        %v662 = vld [vmem:[#allocation2 + $0xd8] sm:$0xff]
        %v663 = vld [vmem:[#allocation2 + $0xe0] sm:$0xff]
        %v664 = vld [vmem:[#allocation2 + $0xe8] sm:$0xff]
        %v665 = vld [vmem:[#allocation2 + $0xf0] sm:$0xff]
        %v666 = vld [vmem:[#allocation2 + $0xf8] sm:$0xff]
        %v667 = vld [vmem:[#allocation2 + $0x100] sm:$0xff]
        %v668 = vld [vmem:[#allocation2 + $0x108] sm:$0xff]
        %v669 = vld [vmem:[#allocation2 + $0x110] sm:$0xff]
        %v670 = vld [vmem:[#allocation2 + $0x118] sm:$0xff]
        %v671 = vld [vmem:[#allocation2 + $0x120] sm:$0xff]
        %v672 = vld [vmem:[#allocation2 + $0x128] sm:$0xff]
        %v673 = vld [vmem:[#allocation2 + $0x130] sm:$0xff]
        %v674 = vld [vmem:[#allocation2 + $0x138] sm:$0xff]
        %v675 = vld [vmem:[#allocation2 + $0x140] sm:$0xf]
        %v676 = vpack.c.bf16 %v636, %v635
        %v677 = vpack.c.bf16 %v638, %v637
        %v678 = vpack.c.bf16 %v640, %v639
        %v679 = vpack.c.bf16 %v642, %v641
        %v680 = vpack.c.bf16 %v644, %v643
        %v681 = vpack.c.bf16 %v646, %v645
        %v682 = vpack.c.bf16 %v648, %v647
        %v683 = vpack.c.bf16 %v650, %v649
        %v684 = vpack.c.bf16 %v652, %v651
        %v685 = vpack.c.bf16 %v654, %v653
        %v686 = vpack.c.bf16 %v656, %v655
        %v687 = vpack.c.bf16 %v658, %v657
        %v688 = vpack.c.bf16 %v660, %v659
        %v689 = vpack.c.bf16 %v662, %v661
        %v690 = vpack.c.bf16 %v664, %v663
        %v691 = vpack.c.bf16 %v666, %v665
        %v692 = vpack.c.bf16 %v668, %v667
        %v693 = vpack.c.bf16 %v670, %v669
        %v694 = vpack.c.bf16 %v672, %v671
        %v695 = vpack.c.bf16 %v674, %v673
        %v696 = vpack.c.bf16 %v675, %v675
        %v697 = vld [vmem:[%s1] sm:$0xf]
        %v698 = vld [vmem:[%s1 + $0x4] sm:$0xf]
        %v699 = vld [vmem:[%s1 + $0x8] sm:$0xf]
        %v700 = vld [vmem:[%s1 + $0xc] sm:$0xf]
        %v701 = vld [vmem:[%s1 + $0x10] sm:$0xf]
        %v702 = vld [vmem:[%s1 + $0x14] sm:$0xf]
        %v703 = vld [vmem:[%s1 + $0x18] sm:$0xf]
        %v704 = vld [vmem:[%s1 + $0x1c] sm:$0xf]
        %v705 = vld [vmem:[%s1 + $0x20] sm:$0xf]
        %v706 = vld [vmem:[%s1 + $0x24] sm:$0xf]
        %v707 = vld [vmem:[%s1 + $0x28] sm:$0xf]
        %v708 = vld [vmem:[%s1 + $0x2c] sm:$0xf]
        %v709 = vld [vmem:[%s1 + $0x30] sm:$0xf]
        %v710 = vld [vmem:[%s1 + $0x34] sm:$0xf]
        %v711 = vld [vmem:[%s1 + $0x38] sm:$0xf]
        %v712 = vld [vmem:[%s1 + $0x3c] sm:$0xf]
        %v713 = vld [vmem:[#allocation2 + $0x1] sm:$0xff]
        %v714 = vld [vmem:[#allocation2 + $0x9] sm:$0xff]
        %v715 = vld [vmem:[#allocation2 + $0x11] sm:$0xff]
        %v716 = vld [vmem:[#allocation2 + $0x19] sm:$0xff]
        %v717 = vld [vmem:[#allocation2 + $0x21] sm:$0xff]
        %v718 = vld [vmem:[#allocation2 + $0x29] sm:$0xff]
        %v719 = vld [vmem:[#allocation2 + $0x31] sm:$0xff]
        %v720 = vld [vmem:[#allocation2 + $0x39] sm:$0xff]
        %v721 = vld [vmem:[#allocation2 + $0x41] sm:$0xff]
        %v722 = vld [vmem:[#allocation2 + $0x49] sm:$0xff]
        %v723 = vld [vmem:[#allocation2 + $0x51] sm:$0xff]
        %v724 = vld [vmem:[#allocation2 + $0x59] sm:$0xff]
        %v725 = vld [vmem:[#allocation2 + $0x61] sm:$0xff]
        %v726 = vld [vmem:[#allocation2 + $0x69] sm:$0xff]
        %v727 = vld [vmem:[#allocation2 + $0x71] sm:$0xff]
        %v728 = vld [vmem:[#allocation2 + $0x79] sm:$0xff]
        %v729 = vld [vmem:[#allocation2 + $0x81] sm:$0xff]
        %v730 = vld [vmem:[#allocation2 + $0x89] sm:$0xff]
        %v731 = vld [vmem:[#allocation2 + $0x91] sm:$0xff]
        %v732 = vld [vmem:[#allocation2 + $0x99] sm:$0xff]
        %v733 = vld [vmem:[#allocation2 + $0xa1] sm:$0xff]
        %v734 = vld [vmem:[#allocation2 + $0xa9] sm:$0xff]
        %v735 = vld [vmem:[#allocation2 + $0xb1] sm:$0xff]
        %v736 = vld [vmem:[#allocation2 + $0xb9] sm:$0xff]
        %v737 = vld [vmem:[#allocation2 + $0xc1] sm:$0xff]
        %v738 = vld [vmem:[#allocation2 + $0xc9] sm:$0xff]
        %v739 = vld [vmem:[#allocation2 + $0xd1] sm:$0xff]
        %v740 = vld [vmem:[#allocation2 + $0xd9] sm:$0xff]
        %v741 = vld [vmem:[#allocation2 + $0xe1] sm:$0xff]
        %v742 = vld [vmem:[#allocation2 + $0xe9] sm:$0xff]
        %v743 = vld [vmem:[#allocation2 + $0xf1] sm:$0xff]
        %v744 = vld [vmem:[#allocation2 + $0xf9] sm:$0xff]
        %v745 = vld [vmem:[#allocation2 + $0x101] sm:$0xff]
        %v746 = vld [vmem:[#allocation2 + $0x109] sm:$0xff]
        %v747 = vld [vmem:[#allocation2 + $0x111] sm:$0xff]
        %v748 = vld [vmem:[#allocation2 + $0x119] sm:$0xff]
        %v749 = vld [vmem:[#allocation2 + $0x121] sm:$0xff]
        %v750 = vld [vmem:[#allocation2 + $0x129] sm:$0xff]
        %v751 = vld [vmem:[#allocation2 + $0x131] sm:$0xff]
        %v752 = vld [vmem:[#allocation2 + $0x139] sm:$0xff]
        %v753 = vld [vmem:[#allocation2 + $0x141] sm:$0xf]
        %v754 = vpack.c.bf16 %v714, %v713
        %v755 = vpack.c.bf16 %v716, %v715
        %v756 = vpack.c.bf16 %v718, %v717
        %v757 = vpack.c.bf16 %v720, %v719
        %v758 = vpack.c.bf16 %v722, %v721
        %v759 = vpack.c.bf16 %v724, %v723
        %v760 = vpack.c.bf16 %v726, %v725
        %v761 = vpack.c.bf16 %v728, %v727
        %v762 = vpack.c.bf16 %v730, %v729
        %v763 = vpack.c.bf16 %v732, %v731
        %v764 = vpack.c.bf16 %v734, %v733
        %v765 = vpack.c.bf16 %v736, %v735
        %v766 = vpack.c.bf16 %v738, %v737
        %v767 = vpack.c.bf16 %v740, %v739
        %v768 = vpack.c.bf16 %v742, %v741
        %v769 = vpack.c.bf16 %v744, %v743
        %v770 = vpack.c.bf16 %v746, %v745
        %v771 = vpack.c.bf16 %v748, %v747
        %v772 = vpack.c.bf16 %v750, %v749
        %v773 = vpack.c.bf16 %v752, %v751
        %v774 = vpack.c.bf16 %v753, %v753
        %s775 = scalar_lea.vmem %s1, 64
        %v776 = vld [vmem:[%s775] sm:$0xf]
        %v777 = vld [vmem:[%s775 + $0x4] sm:$0xf]
        %v778 = vld [vmem:[%s775 + $0x8] sm:$0xf]
        %v779 = vld [vmem:[%s775 + $0xc] sm:$0xf]
        %v780 = vld [vmem:[%s775 + $0x10] sm:$0xf]
        %v781 = vld [vmem:[%s775 + $0x14] sm:$0xf]
        %v782 = vld [vmem:[%s775 + $0x18] sm:$0xf]
        %v783 = vld [vmem:[%s775 + $0x1c] sm:$0xf]
        %v784 = vld [vmem:[%s775 + $0x20] sm:$0xf]
        %v785 = vld [vmem:[%s775 + $0x24] sm:$0xf]
        %v786 = vld [vmem:[%s775 + $0x28] sm:$0xf]
        %v787 = vld [vmem:[%s775 + $0x2c] sm:$0xf]
        %v788 = vld [vmem:[%s775 + $0x30] sm:$0xf]
        %v789 = vld [vmem:[%s775 + $0x34] sm:$0xf]
        %v790 = vld [vmem:[%s775 + $0x38] sm:$0xf]
        %v791 = vld [vmem:[%s775 + $0x3c] sm:$0xf]
        %v808 = vunpack.c.l.b16 %v776
        %v809 = vunpack.c.l.b16 %v777
        %v810 = vunpack.c.l.b16 %v778
        %v811 = vunpack.c.l.b16 %v779
        %v812 = vunpack.c.l.b16 %v780
        %v813 = vunpack.c.l.b16 %v781
        %v814 = vunpack.c.l.b16 %v782
        %v815 = vunpack.c.l.b16 %v783
        %v816 = vunpack.c.l.b16 %v784
        %v817 = vunpack.c.l.b16 %v785
        %v818 = vunpack.c.l.b16 %v786
        %v819 = vunpack.c.l.b16 %v787
        %v820 = vunpack.c.l.b16 %v788
        %v821 = vunpack.c.l.b16 %v789
        %v822 = vunpack.c.l.b16 %v790
        %v823 = vunpack.c.l.b16 %v791
        %v824 = vpack.c.b16 %v809, %v808
        %v825 = vpack.c.b16 %v811, %v810
        %v826 = vpack.c.b16 %v813, %v812
        %v827 = vpack.c.b16 %v815, %v814
        %v828 = vpack.c.b16 %v817, %v816
        %v829 = vpack.c.b16 %v819, %v818
        %v830 = vpack.c.b16 %v821, %v820
        %v831 = vpack.c.b16 %v823, %v822
        %840 = vmatpush.bf16.msra.mxu0 %v831
        %841 = vmatpush.bf16.msra.mxu0 %v830
        %842 = vmatpush.bf16.msra.mxu0 %v829
        %843 = vmatpush.bf16.msra.mxu0 %v828
        %844 = vmatpush.bf16.msra.mxu0 %v827
        %845 = vmatpush.bf16.msra.mxu0 %v826
        %846 = vmatpush.bf16.msra.mxu0 %v825
        %847 = vmatpush.bf16.msra.mxu0 %v824
        %848 = vmatmul.bf16.gmra.mxu0 %v754
        %v849 = vpop.f32.mrf.mxu0
        %v850 = vadd.f32 0.0, %v849
        %v851 = vpop.f32.mrf.mxu0
        %v852 = vadd.f32 0.0, %v851
        %853 = vmatmul.bf16.gmra.mxu0 %v755
        %v854 = vpop.f32.mrf.mxu0
        %v855 = vadd.f32 0.0, %v854
        %v856 = vpop.f32.mrf.mxu0
        %v857 = vadd.f32 0.0, %v856
        %858 = vmatmul.bf16.gmra.mxu0 %v756
        %v859 = vpop.f32.mrf.mxu0
        %v860 = vadd.f32 0.0, %v859
        %v861 = vpop.f32.mrf.mxu0
        %v862 = vadd.f32 0.0, %v861
        %863 = vmatmul.bf16.gmra.mxu0 %v757
        %v864 = vpop.f32.mrf.mxu0
        %v865 = vadd.f32 0.0, %v864
        %v866 = vpop.f32.mrf.mxu0
        %v867 = vadd.f32 0.0, %v866
        %868 = vmatmul.bf16.gmra.mxu0 %v758
        %v869 = vpop.f32.mrf.mxu0
        %v870 = vadd.f32 0.0, %v869
        %v871 = vpop.f32.mrf.mxu0
        %v872 = vadd.f32 0.0, %v871
        %873 = vmatmul.bf16.gmra.mxu0 %v759
        %v874 = vpop.f32.mrf.mxu0
        %v875 = vadd.f32 0.0, %v874
        %v876 = vpop.f32.mrf.mxu0
        %v877 = vadd.f32 0.0, %v876
        %878 = vmatmul.bf16.gmra.mxu0 %v760
        %v879 = vpop.f32.mrf.mxu0
        %v880 = vadd.f32 0.0, %v879
        %v881 = vpop.f32.mrf.mxu0
        %v882 = vadd.f32 0.0, %v881
        %883 = vmatmul.bf16.gmra.mxu0 %v761
        %v884 = vpop.f32.mrf.mxu0
        %v885 = vadd.f32 0.0, %v884
        %v886 = vpop.f32.mrf.mxu0
        %v887 = vadd.f32 0.0, %v886
        %888 = vmatmul.bf16.gmra.mxu0 %v762
        %v889 = vpop.f32.mrf.mxu0
        %v890 = vadd.f32 0.0, %v889
        %v891 = vpop.f32.mrf.mxu0
        %v892 = vadd.f32 0.0, %v891
        %893 = vmatmul.bf16.gmra.mxu0 %v763
        %v894 = vpop.f32.mrf.mxu0
        %v895 = vadd.f32 0.0, %v894
        %v896 = vpop.f32.mrf.mxu0
        %v897 = vadd.f32 0.0, %v896
        %898 = vmatmul.bf16.gmra.mxu0 %v764
        %v899 = vpop.f32.mrf.mxu0
        %v900 = vadd.f32 0.0, %v899
        %v901 = vpop.f32.mrf.mxu0
        %v902 = vadd.f32 0.0, %v901
        %903 = vmatmul.bf16.gmra.mxu0 %v765
        %v904 = vpop.f32.mrf.mxu0
        %v905 = vadd.f32 0.0, %v904
        %v906 = vpop.f32.mrf.mxu0
        %v907 = vadd.f32 0.0, %v906
        %908 = vmatmul.bf16.gmra.mxu0 %v766
        %v909 = vpop.f32.mrf.mxu0
        %v910 = vadd.f32 0.0, %v909
        %v911 = vpop.f32.mrf.mxu0
        %v912 = vadd.f32 0.0, %v911
        %913 = vmatmul.bf16.gmra.mxu0 %v767
        %v914 = vpop.f32.mrf.mxu0
        %v915 = vadd.f32 0.0, %v914
        %v916 = vpop.f32.mrf.mxu0
        %v917 = vadd.f32 0.0, %v916
        %918 = vmatmul.bf16.gmra.mxu0 %v768
        %v919 = vpop.f32.mrf.mxu0
        %v920 = vadd.f32 0.0, %v919
        %v921 = vpop.f32.mrf.mxu0
        %v922 = vadd.f32 0.0, %v921
        %923 = vmatmul.bf16.gmra.mxu0 %v769
        %v924 = vpop.f32.mrf.mxu0
        %v925 = vadd.f32 0.0, %v924
        %v926 = vpop.f32.mrf.mxu0
        %v927 = vadd.f32 0.0, %v926
        %928 = vmatmul.bf16.gmra.mxu0 %v770
        %v929 = vpop.f32.mrf.mxu0
        %v930 = vadd.f32 0.0, %v929
        %v931 = vpop.f32.mrf.mxu0
        %v932 = vadd.f32 0.0, %v931
        %933 = vmatmul.bf16.gmra.mxu0 %v771
        %v934 = vpop.f32.mrf.mxu0
        %v935 = vadd.f32 0.0, %v934
        %v936 = vpop.f32.mrf.mxu0
        %v937 = vadd.f32 0.0, %v936
        %938 = vmatmul.bf16.gmra.mxu0 %v772
        %v939 = vpop.f32.mrf.mxu0
        %v940 = vadd.f32 0.0, %v939
        %v941 = vpop.f32.mrf.mxu0
        %v942 = vadd.f32 0.0, %v941
        %943 = vmatmul.bf16.gmra.mxu0 %v773
        %v944 = vpop.f32.mrf.mxu0
        %v945 = vadd.f32 0.0, %v944
        %v946 = vpop.f32.mrf.mxu0
        %v947 = vadd.f32 0.0, %v946
        %948 = vmatmul.bf16.gmra.mxu0 %v774
        %v949 = vpop.f32.mrf.mxu0
        %v950 = vadd.f32 0.0, %v949
        %v951 = vpop.f32.mrf.mxu0
        %952 = vdwg.mxu0
        %v969 = vunpack.c.l.b16 %v697
        %v970 = vunpack.c.l.b16 %v698
        %v971 = vunpack.c.l.b16 %v699
        %v972 = vunpack.c.l.b16 %v700
        %v973 = vunpack.c.l.b16 %v701
        %v974 = vunpack.c.l.b16 %v702
        %v975 = vunpack.c.l.b16 %v703
        %v976 = vunpack.c.l.b16 %v704
        %v977 = vunpack.c.l.b16 %v705
        %v978 = vunpack.c.l.b16 %v706
        %v979 = vunpack.c.l.b16 %v707
        %v980 = vunpack.c.l.b16 %v708
        %v981 = vunpack.c.l.b16 %v709
        %v982 = vunpack.c.l.b16 %v710
        %v983 = vunpack.c.l.b16 %v711
        %v984 = vunpack.c.l.b16 %v712
        %v985 = vpack.c.b16 %v970, %v969
        %v986 = vpack.c.b16 %v972, %v971
        %v987 = vpack.c.b16 %v974, %v973
        %v988 = vpack.c.b16 %v976, %v975
        %v989 = vpack.c.b16 %v978, %v977
        %v990 = vpack.c.b16 %v980, %v979
        %v991 = vpack.c.b16 %v982, %v981
        %v992 = vpack.c.b16 %v984, %v983
        %1001 = vmatpush.bf16.msra.mxu0 %v992
        %1002 = vmatpush.bf16.msra.mxu0 %v991
        %1003 = vmatpush.bf16.msra.mxu0 %v990
        %1004 = vmatpush.bf16.msra.mxu0 %v989
        %1005 = vmatpush.bf16.msra.mxu0 %v988
        %1006 = vmatpush.bf16.msra.mxu0 %v987
        %1007 = vmatpush.bf16.msra.mxu0 %v986
        %1008 = vmatpush.bf16.msra.mxu0 %v985
        %1009 = vmatmul.bf16.gmra.mxu0 %v676
        %v1010 = vpop.f32.mrf.mxu0
        %v1011 = vadd.f32 %v850, %v1010
        %v1012 = vpop.f32.mrf.mxu0
        %v1013 = vadd.f32 %v852, %v1012
        %1014 = vmatmul.bf16.gmra.mxu0 %v677
        %v1015 = vpop.f32.mrf.mxu0
        %v1016 = vadd.f32 %v855, %v1015
        %v1017 = vpop.f32.mrf.mxu0
        %v1018 = vadd.f32 %v857, %v1017
        %1019 = vmatmul.bf16.gmra.mxu0 %v678
        %v1020 = vpop.f32.mrf.mxu0
        %v1021 = vadd.f32 %v860, %v1020
        %v1022 = vpop.f32.mrf.mxu0
        %v1023 = vadd.f32 %v862, %v1022
        %1024 = vmatmul.bf16.gmra.mxu0 %v679
        %v1025 = vpop.f32.mrf.mxu0
        %v1026 = vadd.f32 %v865, %v1025
        %v1027 = vpop.f32.mrf.mxu0
        %v1028 = vadd.f32 %v867, %v1027
        %1029 = vmatmul.bf16.gmra.mxu0 %v680
        %v1030 = vpop.f32.mrf.mxu0
        %v1031 = vadd.f32 %v870, %v1030
        %v1032 = vpop.f32.mrf.mxu0
        %v1033 = vadd.f32 %v872, %v1032
        %1034 = vmatmul.bf16.gmra.mxu0 %v681
        %v1035 = vpop.f32.mrf.mxu0
        %v1036 = vadd.f32 %v875, %v1035
        %v1037 = vpop.f32.mrf.mxu0
        %v1038 = vadd.f32 %v877, %v1037
        %1039 = vmatmul.bf16.gmra.mxu0 %v682
        %v1040 = vpop.f32.mrf.mxu0
        %v1041 = vadd.f32 %v880, %v1040
        %v1042 = vpop.f32.mrf.mxu0
        %v1043 = vadd.f32 %v882, %v1042
        %1044 = vmatmul.bf16.gmra.mxu0 %v683
        %v1045 = vpop.f32.mrf.mxu0
        %v1046 = vadd.f32 %v885, %v1045
        %v1047 = vpop.f32.mrf.mxu0
        %v1048 = vadd.f32 %v887, %v1047
        %1049 = vmatmul.bf16.gmra.mxu0 %v684
        %v1050 = vpop.f32.mrf.mxu0
        %v1051 = vadd.f32 %v890, %v1050
        %v1052 = vpop.f32.mrf.mxu0
        %v1053 = vadd.f32 %v892, %v1052
        %1054 = vmatmul.bf16.gmra.mxu0 %v685
        %v1055 = vpop.f32.mrf.mxu0
        %v1056 = vadd.f32 %v895, %v1055
        %v1057 = vpop.f32.mrf.mxu0
        %v1058 = vadd.f32 %v897, %v1057
        %1059 = vmatmul.bf16.gmra.mxu0 %v686
        %v1060 = vpop.f32.mrf.mxu0
        %v1061 = vadd.f32 %v900, %v1060
        %v1062 = vpop.f32.mrf.mxu0
        %v1063 = vadd.f32 %v902, %v1062
        %1064 = vmatmul.bf16.gmra.mxu0 %v687
        %v1065 = vpop.f32.mrf.mxu0
        %v1066 = vadd.f32 %v905, %v1065
        %v1067 = vpop.f32.mrf.mxu0
        %v1068 = vadd.f32 %v907, %v1067
        %1069 = vmatmul.bf16.gmra.mxu0 %v688
        %v1070 = vpop.f32.mrf.mxu0
        %v1071 = vadd.f32 %v910, %v1070
        %v1072 = vpop.f32.mrf.mxu0
        %v1073 = vadd.f32 %v912, %v1072
        %1074 = vmatmul.bf16.gmra.mxu0 %v689
        %v1075 = vpop.f32.mrf.mxu0
        %v1076 = vadd.f32 %v915, %v1075
        %v1077 = vpop.f32.mrf.mxu0
        %v1078 = vadd.f32 %v917, %v1077
        %1079 = vmatmul.bf16.gmra.mxu0 %v690
        %v1080 = vpop.f32.mrf.mxu0
        %v1081 = vadd.f32 %v920, %v1080
        %v1082 = vpop.f32.mrf.mxu0
        %v1083 = vadd.f32 %v922, %v1082
        %1084 = vmatmul.bf16.gmra.mxu0 %v691
        %v1085 = vpop.f32.mrf.mxu0
        %v1086 = vadd.f32 %v925, %v1085
        %v1087 = vpop.f32.mrf.mxu0
        %v1088 = vadd.f32 %v927, %v1087
        %1089 = vmatmul.bf16.gmra.mxu0 %v692
        %v1090 = vpop.f32.mrf.mxu0
        %v1091 = vadd.f32 %v930, %v1090
        %v1092 = vpop.f32.mrf.mxu0
        %v1093 = vadd.f32 %v932, %v1092
        %1094 = vmatmul.bf16.gmra.mxu0 %v693
        %v1095 = vpop.f32.mrf.mxu0
        %v1096 = vadd.f32 %v935, %v1095
        %v1097 = vpop.f32.mrf.mxu0
        %v1098 = vadd.f32 %v937, %v1097
        %1099 = vmatmul.bf16.gmra.mxu0 %v694
        %v1100 = vpop.f32.mrf.mxu0
        %v1101 = vadd.f32 %v940, %v1100
        %v1102 = vpop.f32.mrf.mxu0
        %v1103 = vadd.f32 %v942, %v1102
        %1104 = vmatmul.bf16.gmra.mxu0 %v695
        %v1105 = vpop.f32.mrf.mxu0
        %v1106 = vadd.f32 %v945, %v1105
        %v1107 = vpop.f32.mrf.mxu0
        %v1108 = vadd.f32 %v947, %v1107
        %1109 = vmatmul.bf16.gmra.mxu0 %v696
        %v1110 = vpop.f32.mrf.mxu0
        %v1111 = vadd.f32 %v950, %v1110
        %v1112 = vpop.f32.mrf.mxu0
        %1113 = vdwg.mxu0
        %v1114 = vld [vmem:[#allocation2 + $0x2] sm:$0xff]
        %v1115 = vld [vmem:[#allocation2 + $0xa] sm:$0xff]
        %v1116 = vld [vmem:[#allocation2 + $0x12] sm:$0xff]
        %v1117 = vld [vmem:[#allocation2 + $0x1a] sm:$0xff]
        %v1118 = vld [vmem:[#allocation2 + $0x22] sm:$0xff]
        %v1119 = vld [vmem:[#allocation2 + $0x2a] sm:$0xff]
        %v1120 = vld [vmem:[#allocation2 + $0x32] sm:$0xff]
        %v1121 = vld [vmem:[#allocation2 + $0x3a] sm:$0xff]
        %v1122 = vld [vmem:[#allocation2 + $0x42] sm:$0xff]
        %v1123 = vld [vmem:[#allocation2 + $0x4a] sm:$0xff]
        %v1124 = vld [vmem:[#allocation2 + $0x52] sm:$0xff]
        %v1125 = vld [vmem:[#allocation2 + $0x5a] sm:$0xff]
        %v1126 = vld [vmem:[#allocation2 + $0x62] sm:$0xff]
        %v1127 = vld [vmem:[#allocation2 + $0x6a] sm:$0xff]
        %v1128 = vld [vmem:[#allocation2 + $0x72] sm:$0xff]
        %v1129 = vld [vmem:[#allocation2 + $0x7a] sm:$0xff]
        %v1130 = vld [vmem:[#allocation2 + $0x82] sm:$0xff]
        %v1131 = vld [vmem:[#allocation2 + $0x8a] sm:$0xff]
        %v1132 = vld [vmem:[#allocation2 + $0x92] sm:$0xff]
        %v1133 = vld [vmem:[#allocation2 + $0x9a] sm:$0xff]
        %v1134 = vld [vmem:[#allocation2 + $0xa2] sm:$0xff]
        %v1135 = vld [vmem:[#allocation2 + $0xaa] sm:$0xff]
        %v1136 = vld [vmem:[#allocation2 + $0xb2] sm:$0xff]
        %v1137 = vld [vmem:[#allocation2 + $0xba] sm:$0xff]
        %v1138 = vld [vmem:[#allocation2 + $0xc2] sm:$0xff]
        %v1139 = vld [vmem:[#allocation2 + $0xca] sm:$0xff]
        %v1140 = vld [vmem:[#allocation2 + $0xd2] sm:$0xff]
        %v1141 = vld [vmem:[#allocation2 + $0xda] sm:$0xff]
        %v1142 = vld [vmem:[#allocation2 + $0xe2] sm:$0xff]
        %v1143 = vld [vmem:[#allocation2 + $0xea] sm:$0xff]
        %v1144 = vld [vmem:[#allocation2 + $0xf2] sm:$0xff]
        %v1145 = vld [vmem:[#allocation2 + $0xfa] sm:$0xff]
        %v1146 = vld [vmem:[#allocation2 + $0x102] sm:$0xff]
        %v1147 = vld [vmem:[#allocation2 + $0x10a] sm:$0xff]
        %v1148 = vld [vmem:[#allocation2 + $0x112] sm:$0xff]
        %v1149 = vld [vmem:[#allocation2 + $0x11a] sm:$0xff]
        %v1150 = vld [vmem:[#allocation2 + $0x122] sm:$0xff]
        %v1151 = vld [vmem:[#allocation2 + $0x12a] sm:$0xff]
        %v1152 = vld [vmem:[#allocation2 + $0x132] sm:$0xff]
        %v1153 = vld [vmem:[#allocation2 + $0x13a] sm:$0xff]
        %v1154 = vld [vmem:[#allocation2 + $0x142] sm:$0xf]
        %v1155 = vpack.c.bf16 %v1115, %v1114
        %v1156 = vpack.c.bf16 %v1117, %v1116
        %v1157 = vpack.c.bf16 %v1119, %v1118
        %v1158 = vpack.c.bf16 %v1121, %v1120
        %v1159 = vpack.c.bf16 %v1123, %v1122
        %v1160 = vpack.c.bf16 %v1125, %v1124
        %v1161 = vpack.c.bf16 %v1127, %v1126
        %v1162 = vpack.c.bf16 %v1129, %v1128
        %v1163 = vpack.c.bf16 %v1131, %v1130
        %v1164 = vpack.c.bf16 %v1133, %v1132
        %v1165 = vpack.c.bf16 %v1135, %v1134
        %v1166 = vpack.c.bf16 %v1137, %v1136
        %v1167 = vpack.c.bf16 %v1139, %v1138
        %v1168 = vpack.c.bf16 %v1141, %v1140
        %v1169 = vpack.c.bf16 %v1143, %v1142
        %v1170 = vpack.c.bf16 %v1145, %v1144
        %v1171 = vpack.c.bf16 %v1147, %v1146
        %v1172 = vpack.c.bf16 %v1149, %v1148
        %v1173 = vpack.c.bf16 %v1151, %v1150
        %v1174 = vpack.c.bf16 %v1153, %v1152
        %v1175 = vpack.c.bf16 %v1154, %v1154
        %s1176 = scalar_lea.vmem %s1, 128
        %v1177 = vld [vmem:[%s1176] sm:$0xf]
        %v1178 = vld [vmem:[%s1176 + $0x4] sm:$0xf]
        %v1179 = vld [vmem:[%s1176 + $0x8] sm:$0xf]
        %v1180 = vld [vmem:[%s1176 + $0xc] sm:$0xf]
        %v1181 = vld [vmem:[%s1176 + $0x10] sm:$0xf]
        %v1182 = vld [vmem:[%s1176 + $0x14] sm:$0xf]
        %v1183 = vld [vmem:[%s1176 + $0x18] sm:$0xf]
        %v1184 = vld [vmem:[%s1176 + $0x1c] sm:$0xf]
        %v1185 = vld [vmem:[%s1176 + $0x20] sm:$0xf]
        %v1186 = vld [vmem:[%s1176 + $0x24] sm:$0xf]
        %v1187 = vld [vmem:[%s1176 + $0x28] sm:$0xf]
        %v1188 = vld [vmem:[%s1176 + $0x2c] sm:$0xf]
        %v1189 = vld [vmem:[%s1176 + $0x30] sm:$0xf]
        %v1190 = vld [vmem:[%s1176 + $0x34] sm:$0xf]
        %v1191 = vld [vmem:[%s1176 + $0x38] sm:$0xf]
        %v1192 = vld [vmem:[%s1176 + $0x3c] sm:$0xf]
        %v1209 = vunpack.c.l.b16 %v1177
        %v1210 = vunpack.c.l.b16 %v1178
        %v1211 = vunpack.c.l.b16 %v1179
        %v1212 = vunpack.c.l.b16 %v1180
        %v1213 = vunpack.c.l.b16 %v1181
        %v1214 = vunpack.c.l.b16 %v1182
        %v1215 = vunpack.c.l.b16 %v1183
        %v1216 = vunpack.c.l.b16 %v1184
        %v1217 = vunpack.c.l.b16 %v1185
        %v1218 = vunpack.c.l.b16 %v1186
        %v1219 = vunpack.c.l.b16 %v1187
        %v1220 = vunpack.c.l.b16 %v1188
        %v1221 = vunpack.c.l.b16 %v1189
        %v1222 = vunpack.c.l.b16 %v1190
        %v1223 = vunpack.c.l.b16 %v1191
        %v1224 = vunpack.c.l.b16 %v1192
        %v1225 = vpack.c.b16 %v1210, %v1209
        %v1226 = vpack.c.b16 %v1212, %v1211
        %v1227 = vpack.c.b16 %v1214, %v1213
        %v1228 = vpack.c.b16 %v1216, %v1215
        %v1229 = vpack.c.b16 %v1218, %v1217
        %v1230 = vpack.c.b16 %v1220, %v1219
        %v1231 = vpack.c.b16 %v1222, %v1221
        %v1232 = vpack.c.b16 %v1224, %v1223
        %1241 = vmatpush.bf16.msra.mxu0 %v1232
        %1242 = vmatpush.bf16.msra.mxu0 %v1231
        %1243 = vmatpush.bf16.msra.mxu0 %v1230
        %1244 = vmatpush.bf16.msra.mxu0 %v1229
        %1245 = vmatpush.bf16.msra.mxu0 %v1228
        %1246 = vmatpush.bf16.msra.mxu0 %v1227
        %1247 = vmatpush.bf16.msra.mxu0 %v1226
        %1248 = vmatpush.bf16.msra.mxu0 %v1225
        %1249 = vmatmul.bf16.gmra.mxu0 %v1155
        %v1250 = vpop.f32.mrf.mxu0
        %v1251 = vadd.f32 0.0, %v1250
        %v1252 = vpop.f32.mrf.mxu0
        %v1253 = vadd.f32 0.0, %v1252
        %1254 = vmatmul.bf16.gmra.mxu0 %v1156
        %v1255 = vpop.f32.mrf.mxu0
        %v1256 = vadd.f32 0.0, %v1255
        %v1257 = vpop.f32.mrf.mxu0
        %v1258 = vadd.f32 0.0, %v1257
        %1259 = vmatmul.bf16.gmra.mxu0 %v1157
        %v1260 = vpop.f32.mrf.mxu0
        %v1261 = vadd.f32 0.0, %v1260
        %v1262 = vpop.f32.mrf.mxu0
        %v1263 = vadd.f32 0.0, %v1262
        %1264 = vmatmul.bf16.gmra.mxu0 %v1158
        %v1265 = vpop.f32.mrf.mxu0
        %v1266 = vadd.f32 0.0, %v1265
        %v1267 = vpop.f32.mrf.mxu0
        %v1268 = vadd.f32 0.0, %v1267
        %1269 = vmatmul.bf16.gmra.mxu0 %v1159
        %v1270 = vpop.f32.mrf.mxu0
        %v1271 = vadd.f32 0.0, %v1270
        %v1272 = vpop.f32.mrf.mxu0
        %v1273 = vadd.f32 0.0, %v1272
        %1274 = vmatmul.bf16.gmra.mxu0 %v1160
        %v1275 = vpop.f32.mrf.mxu0
        %v1276 = vadd.f32 0.0, %v1275
        %v1277 = vpop.f32.mrf.mxu0
        %v1278 = vadd.f32 0.0, %v1277
        %1279 = vmatmul.bf16.gmra.mxu0 %v1161
        %v1280 = vpop.f32.mrf.mxu0
        %v1281 = vadd.f32 0.0, %v1280
        %v1282 = vpop.f32.mrf.mxu0
        %v1283 = vadd.f32 0.0, %v1282
        %1284 = vmatmul.bf16.gmra.mxu0 %v1162
        %v1285 = vpop.f32.mrf.mxu0
        %v1286 = vadd.f32 0.0, %v1285
        %v1287 = vpop.f32.mrf.mxu0
        %v1288 = vadd.f32 0.0, %v1287
        %1289 = vmatmul.bf16.gmra.mxu0 %v1163
        %v1290 = vpop.f32.mrf.mxu0
        %v1291 = vadd.f32 0.0, %v1290
        %v1292 = vpop.f32.mrf.mxu0
        %v1293 = vadd.f32 0.0, %v1292
        %1294 = vmatmul.bf16.gmra.mxu0 %v1164
        %v1295 = vpop.f32.mrf.mxu0
        %v1296 = vadd.f32 0.0, %v1295
        %v1297 = vpop.f32.mrf.mxu0
        %v1298 = vadd.f32 0.0, %v1297
        %1299 = vmatmul.bf16.gmra.mxu0 %v1165
        %v1300 = vpop.f32.mrf.mxu0
        %v1301 = vadd.f32 0.0, %v1300
        %v1302 = vpop.f32.mrf.mxu0
        %v1303 = vadd.f32 0.0, %v1302
        %1304 = vmatmul.bf16.gmra.mxu0 %v1166
        %v1305 = vpop.f32.mrf.mxu0
        %v1306 = vadd.f32 0.0, %v1305
        %v1307 = vpop.f32.mrf.mxu0
        %v1308 = vadd.f32 0.0, %v1307
        %1309 = vmatmul.bf16.gmra.mxu0 %v1167
        %v1310 = vpop.f32.mrf.mxu0
        %v1311 = vadd.f32 0.0, %v1310
        %v1312 = vpop.f32.mrf.mxu0
        %v1313 = vadd.f32 0.0, %v1312
        %1314 = vmatmul.bf16.gmra.mxu0 %v1168
        %v1315 = vpop.f32.mrf.mxu0
        %v1316 = vadd.f32 0.0, %v1315
        %v1317 = vpop.f32.mrf.mxu0
        %v1318 = vadd.f32 0.0, %v1317
        %1319 = vmatmul.bf16.gmra.mxu0 %v1169
        %v1320 = vpop.f32.mrf.mxu0
        %v1321 = vadd.f32 0.0, %v1320
        %v1322 = vpop.f32.mrf.mxu0
        %v1323 = vadd.f32 0.0, %v1322
        %1324 = vmatmul.bf16.gmra.mxu0 %v1170
        %v1325 = vpop.f32.mrf.mxu0
        %v1326 = vadd.f32 0.0, %v1325
        %v1327 = vpop.f32.mrf.mxu0
        %v1328 = vadd.f32 0.0, %v1327
        %1329 = vmatmul.bf16.gmra.mxu0 %v1171
        %v1330 = vpop.f32.mrf.mxu0
        %v1331 = vadd.f32 0.0, %v1330
        %v1332 = vpop.f32.mrf.mxu0
        %v1333 = vadd.f32 0.0, %v1332
        %1334 = vmatmul.bf16.gmra.mxu0 %v1172
        %v1335 = vpop.f32.mrf.mxu0
        %v1336 = vadd.f32 0.0, %v1335
        %v1337 = vpop.f32.mrf.mxu0
        %v1338 = vadd.f32 0.0, %v1337
        %1339 = vmatmul.bf16.gmra.mxu0 %v1173
        %v1340 = vpop.f32.mrf.mxu0
        %v1341 = vadd.f32 0.0, %v1340
        %v1342 = vpop.f32.mrf.mxu0
        %v1343 = vadd.f32 0.0, %v1342
        %1344 = vmatmul.bf16.gmra.mxu0 %v1174
        %v1345 = vpop.f32.mrf.mxu0
        %v1346 = vadd.f32 0.0, %v1345
        %v1347 = vpop.f32.mrf.mxu0
        %v1348 = vadd.f32 0.0, %v1347
        %1349 = vmatmul.bf16.gmra.mxu0 %v1175
        %v1350 = vpop.f32.mrf.mxu0
        %v1351 = vadd.f32 0.0, %v1350
        %v1352 = vpop.f32.mrf.mxu0
        %1353 = vdwg.mxu0
        %v1354 = vadd.f32 %v1011, %v1251
        %v1355 = vadd.f32 %v1013, %v1253
        %v1356 = vadd.f32 %v1016, %v1256
        %v1357 = vadd.f32 %v1018, %v1258
        %v1358 = vadd.f32 %v1021, %v1261
        %v1359 = vadd.f32 %v1023, %v1263
        %v1360 = vadd.f32 %v1026, %v1266
        %v1361 = vadd.f32 %v1028, %v1268
        %v1362 = vadd.f32 %v1031, %v1271
        %v1363 = vadd.f32 %v1033, %v1273
        %v1364 = vadd.f32 %v1036, %v1276
        %v1365 = vadd.f32 %v1038, %v1278
        %v1366 = vadd.f32 %v1041, %v1281
        %v1367 = vadd.f32 %v1043, %v1283
        %v1368 = vadd.f32 %v1046, %v1286
        %v1369 = vadd.f32 %v1048, %v1288
        %v1370 = vadd.f32 %v1051, %v1291
        %v1371 = vadd.f32 %v1053, %v1293
        %v1372 = vadd.f32 %v1056, %v1296
        %v1373 = vadd.f32 %v1058, %v1298
        %v1374 = vadd.f32 %v1061, %v1301
        %v1375 = vadd.f32 %v1063, %v1303
        %v1376 = vadd.f32 %v1066, %v1306
        %v1377 = vadd.f32 %v1068, %v1308
        %v1378 = vadd.f32 %v1071, %v1311
        %v1379 = vadd.f32 %v1073, %v1313
        %v1380 = vadd.f32 %v1076, %v1316
        %v1381 = vadd.f32 %v1078, %v1318
        %v1382 = vadd.f32 %v1081, %v1321
        %v1383 = vadd.f32 %v1083, %v1323
        %v1384 = vadd.f32 %v1086, %v1326
        %v1385 = vadd.f32 %v1088, %v1328
        %v1386 = vadd.f32 %v1091, %v1331
        %v1387 = vadd.f32 %v1093, %v1333
        %v1388 = vadd.f32 %v1096, %v1336
        %v1389 = vadd.f32 %v1098, %v1338
        %v1390 = vadd.f32 %v1101, %v1341
        %v1391 = vadd.f32 %v1103, %v1343
        %v1392 = vadd.f32 %v1106, %v1346
        %v1393 = vadd.f32 %v1108, %v1348
        %v1394 = vadd.f32 %v1111, %v1351
        %v1395 = vld [vmem:[#allocation2 + $0x12] sm:$0xff]
        %v1396 = vld [vmem:[#allocation2 + $0x1a] sm:$0xff]
        %v1397 = vld [vmem:[#allocation2 + $0x22] sm:$0xff]
        %v1398 = vld [vmem:[#allocation2 + $0x2a] sm:$0xff]
        %v1399 = vld [vmem:[#allocation2 + $0x32] sm:$0xff]
        %v1400 = vld [vmem:[#allocation2 + $0x3a] sm:$0xff]
        %v1401 = vld [vmem:[#allocation2 + $0x42] sm:$0xff]
        %v1402 = vld [vmem:[#allocation2 + $0x4a] sm:$0xff]
        %v1403 = vld [vmem:[#allocation2 + $0x52] sm:$0xff]
        %v1404 = vld [vmem:[#allocation2 + $0x5a] sm:$0xff]
        %v1405 = vld [vmem:[#allocation2 + $0x62] sm:$0xff]
        %v1406 = vld [vmem:[#allocation2 + $0x6a] sm:$0xff]
        %v1407 = vld [vmem:[#allocation2 + $0x72] sm:$0xff]
        %v1408 = vld [vmem:[#allocation2 + $0x7a] sm:$0xff]
        %v1409 = vld [vmem:[#allocation2 + $0x82] sm:$0xff]
        %v1410 = vld [vmem:[#allocation2 + $0x8a] sm:$0xff]
        %v1411 = vld [vmem:[#allocation2 + $0x92] sm:$0xff]
        %v1412 = vld [vmem:[#allocation2 + $0x9a] sm:$0xff]
        %v1413 = vld [vmem:[#allocation2 + $0xa2] sm:$0xff]
        %v1414 = vld [vmem:[#allocation2 + $0xaa] sm:$0xff]
        %v1415 = vld [vmem:[#allocation2 + $0xb2] sm:$0xff]
        %v1416 = vld [vmem:[#allocation2 + $0xba] sm:$0xff]
        %v1417 = vld [vmem:[#allocation2 + $0xc2] sm:$0xff]
        %v1418 = vld [vmem:[#allocation2 + $0xca] sm:$0xff]
        %v1419 = vld [vmem:[#allocation2 + $0xd2] sm:$0xff]
        %v1420 = vld [vmem:[#allocation2 + $0xda] sm:$0xff]
        %v1421 = vld [vmem:[#allocation2 + $0xe2] sm:$0xff]
        %v1422 = vld [vmem:[#allocation2 + $0xea] sm:$0xff]
        %v1423 = vld [vmem:[#allocation2 + $0xf2] sm:$0xff]
        %v1424 = vld [vmem:[#allocation2 + $0xfa] sm:$0xff]
        %v1425 = vld [vmem:[#allocation2 + $0x102] sm:$0xff]
        %v1426 = vld [vmem:[#allocation2 + $0x10a] sm:$0xff]
        %v1427 = vld [vmem:[#allocation2 + $0x112] sm:$0xff]
        %v1428 = vld [vmem:[#allocation2 + $0x11a] sm:$0xff]
        %v1429 = vld [vmem:[#allocation2 + $0x122] sm:$0xff]
        %v1430 = vld [vmem:[#allocation2 + $0x12a] sm:$0xff]
        %v1431 = vld [vmem:[#allocation2 + $0x132] sm:$0xff]
        %v1432 = vld [vmem:[#allocation2 + $0x13a] sm:$0xff]
        %v1433 = vld [vmem:[#allocation2 + $0x142] sm:$0xff]
        %v1434 = vld [vmem:[#allocation2 + $0x14a] sm:$0xff]
        %v1435 = vld [vmem:[#allocation2 + $0x152] sm:$0xf]
        %v1436 = vpack.c.bf16 %v1396, %v1395
        %v1437 = vpack.c.bf16 %v1398, %v1397
        %v1438 = vpack.c.bf16 %v1400, %v1399
        %v1439 = vpack.c.bf16 %v1402, %v1401
        %v1440 = vpack.c.bf16 %v1404, %v1403
        %v1441 = vpack.c.bf16 %v1406, %v1405
        %v1442 = vpack.c.bf16 %v1408, %v1407
        %v1443 = vpack.c.bf16 %v1410, %v1409
        %v1444 = vpack.c.bf16 %v1412, %v1411
        %v1445 = vpack.c.bf16 %v1414, %v1413
        %v1446 = vpack.c.bf16 %v1416, %v1415
        %v1447 = vpack.c.bf16 %v1418, %v1417
        %v1448 = vpack.c.bf16 %v1420, %v1419
        %v1449 = vpack.c.bf16 %v1422, %v1421
        %v1450 = vpack.c.bf16 %v1424, %v1423
        %v1451 = vpack.c.bf16 %v1426, %v1425
        %v1452 = vpack.c.bf16 %v1428, %v1427
        %v1453 = vpack.c.bf16 %v1430, %v1429
        %v1454 = vpack.c.bf16 %v1432, %v1431
        %v1455 = vpack.c.bf16 %v1434, %v1433
        %v1456 = vpack.c.bf16 %v1435, %v1435
        %s1457 = scalar_lea.vmem %s1, 192
        %v1458 = vld [vmem:[%s1457] sm:$0xf]
        %v1459 = vld [vmem:[%s1457 + $0x4] sm:$0xf]
        %v1460 = vld [vmem:[%s1457 + $0x8] sm:$0xf]
        %v1461 = vld [vmem:[%s1457 + $0xc] sm:$0xf]
        %v1462 = vld [vmem:[%s1457 + $0x10] sm:$0xf]
        %v1463 = vld [vmem:[%s1457 + $0x14] sm:$0xf]
        %v1464 = vld [vmem:[%s1457 + $0x18] sm:$0xf]
        %v1465 = vld [vmem:[%s1457 + $0x1c] sm:$0xf]
        %v1466 = vld [vmem:[%s1457 + $0x20] sm:$0xf]
        %v1467 = vld [vmem:[%s1457 + $0x24] sm:$0xf]
        %v1468 = vld [vmem:[%s1457 + $0x28] sm:$0xf]
        %v1469 = vld [vmem:[%s1457 + $0x2c] sm:$0xf]
        %v1470 = vld [vmem:[%s1457 + $0x30] sm:$0xf]
        %v1471 = vld [vmem:[%s1457 + $0x34] sm:$0xf]
        %v1472 = vld [vmem:[%s1457 + $0x38] sm:$0xf]
        %v1473 = vld [vmem:[%s1457 + $0x3c] sm:$0xf]
        %v1490 = vunpack.c.l.b16 %v1458
        %v1491 = vunpack.c.l.b16 %v1459
        %v1492 = vunpack.c.l.b16 %v1460
        %v1493 = vunpack.c.l.b16 %v1461
        %v1494 = vunpack.c.l.b16 %v1462
        %v1495 = vunpack.c.l.b16 %v1463
        %v1496 = vunpack.c.l.b16 %v1464
        %v1497 = vunpack.c.l.b16 %v1465
        %v1498 = vunpack.c.l.b16 %v1466
        %v1499 = vunpack.c.l.b16 %v1467
        %v1500 = vunpack.c.l.b16 %v1468
        %v1501 = vunpack.c.l.b16 %v1469
        %v1502 = vunpack.c.l.b16 %v1470
        %v1503 = vunpack.c.l.b16 %v1471
        %v1504 = vunpack.c.l.b16 %v1472
        %v1505 = vunpack.c.l.b16 %v1473
        %v1506 = vpack.c.b16 %v1491, %v1490
        %v1507 = vpack.c.b16 %v1493, %v1492
        %v1508 = vpack.c.b16 %v1495, %v1494
        %v1509 = vpack.c.b16 %v1497, %v1496
        %v1510 = vpack.c.b16 %v1499, %v1498
        %v1511 = vpack.c.b16 %v1501, %v1500
        %v1512 = vpack.c.b16 %v1503, %v1502
        %v1513 = vpack.c.b16 %v1505, %v1504
        %1522 = vmatpush.bf16.msra.mxu0 %v1513
        %1523 = vmatpush.bf16.msra.mxu0 %v1512
        %1524 = vmatpush.bf16.msra.mxu0 %v1511
        %1525 = vmatpush.bf16.msra.mxu0 %v1510
        %1526 = vmatpush.bf16.msra.mxu0 %v1509
        %1527 = vmatpush.bf16.msra.mxu0 %v1508
        %1528 = vmatpush.bf16.msra.mxu0 %v1507
        %1529 = vmatpush.bf16.msra.mxu0 %v1506
        %1530 = vmatmul.bf16.gmra.mxu0 %v1436
        %v1531 = vpop.f32.mrf.mxu0
        %v1532 = vadd.f32 0.0, %v1531
        %v1533 = vpop.f32.mrf.mxu0
        %v1534 = vadd.f32 0.0, %v1533
        %1535 = vmatmul.bf16.gmra.mxu0 %v1437
        %v1536 = vpop.f32.mrf.mxu0
        %v1537 = vadd.f32 0.0, %v1536
        %v1538 = vpop.f32.mrf.mxu0
        %v1539 = vadd.f32 0.0, %v1538
        %1540 = vmatmul.bf16.gmra.mxu0 %v1438
        %v1541 = vpop.f32.mrf.mxu0
        %v1542 = vadd.f32 0.0, %v1541
        %v1543 = vpop.f32.mrf.mxu0
        %v1544 = vadd.f32 0.0, %v1543
        %1545 = vmatmul.bf16.gmra.mxu0 %v1439
        %v1546 = vpop.f32.mrf.mxu0
        %v1547 = vadd.f32 0.0, %v1546
        %v1548 = vpop.f32.mrf.mxu0
        %v1549 = vadd.f32 0.0, %v1548
        %1550 = vmatmul.bf16.gmra.mxu0 %v1440
        %v1551 = vpop.f32.mrf.mxu0
        %v1552 = vadd.f32 0.0, %v1551
        %v1553 = vpop.f32.mrf.mxu0
        %v1554 = vadd.f32 0.0, %v1553
        %1555 = vmatmul.bf16.gmra.mxu0 %v1441
        %v1556 = vpop.f32.mrf.mxu0
        %v1557 = vadd.f32 0.0, %v1556
        %v1558 = vpop.f32.mrf.mxu0
        %v1559 = vadd.f32 0.0, %v1558
        %1560 = vmatmul.bf16.gmra.mxu0 %v1442
        %v1561 = vpop.f32.mrf.mxu0
        %v1562 = vadd.f32 0.0, %v1561
        %v1563 = vpop.f32.mrf.mxu0
        %v1564 = vadd.f32 0.0, %v1563
        %1565 = vmatmul.bf16.gmra.mxu0 %v1443
        %v1566 = vpop.f32.mrf.mxu0
        %v1567 = vadd.f32 0.0, %v1566
        %v1568 = vpop.f32.mrf.mxu0
        %v1569 = vadd.f32 0.0, %v1568
        %1570 = vmatmul.bf16.gmra.mxu0 %v1444
        %v1571 = vpop.f32.mrf.mxu0
        %v1572 = vadd.f32 0.0, %v1571
        %v1573 = vpop.f32.mrf.mxu0
        %v1574 = vadd.f32 0.0, %v1573
        %1575 = vmatmul.bf16.gmra.mxu0 %v1445
        %v1576 = vpop.f32.mrf.mxu0
        %v1577 = vadd.f32 0.0, %v1576
        %v1578 = vpop.f32.mrf.mxu0
        %v1579 = vadd.f32 0.0, %v1578
        %1580 = vmatmul.bf16.gmra.mxu0 %v1446
        %v1581 = vpop.f32.mrf.mxu0
        %v1582 = vadd.f32 0.0, %v1581
        %v1583 = vpop.f32.mrf.mxu0
        %v1584 = vadd.f32 0.0, %v1583
        %1585 = vmatmul.bf16.gmra.mxu0 %v1447
        %v1586 = vpop.f32.mrf.mxu0
        %v1587 = vadd.f32 0.0, %v1586
        %v1588 = vpop.f32.mrf.mxu0
        %v1589 = vadd.f32 0.0, %v1588
        %1590 = vmatmul.bf16.gmra.mxu0 %v1448
        %v1591 = vpop.f32.mrf.mxu0
        %v1592 = vadd.f32 0.0, %v1591
        %v1593 = vpop.f32.mrf.mxu0
        %v1594 = vadd.f32 0.0, %v1593
        %1595 = vmatmul.bf16.gmra.mxu0 %v1449
        %v1596 = vpop.f32.mrf.mxu0
        %v1597 = vadd.f32 0.0, %v1596
        %v1598 = vpop.f32.mrf.mxu0
        %v1599 = vadd.f32 0.0, %v1598
        %1600 = vmatmul.bf16.gmra.mxu0 %v1450
        %v1601 = vpop.f32.mrf.mxu0
        %v1602 = vadd.f32 0.0, %v1601
        %v1603 = vpop.f32.mrf.mxu0
        %v1604 = vadd.f32 0.0, %v1603
        %1605 = vmatmul.bf16.gmra.mxu0 %v1451
        %v1606 = vpop.f32.mrf.mxu0
        %v1607 = vadd.f32 0.0, %v1606
        %v1608 = vpop.f32.mrf.mxu0
        %v1609 = vadd.f32 0.0, %v1608
        %1610 = vmatmul.bf16.gmra.mxu0 %v1452
        %v1611 = vpop.f32.mrf.mxu0
        %v1612 = vadd.f32 0.0, %v1611
        %v1613 = vpop.f32.mrf.mxu0
        %v1614 = vadd.f32 0.0, %v1613
        %1615 = vmatmul.bf16.gmra.mxu0 %v1453
        %v1616 = vpop.f32.mrf.mxu0
        %v1617 = vadd.f32 0.0, %v1616
        %v1618 = vpop.f32.mrf.mxu0
        %v1619 = vadd.f32 0.0, %v1618
        %1620 = vmatmul.bf16.gmra.mxu0 %v1454
        %v1621 = vpop.f32.mrf.mxu0
        %v1622 = vadd.f32 0.0, %v1621
        %v1623 = vpop.f32.mrf.mxu0
        %v1624 = vadd.f32 0.0, %v1623
        %1625 = vmatmul.bf16.gmra.mxu0 %v1455
        %v1626 = vpop.f32.mrf.mxu0
        %v1627 = vadd.f32 0.0, %v1626
        %v1628 = vpop.f32.mrf.mxu0
        %v1629 = vadd.f32 0.0, %v1628
        %1630 = vmatmul.bf16.gmra.mxu0 %v1456
        %v1631 = vpop.f32.mrf.mxu0
        %v1632 = vadd.f32 0.0, %v1631
        %v1633 = vpop.f32.mrf.mxu0
        %1634 = vdwg.mxu0
        %v1635 = vadd.f32 %v1354, %v1532
        %v1636 = vadd.f32 %v1355, %v1534
        %v1637 = vadd.f32 %v1356, %v1537
        %v1638 = vadd.f32 %v1357, %v1539
        %v1639 = vadd.f32 %v1358, %v1542
        %v1640 = vadd.f32 %v1359, %v1544
        %v1641 = vadd.f32 %v1360, %v1547
        %v1642 = vadd.f32 %v1361, %v1549
        %v1643 = vadd.f32 %v1362, %v1552
        %v1644 = vadd.f32 %v1363, %v1554
        %v1645 = vadd.f32 %v1364, %v1557
        %v1646 = vadd.f32 %v1365, %v1559
        %v1647 = vadd.f32 %v1366, %v1562
        %v1648 = vadd.f32 %v1367, %v1564
        %v1649 = vadd.f32 %v1368, %v1567
        %v1650 = vadd.f32 %v1369, %v1569
        %v1651 = vadd.f32 %v1370, %v1572
        %v1652 = vadd.f32 %v1371, %v1574
        %v1653 = vadd.f32 %v1372, %v1577
        %v1654 = vadd.f32 %v1373, %v1579
        %v1655 = vadd.f32 %v1374, %v1582
        %v1656 = vadd.f32 %v1375, %v1584
        %v1657 = vadd.f32 %v1376, %v1587
        %v1658 = vadd.f32 %v1377, %v1589
        %v1659 = vadd.f32 %v1378, %v1592
        %v1660 = vadd.f32 %v1379, %v1594
        %v1661 = vadd.f32 %v1380, %v1597
        %v1662 = vadd.f32 %v1381, %v1599
        %v1663 = vadd.f32 %v1382, %v1602
        %v1664 = vadd.f32 %v1383, %v1604
        %v1665 = vadd.f32 %v1384, %v1607
        %v1666 = vadd.f32 %v1385, %v1609
        %v1667 = vadd.f32 %v1386, %v1612
        %v1668 = vadd.f32 %v1387, %v1614
        %v1669 = vadd.f32 %v1388, %v1617
        %v1670 = vadd.f32 %v1389, %v1619
        %v1671 = vadd.f32 %v1390, %v1622
        %v1672 = vadd.f32 %v1391, %v1624
        %v1673 = vadd.f32 %v1392, %v1627
        %v1674 = vadd.f32 %v1393, %v1629
        %v1675 = vadd.f32 %v1394, %v1632
        %v1676 = vld [vmem:[#allocation2 + $0x13] sm:$0xff]
        %v1677 = vld [vmem:[#allocation2 + $0x1b] sm:$0xff]
        %v1678 = vld [vmem:[#allocation2 + $0x23] sm:$0xff]
        %v1679 = vld [vmem:[#allocation2 + $0x2b] sm:$0xff]
        %v1680 = vld [vmem:[#allocation2 + $0x33] sm:$0xff]
        %v1681 = vld [vmem:[#allocation2 + $0x3b] sm:$0xff]
        %v1682 = vld [vmem:[#allocation2 + $0x43] sm:$0xff]
        %v1683 = vld [vmem:[#allocation2 + $0x4b] sm:$0xff]
        %v1684 = vld [vmem:[#allocation2 + $0x53] sm:$0xff]
        %v1685 = vld [vmem:[#allocation2 + $0x5b] sm:$0xff]
        %v1686 = vld [vmem:[#allocation2 + $0x63] sm:$0xff]
        %v1687 = vld [vmem:[#allocation2 + $0x6b] sm:$0xff]
        %v1688 = vld [vmem:[#allocation2 + $0x73] sm:$0xff]
        %v1689 = vld [vmem:[#allocation2 + $0x7b] sm:$0xff]
        %v1690 = vld [vmem:[#allocation2 + $0x83] sm:$0xff]
        %v1691 = vld [vmem:[#allocation2 + $0x8b] sm:$0xff]
        %v1692 = vld [vmem:[#allocation2 + $0x93] sm:$0xff]
        %v1693 = vld [vmem:[#allocation2 + $0x9b] sm:$0xff]
        %v1694 = vld [vmem:[#allocation2 + $0xa3] sm:$0xff]
        %v1695 = vld [vmem:[#allocation2 + $0xab] sm:$0xff]
        %v1696 = vld [vmem:[#allocation2 + $0xb3] sm:$0xff]
        %v1697 = vld [vmem:[#allocation2 + $0xbb] sm:$0xff]
        %v1698 = vld [vmem:[#allocation2 + $0xc3] sm:$0xff]
        %v1699 = vld [vmem:[#allocation2 + $0xcb] sm:$0xff]
        %v1700 = vld [vmem:[#allocation2 + $0xd3] sm:$0xff]
        %v1701 = vld [vmem:[#allocation2 + $0xdb] sm:$0xff]
        %v1702 = vld [vmem:[#allocation2 + $0xe3] sm:$0xff]
        %v1703 = vld [vmem:[#allocation2 + $0xeb] sm:$0xff]
        %v1704 = vld [vmem:[#allocation2 + $0xf3] sm:$0xff]
        %v1705 = vld [vmem:[#allocation2 + $0xfb] sm:$0xff]
        %v1706 = vld [vmem:[#allocation2 + $0x103] sm:$0xff]
        %v1707 = vld [vmem:[#allocation2 + $0x10b] sm:$0xff]
        %v1708 = vld [vmem:[#allocation2 + $0x113] sm:$0xff]
        %v1709 = vld [vmem:[#allocation2 + $0x11b] sm:$0xff]
        %v1710 = vld [vmem:[#allocation2 + $0x123] sm:$0xff]
        %v1711 = vld [vmem:[#allocation2 + $0x12b] sm:$0xff]
        %v1712 = vld [vmem:[#allocation2 + $0x133] sm:$0xff]
        %v1713 = vld [vmem:[#allocation2 + $0x13b] sm:$0xff]
        %v1714 = vld [vmem:[#allocation2 + $0x143] sm:$0xff]
        %v1715 = vld [vmem:[#allocation2 + $0x14b] sm:$0xff]
        %v1716 = vld [vmem:[#allocation2 + $0x153] sm:$0xf]
        %v1717 = vpack.c.bf16 %v1677, %v1676
        %v1718 = vpack.c.bf16 %v1679, %v1678
        %v1719 = vpack.c.bf16 %v1681, %v1680
        %v1720 = vpack.c.bf16 %v1683, %v1682
        %v1721 = vpack.c.bf16 %v1685, %v1684
        %v1722 = vpack.c.bf16 %v1687, %v1686
        %v1723 = vpack.c.bf16 %v1689, %v1688
        %v1724 = vpack.c.bf16 %v1691, %v1690
        %v1725 = vpack.c.bf16 %v1693, %v1692
        %v1726 = vpack.c.bf16 %v1695, %v1694
        %v1727 = vpack.c.bf16 %v1697, %v1696
        %v1728 = vpack.c.bf16 %v1699, %v1698
        %v1729 = vpack.c.bf16 %v1701, %v1700
        %v1730 = vpack.c.bf16 %v1703, %v1702
        %v1731 = vpack.c.bf16 %v1705, %v1704
        %v1732 = vpack.c.bf16 %v1707, %v1706
        %v1733 = vpack.c.bf16 %v1709, %v1708
        %v1734 = vpack.c.bf16 %v1711, %v1710
        %v1735 = vpack.c.bf16 %v1713, %v1712
        %v1736 = vpack.c.bf16 %v1715, %v1714
        %v1737 = vpack.c.bf16 %v1716, %v1716
        %s1738 = scalar_lea.vmem %s1, 256
        %v1739 = vld [vmem:[%s1738] sm:$0xf]
        %v1740 = vld [vmem:[%s1738 + $0x4] sm:$0xf]
        %v1741 = vld [vmem:[%s1738 + $0x8] sm:$0xf]
        %v1742 = vld [vmem:[%s1738 + $0xc] sm:$0xf]
        %v1743 = vld [vmem:[%s1738 + $0x10] sm:$0xf]
        %v1744 = vld [vmem:[%s1738 + $0x14] sm:$0xf]
        %v1745 = vld [vmem:[%s1738 + $0x18] sm:$0xf]
        %v1746 = vld [vmem:[%s1738 + $0x1c] sm:$0xf]
        %v1747 = vld [vmem:[%s1738 + $0x20] sm:$0xf]
        %v1748 = vld [vmem:[%s1738 + $0x24] sm:$0xf]
        %v1749 = vld [vmem:[%s1738 + $0x28] sm:$0xf]
        %v1750 = vld [vmem:[%s1738 + $0x2c] sm:$0xf]
        %v1751 = vld [vmem:[%s1738 + $0x30] sm:$0xf]
        %v1752 = vld [vmem:[%s1738 + $0x34] sm:$0xf]
        %v1753 = vld [vmem:[%s1738 + $0x38] sm:$0xf]
        %v1754 = vld [vmem:[%s1738 + $0x3c] sm:$0xf]
        %v1771 = vunpack.c.l.b16 %v1739
        %v1772 = vunpack.c.l.b16 %v1740
        %v1773 = vunpack.c.l.b16 %v1741
        %v1774 = vunpack.c.l.b16 %v1742
        %v1775 = vunpack.c.l.b16 %v1743
        %v1776 = vunpack.c.l.b16 %v1744
        %v1777 = vunpack.c.l.b16 %v1745
        %v1778 = vunpack.c.l.b16 %v1746
        %v1779 = vunpack.c.l.b16 %v1747
        %v1780 = vunpack.c.l.b16 %v1748
        %v1781 = vunpack.c.l.b16 %v1749
        %v1782 = vunpack.c.l.b16 %v1750
        %v1783 = vunpack.c.l.b16 %v1751
        %v1784 = vunpack.c.l.b16 %v1752
        %v1785 = vunpack.c.l.b16 %v1753
        %v1786 = vunpack.c.l.b16 %v1754
        %v1787 = vpack.c.b16 %v1772, %v1771
        %v1788 = vpack.c.b16 %v1774, %v1773
        %v1789 = vpack.c.b16 %v1776, %v1775
        %v1790 = vpack.c.b16 %v1778, %v1777
        %v1791 = vpack.c.b16 %v1780, %v1779
        %v1792 = vpack.c.b16 %v1782, %v1781
        %v1793 = vpack.c.b16 %v1784, %v1783
        %v1794 = vpack.c.b16 %v1786, %v1785
        %1803 = vmatpush.bf16.msra.mxu0 %v1794
        %1804 = vmatpush.bf16.msra.mxu0 %v1793
        %1805 = vmatpush.bf16.msra.mxu0 %v1792
        %1806 = vmatpush.bf16.msra.mxu0 %v1791
        %1807 = vmatpush.bf16.msra.mxu0 %v1790
        %1808 = vmatpush.bf16.msra.mxu0 %v1789
        %1809 = vmatpush.bf16.msra.mxu0 %v1788
        %1810 = vmatpush.bf16.msra.mxu0 %v1787
        %1811 = vmatmul.bf16.gmra.mxu0 %v1717
        %v1812 = vpop.f32.mrf.mxu0
        %v1813 = vadd.f32 0.0, %v1812
        %v1814 = vpop.f32.mrf.mxu0
        %v1815 = vadd.f32 0.0, %v1814
        %1816 = vmatmul.bf16.gmra.mxu0 %v1718
        %v1817 = vpop.f32.mrf.mxu0
        %v1818 = vadd.f32 0.0, %v1817
        %v1819 = vpop.f32.mrf.mxu0
        %v1820 = vadd.f32 0.0, %v1819
        %1821 = vmatmul.bf16.gmra.mxu0 %v1719
        %v1822 = vpop.f32.mrf.mxu0
        %v1823 = vadd.f32 0.0, %v1822
        %v1824 = vpop.f32.mrf.mxu0
        %v1825 = vadd.f32 0.0, %v1824
        %1826 = vmatmul.bf16.gmra.mxu0 %v1720
        %v1827 = vpop.f32.mrf.mxu0
        %v1828 = vadd.f32 0.0, %v1827
        %v1829 = vpop.f32.mrf.mxu0
        %v1830 = vadd.f32 0.0, %v1829
        %1831 = vmatmul.bf16.gmra.mxu0 %v1721
        %v1832 = vpop.f32.mrf.mxu0
        %v1833 = vadd.f32 0.0, %v1832
        %v1834 = vpop.f32.mrf.mxu0
        %v1835 = vadd.f32 0.0, %v1834
        %1836 = vmatmul.bf16.gmra.mxu0 %v1722
        %v1837 = vpop.f32.mrf.mxu0
        %v1838 = vadd.f32 0.0, %v1837
        %v1839 = vpop.f32.mrf.mxu0
        %v1840 = vadd.f32 0.0, %v1839
        %1841 = vmatmul.bf16.gmra.mxu0 %v1723
        %v1842 = vpop.f32.mrf.mxu0
        %v1843 = vadd.f32 0.0, %v1842
        %v1844 = vpop.f32.mrf.mxu0
        %v1845 = vadd.f32 0.0, %v1844
        %1846 = vmatmul.bf16.gmra.mxu0 %v1724
        %v1847 = vpop.f32.mrf.mxu0
        %v1848 = vadd.f32 0.0, %v1847
        %v1849 = vpop.f32.mrf.mxu0
        %v1850 = vadd.f32 0.0, %v1849
        %1851 = vmatmul.bf16.gmra.mxu0 %v1725
        %v1852 = vpop.f32.mrf.mxu0
        %v1853 = vadd.f32 0.0, %v1852
        %v1854 = vpop.f32.mrf.mxu0
        %v1855 = vadd.f32 0.0, %v1854
        %1856 = vmatmul.bf16.gmra.mxu0 %v1726
        %v1857 = vpop.f32.mrf.mxu0
        %v1858 = vadd.f32 0.0, %v1857
        %v1859 = vpop.f32.mrf.mxu0
        %v1860 = vadd.f32 0.0, %v1859
        %1861 = vmatmul.bf16.gmra.mxu0 %v1727
        %v1862 = vpop.f32.mrf.mxu0
        %v1863 = vadd.f32 0.0, %v1862
        %v1864 = vpop.f32.mrf.mxu0
        %v1865 = vadd.f32 0.0, %v1864
        %1866 = vmatmul.bf16.gmra.mxu0 %v1728
        %v1867 = vpop.f32.mrf.mxu0
        %v1868 = vadd.f32 0.0, %v1867
        %v1869 = vpop.f32.mrf.mxu0
        %v1870 = vadd.f32 0.0, %v1869
        %1871 = vmatmul.bf16.gmra.mxu0 %v1729
        %v1872 = vpop.f32.mrf.mxu0
        %v1873 = vadd.f32 0.0, %v1872
        %v1874 = vpop.f32.mrf.mxu0
        %v1875 = vadd.f32 0.0, %v1874
        %1876 = vmatmul.bf16.gmra.mxu0 %v1730
        %v1877 = vpop.f32.mrf.mxu0
        %v1878 = vadd.f32 0.0, %v1877
        %v1879 = vpop.f32.mrf.mxu0
        %v1880 = vadd.f32 0.0, %v1879
        %1881 = vmatmul.bf16.gmra.mxu0 %v1731
        %v1882 = vpop.f32.mrf.mxu0
        %v1883 = vadd.f32 0.0, %v1882
        %v1884 = vpop.f32.mrf.mxu0
        %v1885 = vadd.f32 0.0, %v1884
        %1886 = vmatmul.bf16.gmra.mxu0 %v1732
        %v1887 = vpop.f32.mrf.mxu0
        %v1888 = vadd.f32 0.0, %v1887
        %v1889 = vpop.f32.mrf.mxu0
        %v1890 = vadd.f32 0.0, %v1889
        %1891 = vmatmul.bf16.gmra.mxu0 %v1733
        %v1892 = vpop.f32.mrf.mxu0
        %v1893 = vadd.f32 0.0, %v1892
        %v1894 = vpop.f32.mrf.mxu0
        %v1895 = vadd.f32 0.0, %v1894
        %1896 = vmatmul.bf16.gmra.mxu0 %v1734
        %v1897 = vpop.f32.mrf.mxu0
        %v1898 = vadd.f32 0.0, %v1897
        %v1899 = vpop.f32.mrf.mxu0
        %v1900 = vadd.f32 0.0, %v1899
        %1901 = vmatmul.bf16.gmra.mxu0 %v1735
        %v1902 = vpop.f32.mrf.mxu0
        %v1903 = vadd.f32 0.0, %v1902
        %v1904 = vpop.f32.mrf.mxu0
        %v1905 = vadd.f32 0.0, %v1904
        %1906 = vmatmul.bf16.gmra.mxu0 %v1736
        %v1907 = vpop.f32.mrf.mxu0
        %v1908 = vadd.f32 0.0, %v1907
        %v1909 = vpop.f32.mrf.mxu0
        %v1910 = vadd.f32 0.0, %v1909
        %1911 = vmatmul.bf16.gmra.mxu0 %v1737
        %v1912 = vpop.f32.mrf.mxu0
        %v1913 = vadd.f32 0.0, %v1912
        %v1914 = vpop.f32.mrf.mxu0
        %1915 = vdwg.mxu0
        %v1916 = vadd.f32 %v1635, %v1813
        %v1917 = vadd.f32 %v1636, %v1815
        %v1918 = vadd.f32 %v1637, %v1818
        %v1919 = vadd.f32 %v1638, %v1820
        %v1920 = vadd.f32 %v1639, %v1823
        %v1921 = vadd.f32 %v1640, %v1825
        %v1922 = vadd.f32 %v1641, %v1828
        %v1923 = vadd.f32 %v1642, %v1830
        %v1924 = vadd.f32 %v1643, %v1833
        %v1925 = vadd.f32 %v1644, %v1835
        %v1926 = vadd.f32 %v1645, %v1838
        %v1927 = vadd.f32 %v1646, %v1840
        %v1928 = vadd.f32 %v1647, %v1843
        %v1929 = vadd.f32 %v1648, %v1845
        %v1930 = vadd.f32 %v1649, %v1848
        %v1931 = vadd.f32 %v1650, %v1850
        %v1932 = vadd.f32 %v1651, %v1853
        %v1933 = vadd.f32 %v1652, %v1855
        %v1934 = vadd.f32 %v1653, %v1858
        %v1935 = vadd.f32 %v1654, %v1860
        %v1936 = vadd.f32 %v1655, %v1863
        %v1937 = vadd.f32 %v1656, %v1865
        %v1938 = vadd.f32 %v1657, %v1868
        %v1939 = vadd.f32 %v1658, %v1870
        %v1940 = vadd.f32 %v1659, %v1873
        %v1941 = vadd.f32 %v1660, %v1875
        %v1942 = vadd.f32 %v1661, %v1878
        %v1943 = vadd.f32 %v1662, %v1880
        %v1944 = vadd.f32 %v1663, %v1883
        %v1945 = vadd.f32 %v1664, %v1885
        %v1946 = vadd.f32 %v1665, %v1888
        %v1947 = vadd.f32 %v1666, %v1890
        %v1948 = vadd.f32 %v1667, %v1893
        %v1949 = vadd.f32 %v1668, %v1895
        %v1950 = vadd.f32 %v1669, %v1898
        %v1951 = vadd.f32 %v1670, %v1900
        %v1952 = vadd.f32 %v1671, %v1903
        %v1953 = vadd.f32 %v1672, %v1905
        %v1954 = vadd.f32 %v1673, %v1908
        %v1955 = vadd.f32 %v1674, %v1910
        %v1956 = vadd.f32 %v1675, %v1913
        %v1957 = vld [vmem:[#allocation2 + $0x14] sm:$0xff]
        %v1958 = vld [vmem:[#allocation2 + $0x1c] sm:$0xff]
        %v1959 = vld [vmem:[#allocation2 + $0x24] sm:$0xff]
        %v1960 = vld [vmem:[#allocation2 + $0x2c] sm:$0xff]
        %v1961 = vld [vmem:[#allocation2 + $0x34] sm:$0xff]
        %v1962 = vld [vmem:[#allocation2 + $0x3c] sm:$0xff]
        %v1963 = vld [vmem:[#allocation2 + $0x44] sm:$0xff]
        %v1964 = vld [vmem:[#allocation2 + $0x4c] sm:$0xff]
        %v1965 = vld [vmem:[#allocation2 + $0x54] sm:$0xff]
        %v1966 = vld [vmem:[#allocation2 + $0x5c] sm:$0xff]
        %v1967 = vld [vmem:[#allocation2 + $0x64] sm:$0xff]
        %v1968 = vld [vmem:[#allocation2 + $0x6c] sm:$0xff]
        %v1969 = vld [vmem:[#allocation2 + $0x74] sm:$0xff]
        %v1970 = vld [vmem:[#allocation2 + $0x7c] sm:$0xff]
        %v1971 = vld [vmem:[#allocation2 + $0x84] sm:$0xff]
        %v1972 = vld [vmem:[#allocation2 + $0x8c] sm:$0xff]
        %v1973 = vld [vmem:[#allocation2 + $0x94] sm:$0xff]
        %v1974 = vld [vmem:[#allocation2 + $0x9c] sm:$0xff]
        %v1975 = vld [vmem:[#allocation2 + $0xa4] sm:$0xff]
        %v1976 = vld [vmem:[#allocation2 + $0xac] sm:$0xff]
        %v1977 = vld [vmem:[#allocation2 + $0xb4] sm:$0xff]
        %v1978 = vld [vmem:[#allocation2 + $0xbc] sm:$0xff]
        %v1979 = vld [vmem:[#allocation2 + $0xc4] sm:$0xff]
        %v1980 = vld [vmem:[#allocation2 + $0xcc] sm:$0xff]
        %v1981 = vld [vmem:[#allocation2 + $0xd4] sm:$0xff]
        %v1982 = vld [vmem:[#allocation2 + $0xdc] sm:$0xff]
        %v1983 = vld [vmem:[#allocation2 + $0xe4] sm:$0xff]
        %v1984 = vld [vmem:[#allocation2 + $0xec] sm:$0xff]
        %v1985 = vld [vmem:[#allocation2 + $0xf4] sm:$0xff]
        %v1986 = vld [vmem:[#allocation2 + $0xfc] sm:$0xff]
        %v1987 = vld [vmem:[#allocation2 + $0x104] sm:$0xff]
        %v1988 = vld [vmem:[#allocation2 + $0x10c] sm:$0xff]
        %v1989 = vld [vmem:[#allocation2 + $0x114] sm:$0xff]
        %v1990 = vld [vmem:[#allocation2 + $0x11c] sm:$0xff]
        %v1991 = vld [vmem:[#allocation2 + $0x124] sm:$0xff]
        %v1992 = vld [vmem:[#allocation2 + $0x12c] sm:$0xff]
        %v1993 = vld [vmem:[#allocation2 + $0x134] sm:$0xff]
        %v1994 = vld [vmem:[#allocation2 + $0x13c] sm:$0xff]
        %v1995 = vld [vmem:[#allocation2 + $0x144] sm:$0xff]
        %v1996 = vld [vmem:[#allocation2 + $0x14c] sm:$0xff]
        %v1997 = vld [vmem:[#allocation2 + $0x154] sm:$0xf]
        %v1998 = vpack.c.bf16 %v1958, %v1957
        %v1999 = vpack.c.bf16 %v1960, %v1959
        %v2000 = vpack.c.bf16 %v1962, %v1961
        %v2001 = vpack.c.bf16 %v1964, %v1963
        %v2002 = vpack.c.bf16 %v1966, %v1965
        %v2003 = vpack.c.bf16 %v1968, %v1967
        %v2004 = vpack.c.bf16 %v1970, %v1969
        %v2005 = vpack.c.bf16 %v1972, %v1971
        %v2006 = vpack.c.bf16 %v1974, %v1973
        %v2007 = vpack.c.bf16 %v1976, %v1975
        %v2008 = vpack.c.bf16 %v1978, %v1977
        %v2009 = vpack.c.bf16 %v1980, %v1979
        %v2010 = vpack.c.bf16 %v1982, %v1981
        %v2011 = vpack.c.bf16 %v1984, %v1983
        %v2012 = vpack.c.bf16 %v1986, %v1985
        %v2013 = vpack.c.bf16 %v1988, %v1987
        %v2014 = vpack.c.bf16 %v1990, %v1989
        %v2015 = vpack.c.bf16 %v1992, %v1991
        %v2016 = vpack.c.bf16 %v1994, %v1993
        %v2017 = vpack.c.bf16 %v1996, %v1995
        %v2018 = vpack.c.bf16 %v1997, %v1997
        %s2019 = scalar_lea.vmem %s1, 320
        %v2020 = vld [vmem:[%s2019] sm:$0xf]
        %v2021 = vld [vmem:[%s2019 + $0x4] sm:$0xf]
        %v2022 = vld [vmem:[%s2019 + $0x8] sm:$0xf]
        %v2023 = vld [vmem:[%s2019 + $0xc] sm:$0xf]
        %v2024 = vld [vmem:[%s2019 + $0x10] sm:$0xf]
        %v2025 = vld [vmem:[%s2019 + $0x14] sm:$0xf]
        %v2026 = vld [vmem:[%s2019 + $0x18] sm:$0xf]
        %v2027 = vld [vmem:[%s2019 + $0x1c] sm:$0xf]
        %v2028 = vld [vmem:[%s2019 + $0x20] sm:$0xf]
        %v2029 = vld [vmem:[%s2019 + $0x24] sm:$0xf]
        %v2030 = vld [vmem:[%s2019 + $0x28] sm:$0xf]
        %v2031 = vld [vmem:[%s2019 + $0x2c] sm:$0xf]
        %v2032 = vld [vmem:[%s2019 + $0x30] sm:$0xf]
        %v2033 = vld [vmem:[%s2019 + $0x34] sm:$0xf]
        %v2034 = vld [vmem:[%s2019 + $0x38] sm:$0xf]
        %v2035 = vld [vmem:[%s2019 + $0x3c] sm:$0xf]
        %v2052 = vunpack.c.l.b16 %v2020
        %v2053 = vunpack.c.l.b16 %v2021
        %v2054 = vunpack.c.l.b16 %v2022
        %v2055 = vunpack.c.l.b16 %v2023
        %v2056 = vunpack.c.l.b16 %v2024
        %v2057 = vunpack.c.l.b16 %v2025
        %v2058 = vunpack.c.l.b16 %v2026
        %v2059 = vunpack.c.l.b16 %v2027
        %v2060 = vunpack.c.l.b16 %v2028
        %v2061 = vunpack.c.l.b16 %v2029
        %v2062 = vunpack.c.l.b16 %v2030
        %v2063 = vunpack.c.l.b16 %v2031
        %v2064 = vunpack.c.l.b16 %v2032
        %v2065 = vunpack.c.l.b16 %v2033
        %v2066 = vunpack.c.l.b16 %v2034
        %v2067 = vunpack.c.l.b16 %v2035
        %v2068 = vpack.c.b16 %v2053, %v2052
        %v2069 = vpack.c.b16 %v2055, %v2054
        %v2070 = vpack.c.b16 %v2057, %v2056
        %v2071 = vpack.c.b16 %v2059, %v2058
        %v2072 = vpack.c.b16 %v2061, %v2060
        %v2073 = vpack.c.b16 %v2063, %v2062
        %v2074 = vpack.c.b16 %v2065, %v2064
        %v2075 = vpack.c.b16 %v2067, %v2066
        %2084 = vmatpush.bf16.msra.mxu0 %v2075
        %2085 = vmatpush.bf16.msra.mxu0 %v2074
        %2086 = vmatpush.bf16.msra.mxu0 %v2073
        %2087 = vmatpush.bf16.msra.mxu0 %v2072
        %2088 = vmatpush.bf16.msra.mxu0 %v2071
        %2089 = vmatpush.bf16.msra.mxu0 %v2070
        %2090 = vmatpush.bf16.msra.mxu0 %v2069
        %2091 = vmatpush.bf16.msra.mxu0 %v2068
        %2092 = vmatmul.bf16.gmra.mxu0 %v1998
        %v2093 = vpop.f32.mrf.mxu0
        %v2094 = vadd.f32 0.0, %v2093
        %v2095 = vpop.f32.mrf.mxu0
        %v2096 = vadd.f32 0.0, %v2095
        %2097 = vmatmul.bf16.gmra.mxu0 %v1999
        %v2098 = vpop.f32.mrf.mxu0
        %v2099 = vadd.f32 0.0, %v2098
        %v2100 = vpop.f32.mrf.mxu0
        %v2101 = vadd.f32 0.0, %v2100
        %2102 = vmatmul.bf16.gmra.mxu0 %v2000
        %v2103 = vpop.f32.mrf.mxu0
        %v2104 = vadd.f32 0.0, %v2103
        %v2105 = vpop.f32.mrf.mxu0
        %v2106 = vadd.f32 0.0, %v2105
        %2107 = vmatmul.bf16.gmra.mxu0 %v2001
        %v2108 = vpop.f32.mrf.mxu0
        %v2109 = vadd.f32 0.0, %v2108
        %v2110 = vpop.f32.mrf.mxu0
        %v2111 = vadd.f32 0.0, %v2110
        %2112 = vmatmul.bf16.gmra.mxu0 %v2002
        %v2113 = vpop.f32.mrf.mxu0
        %v2114 = vadd.f32 0.0, %v2113
        %v2115 = vpop.f32.mrf.mxu0
        %v2116 = vadd.f32 0.0, %v2115
        %2117 = vmatmul.bf16.gmra.mxu0 %v2003
        %v2118 = vpop.f32.mrf.mxu0
        %v2119 = vadd.f32 0.0, %v2118
        %v2120 = vpop.f32.mrf.mxu0
        %v2121 = vadd.f32 0.0, %v2120
        %2122 = vmatmul.bf16.gmra.mxu0 %v2004
        %v2123 = vpop.f32.mrf.mxu0
        %v2124 = vadd.f32 0.0, %v2123
        %v2125 = vpop.f32.mrf.mxu0
        %v2126 = vadd.f32 0.0, %v2125
        %2127 = vmatmul.bf16.gmra.mxu0 %v2005
        %v2128 = vpop.f32.mrf.mxu0
        %v2129 = vadd.f32 0.0, %v2128
        %v2130 = vpop.f32.mrf.mxu0
        %v2131 = vadd.f32 0.0, %v2130
        %2132 = vmatmul.bf16.gmra.mxu0 %v2006
        %v2133 = vpop.f32.mrf.mxu0
        %v2134 = vadd.f32 0.0, %v2133
        %v2135 = vpop.f32.mrf.mxu0
        %v2136 = vadd.f32 0.0, %v2135
        %2137 = vmatmul.bf16.gmra.mxu0 %v2007
        %v2138 = vpop.f32.mrf.mxu0
        %v2139 = vadd.f32 0.0, %v2138
        %v2140 = vpop.f32.mrf.mxu0
        %v2141 = vadd.f32 0.0, %v2140
        %2142 = vmatmul.bf16.gmra.mxu0 %v2008
        %v2143 = vpop.f32.mrf.mxu0
        %v2144 = vadd.f32 0.0, %v2143
        %v2145 = vpop.f32.mrf.mxu0
        %v2146 = vadd.f32 0.0, %v2145
        %2147 = vmatmul.bf16.gmra.mxu0 %v2009
        %v2148 = vpop.f32.mrf.mxu0
        %v2149 = vadd.f32 0.0, %v2148
        %v2150 = vpop.f32.mrf.mxu0
        %v2151 = vadd.f32 0.0, %v2150
        %2152 = vmatmul.bf16.gmra.mxu0 %v2010
        %v2153 = vpop.f32.mrf.mxu0
        %v2154 = vadd.f32 0.0, %v2153
        %v2155 = vpop.f32.mrf.mxu0
        %v2156 = vadd.f32 0.0, %v2155
        %2157 = vmatmul.bf16.gmra.mxu0 %v2011
        %v2158 = vpop.f32.mrf.mxu0
        %v2159 = vadd.f32 0.0, %v2158
        %v2160 = vpop.f32.mrf.mxu0
        %v2161 = vadd.f32 0.0, %v2160
        %2162 = vmatmul.bf16.gmra.mxu0 %v2012
        %v2163 = vpop.f32.mrf.mxu0
        %v2164 = vadd.f32 0.0, %v2163
        %v2165 = vpop.f32.mrf.mxu0
        %v2166 = vadd.f32 0.0, %v2165
        %2167 = vmatmul.bf16.gmra.mxu0 %v2013
        %v2168 = vpop.f32.mrf.mxu0
        %v2169 = vadd.f32 0.0, %v2168
        %v2170 = vpop.f32.mrf.mxu0
        %v2171 = vadd.f32 0.0, %v2170
        %2172 = vmatmul.bf16.gmra.mxu0 %v2014
        %v2173 = vpop.f32.mrf.mxu0
        %v2174 = vadd.f32 0.0, %v2173
        %v2175 = vpop.f32.mrf.mxu0
        %v2176 = vadd.f32 0.0, %v2175
        %2177 = vmatmul.bf16.gmra.mxu0 %v2015
        %v2178 = vpop.f32.mrf.mxu0
        %v2179 = vadd.f32 0.0, %v2178
        %v2180 = vpop.f32.mrf.mxu0
        %v2181 = vadd.f32 0.0, %v2180
        %2182 = vmatmul.bf16.gmra.mxu0 %v2016
        %v2183 = vpop.f32.mrf.mxu0
        %v2184 = vadd.f32 0.0, %v2183
        %v2185 = vpop.f32.mrf.mxu0
        %v2186 = vadd.f32 0.0, %v2185
        %2187 = vmatmul.bf16.gmra.mxu0 %v2017
        %v2188 = vpop.f32.mrf.mxu0
        %v2189 = vadd.f32 0.0, %v2188
        %v2190 = vpop.f32.mrf.mxu0
        %v2191 = vadd.f32 0.0, %v2190
        %2192 = vmatmul.bf16.gmra.mxu0 %v2018
        %v2193 = vpop.f32.mrf.mxu0
        %v2194 = vadd.f32 0.0, %v2193
        %v2195 = vpop.f32.mrf.mxu0
        %2196 = vdwg.mxu0
        %v2197 = vadd.f32 %v1916, %v2094
        %v2198 = vadd.f32 %v1917, %v2096
        %v2199 = vadd.f32 %v1918, %v2099
        %v2200 = vadd.f32 %v1919, %v2101
        %v2201 = vadd.f32 %v1920, %v2104
        %v2202 = vadd.f32 %v1921, %v2106
        %v2203 = vadd.f32 %v1922, %v2109
        %v2204 = vadd.f32 %v1923, %v2111
        %v2205 = vadd.f32 %v1924, %v2114
        %v2206 = vadd.f32 %v1925, %v2116
        %v2207 = vadd.f32 %v1926, %v2119
        %v2208 = vadd.f32 %v1927, %v2121
        %v2209 = vadd.f32 %v1928, %v2124
        %v2210 = vadd.f32 %v1929, %v2126
        %v2211 = vadd.f32 %v1930, %v2129
        %v2212 = vadd.f32 %v1931, %v2131
        %v2213 = vadd.f32 %v1932, %v2134
        %v2214 = vadd.f32 %v1933, %v2136
        %v2215 = vadd.f32 %v1934, %v2139
        %v2216 = vadd.f32 %v1935, %v2141
        %v2217 = vadd.f32 %v1936, %v2144
        %v2218 = vadd.f32 %v1937, %v2146
        %v2219 = vadd.f32 %v1938, %v2149
        %v2220 = vadd.f32 %v1939, %v2151
        %v2221 = vadd.f32 %v1940, %v2154
        %v2222 = vadd.f32 %v1941, %v2156
        %v2223 = vadd.f32 %v1942, %v2159
        %v2224 = vadd.f32 %v1943, %v2161
        %v2225 = vadd.f32 %v1944, %v2164
        %v2226 = vadd.f32 %v1945, %v2166
        %v2227 = vadd.f32 %v1946, %v2169
        %v2228 = vadd.f32 %v1947, %v2171
        %v2229 = vadd.f32 %v1948, %v2174
        %v2230 = vadd.f32 %v1949, %v2176
        %v2231 = vadd.f32 %v1950, %v2179
        %v2232 = vadd.f32 %v1951, %v2181
        %v2233 = vadd.f32 %v1952, %v2184
        %v2234 = vadd.f32 %v1953, %v2186
        %v2235 = vadd.f32 %v1954, %v2189
        %v2236 = vadd.f32 %v1955, %v2191
        %v2237 = vadd.f32 %v1956, %v2194
        %v2238 = vld [vmem:[#allocation2 + $0x24] sm:$0xff]
        %v2239 = vld [vmem:[#allocation2 + $0x2c] sm:$0xff]
        %v2240 = vld [vmem:[#allocation2 + $0x34] sm:$0xff]
        %v2241 = vld [vmem:[#allocation2 + $0x3c] sm:$0xff]
        %v2242 = vld [vmem:[#allocation2 + $0x44] sm:$0xff]
        %v2243 = vld [vmem:[#allocation2 + $0x4c] sm:$0xff]
        %v2244 = vld [vmem:[#allocation2 + $0x54] sm:$0xff]
        %v2245 = vld [vmem:[#allocation2 + $0x5c] sm:$0xff]
        %v2246 = vld [vmem:[#allocation2 + $0x64] sm:$0xff]
        %v2247 = vld [vmem:[#allocation2 + $0x6c] sm:$0xff]
        %v2248 = vld [vmem:[#allocation2 + $0x74] sm:$0xff]
        %v2249 = vld [vmem:[#allocation2 + $0x7c] sm:$0xff]
        %v2250 = vld [vmem:[#allocation2 + $0x84] sm:$0xff]
        %v2251 = vld [vmem:[#allocation2 + $0x8c] sm:$0xff]
        %v2252 = vld [vmem:[#allocation2 + $0x94] sm:$0xff]
        %v2253 = vld [vmem:[#allocation2 + $0x9c] sm:$0xff]
        %v2254 = vld [vmem:[#allocation2 + $0xa4] sm:$0xff]
        %v2255 = vld [vmem:[#allocation2 + $0xac] sm:$0xff]
        %v2256 = vld [vmem:[#allocation2 + $0xb4] sm:$0xff]
        %v2257 = vld [vmem:[#allocation2 + $0xbc] sm:$0xff]
        %v2258 = vld [vmem:[#allocation2 + $0xc4] sm:$0xff]
        %v2259 = vld [vmem:[#allocation2 + $0xcc] sm:$0xff]
        %v2260 = vld [vmem:[#allocation2 + $0xd4] sm:$0xff]
        %v2261 = vld [vmem:[#allocation2 + $0xdc] sm:$0xff]
        %v2262 = vld [vmem:[#allocation2 + $0xe4] sm:$0xff]
        %v2263 = vld [vmem:[#allocation2 + $0xec] sm:$0xff]
        %v2264 = vld [vmem:[#allocation2 + $0xf4] sm:$0xff]
        %v2265 = vld [vmem:[#allocation2 + $0xfc] sm:$0xff]
        %v2266 = vld [vmem:[#allocation2 + $0x104] sm:$0xff]
        %v2267 = vld [vmem:[#allocation2 + $0x10c] sm:$0xff]
        %v2268 = vld [vmem:[#allocation2 + $0x114] sm:$0xff]
        %v2269 = vld [vmem:[#allocation2 + $0x11c] sm:$0xff]
        %v2270 = vld [vmem:[#allocation2 + $0x124] sm:$0xff]
        %v2271 = vld [vmem:[#allocation2 + $0x12c] sm:$0xff]
        %v2272 = vld [vmem:[#allocation2 + $0x134] sm:$0xff]
        %v2273 = vld [vmem:[#allocation2 + $0x13c] sm:$0xff]
        %v2274 = vld [vmem:[#allocation2 + $0x144] sm:$0xff]
        %v2275 = vld [vmem:[#allocation2 + $0x14c] sm:$0xff]
        %v2276 = vld [vmem:[#allocation2 + $0x154] sm:$0xff]
        %v2277 = vld [vmem:[#allocation2 + $0x15c] sm:$0xff]
        %v2278 = vld [vmem:[#allocation2 + $0x164] sm:$0xf]
        %v2279 = vpack.c.bf16 %v2239, %v2238
        %v2280 = vpack.c.bf16 %v2241, %v2240
        %v2281 = vpack.c.bf16 %v2243, %v2242
        %v2282 = vpack.c.bf16 %v2245, %v2244
        %v2283 = vpack.c.bf16 %v2247, %v2246
        %v2284 = vpack.c.bf16 %v2249, %v2248
        %v2285 = vpack.c.bf16 %v2251, %v2250
        %v2286 = vpack.c.bf16 %v2253, %v2252
        %v2287 = vpack.c.bf16 %v2255, %v2254
        %v2288 = vpack.c.bf16 %v2257, %v2256
        %v2289 = vpack.c.bf16 %v2259, %v2258
        %v2290 = vpack.c.bf16 %v2261, %v2260
        %v2291 = vpack.c.bf16 %v2263, %v2262
        %v2292 = vpack.c.bf16 %v2265, %v2264
        %v2293 = vpack.c.bf16 %v2267, %v2266
        %v2294 = vpack.c.bf16 %v2269, %v2268
        %v2295 = vpack.c.bf16 %v2271, %v2270
        %v2296 = vpack.c.bf16 %v2273, %v2272
        %v2297 = vpack.c.bf16 %v2275, %v2274
        %v2298 = vpack.c.bf16 %v2277, %v2276
        %v2299 = vpack.c.bf16 %v2278, %v2278
        %s2300 = scalar_lea.vmem %s1, 384
        %v2301 = vld [vmem:[%s2300] sm:$0xf]
        %v2302 = vld [vmem:[%s2300 + $0x4] sm:$0xf]
        %v2303 = vld [vmem:[%s2300 + $0x8] sm:$0xf]
        %v2304 = vld [vmem:[%s2300 + $0xc] sm:$0xf]
        %v2305 = vld [vmem:[%s2300 + $0x10] sm:$0xf]
        %v2306 = vld [vmem:[%s2300 + $0x14] sm:$0xf]
        %v2307 = vld [vmem:[%s2300 + $0x18] sm:$0xf]
        %v2308 = vld [vmem:[%s2300 + $0x1c] sm:$0xf]
        %v2309 = vld [vmem:[%s2300 + $0x20] sm:$0xf]
        %v2310 = vld [vmem:[%s2300 + $0x24] sm:$0xf]
        %v2311 = vld [vmem:[%s2300 + $0x28] sm:$0xf]
        %v2312 = vld [vmem:[%s2300 + $0x2c] sm:$0xf]
        %v2313 = vld [vmem:[%s2300 + $0x30] sm:$0xf]
        %v2314 = vld [vmem:[%s2300 + $0x34] sm:$0xf]
        %v2315 = vld [vmem:[%s2300 + $0x38] sm:$0xf]
        %v2316 = vld [vmem:[%s2300 + $0x3c] sm:$0xf]
        %v2333 = vunpack.c.l.b16 %v2301
        %v2334 = vunpack.c.l.b16 %v2302
        %v2335 = vunpack.c.l.b16 %v2303
        %v2336 = vunpack.c.l.b16 %v2304
        %v2337 = vunpack.c.l.b16 %v2305
        %v2338 = vunpack.c.l.b16 %v2306
        %v2339 = vunpack.c.l.b16 %v2307
        %v2340 = vunpack.c.l.b16 %v2308
        %v2341 = vunpack.c.l.b16 %v2309
        %v2342 = vunpack.c.l.b16 %v2310
        %v2343 = vunpack.c.l.b16 %v2311
        %v2344 = vunpack.c.l.b16 %v2312
        %v2345 = vunpack.c.l.b16 %v2313
        %v2346 = vunpack.c.l.b16 %v2314
        %v2347 = vunpack.c.l.b16 %v2315
        %v2348 = vunpack.c.l.b16 %v2316
        %v2349 = vpack.c.b16 %v2334, %v2333
        %v2350 = vpack.c.b16 %v2336, %v2335
        %v2351 = vpack.c.b16 %v2338, %v2337
        %v2352 = vpack.c.b16 %v2340, %v2339
        %v2353 = vpack.c.b16 %v2342, %v2341
        %v2354 = vpack.c.b16 %v2344, %v2343
        %v2355 = vpack.c.b16 %v2346, %v2345
        %v2356 = vpack.c.b16 %v2348, %v2347
        %2365 = vmatpush.bf16.msra.mxu0 %v2356
        %2366 = vmatpush.bf16.msra.mxu0 %v2355
        %2367 = vmatpush.bf16.msra.mxu0 %v2354
        %2368 = vmatpush.bf16.msra.mxu0 %v2353
        %2369 = vmatpush.bf16.msra.mxu0 %v2352
        %2370 = vmatpush.bf16.msra.mxu0 %v2351
        %2371 = vmatpush.bf16.msra.mxu0 %v2350
        %2372 = vmatpush.bf16.msra.mxu0 %v2349
        %2373 = vmatmul.bf16.gmra.mxu0 %v2279
        %v2374 = vpop.f32.mrf.mxu0
        %v2375 = vadd.f32 0.0, %v2374
        %v2376 = vpop.f32.mrf.mxu0
        %v2377 = vadd.f32 0.0, %v2376
        %2378 = vmatmul.bf16.gmra.mxu0 %v2280
        %v2379 = vpop.f32.mrf.mxu0
        %v2380 = vadd.f32 0.0, %v2379
        %v2381 = vpop.f32.mrf.mxu0
        %v2382 = vadd.f32 0.0, %v2381
        %2383 = vmatmul.bf16.gmra.mxu0 %v2281
        %v2384 = vpop.f32.mrf.mxu0
        %v2385 = vadd.f32 0.0, %v2384
        %v2386 = vpop.f32.mrf.mxu0
        %v2387 = vadd.f32 0.0, %v2386
        %2388 = vmatmul.bf16.gmra.mxu0 %v2282
        %v2389 = vpop.f32.mrf.mxu0
        %v2390 = vadd.f32 0.0, %v2389
        %v2391 = vpop.f32.mrf.mxu0
        %v2392 = vadd.f32 0.0, %v2391
        %2393 = vmatmul.bf16.gmra.mxu0 %v2283
        %v2394 = vpop.f32.mrf.mxu0
        %v2395 = vadd.f32 0.0, %v2394
        %v2396 = vpop.f32.mrf.mxu0
        %v2397 = vadd.f32 0.0, %v2396
        %2398 = vmatmul.bf16.gmra.mxu0 %v2284
        %v2399 = vpop.f32.mrf.mxu0
        %v2400 = vadd.f32 0.0, %v2399
        %v2401 = vpop.f32.mrf.mxu0
        %v2402 = vadd.f32 0.0, %v2401
        %2403 = vmatmul.bf16.gmra.mxu0 %v2285
        %v2404 = vpop.f32.mrf.mxu0
        %v2405 = vadd.f32 0.0, %v2404
        %v2406 = vpop.f32.mrf.mxu0
        %v2407 = vadd.f32 0.0, %v2406
        %2408 = vmatmul.bf16.gmra.mxu0 %v2286
        %v2409 = vpop.f32.mrf.mxu0
        %v2410 = vadd.f32 0.0, %v2409
        %v2411 = vpop.f32.mrf.mxu0
        %v2412 = vadd.f32 0.0, %v2411
        %2413 = vmatmul.bf16.gmra.mxu0 %v2287
        %v2414 = vpop.f32.mrf.mxu0
        %v2415 = vadd.f32 0.0, %v2414
        %v2416 = vpop.f32.mrf.mxu0
        %v2417 = vadd.f32 0.0, %v2416
        %2418 = vmatmul.bf16.gmra.mxu0 %v2288
        %v2419 = vpop.f32.mrf.mxu0
        %v2420 = vadd.f32 0.0, %v2419
        %v2421 = vpop.f32.mrf.mxu0
        %v2422 = vadd.f32 0.0, %v2421
        %2423 = vmatmul.bf16.gmra.mxu0 %v2289
        %v2424 = vpop.f32.mrf.mxu0
        %v2425 = vadd.f32 0.0, %v2424
        %v2426 = vpop.f32.mrf.mxu0
        %v2427 = vadd.f32 0.0, %v2426
        %2428 = vmatmul.bf16.gmra.mxu0 %v2290
        %v2429 = vpop.f32.mrf.mxu0
        %v2430 = vadd.f32 0.0, %v2429
        %v2431 = vpop.f32.mrf.mxu0
        %v2432 = vadd.f32 0.0, %v2431
        %2433 = vmatmul.bf16.gmra.mxu0 %v2291
        %v2434 = vpop.f32.mrf.mxu0
        %v2435 = vadd.f32 0.0, %v2434
        %v2436 = vpop.f32.mrf.mxu0
        %v2437 = vadd.f32 0.0, %v2436
        %2438 = vmatmul.bf16.gmra.mxu0 %v2292
        %v2439 = vpop.f32.mrf.mxu0
        %v2440 = vadd.f32 0.0, %v2439
        %v2441 = vpop.f32.mrf.mxu0
        %v2442 = vadd.f32 0.0, %v2441
        %2443 = vmatmul.bf16.gmra.mxu0 %v2293
        %v2444 = vpop.f32.mrf.mxu0
        %v2445 = vadd.f32 0.0, %v2444
        %v2446 = vpop.f32.mrf.mxu0
        %v2447 = vadd.f32 0.0, %v2446
        %2448 = vmatmul.bf16.gmra.mxu0 %v2294
        %v2449 = vpop.f32.mrf.mxu0
        %v2450 = vadd.f32 0.0, %v2449
        %v2451 = vpop.f32.mrf.mxu0
        %v2452 = vadd.f32 0.0, %v2451
        %2453 = vmatmul.bf16.gmra.mxu0 %v2295
        %v2454 = vpop.f32.mrf.mxu0
        %v2455 = vadd.f32 0.0, %v2454
        %v2456 = vpop.f32.mrf.mxu0
        %v2457 = vadd.f32 0.0, %v2456
        %2458 = vmatmul.bf16.gmra.mxu0 %v2296
        %v2459 = vpop.f32.mrf.mxu0
        %v2460 = vadd.f32 0.0, %v2459
        %v2461 = vpop.f32.mrf.mxu0
        %v2462 = vadd.f32 0.0, %v2461
        %2463 = vmatmul.bf16.gmra.mxu0 %v2297
        %v2464 = vpop.f32.mrf.mxu0
        %v2465 = vadd.f32 0.0, %v2464
        %v2466 = vpop.f32.mrf.mxu0
        %v2467 = vadd.f32 0.0, %v2466
        %2468 = vmatmul.bf16.gmra.mxu0 %v2298
        %v2469 = vpop.f32.mrf.mxu0
        %v2470 = vadd.f32 0.0, %v2469
        %v2471 = vpop.f32.mrf.mxu0
        %v2472 = vadd.f32 0.0, %v2471
        %2473 = vmatmul.bf16.gmra.mxu0 %v2299
        %v2474 = vpop.f32.mrf.mxu0
        %v2475 = vadd.f32 0.0, %v2474
        %v2476 = vpop.f32.mrf.mxu0
        %2477 = vdwg.mxu0
        %v2478 = vadd.f32 %v2197, %v2375
        %v2479 = vadd.f32 %v2198, %v2377
        %v2480 = vadd.f32 %v2199, %v2380
        %v2481 = vadd.f32 %v2200, %v2382
        %v2482 = vadd.f32 %v2201, %v2385
        %v2483 = vadd.f32 %v2202, %v2387
        %v2484 = vadd.f32 %v2203, %v2390
        %v2485 = vadd.f32 %v2204, %v2392
        %v2486 = vadd.f32 %v2205, %v2395
        %v2487 = vadd.f32 %v2206, %v2397
        %v2488 = vadd.f32 %v2207, %v2400
        %v2489 = vadd.f32 %v2208, %v2402
        %v2490 = vadd.f32 %v2209, %v2405
        %v2491 = vadd.f32 %v2210, %v2407
        %v2492 = vadd.f32 %v2211, %v2410
        %v2493 = vadd.f32 %v2212, %v2412
        %v2494 = vadd.f32 %v2213, %v2415
        %v2495 = vadd.f32 %v2214, %v2417
        %v2496 = vadd.f32 %v2215, %v2420
        %v2497 = vadd.f32 %v2216, %v2422
        %v2498 = vadd.f32 %v2217, %v2425
        %v2499 = vadd.f32 %v2218, %v2427
        %v2500 = vadd.f32 %v2219, %v2430
        %v2501 = vadd.f32 %v2220, %v2432
        %v2502 = vadd.f32 %v2221, %v2435
        %v2503 = vadd.f32 %v2222, %v2437
        %v2504 = vadd.f32 %v2223, %v2440
        %v2505 = vadd.f32 %v2224, %v2442
        %v2506 = vadd.f32 %v2225, %v2445
        %v2507 = vadd.f32 %v2226, %v2447
        %v2508 = vadd.f32 %v2227, %v2450
        %v2509 = vadd.f32 %v2228, %v2452
        %v2510 = vadd.f32 %v2229, %v2455
        %v2511 = vadd.f32 %v2230, %v2457
        %v2512 = vadd.f32 %v2231, %v2460
        %v2513 = vadd.f32 %v2232, %v2462
        %v2514 = vadd.f32 %v2233, %v2465
        %v2515 = vadd.f32 %v2234, %v2467
        %v2516 = vadd.f32 %v2235, %v2470
        %v2517 = vadd.f32 %v2236, %v2472
        %v2518 = vadd.f32 %v2237, %v2475
        %v2519 = vld [vmem:[#allocation2 + $0x25] sm:$0xff]
        %v2520 = vld [vmem:[#allocation2 + $0x2d] sm:$0xff]
        %v2521 = vld [vmem:[#allocation2 + $0x35] sm:$0xff]
        %v2522 = vld [vmem:[#allocation2 + $0x3d] sm:$0xff]
        %v2523 = vld [vmem:[#allocation2 + $0x45] sm:$0xff]
        %v2524 = vld [vmem:[#allocation2 + $0x4d] sm:$0xff]
        %v2525 = vld [vmem:[#allocation2 + $0x55] sm:$0xff]
        %v2526 = vld [vmem:[#allocation2 + $0x5d] sm:$0xff]
        %v2527 = vld [vmem:[#allocation2 + $0x65] sm:$0xff]
        %v2528 = vld [vmem:[#allocation2 + $0x6d] sm:$0xff]
        %v2529 = vld [vmem:[#allocation2 + $0x75] sm:$0xff]
        %v2530 = vld [vmem:[#allocation2 + $0x7d] sm:$0xff]
        %v2531 = vld [vmem:[#allocation2 + $0x85] sm:$0xff]
        %v2532 = vld [vmem:[#allocation2 + $0x8d] sm:$0xff]
        %v2533 = vld [vmem:[#allocation2 + $0x95] sm:$0xff]
        %v2534 = vld [vmem:[#allocation2 + $0x9d] sm:$0xff]
        %v2535 = vld [vmem:[#allocation2 + $0xa5] sm:$0xff]
        %v2536 = vld [vmem:[#allocation2 + $0xad] sm:$0xff]
        %v2537 = vld [vmem:[#allocation2 + $0xb5] sm:$0xff]
        %v2538 = vld [vmem:[#allocation2 + $0xbd] sm:$0xff]
        %v2539 = vld [vmem:[#allocation2 + $0xc5] sm:$0xff]
        %v2540 = vld [vmem:[#allocation2 + $0xcd] sm:$0xff]
        %v2541 = vld [vmem:[#allocation2 + $0xd5] sm:$0xff]
        %v2542 = vld [vmem:[#allocation2 + $0xdd] sm:$0xff]
        %v2543 = vld [vmem:[#allocation2 + $0xe5] sm:$0xff]
        %v2544 = vld [vmem:[#allocation2 + $0xed] sm:$0xff]
        %v2545 = vld [vmem:[#allocation2 + $0xf5] sm:$0xff]
        %v2546 = vld [vmem:[#allocation2 + $0xfd] sm:$0xff]
        %v2547 = vld [vmem:[#allocation2 + $0x105] sm:$0xff]
        %v2548 = vld [vmem:[#allocation2 + $0x10d] sm:$0xff]
        %v2549 = vld [vmem:[#allocation2 + $0x115] sm:$0xff]
        %v2550 = vld [vmem:[#allocation2 + $0x11d] sm:$0xff]
        %v2551 = vld [vmem:[#allocation2 + $0x125] sm:$0xff]
        %v2552 = vld [vmem:[#allocation2 + $0x12d] sm:$0xff]
        %v2553 = vld [vmem:[#allocation2 + $0x135] sm:$0xff]
        %v2554 = vld [vmem:[#allocation2 + $0x13d] sm:$0xff]
        %v2555 = vld [vmem:[#allocation2 + $0x145] sm:$0xff]
        %v2556 = vld [vmem:[#allocation2 + $0x14d] sm:$0xff]
        %v2557 = vld [vmem:[#allocation2 + $0x155] sm:$0xff]
        %v2558 = vld [vmem:[#allocation2 + $0x15d] sm:$0xff]
        %v2559 = vld [vmem:[#allocation2 + $0x165] sm:$0xf]
        %v2560 = vpack.c.bf16 %v2520, %v2519
        %v2561 = vpack.c.bf16 %v2522, %v2521
        %v2562 = vpack.c.bf16 %v2524, %v2523
        %v2563 = vpack.c.bf16 %v2526, %v2525
        %v2564 = vpack.c.bf16 %v2528, %v2527
        %v2565 = vpack.c.bf16 %v2530, %v2529
        %v2566 = vpack.c.bf16 %v2532, %v2531
        %v2567 = vpack.c.bf16 %v2534, %v2533
        %v2568 = vpack.c.bf16 %v2536, %v2535
        %v2569 = vpack.c.bf16 %v2538, %v2537
        %v2570 = vpack.c.bf16 %v2540, %v2539
        %v2571 = vpack.c.bf16 %v2542, %v2541
        %v2572 = vpack.c.bf16 %v2544, %v2543
        %v2573 = vpack.c.bf16 %v2546, %v2545
        %v2574 = vpack.c.bf16 %v2548, %v2547
        %v2575 = vpack.c.bf16 %v2550, %v2549
        %v2576 = vpack.c.bf16 %v2552, %v2551
        %v2577 = vpack.c.bf16 %v2554, %v2553
        %v2578 = vpack.c.bf16 %v2556, %v2555
        %v2579 = vpack.c.bf16 %v2558, %v2557
        %v2580 = vpack.c.bf16 %v2559, %v2559
        %s2581 = scalar_lea.vmem %s1, 448
        %v2582 = vld [vmem:[%s2581] sm:$0xf]
        %v2583 = vld [vmem:[%s2581 + $0x4] sm:$0xf]
        %v2584 = vld [vmem:[%s2581 + $0x8] sm:$0xf]
        %v2585 = vld [vmem:[%s2581 + $0xc] sm:$0xf]
        %v2586 = vld [vmem:[%s2581 + $0x10] sm:$0xf]
        %v2587 = vld [vmem:[%s2581 + $0x14] sm:$0xf]
        %v2588 = vld [vmem:[%s2581 + $0x18] sm:$0xf]
        %v2589 = vld [vmem:[%s2581 + $0x1c] sm:$0xf]
        %v2590 = vld [vmem:[%s2581 + $0x20] sm:$0xf]
        %v2591 = vld [vmem:[%s2581 + $0x24] sm:$0xf]
        %v2592 = vld [vmem:[%s2581 + $0x28] sm:$0xf]
        %v2593 = vld [vmem:[%s2581 + $0x2c] sm:$0xf]
        %v2594 = vld [vmem:[%s2581 + $0x30] sm:$0xf]
        %v2595 = vld [vmem:[%s2581 + $0x34] sm:$0xf]
        %v2596 = vld [vmem:[%s2581 + $0x38] sm:$0xf]
        %v2597 = vld [vmem:[%s2581 + $0x3c] sm:$0xf]
        %v2614 = vunpack.c.l.b16 %v2582
        %v2615 = vunpack.c.l.b16 %v2583
        %v2616 = vunpack.c.l.b16 %v2584
        %v2617 = vunpack.c.l.b16 %v2585
        %v2618 = vunpack.c.l.b16 %v2586
        %v2619 = vunpack.c.l.b16 %v2587
        %v2620 = vunpack.c.l.b16 %v2588
        %v2621 = vunpack.c.l.b16 %v2589
        %v2622 = vunpack.c.l.b16 %v2590
        %v2623 = vunpack.c.l.b16 %v2591
        %v2624 = vunpack.c.l.b16 %v2592
        %v2625 = vunpack.c.l.b16 %v2593
        %v2626 = vunpack.c.l.b16 %v2594
        %v2627 = vunpack.c.l.b16 %v2595
        %v2628 = vunpack.c.l.b16 %v2596
        %v2629 = vunpack.c.l.b16 %v2597
        %v2630 = vpack.c.b16 %v2615, %v2614
        %v2631 = vpack.c.b16 %v2617, %v2616
        %v2632 = vpack.c.b16 %v2619, %v2618
        %v2633 = vpack.c.b16 %v2621, %v2620
        %v2634 = vpack.c.b16 %v2623, %v2622
        %v2635 = vpack.c.b16 %v2625, %v2624
        %v2636 = vpack.c.b16 %v2627, %v2626
        %v2637 = vpack.c.b16 %v2629, %v2628
        %2646 = vmatpush.bf16.msra.mxu0 %v2637
        %2647 = vmatpush.bf16.msra.mxu0 %v2636
        %2648 = vmatpush.bf16.msra.mxu0 %v2635
        %2649 = vmatpush.bf16.msra.mxu0 %v2634
        %2650 = vmatpush.bf16.msra.mxu0 %v2633
        %2651 = vmatpush.bf16.msra.mxu0 %v2632
        %2652 = vmatpush.bf16.msra.mxu0 %v2631
        %2653 = vmatpush.bf16.msra.mxu0 %v2630
        %2654 = vmatmul.bf16.gmra.mxu0 %v2560
        %v2655 = vpop.f32.mrf.mxu0
        %v2656 = vadd.f32 0.0, %v2655
        %v2657 = vpop.f32.mrf.mxu0
        %v2658 = vadd.f32 0.0, %v2657
        %2659 = vmatmul.bf16.gmra.mxu0 %v2561
        %v2660 = vpop.f32.mrf.mxu0
        %v2661 = vadd.f32 0.0, %v2660
        %v2662 = vpop.f32.mrf.mxu0
        %v2663 = vadd.f32 0.0, %v2662
        %2664 = vmatmul.bf16.gmra.mxu0 %v2562
        %v2665 = vpop.f32.mrf.mxu0
        %v2666 = vadd.f32 0.0, %v2665
        %v2667 = vpop.f32.mrf.mxu0
        %v2668 = vadd.f32 0.0, %v2667
        %2669 = vmatmul.bf16.gmra.mxu0 %v2563
        %v2670 = vpop.f32.mrf.mxu0
        %v2671 = vadd.f32 0.0, %v2670
        %v2672 = vpop.f32.mrf.mxu0
        %v2673 = vadd.f32 0.0, %v2672
        %2674 = vmatmul.bf16.gmra.mxu0 %v2564
        %v2675 = vpop.f32.mrf.mxu0
        %v2676 = vadd.f32 0.0, %v2675
        %v2677 = vpop.f32.mrf.mxu0
        %v2678 = vadd.f32 0.0, %v2677
        %2679 = vmatmul.bf16.gmra.mxu0 %v2565
        %v2680 = vpop.f32.mrf.mxu0
        %v2681 = vadd.f32 0.0, %v2680
        %v2682 = vpop.f32.mrf.mxu0
        %v2683 = vadd.f32 0.0, %v2682
        %2684 = vmatmul.bf16.gmra.mxu0 %v2566
        %v2685 = vpop.f32.mrf.mxu0
        %v2686 = vadd.f32 0.0, %v2685
        %v2687 = vpop.f32.mrf.mxu0
        %v2688 = vadd.f32 0.0, %v2687
        %2689 = vmatmul.bf16.gmra.mxu0 %v2567
        %v2690 = vpop.f32.mrf.mxu0
        %v2691 = vadd.f32 0.0, %v2690
        %v2692 = vpop.f32.mrf.mxu0
        %v2693 = vadd.f32 0.0, %v2692
        %2694 = vmatmul.bf16.gmra.mxu0 %v2568
        %v2695 = vpop.f32.mrf.mxu0
        %v2696 = vadd.f32 0.0, %v2695
        %v2697 = vpop.f32.mrf.mxu0
        %v2698 = vadd.f32 0.0, %v2697
        %2699 = vmatmul.bf16.gmra.mxu0 %v2569
        %v2700 = vpop.f32.mrf.mxu0
        %v2701 = vadd.f32 0.0, %v2700
        %v2702 = vpop.f32.mrf.mxu0
        %v2703 = vadd.f32 0.0, %v2702
        %2704 = vmatmul.bf16.gmra.mxu0 %v2570
        %v2705 = vpop.f32.mrf.mxu0
        %v2706 = vadd.f32 0.0, %v2705
        %v2707 = vpop.f32.mrf.mxu0
        %v2708 = vadd.f32 0.0, %v2707
        %2709 = vmatmul.bf16.gmra.mxu0 %v2571
        %v2710 = vpop.f32.mrf.mxu0
        %v2711 = vadd.f32 0.0, %v2710
        %v2712 = vpop.f32.mrf.mxu0
        %v2713 = vadd.f32 0.0, %v2712
        %2714 = vmatmul.bf16.gmra.mxu0 %v2572
        %v2715 = vpop.f32.mrf.mxu0
        %v2716 = vadd.f32 0.0, %v2715
        %v2717 = vpop.f32.mrf.mxu0
        %v2718 = vadd.f32 0.0, %v2717
        %2719 = vmatmul.bf16.gmra.mxu0 %v2573
        %v2720 = vpop.f32.mrf.mxu0
        %v2721 = vadd.f32 0.0, %v2720
        %v2722 = vpop.f32.mrf.mxu0
        %v2723 = vadd.f32 0.0, %v2722
        %2724 = vmatmul.bf16.gmra.mxu0 %v2574
        %v2725 = vpop.f32.mrf.mxu0
        %v2726 = vadd.f32 0.0, %v2725
        %v2727 = vpop.f32.mrf.mxu0
        %v2728 = vadd.f32 0.0, %v2727
        %2729 = vmatmul.bf16.gmra.mxu0 %v2575
        %v2730 = vpop.f32.mrf.mxu0
        %v2731 = vadd.f32 0.0, %v2730
        %v2732 = vpop.f32.mrf.mxu0
        %v2733 = vadd.f32 0.0, %v2732
        %2734 = vmatmul.bf16.gmra.mxu0 %v2576
        %v2735 = vpop.f32.mrf.mxu0
        %v2736 = vadd.f32 0.0, %v2735
        %v2737 = vpop.f32.mrf.mxu0
        %v2738 = vadd.f32 0.0, %v2737
        %2739 = vmatmul.bf16.gmra.mxu0 %v2577
        %v2740 = vpop.f32.mrf.mxu0
        %v2741 = vadd.f32 0.0, %v2740
        %v2742 = vpop.f32.mrf.mxu0
        %v2743 = vadd.f32 0.0, %v2742
        %2744 = vmatmul.bf16.gmra.mxu0 %v2578
        %v2745 = vpop.f32.mrf.mxu0
        %v2746 = vadd.f32 0.0, %v2745
        %v2747 = vpop.f32.mrf.mxu0
        %v2748 = vadd.f32 0.0, %v2747
        %2749 = vmatmul.bf16.gmra.mxu0 %v2579
        %v2750 = vpop.f32.mrf.mxu0
        %v2751 = vadd.f32 0.0, %v2750
        %v2752 = vpop.f32.mrf.mxu0
        %v2753 = vadd.f32 0.0, %v2752
        %2754 = vmatmul.bf16.gmra.mxu0 %v2580
        %v2755 = vpop.f32.mrf.mxu0
        %v2756 = vadd.f32 0.0, %v2755
        %v2757 = vpop.f32.mrf.mxu0
        %2758 = vdwg.mxu0
        %v2759 = vadd.f32 %v2478, %v2656
        %v2760 = vadd.f32 %v2479, %v2658
        %v2761 = vadd.f32 %v2480, %v2661
        %v2762 = vadd.f32 %v2481, %v2663
        %v2763 = vadd.f32 %v2482, %v2666
        %v2764 = vadd.f32 %v2483, %v2668
        %v2765 = vadd.f32 %v2484, %v2671
        %v2766 = vadd.f32 %v2485, %v2673
        %v2767 = vadd.f32 %v2486, %v2676
        %v2768 = vadd.f32 %v2487, %v2678
        %v2769 = vadd.f32 %v2488, %v2681
        %v2770 = vadd.f32 %v2489, %v2683
        %v2771 = vadd.f32 %v2490, %v2686
        %v2772 = vadd.f32 %v2491, %v2688
        %v2773 = vadd.f32 %v2492, %v2691
        %v2774 = vadd.f32 %v2493, %v2693
        %v2775 = vadd.f32 %v2494, %v2696
        %v2776 = vadd.f32 %v2495, %v2698
        %v2777 = vadd.f32 %v2496, %v2701
        %v2778 = vadd.f32 %v2497, %v2703
        %v2779 = vadd.f32 %v2498, %v2706
        %v2780 = vadd.f32 %v2499, %v2708
        %v2781 = vadd.f32 %v2500, %v2711
        %v2782 = vadd.f32 %v2501, %v2713
        %v2783 = vadd.f32 %v2502, %v2716
        %v2784 = vadd.f32 %v2503, %v2718
        %v2785 = vadd.f32 %v2504, %v2721
        %v2786 = vadd.f32 %v2505, %v2723
        %v2787 = vadd.f32 %v2506, %v2726
        %v2788 = vadd.f32 %v2507, %v2728
        %v2789 = vadd.f32 %v2508, %v2731
        %v2790 = vadd.f32 %v2509, %v2733
        %v2791 = vadd.f32 %v2510, %v2736
        %v2792 = vadd.f32 %v2511, %v2738
        %v2793 = vadd.f32 %v2512, %v2741
        %v2794 = vadd.f32 %v2513, %v2743
        %v2795 = vadd.f32 %v2514, %v2746
        %v2796 = vadd.f32 %v2515, %v2748
        %v2797 = vadd.f32 %v2516, %v2751
        %v2798 = vadd.f32 %v2517, %v2753
        %v2799 = vadd.f32 %v2518, %v2756
        %v2800 = vld [vmem:[#allocation2 + $0x26] sm:$0xff]
        %v2801 = vld [vmem:[#allocation2 + $0x2e] sm:$0xff]
        %v2802 = vld [vmem:[#allocation2 + $0x36] sm:$0xff]
        %v2803 = vld [vmem:[#allocation2 + $0x3e] sm:$0xff]
        %v2804 = vld [vmem:[#allocation2 + $0x46] sm:$0xff]
        %v2805 = vld [vmem:[#allocation2 + $0x4e] sm:$0xff]
        %v2806 = vld [vmem:[#allocation2 + $0x56] sm:$0xff]
        %v2807 = vld [vmem:[#allocation2 + $0x5e] sm:$0xff]
        %v2808 = vld [vmem:[#allocation2 + $0x66] sm:$0xff]
        %v2809 = vld [vmem:[#allocation2 + $0x6e] sm:$0xff]
        %v2810 = vld [vmem:[#allocation2 + $0x76] sm:$0xff]
        %v2811 = vld [vmem:[#allocation2 + $0x7e] sm:$0xff]
        %v2812 = vld [vmem:[#allocation2 + $0x86] sm:$0xff]
        %v2813 = vld [vmem:[#allocation2 + $0x8e] sm:$0xff]
        %v2814 = vld [vmem:[#allocation2 + $0x96] sm:$0xff]
        %v2815 = vld [vmem:[#allocation2 + $0x9e] sm:$0xff]
        %v2816 = vld [vmem:[#allocation2 + $0xa6] sm:$0xff]
        %v2817 = vld [vmem:[#allocation2 + $0xae] sm:$0xff]
        %v2818 = vld [vmem:[#allocation2 + $0xb6] sm:$0xff]
        %v2819 = vld [vmem:[#allocation2 + $0xbe] sm:$0xff]
        %v2820 = vld [vmem:[#allocation2 + $0xc6] sm:$0xff]
        %v2821 = vld [vmem:[#allocation2 + $0xce] sm:$0xff]
        %v2822 = vld [vmem:[#allocation2 + $0xd6] sm:$0xff]
        %v2823 = vld [vmem:[#allocation2 + $0xde] sm:$0xff]
        %v2824 = vld [vmem:[#allocation2 + $0xe6] sm:$0xff]
        %v2825 = vld [vmem:[#allocation2 + $0xee] sm:$0xff]
        %v2826 = vld [vmem:[#allocation2 + $0xf6] sm:$0xff]
        %v2827 = vld [vmem:[#allocation2 + $0xfe] sm:$0xff]
        %v2828 = vld [vmem:[#allocation2 + $0x106] sm:$0xff]
        %v2829 = vld [vmem:[#allocation2 + $0x10e] sm:$0xff]
        %v2830 = vld [vmem:[#allocation2 + $0x116] sm:$0xff]
        %v2831 = vld [vmem:[#allocation2 + $0x11e] sm:$0xff]
        %v2832 = vld [vmem:[#allocation2 + $0x126] sm:$0xff]
        %v2833 = vld [vmem:[#allocation2 + $0x12e] sm:$0xff]
        %v2834 = vld [vmem:[#allocation2 + $0x136] sm:$0xff]
        %v2835 = vld [vmem:[#allocation2 + $0x13e] sm:$0xff]
        %v2836 = vld [vmem:[#allocation2 + $0x146] sm:$0xff]
        %v2837 = vld [vmem:[#allocation2 + $0x14e] sm:$0xff]
        %v2838 = vld [vmem:[#allocation2 + $0x156] sm:$0xff]
        %v2839 = vld [vmem:[#allocation2 + $0x15e] sm:$0xff]
        %v2840 = vld [vmem:[#allocation2 + $0x166] sm:$0xf]
        %v2841 = vpack.c.bf16 %v2801, %v2800
        %v2842 = vpack.c.bf16 %v2803, %v2802
        %v2843 = vpack.c.bf16 %v2805, %v2804
        %v2844 = vpack.c.bf16 %v2807, %v2806
        %v2845 = vpack.c.bf16 %v2809, %v2808
        %v2846 = vpack.c.bf16 %v2811, %v2810
        %v2847 = vpack.c.bf16 %v2813, %v2812
        %v2848 = vpack.c.bf16 %v2815, %v2814
        %v2849 = vpack.c.bf16 %v2817, %v2816
        %v2850 = vpack.c.bf16 %v2819, %v2818
        %v2851 = vpack.c.bf16 %v2821, %v2820
        %v2852 = vpack.c.bf16 %v2823, %v2822
        %v2853 = vpack.c.bf16 %v2825, %v2824
        %v2854 = vpack.c.bf16 %v2827, %v2826
        %v2855 = vpack.c.bf16 %v2829, %v2828
        %v2856 = vpack.c.bf16 %v2831, %v2830
        %v2857 = vpack.c.bf16 %v2833, %v2832
        %v2858 = vpack.c.bf16 %v2835, %v2834
        %v2859 = vpack.c.bf16 %v2837, %v2836
        %v2860 = vpack.c.bf16 %v2839, %v2838
        %v2861 = vpack.c.bf16 %v2840, %v2840
        %s2862 = scalar_lea.vmem %s1, 512
        %v2863 = vld [vmem:[%s2862] sm:$0xf]
        %v2864 = vld [vmem:[%s2862 + $0x4] sm:$0xf]
        %v2865 = vld [vmem:[%s2862 + $0x8] sm:$0xf]
        %v2866 = vld [vmem:[%s2862 + $0xc] sm:$0xf]
        %v2867 = vld [vmem:[%s2862 + $0x10] sm:$0xf]
        %v2868 = vld [vmem:[%s2862 + $0x14] sm:$0xf]
        %v2869 = vld [vmem:[%s2862 + $0x18] sm:$0xf]
        %v2870 = vld [vmem:[%s2862 + $0x1c] sm:$0xf]
        %v2871 = vld [vmem:[%s2862 + $0x20] sm:$0xf]
        %v2872 = vld [vmem:[%s2862 + $0x24] sm:$0xf]
        %v2873 = vld [vmem:[%s2862 + $0x28] sm:$0xf]
        %v2874 = vld [vmem:[%s2862 + $0x2c] sm:$0xf]
        %v2875 = vld [vmem:[%s2862 + $0x30] sm:$0xf]
        %v2876 = vld [vmem:[%s2862 + $0x34] sm:$0xf]
        %v2877 = vld [vmem:[%s2862 + $0x38] sm:$0xf]
        %v2878 = vld [vmem:[%s2862 + $0x3c] sm:$0xf]
        %v2895 = vunpack.c.l.b16 %v2863
        %v2896 = vunpack.c.l.b16 %v2864
        %v2897 = vunpack.c.l.b16 %v2865
        %v2898 = vunpack.c.l.b16 %v2866
        %v2899 = vunpack.c.l.b16 %v2867
        %v2900 = vunpack.c.l.b16 %v2868
        %v2901 = vunpack.c.l.b16 %v2869
        %v2902 = vunpack.c.l.b16 %v2870
        %v2903 = vunpack.c.l.b16 %v2871
        %v2904 = vunpack.c.l.b16 %v2872
        %v2905 = vunpack.c.l.b16 %v2873
        %v2906 = vunpack.c.l.b16 %v2874
        %v2907 = vunpack.c.l.b16 %v2875
        %v2908 = vunpack.c.l.b16 %v2876
        %v2909 = vunpack.c.l.b16 %v2877
        %v2910 = vunpack.c.l.b16 %v2878
        %v2911 = vpack.c.b16 %v2896, %v2895
        %v2912 = vpack.c.b16 %v2898, %v2897
        %v2913 = vpack.c.b16 %v2900, %v2899
        %v2914 = vpack.c.b16 %v2902, %v2901
        %v2915 = vpack.c.b16 %v2904, %v2903
        %v2916 = vpack.c.b16 %v2906, %v2905
        %v2917 = vpack.c.b16 %v2908, %v2907
        %v2918 = vpack.c.b16 %v2910, %v2909
        %2927 = vmatpush.bf16.msra.mxu0 %v2918
        %2928 = vmatpush.bf16.msra.mxu0 %v2917
        %2929 = vmatpush.bf16.msra.mxu0 %v2916
        %2930 = vmatpush.bf16.msra.mxu0 %v2915
        %2931 = vmatpush.bf16.msra.mxu0 %v2914
        %2932 = vmatpush.bf16.msra.mxu0 %v2913
        %2933 = vmatpush.bf16.msra.mxu0 %v2912
        %2934 = vmatpush.bf16.msra.mxu0 %v2911
        %2935 = vmatmul.bf16.gmra.mxu0 %v2841
        %v2936 = vpop.f32.mrf.mxu0
        %v2937 = vadd.f32 0.0, %v2936
        %v2938 = vpop.f32.mrf.mxu0
        %v2939 = vadd.f32 0.0, %v2938
        %2940 = vmatmul.bf16.gmra.mxu0 %v2842
        %v2941 = vpop.f32.mrf.mxu0
        %v2942 = vadd.f32 0.0, %v2941
        %v2943 = vpop.f32.mrf.mxu0
        %v2944 = vadd.f32 0.0, %v2943
        %2945 = vmatmul.bf16.gmra.mxu0 %v2843
        %v2946 = vpop.f32.mrf.mxu0
        %v2947 = vadd.f32 0.0, %v2946
        %v2948 = vpop.f32.mrf.mxu0
        %v2949 = vadd.f32 0.0, %v2948
        %2950 = vmatmul.bf16.gmra.mxu0 %v2844
        %v2951 = vpop.f32.mrf.mxu0
        %v2952 = vadd.f32 0.0, %v2951
        %v2953 = vpop.f32.mrf.mxu0
        %v2954 = vadd.f32 0.0, %v2953
        %2955 = vmatmul.bf16.gmra.mxu0 %v2845
        %v2956 = vpop.f32.mrf.mxu0
        %v2957 = vadd.f32 0.0, %v2956
        %v2958 = vpop.f32.mrf.mxu0
        %v2959 = vadd.f32 0.0, %v2958
        %2960 = vmatmul.bf16.gmra.mxu0 %v2846
        %v2961 = vpop.f32.mrf.mxu0
        %v2962 = vadd.f32 0.0, %v2961
        %v2963 = vpop.f32.mrf.mxu0
        %v2964 = vadd.f32 0.0, %v2963
        %2965 = vmatmul.bf16.gmra.mxu0 %v2847
        %v2966 = vpop.f32.mrf.mxu0
        %v2967 = vadd.f32 0.0, %v2966
        %v2968 = vpop.f32.mrf.mxu0
        %v2969 = vadd.f32 0.0, %v2968
        %2970 = vmatmul.bf16.gmra.mxu0 %v2848
        %v2971 = vpop.f32.mrf.mxu0
        %v2972 = vadd.f32 0.0, %v2971
        %v2973 = vpop.f32.mrf.mxu0
        %v2974 = vadd.f32 0.0, %v2973
        %2975 = vmatmul.bf16.gmra.mxu0 %v2849
        %v2976 = vpop.f32.mrf.mxu0
        %v2977 = vadd.f32 0.0, %v2976
        %v2978 = vpop.f32.mrf.mxu0
        %v2979 = vadd.f32 0.0, %v2978
        %2980 = vmatmul.bf16.gmra.mxu0 %v2850
        %v2981 = vpop.f32.mrf.mxu0
        %v2982 = vadd.f32 0.0, %v2981
        %v2983 = vpop.f32.mrf.mxu0
        %v2984 = vadd.f32 0.0, %v2983
        %2985 = vmatmul.bf16.gmra.mxu0 %v2851
        %v2986 = vpop.f32.mrf.mxu0
        %v2987 = vadd.f32 0.0, %v2986
        %v2988 = vpop.f32.mrf.mxu0
        %v2989 = vadd.f32 0.0, %v2988
        %2990 = vmatmul.bf16.gmra.mxu0 %v2852
        %v2991 = vpop.f32.mrf.mxu0
        %v2992 = vadd.f32 0.0, %v2991
        %v2993 = vpop.f32.mrf.mxu0
        %v2994 = vadd.f32 0.0, %v2993
        %2995 = vmatmul.bf16.gmra.mxu0 %v2853
        %v2996 = vpop.f32.mrf.mxu0
        %v2997 = vadd.f32 0.0, %v2996
        %v2998 = vpop.f32.mrf.mxu0
        %v2999 = vadd.f32 0.0, %v2998
        %3000 = vmatmul.bf16.gmra.mxu0 %v2854
        %v3001 = vpop.f32.mrf.mxu0
        %v3002 = vadd.f32 0.0, %v3001
        %v3003 = vpop.f32.mrf.mxu0
        %v3004 = vadd.f32 0.0, %v3003
        %3005 = vmatmul.bf16.gmra.mxu0 %v2855
        %v3006 = vpop.f32.mrf.mxu0
        %v3007 = vadd.f32 0.0, %v3006
        %v3008 = vpop.f32.mrf.mxu0
        %v3009 = vadd.f32 0.0, %v3008
        %3010 = vmatmul.bf16.gmra.mxu0 %v2856
        %v3011 = vpop.f32.mrf.mxu0
        %v3012 = vadd.f32 0.0, %v3011
        %v3013 = vpop.f32.mrf.mxu0
        %v3014 = vadd.f32 0.0, %v3013
        %3015 = vmatmul.bf16.gmra.mxu0 %v2857
        %v3016 = vpop.f32.mrf.mxu0
        %v3017 = vadd.f32 0.0, %v3016
        %v3018 = vpop.f32.mrf.mxu0
        %v3019 = vadd.f32 0.0, %v3018
        %3020 = vmatmul.bf16.gmra.mxu0 %v2858
        %v3021 = vpop.f32.mrf.mxu0
        %v3022 = vadd.f32 0.0, %v3021
        %v3023 = vpop.f32.mrf.mxu0
        %v3024 = vadd.f32 0.0, %v3023
        %3025 = vmatmul.bf16.gmra.mxu0 %v2859
        %v3026 = vpop.f32.mrf.mxu0
        %v3027 = vadd.f32 0.0, %v3026
        %v3028 = vpop.f32.mrf.mxu0
        %v3029 = vadd.f32 0.0, %v3028
        %3030 = vmatmul.bf16.gmra.mxu0 %v2860
        %v3031 = vpop.f32.mrf.mxu0
        %v3032 = vadd.f32 0.0, %v3031
        %v3033 = vpop.f32.mrf.mxu0
        %v3034 = vadd.f32 0.0, %v3033
        %3035 = vmatmul.bf16.gmra.mxu0 %v2861
        %v3036 = vpop.f32.mrf.mxu0
        %v3037 = vadd.f32 0.0, %v3036
        %v3038 = vpop.f32.mrf.mxu0
        %3039 = vdwg.mxu0
        %v3040 = vadd.f32 %v2759, %v2937
        %v3041 = vadd.f32 %v2760, %v2939
        %v3042 = vadd.f32 %v2761, %v2942
        %v3043 = vadd.f32 %v2762, %v2944
        %v3044 = vadd.f32 %v2763, %v2947
        %v3045 = vadd.f32 %v2764, %v2949
        %v3046 = vadd.f32 %v2765, %v2952
        %v3047 = vadd.f32 %v2766, %v2954
        %v3048 = vadd.f32 %v2767, %v2957
        %v3049 = vadd.f32 %v2768, %v2959
        %v3050 = vadd.f32 %v2769, %v2962
        %v3051 = vadd.f32 %v2770, %v2964
        %v3052 = vadd.f32 %v2771, %v2967
        %v3053 = vadd.f32 %v2772, %v2969
        %v3054 = vadd.f32 %v2773, %v2972
        %v3055 = vadd.f32 %v2774, %v2974
        %v3056 = vadd.f32 %v2775, %v2977
        %v3057 = vadd.f32 %v2776, %v2979
        %v3058 = vadd.f32 %v2777, %v2982
        %v3059 = vadd.f32 %v2778, %v2984
        %v3060 = vadd.f32 %v2779, %v2987
        %v3061 = vadd.f32 %v2780, %v2989
        %v3062 = vadd.f32 %v2781, %v2992
        %v3063 = vadd.f32 %v2782, %v2994
        %v3064 = vadd.f32 %v2783, %v2997
        %v3065 = vadd.f32 %v2784, %v2999
        %v3066 = vadd.f32 %v2785, %v3002
        %v3067 = vadd.f32 %v2786, %v3004
        %v3068 = vadd.f32 %v2787, %v3007
        %v3069 = vadd.f32 %v2788, %v3009
        %v3070 = vadd.f32 %v2789, %v3012
        %v3071 = vadd.f32 %v2790, %v3014
        %v3072 = vadd.f32 %v2791, %v3017
        %v3073 = vadd.f32 %v2792, %v3019
        %v3074 = vadd.f32 %v2793, %v3022
        %v3075 = vadd.f32 %v2794, %v3024
        %v3076 = vadd.f32 %v2795, %v3027
        %v3077 = vadd.f32 %v2796, %v3029
        %v3078 = vadd.f32 %v2797, %v3032
        %v3079 = vadd.f32 %v2798, %v3034
        %v3080 = vadd.f32 %v2799, %v3037
        %v3081 = vld [vmem:[%s2] sm:$0x1]
        %v3083 = vperm.slane %v3081, 0
        %v3085 = vadd.f32 %v3040, %v3083
        %v3086 = vadd.f32 %v3041, %v3083
        %v3087 = vadd.f32 %v3042, %v3083
        %v3088 = vadd.f32 %v3043, %v3083
        %v3089 = vadd.f32 %v3044, %v3083
        %v3090 = vadd.f32 %v3045, %v3083
        %v3091 = vadd.f32 %v3046, %v3083
        %v3092 = vadd.f32 %v3047, %v3083
        %v3093 = vadd.f32 %v3048, %v3083
        %v3094 = vadd.f32 %v3049, %v3083
        %v3095 = vadd.f32 %v3050, %v3083
        %v3096 = vadd.f32 %v3051, %v3083
        %v3097 = vadd.f32 %v3052, %v3083
        %v3098 = vadd.f32 %v3053, %v3083
        %v3099 = vadd.f32 %v3054, %v3083
        %v3100 = vadd.f32 %v3055, %v3083
        %v3101 = vadd.f32 %v3056, %v3083
        %v3102 = vadd.f32 %v3057, %v3083
        %v3103 = vadd.f32 %v3058, %v3083
        %v3104 = vadd.f32 %v3059, %v3083
        %v3105 = vadd.f32 %v3060, %v3083
        %v3106 = vadd.f32 %v3061, %v3083
        %v3107 = vadd.f32 %v3062, %v3083
        %v3108 = vadd.f32 %v3063, %v3083
        %v3109 = vadd.f32 %v3064, %v3083
        %v3110 = vadd.f32 %v3065, %v3083
        %v3111 = vadd.f32 %v3066, %v3083
        %v3112 = vadd.f32 %v3067, %v3083
        %v3113 = vadd.f32 %v3068, %v3083
        %v3114 = vadd.f32 %v3069, %v3083
        %v3115 = vadd.f32 %v3070, %v3083
        %v3116 = vadd.f32 %v3071, %v3083
        %v3117 = vadd.f32 %v3072, %v3083
        %v3118 = vadd.f32 %v3073, %v3083
        %v3119 = vadd.f32 %v3074, %v3083
        %v3120 = vadd.f32 %v3075, %v3083
        %v3121 = vadd.f32 %v3076, %v3083
        %v3122 = vadd.f32 %v3077, %v3083
        %v3123 = vadd.f32 %v3078, %v3083
        %v3124 = vadd.f32 %v3079, %v3083
        %v3125 = vadd.f32 %v3080, %v3083
        %v3126 = vmax.f32 %v3085, 0.0
        %v3127 = vmax.f32 %v3086, 0.0
        %v3128 = vmax.f32 %v3087, 0.0
        %v3129 = vmax.f32 %v3088, 0.0
        %v3130 = vmax.f32 %v3089, 0.0
        %v3131 = vmax.f32 %v3090, 0.0
        %v3132 = vmax.f32 %v3091, 0.0
        %v3133 = vmax.f32 %v3092, 0.0
        %v3134 = vmax.f32 %v3093, 0.0
        %v3135 = vmax.f32 %v3094, 0.0
        %v3136 = vmax.f32 %v3095, 0.0
        %v3137 = vmax.f32 %v3096, 0.0
        %v3138 = vmax.f32 %v3097, 0.0
        %v3139 = vmax.f32 %v3098, 0.0
        %v3140 = vmax.f32 %v3099, 0.0
        %v3141 = vmax.f32 %v3100, 0.0
        %v3142 = vmax.f32 %v3101, 0.0
        %v3143 = vmax.f32 %v3102, 0.0
        %v3144 = vmax.f32 %v3103, 0.0
        %v3145 = vmax.f32 %v3104, 0.0
        %v3146 = vmax.f32 %v3105, 0.0
        %v3147 = vmax.f32 %v3106, 0.0
        %v3148 = vmax.f32 %v3107, 0.0
        %v3149 = vmax.f32 %v3108, 0.0
        %v3150 = vmax.f32 %v3109, 0.0
        %v3151 = vmax.f32 %v3110, 0.0
        %v3152 = vmax.f32 %v3111, 0.0
        %v3153 = vmax.f32 %v3112, 0.0
        %v3154 = vmax.f32 %v3113, 0.0
        %v3155 = vmax.f32 %v3114, 0.0
        %v3156 = vmax.f32 %v3115, 0.0
        %v3157 = vmax.f32 %v3116, 0.0
        %v3158 = vmax.f32 %v3117, 0.0
        %v3159 = vmax.f32 %v3118, 0.0
        %v3160 = vmax.f32 %v3119, 0.0
        %v3161 = vmax.f32 %v3120, 0.0
        %v3162 = vmax.f32 %v3121, 0.0
        %v3163 = vmax.f32 %v3122, 0.0
        %v3164 = vmax.f32 %v3123, 0.0
        %v3165 = vmax.f32 %v3124, 0.0
        %v3166 = vmax.f32 %v3125, 0.0
        %3167 = vst [vmem:[#allocation3] sm:$0xff] %v3126
        %3168 = vst [vmem:[#allocation3 + $0x8] sm:$0xff] %v3127
        %3169 = vst [vmem:[#allocation3 + $0x10] sm:$0xff] %v3128
        %3170 = vst [vmem:[#allocation3 + $0x18] sm:$0xff] %v3129
        %3171 = vst [vmem:[#allocation3 + $0x20] sm:$0xff] %v3130
        %3172 = vst [vmem:[#allocation3 + $0x28] sm:$0xff] %v3131
        %3173 = vst [vmem:[#allocation3 + $0x30] sm:$0xff] %v3132
        %3174 = vst [vmem:[#allocation3 + $0x38] sm:$0xff] %v3133
        %3175 = vst [vmem:[#allocation3 + $0x40] sm:$0xff] %v3134
        %3176 = vst [vmem:[#allocation3 + $0x48] sm:$0xff] %v3135
        %3177 = vst [vmem:[#allocation3 + $0x50] sm:$0xff] %v3136
        %3178 = vst [vmem:[#allocation3 + $0x58] sm:$0xff] %v3137
        %3179 = vst [vmem:[#allocation3 + $0x60] sm:$0xff] %v3138
        %3180 = vst [vmem:[#allocation3 + $0x68] sm:$0xff] %v3139
        %3181 = vst [vmem:[#allocation3 + $0x70] sm:$0xff] %v3140
        %3182 = vst [vmem:[#allocation3 + $0x78] sm:$0xff] %v3141
        %3183 = vst [vmem:[#allocation3 + $0x80] sm:$0xff] %v3142
        %3184 = vst [vmem:[#allocation3 + $0x88] sm:$0xff] %v3143
        %3185 = vst [vmem:[#allocation3 + $0x90] sm:$0xff] %v3144
        %3186 = vst [vmem:[#allocation3 + $0x98] sm:$0xff] %v3145
        %3187 = vst [vmem:[#allocation3 + $0xa0] sm:$0xff] %v3146
        %3188 = vst [vmem:[#allocation3 + $0xa8] sm:$0xff] %v3147
        %3189 = vst [vmem:[#allocation3 + $0xb0] sm:$0xff] %v3148
        %3190 = vst [vmem:[#allocation3 + $0xb8] sm:$0xff] %v3149
        %3191 = vst [vmem:[#allocation3 + $0xc0] sm:$0xff] %v3150
        %3192 = vst [vmem:[#allocation3 + $0xc8] sm:$0xff] %v3151
        %3193 = vst [vmem:[#allocation3 + $0xd0] sm:$0xff] %v3152
        %3194 = vst [vmem:[#allocation3 + $0xd8] sm:$0xff] %v3153
        %3195 = vst [vmem:[#allocation3 + $0xe0] sm:$0xff] %v3154
        %3196 = vst [vmem:[#allocation3 + $0xe8] sm:$0xff] %v3155
        %3197 = vst [vmem:[#allocation3 + $0xf0] sm:$0xff] %v3156
        %3198 = vst [vmem:[#allocation3 + $0xf8] sm:$0xff] %v3157
        %3199 = vst [vmem:[#allocation3 + $0x100] sm:$0xff] %v3158
        %3200 = vst [vmem:[#allocation3 + $0x108] sm:$0xff] %v3159
        %3201 = vst [vmem:[#allocation3 + $0x110] sm:$0xff] %v3160
        %3202 = vst [vmem:[#allocation3 + $0x118] sm:$0xff] %v3161
        %3203 = vst [vmem:[#allocation3 + $0x120] sm:$0xff] %v3162
        %3204 = vst [vmem:[#allocation3 + $0x128] sm:$0xff] %v3163
        %3205 = vst [vmem:[#allocation3 + $0x130] sm:$0xff] %v3164
        %3206 = vst [vmem:[#allocation3 + $0x138] sm:$0xff] %v3165
        %3207 = vst [vmem:[#allocation3 + $0x140] sm:$0xf] %v3166
        %3208 = vst [vmem:[#allocation2 + $0x13] sm:$0xff] 0.0
        %3209 = vst [vmem:[#allocation2 + $0x1b] sm:$0xff] 0.0
        %3210 = vst [vmem:[#allocation2 + $0x23] sm:$0xff] 0.0
        %3211 = vst [vmem:[#allocation2 + $0x2b] sm:$0xff] 0.0
        %3212 = vst [vmem:[#allocation2 + $0x33] sm:$0xff] 0.0
        %3213 = vst [vmem:[#allocation2 + $0x3b] sm:$0xff] 0.0
        %3214 = vst [vmem:[#allocation2 + $0x43] sm:$0xff] 0.0
        %3215 = vst [vmem:[#allocation2 + $0x4b] sm:$0xff] 0.0
        %3216 = vst [vmem:[#allocation2 + $0x53] sm:$0xff] 0.0
        %3217 = vst [vmem:[#allocation2 + $0x5b] sm:$0xff] 0.0
        %3218 = vst [vmem:[#allocation2 + $0x63] sm:$0xff] 0.0
        %3219 = vst [vmem:[#allocation2 + $0x6b] sm:$0xff] 0.0
        %3220 = vst [vmem:[#allocation2 + $0x73] sm:$0xf] 0.0
        %v3221 = vld [vmem:[#allocation3] sm:$0xff]
        %v3222 = vld [vmem:[#allocation3 + $0x8] sm:$0xff]
        %v3223 = vld [vmem:[#allocation3 + $0x10] sm:$0xff]
        %v3224 = vld [vmem:[#allocation3 + $0x18] sm:$0xff]
        %v3225 = vld [vmem:[#allocation3 + $0x20] sm:$0xff]
        %v3226 = vld [vmem:[#allocation3 + $0x28] sm:$0xff]
        %v3227 = vld [vmem:[#allocation3 + $0x30] sm:$0xff]
        %v3228 = vld [vmem:[#allocation3 + $0x38] sm:$0xff]
        %v3229 = vld [vmem:[#allocation3 + $0x40] sm:$0xff]
        %v3230 = vld [vmem:[#allocation3 + $0x48] sm:$0xff]
        %v3231 = vld [vmem:[#allocation3 + $0x50] sm:$0xff]
        %v3232 = vld [vmem:[#allocation3 + $0x58] sm:$0xff]
        %v3233 = vld [vmem:[#allocation3 + $0x60] sm:$0xff]
        %v3234 = vld [vmem:[#allocation3 + $0x68] sm:$0xff]
        %v3235 = vld [vmem:[#allocation3 + $0x70] sm:$0xff]
        %v3236 = vld [vmem:[#allocation3 + $0x78] sm:$0xff]
        %v3237 = vld [vmem:[#allocation3 + $0x80] sm:$0xff]
        %v3238 = vld [vmem:[#allocation3 + $0x88] sm:$0xff]
        %v3239 = vld [vmem:[#allocation3 + $0x90] sm:$0xff]
        %v3240 = vld [vmem:[#allocation3 + $0x98] sm:$0xff]
        %v3241 = vld [vmem:[#allocation3 + $0xa0] sm:$0xff]
        %v3242 = vld [vmem:[#allocation3 + $0xa8] sm:$0xff]
        %v3243 = vld [vmem:[#allocation3 + $0xb0] sm:$0xff]
        %v3244 = vld [vmem:[#allocation3 + $0xb8] sm:$0xff]
        %v3245 = vld [vmem:[#allocation3 + $0xc0] sm:$0xff]
        %v3246 = vld [vmem:[#allocation3 + $0xc8] sm:$0xff]
        %v3247 = vld [vmem:[#allocation3 + $0xd0] sm:$0xff]
        %v3248 = vld [vmem:[#allocation3 + $0xd8] sm:$0xff]
        %v3249 = vld [vmem:[#allocation3 + $0xe0] sm:$0xff]
        %v3250 = vld [vmem:[#allocation3 + $0xe8] sm:$0xff]
        %v3251 = vld [vmem:[#allocation3 + $0xf0] sm:$0xff]
        %v3252 = vld [vmem:[#allocation3 + $0xf8] sm:$0xff]
        %v3253 = vld [vmem:[#allocation3 + $0x100] sm:$0xff]
        %v3254 = vld [vmem:[#allocation3 + $0x108] sm:$0xff]
        %v3255 = vld [vmem:[#allocation3 + $0x110] sm:$0xff]
        %v3256 = vld [vmem:[#allocation3 + $0x118] sm:$0xff]
        %v3257 = vld [vmem:[#allocation3 + $0x120] sm:$0xff]
        %v3258 = vld [vmem:[#allocation3 + $0x128] sm:$0xff]
        %v3259 = vld [vmem:[#allocation3 + $0x130] sm:$0x3]
        %v3260 = vld [vmem:[#allocation3 + $0x12] sm:$0xff]
        %v3261 = vld [vmem:[#allocation3 + $0x1a] sm:$0xff]
        %v3262 = vld [vmem:[#allocation3 + $0x22] sm:$0xff]
        %v3263 = vld [vmem:[#allocation3 + $0x2a] sm:$0xff]
        %v3264 = vld [vmem:[#allocation3 + $0x32] sm:$0xff]
        %v3265 = vld [vmem:[#allocation3 + $0x3a] sm:$0xff]
        %v3266 = vld [vmem:[#allocation3 + $0x42] sm:$0xff]
        %v3267 = vld [vmem:[#allocation3 + $0x4a] sm:$0xff]
        %v3268 = vld [vmem:[#allocation3 + $0x52] sm:$0xff]
        %v3269 = vld [vmem:[#allocation3 + $0x5a] sm:$0xff]
        %v3270 = vld [vmem:[#allocation3 + $0x62] sm:$0xff]
        %v3271 = vld [vmem:[#allocation3 + $0x6a] sm:$0xff]
        %v3272 = vld [vmem:[#allocation3 + $0x72] sm:$0xff]
        %v3273 = vld [vmem:[#allocation3 + $0x7a] sm:$0xff]
        %v3274 = vld [vmem:[#allocation3 + $0x82] sm:$0xff]
        %v3275 = vld [vmem:[#allocation3 + $0x8a] sm:$0xff]
        %v3276 = vld [vmem:[#allocation3 + $0x92] sm:$0xff]
        %v3277 = vld [vmem:[#allocation3 + $0x9a] sm:$0xff]
        %v3278 = vld [vmem:[#allocation3 + $0xa2] sm:$0xff]
        %v3279 = vld [vmem:[#allocation3 + $0xaa] sm:$0xff]
        %v3280 = vld [vmem:[#allocation3 + $0xb2] sm:$0xff]
        %v3281 = vld [vmem:[#allocation3 + $0xba] sm:$0xff]
        %v3282 = vld [vmem:[#allocation3 + $0xc2] sm:$0xff]
        %v3283 = vld [vmem:[#allocation3 + $0xca] sm:$0xff]
        %v3284 = vld [vmem:[#allocation3 + $0xd2] sm:$0xff]
        %v3285 = vld [vmem:[#allocation3 + $0xda] sm:$0xff]
        %v3286 = vld [vmem:[#allocation3 + $0xe2] sm:$0xff]
        %v3287 = vld [vmem:[#allocation3 + $0xea] sm:$0xff]
        %v3288 = vld [vmem:[#allocation3 + $0xf2] sm:$0xff]
        %v3289 = vld [vmem:[#allocation3 + $0xfa] sm:$0xff]
        %v3290 = vld [vmem:[#allocation3 + $0x102] sm:$0xff]
        %v3291 = vld [vmem:[#allocation3 + $0x10a] sm:$0xff]
        %v3292 = vld [vmem:[#allocation3 + $0x112] sm:$0xff]
        %v3293 = vld [vmem:[#allocation3 + $0x11a] sm:$0xff]
        %v3294 = vld [vmem:[#allocation3 + $0x122] sm:$0xff]
        %v3295 = vld [vmem:[#allocation3 + $0x12a] sm:$0xff]
        %v3296 = vld [vmem:[#allocation3 + $0x132] sm:$0xff]
        %v3297 = vld [vmem:[#allocation3 + $0x13a] sm:$0xff]
        %v3298 = vld [vmem:[#allocation3 + $0x142] sm:$0x3]
        %v3299 = vmax.f32 %v3221, %v3260
        %v3300 = vmax.f32 %v3222, %v3261
        %v3301 = vmax.f32 %v3223, %v3262
        %v3302 = vmax.f32 %v3224, %v3263
        %v3303 = vmax.f32 %v3225, %v3264
        %v3304 = vmax.f32 %v3226, %v3265
        %v3305 = vmax.f32 %v3227, %v3266
        %v3306 = vmax.f32 %v3228, %v3267
        %v3307 = vmax.f32 %v3229, %v3268
        %v3308 = vmax.f32 %v3230, %v3269
        %v3309 = vmax.f32 %v3231, %v3270
        %v3310 = vmax.f32 %v3232, %v3271
        %v3311 = vmax.f32 %v3233, %v3272
        %v3312 = vmax.f32 %v3234, %v3273
        %v3313 = vmax.f32 %v3235, %v3274
        %v3314 = vmax.f32 %v3236, %v3275
        %v3315 = vmax.f32 %v3237, %v3276
        %v3316 = vmax.f32 %v3238, %v3277
        %v3317 = vmax.f32 %v3239, %v3278
        %v3318 = vmax.f32 %v3240, %v3279
        %v3319 = vmax.f32 %v3241, %v3280
        %v3320 = vmax.f32 %v3242, %v3281
        %v3321 = vmax.f32 %v3243, %v3282
        %v3322 = vmax.f32 %v3244, %v3283
        %v3323 = vmax.f32 %v3245, %v3284
        %v3324 = vmax.f32 %v3246, %v3285
        %v3325 = vmax.f32 %v3247, %v3286
        %v3326 = vmax.f32 %v3248, %v3287
        %v3327 = vmax.f32 %v3249, %v3288
        %v3328 = vmax.f32 %v3250, %v3289
        %v3329 = vmax.f32 %v3251, %v3290
        %v3330 = vmax.f32 %v3252, %v3291
        %v3331 = vmax.f32 %v3253, %v3292
        %v3332 = vmax.f32 %v3254, %v3293
        %v3333 = vmax.f32 %v3255, %v3294
        %v3334 = vmax.f32 %v3256, %v3295
        %v3335 = vmax.f32 %v3257, %v3296
        %v3336 = vmax.f32 %v3258, %v3297
        %v3337 = vmax.f32 %v3259, %v3298
        %3338 = vst [vmem:[#allocation4] sm:$0xff] %v3299
        %3339 = vst [vmem:[#allocation4 + $0x8] sm:$0xff] %v3300
        %3340 = vst [vmem:[#allocation4 + $0x10] sm:$0xff] %v3301
        %3341 = vst [vmem:[#allocation4 + $0x18] sm:$0xff] %v3302
        %3342 = vst [vmem:[#allocation4 + $0x20] sm:$0xff] %v3303
        %3343 = vst [vmem:[#allocation4 + $0x28] sm:$0xff] %v3304
        %3344 = vst [vmem:[#allocation4 + $0x30] sm:$0xff] %v3305
        %3345 = vst [vmem:[#allocation4 + $0x38] sm:$0xff] %v3306
        %3346 = vst [vmem:[#allocation4 + $0x40] sm:$0xff] %v3307
        %3347 = vst [vmem:[#allocation4 + $0x48] sm:$0xff] %v3308
        %3348 = vst [vmem:[#allocation4 + $0x50] sm:$0xff] %v3309
        %3349 = vst [vmem:[#allocation4 + $0x58] sm:$0xff] %v3310
        %3350 = vst [vmem:[#allocation4 + $0x60] sm:$0xff] %v3311
        %3351 = vst [vmem:[#allocation4 + $0x68] sm:$0xff] %v3312
        %3352 = vst [vmem:[#allocation4 + $0x70] sm:$0xff] %v3313
        %3353 = vst [vmem:[#allocation4 + $0x78] sm:$0xff] %v3314
        %3354 = vst [vmem:[#allocation4 + $0x80] sm:$0xff] %v3315
        %3355 = vst [vmem:[#allocation4 + $0x88] sm:$0xff] %v3316
        %3356 = vst [vmem:[#allocation4 + $0x90] sm:$0xff] %v3317
        %3357 = vst [vmem:[#allocation4 + $0x98] sm:$0xff] %v3318
        %3358 = vst [vmem:[#allocation4 + $0xa0] sm:$0xff] %v3319
        %3359 = vst [vmem:[#allocation4 + $0xa8] sm:$0xff] %v3320
        %3360 = vst [vmem:[#allocation4 + $0xb0] sm:$0xff] %v3321
        %3361 = vst [vmem:[#allocation4 + $0xb8] sm:$0xff] %v3322
        %3362 = vst [vmem:[#allocation4 + $0xc0] sm:$0xff] %v3323
        %3363 = vst [vmem:[#allocation4 + $0xc8] sm:$0xff] %v3324
        %3364 = vst [vmem:[#allocation4 + $0xd0] sm:$0xff] %v3325
        %3365 = vst [vmem:[#allocation4 + $0xd8] sm:$0xff] %v3326
        %3366 = vst [vmem:[#allocation4 + $0xe0] sm:$0xff] %v3327
        %3367 = vst [vmem:[#allocation4 + $0xe8] sm:$0xff] %v3328
        %3368 = vst [vmem:[#allocation4 + $0xf0] sm:$0xff] %v3329
        %3369 = vst [vmem:[#allocation4 + $0xf8] sm:$0xff] %v3330
        %3370 = vst [vmem:[#allocation4 + $0x100] sm:$0xff] %v3331
        %3371 = vst [vmem:[#allocation4 + $0x108] sm:$0xff] %v3332
        %3372 = vst [vmem:[#allocation4 + $0x110] sm:$0xff] %v3333
        %3373 = vst [vmem:[#allocation4 + $0x118] sm:$0xff] %v3334
        %3374 = vst [vmem:[#allocation4 + $0x120] sm:$0xff] %v3335
        %3375 = vst [vmem:[#allocation4 + $0x128] sm:$0xff] %v3336
        %3376 = vst [vmem:[#allocation4 + $0x130] sm:$0x3] %v3337
        %v3377 = vld [vmem:[#allocation4 + $0x13] sm:$0x1]
        %v3378 = vld [vmem:[#allocation4 + $0x14] sm:$0x1]
        %v3379 = vmax.f32 %v3377, %v3378
        %3380 = vst [vmem:[#allocation2 + $0x1e] sm:$0x1] %v3379
        %v3381 = vld [vmem:[#allocation4 + $0x15] sm:$0x1]
        %v3382 = vld [vmem:[#allocation4 + $0x16] sm:$0x1]
        %v3383 = vmax.f32 %v3381, %v3382
        %3384 = vst [vmem:[#allocation2 + $0x1f] sm:$0x1] %v3383
        %v3385 = vld [vmem:[#allocation4 + $0x17] sm:$0x1]
        %v3386 = vld [vmem:[#allocation4 + $0x18] sm:$0x1]
        %v3387 = vmax.f32 %v3385, %v3386
        %3388 = vst [vmem:[#allocation2 + $0x20] sm:$0x1] %v3387
        %v3389 = vld [vmem:[#allocation4 + $0x19] sm:$0x1]
        %v3390 = vld [vmem:[#allocation4 + $0x1a] sm:$0x1]
        %v3391 = vmax.f32 %v3389, %v3390
        %3392 = vst [vmem:[#allocation2 + $0x21] sm:$0x1] %v3391
        %v3393 = vld [vmem:[#allocation4 + $0x1b] sm:$0x1]
        %v3394 = vld [vmem:[#allocation4 + $0x1c] sm:$0x1]
        %v3395 = vmax.f32 %v3393, %v3394
        %3396 = vst [vmem:[#allocation2 + $0x22] sm:$0x1] %v3395
        %v3397 = vld [vmem:[#allocation4 + $0x1d] sm:$0x1]
        %v3398 = vld [vmem:[#allocation4 + $0x1e] sm:$0x1]
        %v3399 = vmax.f32 %v3397, %v3398
        %3400 = vst [vmem:[#allocation2 + $0x23] sm:$0x1] %v3399
        %v3401 = vld [vmem:[#allocation4 + $0x1f] sm:$0x1]
        %v3402 = vld [vmem:[#allocation4 + $0x20] sm:$0x1]
        %v3403 = vmax.f32 %v3401, %v3402
        %3404 = vst [vmem:[#allocation2 + $0x24] sm:$0x1] %v3403
        %v3405 = vld [vmem:[#allocation4 + $0x21] sm:$0x1]
        %v3406 = vld [vmem:[#allocation4 + $0x22] sm:$0x1]
        %v3407 = vmax.f32 %v3405, %v3406
        %3408 = vst [vmem:[#allocation2 + $0x25] sm:$0x1] %v3407
        %v3409 = vld [vmem:[#allocation4 + $0x37] sm:$0x1]
        %v3410 = vld [vmem:[#allocation4 + $0x38] sm:$0x1]
        %v3411 = vmax.f32 %v3409, %v3410
        %3412 = vst [vmem:[#allocation2 + $0x28] sm:$0x1] %v3411
        %v3413 = vld [vmem:[#allocation4 + $0x39] sm:$0x1]
        %v3414 = vld [vmem:[#allocation4 + $0x3a] sm:$0x1]
        %v3415 = vmax.f32 %v3413, %v3414
        %3416 = vst [vmem:[#allocation2 + $0x29] sm:$0x1] %v3415
        %v3417 = vld [vmem:[#allocation4 + $0x3b] sm:$0x1]
        %v3418 = vld [vmem:[#allocation4 + $0x3c] sm:$0x1]
        %v3419 = vmax.f32 %v3417, %v3418
        %3420 = vst [vmem:[#allocation2 + $0x2a] sm:$0x1] %v3419
        %v3421 = vld [vmem:[#allocation4 + $0x3d] sm:$0x1]
        %v3422 = vld [vmem:[#allocation4 + $0x3e] sm:$0x1]
        %v3423 = vmax.f32 %v3421, %v3422
        %3424 = vst [vmem:[#allocation2 + $0x2b] sm:$0x1] %v3423
        %v3425 = vld [vmem:[#allocation4 + $0x3f] sm:$0x1]
        %v3426 = vld [vmem:[#allocation4 + $0x40] sm:$0x1]
        %v3427 = vmax.f32 %v3425, %v3426
        %3428 = vst [vmem:[#allocation2 + $0x2c] sm:$0x1] %v3427
        %v3429 = vld [vmem:[#allocation4 + $0x41] sm:$0x1]
        %v3430 = vld [vmem:[#allocation4 + $0x42] sm:$0x1]
        %v3431 = vmax.f32 %v3429, %v3430
        %3432 = vst [vmem:[#allocation2 + $0x2d] sm:$0x1] %v3431
        %v3433 = vld [vmem:[#allocation4 + $0x43] sm:$0x1]
        %v3434 = vld [vmem:[#allocation4 + $0x44] sm:$0x1]
        %v3435 = vmax.f32 %v3433, %v3434
        %3436 = vst [vmem:[#allocation2 + $0x2e] sm:$0x1] %v3435
        %v3437 = vld [vmem:[#allocation4 + $0x45] sm:$0x1]
        %v3438 = vld [vmem:[#allocation4 + $0x46] sm:$0x1]
        %v3439 = vmax.f32 %v3437, %v3438
        %3440 = vst [vmem:[#allocation2 + $0x2f] sm:$0x1] %v3439
        %v3441 = vld [vmem:[#allocation4 + $0x5b] sm:$0x1]
        %v3442 = vld [vmem:[#allocation4 + $0x5c] sm:$0x1]
        %v3443 = vmax.f32 %v3441, %v3442
        %3444 = vst [vmem:[#allocation2 + $0x32] sm:$0x1] %v3443
        %v3445 = vld [vmem:[#allocation4 + $0x5d] sm:$0x1]
        %v3446 = vld [vmem:[#allocation4 + $0x5e] sm:$0x1]
        %v3447 = vmax.f32 %v3445, %v3446
        %3448 = vst [vmem:[#allocation2 + $0x33] sm:$0x1] %v3447
        %v3449 = vld [vmem:[#allocation4 + $0x5f] sm:$0x1]
        %v3450 = vld [vmem:[#allocation4 + $0x60] sm:$0x1]
        %v3451 = vmax.f32 %v3449, %v3450
        %3452 = vst [vmem:[#allocation2 + $0x34] sm:$0x1] %v3451
        %v3453 = vld [vmem:[#allocation4 + $0x61] sm:$0x1]
        %v3454 = vld [vmem:[#allocation4 + $0x62] sm:$0x1]
        %v3455 = vmax.f32 %v3453, %v3454
        %3456 = vst [vmem:[#allocation2 + $0x35] sm:$0x1] %v3455
        %v3457 = vld [vmem:[#allocation4 + $0x63] sm:$0x1]
        %v3458 = vld [vmem:[#allocation4 + $0x64] sm:$0x1]
        %v3459 = vmax.f32 %v3457, %v3458
        %3460 = vst [vmem:[#allocation2 + $0x36] sm:$0x1] %v3459
        %v3461 = vld [vmem:[#allocation4 + $0x65] sm:$0x1]
        %v3462 = vld [vmem:[#allocation4 + $0x66] sm:$0x1]
        %v3463 = vmax.f32 %v3461, %v3462
        %3464 = vst [vmem:[#allocation2 + $0x37] sm:$0x1] %v3463
        %v3465 = vld [vmem:[#allocation4 + $0x67] sm:$0x1]
        %v3466 = vld [vmem:[#allocation4 + $0x68] sm:$0x1]
        %v3467 = vmax.f32 %v3465, %v3466
        %3468 = vst [vmem:[#allocation2 + $0x38] sm:$0x1] %v3467
        %v3469 = vld [vmem:[#allocation4 + $0x69] sm:$0x1]
        %v3470 = vld [vmem:[#allocation4 + $0x6a] sm:$0x1]
        %v3471 = vmax.f32 %v3469, %v3470
        %3472 = vst [vmem:[#allocation2 + $0x39] sm:$0x1] %v3471
        %v3473 = vld [vmem:[#allocation4 + $0x7f] sm:$0x1]
        %v3474 = vld [vmem:[#allocation4 + $0x80] sm:$0x1]
        %v3475 = vmax.f32 %v3473, %v3474
        %3476 = vst [vmem:[#allocation2 + $0x3c] sm:$0x1] %v3475
        %v3477 = vld [vmem:[#allocation4 + $0x81] sm:$0x1]
        %v3478 = vld [vmem:[#allocation4 + $0x82] sm:$0x1]
        %v3479 = vmax.f32 %v3477, %v3478
        %3480 = vst [vmem:[#allocation2 + $0x3d] sm:$0x1] %v3479
        %v3481 = vld [vmem:[#allocation4 + $0x83] sm:$0x1]
        %v3482 = vld [vmem:[#allocation4 + $0x84] sm:$0x1]
        %v3483 = vmax.f32 %v3481, %v3482
        %3484 = vst [vmem:[#allocation2 + $0x3e] sm:$0x1] %v3483
        %v3485 = vld [vmem:[#allocation4 + $0x85] sm:$0x1]
        %v3486 = vld [vmem:[#allocation4 + $0x86] sm:$0x1]
        %v3487 = vmax.f32 %v3485, %v3486
        %3488 = vst [vmem:[#allocation2 + $0x3f] sm:$0x1] %v3487
        %v3489 = vld [vmem:[#allocation4 + $0x87] sm:$0x1]
        %v3490 = vld [vmem:[#allocation4 + $0x88] sm:$0x1]
        %v3491 = vmax.f32 %v3489, %v3490
        %3492 = vst [vmem:[#allocation2 + $0x40] sm:$0x1] %v3491
        %v3493 = vld [vmem:[#allocation4 + $0x89] sm:$0x1]
        %v3494 = vld [vmem:[#allocation4 + $0x8a] sm:$0x1]
        %v3495 = vmax.f32 %v3493, %v3494
        %3496 = vst [vmem:[#allocation2 + $0x41] sm:$0x1] %v3495
        %v3497 = vld [vmem:[#allocation4 + $0x8b] sm:$0x1]
        %v3498 = vld [vmem:[#allocation4 + $0x8c] sm:$0x1]
        %v3499 = vmax.f32 %v3497, %v3498
        %3500 = vst [vmem:[#allocation2 + $0x42] sm:$0x1] %v3499
        %v3501 = vld [vmem:[#allocation4 + $0x8d] sm:$0x1]
        %v3502 = vld [vmem:[#allocation4 + $0x8e] sm:$0x1]
        %v3503 = vmax.f32 %v3501, %v3502
        %3504 = vst [vmem:[#allocation2 + $0x43] sm:$0x1] %v3503
        %v3505 = vld [vmem:[#allocation4 + $0xa3] sm:$0x1]
        %v3506 = vld [vmem:[#allocation4 + $0xa4] sm:$0x1]
        %v3507 = vmax.f32 %v3505, %v3506
        %3508 = vst [vmem:[#allocation2 + $0x46] sm:$0x1] %v3507
        %v3509 = vld [vmem:[#allocation4 + $0xa5] sm:$0x1]
        %v3510 = vld [vmem:[#allocation4 + $0xa6] sm:$0x1]
        %v3511 = vmax.f32 %v3509, %v3510
        %3512 = vst [vmem:[#allocation2 + $0x47] sm:$0x1] %v3511
        %v3513 = vld [vmem:[#allocation4 + $0xa7] sm:$0x1]
        %v3514 = vld [vmem:[#allocation4 + $0xa8] sm:$0x1]
        %v3515 = vmax.f32 %v3513, %v3514
        %3516 = vst [vmem:[#allocation2 + $0x48] sm:$0x1] %v3515
        %v3517 = vld [vmem:[#allocation4 + $0xa9] sm:$0x1]
        %v3518 = vld [vmem:[#allocation4 + $0xaa] sm:$0x1]
        %v3519 = vmax.f32 %v3517, %v3518
        %3520 = vst [vmem:[#allocation2 + $0x49] sm:$0x1] %v3519
        %v3521 = vld [vmem:[#allocation4 + $0xab] sm:$0x1]
        %v3522 = vld [vmem:[#allocation4 + $0xac] sm:$0x1]
        %v3523 = vmax.f32 %v3521, %v3522
        %3524 = vst [vmem:[#allocation2 + $0x4a] sm:$0x1] %v3523
        %v3525 = vld [vmem:[#allocation4 + $0xad] sm:$0x1]
        %v3526 = vld [vmem:[#allocation4 + $0xae] sm:$0x1]
        %v3527 = vmax.f32 %v3525, %v3526
        %3528 = vst [vmem:[#allocation2 + $0x4b] sm:$0x1] %v3527
        %v3529 = vld [vmem:[#allocation4 + $0xaf] sm:$0x1]
        %v3530 = vld [vmem:[#allocation4 + $0xb0] sm:$0x1]
        %v3531 = vmax.f32 %v3529, %v3530
        %3532 = vst [vmem:[#allocation2 + $0x4c] sm:$0x1] %v3531
        %v3533 = vld [vmem:[#allocation4 + $0xb1] sm:$0x1]
        %v3534 = vld [vmem:[#allocation4 + $0xb2] sm:$0x1]
        %v3535 = vmax.f32 %v3533, %v3534
        %3536 = vst [vmem:[#allocation2 + $0x4d] sm:$0x1] %v3535
        %v3537 = vld [vmem:[#allocation4 + $0xc7] sm:$0x1]
        %v3538 = vld [vmem:[#allocation4 + $0xc8] sm:$0x1]
        %v3539 = vmax.f32 %v3537, %v3538
        %3540 = vst [vmem:[#allocation2 + $0x50] sm:$0x1] %v3539
        %v3541 = vld [vmem:[#allocation4 + $0xc9] sm:$0x1]
        %v3542 = vld [vmem:[#allocation4 + $0xca] sm:$0x1]
        %v3543 = vmax.f32 %v3541, %v3542
        %3544 = vst [vmem:[#allocation2 + $0x51] sm:$0x1] %v3543
        %v3545 = vld [vmem:[#allocation4 + $0xcb] sm:$0x1]
        %v3546 = vld [vmem:[#allocation4 + $0xcc] sm:$0x1]
        %v3547 = vmax.f32 %v3545, %v3546
        %3548 = vst [vmem:[#allocation2 + $0x52] sm:$0x1] %v3547
        %v3549 = vld [vmem:[#allocation4 + $0xcd] sm:$0x1]
        %v3550 = vld [vmem:[#allocation4 + $0xce] sm:$0x1]
        %v3551 = vmax.f32 %v3549, %v3550
        %3552 = vst [vmem:[#allocation2 + $0x53] sm:$0x1] %v3551
        %v3553 = vld [vmem:[#allocation4 + $0xcf] sm:$0x1]
        %v3554 = vld [vmem:[#allocation4 + $0xd0] sm:$0x1]
        %v3555 = vmax.f32 %v3553, %v3554
        %3556 = vst [vmem:[#allocation2 + $0x54] sm:$0x1] %v3555
        %v3557 = vld [vmem:[#allocation4 + $0xd1] sm:$0x1]
        %v3558 = vld [vmem:[#allocation4 + $0xd2] sm:$0x1]
        %v3559 = vmax.f32 %v3557, %v3558
        %3560 = vst [vmem:[#allocation2 + $0x55] sm:$0x1] %v3559
        %v3561 = vld [vmem:[#allocation4 + $0xd3] sm:$0x1]
        %v3562 = vld [vmem:[#allocation4 + $0xd4] sm:$0x1]
        %v3563 = vmax.f32 %v3561, %v3562
        %3564 = vst [vmem:[#allocation2 + $0x56] sm:$0x1] %v3563
        %v3565 = vld [vmem:[#allocation4 + $0xd5] sm:$0x1]
        %v3566 = vld [vmem:[#allocation4 + $0xd6] sm:$0x1]
        %v3567 = vmax.f32 %v3565, %v3566
        %3568 = vst [vmem:[#allocation2 + $0x57] sm:$0x1] %v3567
        %v3569 = vld [vmem:[#allocation4 + $0xeb] sm:$0x1]
        %v3570 = vld [vmem:[#allocation4 + $0xec] sm:$0x1]
        %v3571 = vmax.f32 %v3569, %v3570
        %3572 = vst [vmem:[#allocation2 + $0x5a] sm:$0x1] %v3571
        %v3573 = vld [vmem:[#allocation4 + $0xed] sm:$0x1]
        %v3574 = vld [vmem:[#allocation4 + $0xee] sm:$0x1]
        %v3575 = vmax.f32 %v3573, %v3574
        %3576 = vst [vmem:[#allocation2 + $0x5b] sm:$0x1] %v3575
        %v3577 = vld [vmem:[#allocation4 + $0xef] sm:$0x1]
        %v3578 = vld [vmem:[#allocation4 + $0xf0] sm:$0x1]
        %v3579 = vmax.f32 %v3577, %v3578
        %3580 = vst [vmem:[#allocation2 + $0x5c] sm:$0x1] %v3579
        %v3581 = vld [vmem:[#allocation4 + $0xf1] sm:$0x1]
        %v3582 = vld [vmem:[#allocation4 + $0xf2] sm:$0x1]
        %v3583 = vmax.f32 %v3581, %v3582
        %3584 = vst [vmem:[#allocation2 + $0x5d] sm:$0x1] %v3583
        %v3585 = vld [vmem:[#allocation4 + $0xf3] sm:$0x1]
        %v3586 = vld [vmem:[#allocation4 + $0xf4] sm:$0x1]
        %v3587 = vmax.f32 %v3585, %v3586
        %3588 = vst [vmem:[#allocation2 + $0x5e] sm:$0x1] %v3587
        %v3589 = vld [vmem:[#allocation4 + $0xf5] sm:$0x1]
        %v3590 = vld [vmem:[#allocation4 + $0xf6] sm:$0x1]
        %v3591 = vmax.f32 %v3589, %v3590
        %3592 = vst [vmem:[#allocation2 + $0x5f] sm:$0x1] %v3591
        %v3593 = vld [vmem:[#allocation4 + $0xf7] sm:$0x1]
        %v3594 = vld [vmem:[#allocation4 + $0xf8] sm:$0x1]
        %v3595 = vmax.f32 %v3593, %v3594
        %3596 = vst [vmem:[#allocation2 + $0x60] sm:$0x1] %v3595
        %v3597 = vld [vmem:[#allocation4 + $0xf9] sm:$0x1]
        %v3598 = vld [vmem:[#allocation4 + $0xfa] sm:$0x1]
        %v3599 = vmax.f32 %v3597, %v3598
        %3600 = vst [vmem:[#allocation2 + $0x61] sm:$0x1] %v3599
        %v3601 = vld [vmem:[#allocation4 + $0x10f] sm:$0x1]
        %v3602 = vld [vmem:[#allocation4 + $0x110] sm:$0x1]
        %v3603 = vmax.f32 %v3601, %v3602
        %3604 = vst [vmem:[#allocation2 + $0x64] sm:$0x1] %v3603
        %v3605 = vld [vmem:[#allocation4 + $0x111] sm:$0x1]
        %v3606 = vld [vmem:[#allocation4 + $0x112] sm:$0x1]
        %v3607 = vmax.f32 %v3605, %v3606
        %3608 = vst [vmem:[#allocation2 + $0x65] sm:$0x1] %v3607
        %v3609 = vld [vmem:[#allocation4 + $0x113] sm:$0x1]
        %v3610 = vld [vmem:[#allocation4 + $0x114] sm:$0x1]
        %v3611 = vmax.f32 %v3609, %v3610
        %3612 = vst [vmem:[#allocation2 + $0x66] sm:$0x1] %v3611
        %v3613 = vld [vmem:[#allocation4 + $0x115] sm:$0x1]
        %v3614 = vld [vmem:[#allocation4 + $0x116] sm:$0x1]
        %v3615 = vmax.f32 %v3613, %v3614
        %3616 = vst [vmem:[#allocation2 + $0x67] sm:$0x1] %v3615
        %v3617 = vld [vmem:[#allocation4 + $0x117] sm:$0x1]
        %v3618 = vld [vmem:[#allocation4 + $0x118] sm:$0x1]
        %v3619 = vmax.f32 %v3617, %v3618
        %3620 = vst [vmem:[#allocation2 + $0x68] sm:$0x1] %v3619
        %v3621 = vld [vmem:[#allocation4 + $0x119] sm:$0x1]
        %v3622 = vld [vmem:[#allocation4 + $0x11a] sm:$0x1]
        %v3623 = vmax.f32 %v3621, %v3622
        %3624 = vst [vmem:[#allocation2 + $0x69] sm:$0x1] %v3623
        %v3625 = vld [vmem:[#allocation4 + $0x11b] sm:$0x1]
        %v3626 = vld [vmem:[#allocation4 + $0x11c] sm:$0x1]
        %v3627 = vmax.f32 %v3625, %v3626
        %3628 = vst [vmem:[#allocation2 + $0x6a] sm:$0x1] %v3627
        %v3629 = vld [vmem:[#allocation4 + $0x11d] sm:$0x1]
        %v3630 = vld [vmem:[#allocation4 + $0x11e] sm:$0x1]
        %v3631 = vmax.f32 %v3629, %v3630
        %3632 = vst [vmem:[#allocation2 + $0x6b] sm:$0x1] %v3631
        %v3633 = vld [vmem:[#allocation2 + $0x8] sm:$0xff]
        %v3634 = vld [vmem:[#allocation2 + $0x10] sm:$0xff]
        %v3635 = vld [vmem:[#allocation2 + $0x18] sm:$0xff]
        %v3636 = vld [vmem:[#allocation2 + $0x20] sm:$0xff]
        %v3637 = vld [vmem:[#allocation2 + $0x28] sm:$0xff]
        %v3638 = vld [vmem:[#allocation2 + $0x30] sm:$0xff]
        %v3639 = vld [vmem:[#allocation2 + $0x38] sm:$0xff]
        %v3640 = vld [vmem:[#allocation2 + $0x40] sm:$0xff]
        %v3641 = vld [vmem:[#allocation2 + $0x48] sm:$0xff]
        %v3642 = vld [vmem:[#allocation2 + $0x50] sm:$0xff]
        %v3643 = vld [vmem:[#allocation2 + $0x58] sm:$0xff]
        %v3644 = vld [vmem:[#allocation2 + $0x60] sm:$0xff]
        %v3645 = vld [vmem:[#allocation2 + $0x68] sm:$0xf]
        %v3646 = vpack.c.bf16 %v3634, %v3633
        %v3647 = vpack.c.bf16 %v3636, %v3635
        %v3648 = vpack.c.bf16 %v3638, %v3637
        %v3649 = vpack.c.bf16 %v3640, %v3639
        %v3650 = vpack.c.bf16 %v3642, %v3641
        %v3651 = vpack.c.bf16 %v3644, %v3643
        %v3652 = vpack.c.bf16 %v3645, %v3645
        %v3653 = vld [vmem:[#allocation5] sm:$0xf]
        %v3654 = vld [vmem:[#allocation5 + $0x4] sm:$0xf]
        %v3655 = vld [vmem:[#allocation5 + $0x8] sm:$0xf]
        %v3656 = vld [vmem:[#allocation5 + $0xc] sm:$0xf]
        %v3657 = vld [vmem:[#allocation5 + $0x10] sm:$0xf]
        %v3658 = vld [vmem:[#allocation5 + $0x14] sm:$0xf]
        %v3659 = vld [vmem:[#allocation5 + $0x18] sm:$0xf]
        %v3660 = vld [vmem:[#allocation5 + $0x1c] sm:$0xf]
        %v3661 = vld [vmem:[#allocation5 + $0x20] sm:$0xf]
        %v3662 = vld [vmem:[#allocation5 + $0x24] sm:$0xf]
        %v3663 = vld [vmem:[#allocation5 + $0x28] sm:$0xf]
        %v3664 = vld [vmem:[#allocation5 + $0x2c] sm:$0xf]
        %v3665 = vld [vmem:[#allocation5 + $0x30] sm:$0xf]
        %v3666 = vld [vmem:[#allocation5 + $0x34] sm:$0xf]
        %v3667 = vld [vmem:[#allocation5 + $0x38] sm:$0xf]
        %v3668 = vld [vmem:[#allocation5 + $0x3c] sm:$0xf]
        %v3669 = vld [vmem:[#allocation2 + $0x9] sm:$0xff]
        %v3670 = vld [vmem:[#allocation2 + $0x11] sm:$0xff]
        %v3671 = vld [vmem:[#allocation2 + $0x19] sm:$0xff]
        %v3672 = vld [vmem:[#allocation2 + $0x21] sm:$0xff]
        %v3673 = vld [vmem:[#allocation2 + $0x29] sm:$0xff]
        %v3674 = vld [vmem:[#allocation2 + $0x31] sm:$0xff]
        %v3675 = vld [vmem:[#allocation2 + $0x39] sm:$0xff]
        %v3676 = vld [vmem:[#allocation2 + $0x41] sm:$0xff]
        %v3677 = vld [vmem:[#allocation2 + $0x49] sm:$0xff]
        %v3678 = vld [vmem:[#allocation2 + $0x51] sm:$0xff]
        %v3679 = vld [vmem:[#allocation2 + $0x59] sm:$0xff]
        %v3680 = vld [vmem:[#allocation2 + $0x61] sm:$0xff]
        %v3681 = vld [vmem:[#allocation2 + $0x69] sm:$0xf]
        %v3682 = vpack.c.bf16 %v3670, %v3669
        %v3683 = vpack.c.bf16 %v3672, %v3671
        %v3684 = vpack.c.bf16 %v3674, %v3673
        %v3685 = vpack.c.bf16 %v3676, %v3675
        %v3686 = vpack.c.bf16 %v3678, %v3677
        %v3687 = vpack.c.bf16 %v3680, %v3679
        %v3688 = vpack.c.bf16 %v3681, %v3681
        %s3689 = scalar_lea.vmem [#allocation5], 64
        %v3690 = vld [vmem:[%s3689] sm:$0xf]
        %v3691 = vld [vmem:[%s3689 + $0x4] sm:$0xf]
        %v3692 = vld [vmem:[%s3689 + $0x8] sm:$0xf]
        %v3693 = vld [vmem:[%s3689 + $0xc] sm:$0xf]
        %v3694 = vld [vmem:[%s3689 + $0x10] sm:$0xf]
        %v3695 = vld [vmem:[%s3689 + $0x14] sm:$0xf]
        %v3696 = vld [vmem:[%s3689 + $0x18] sm:$0xf]
        %v3697 = vld [vmem:[%s3689 + $0x1c] sm:$0xf]
        %v3698 = vld [vmem:[%s3689 + $0x20] sm:$0xf]
        %v3699 = vld [vmem:[%s3689 + $0x24] sm:$0xf]
        %v3700 = vld [vmem:[%s3689 + $0x28] sm:$0xf]
        %v3701 = vld [vmem:[%s3689 + $0x2c] sm:$0xf]
        %v3702 = vld [vmem:[%s3689 + $0x30] sm:$0xf]
        %v3703 = vld [vmem:[%s3689 + $0x34] sm:$0xf]
        %v3704 = vld [vmem:[%s3689 + $0x38] sm:$0xf]
        %v3705 = vld [vmem:[%s3689 + $0x3c] sm:$0xf]
        %v3722 = vunpack.c.l.b16 %v3690
        %v3723 = vunpack.c.l.b16 %v3691
        %v3724 = vunpack.c.l.b16 %v3692
        %v3725 = vunpack.c.l.b16 %v3693
        %v3726 = vunpack.c.l.b16 %v3694
        %v3727 = vunpack.c.l.b16 %v3695
        %v3728 = vunpack.c.l.b16 %v3696
        %v3729 = vunpack.c.l.b16 %v3697
        %v3730 = vunpack.c.l.b16 %v3698
        %v3731 = vunpack.c.l.b16 %v3699
        %v3732 = vunpack.c.l.b16 %v3700
        %v3733 = vunpack.c.l.b16 %v3701
        %v3734 = vunpack.c.l.b16 %v3702
        %v3735 = vunpack.c.l.b16 %v3703
        %v3736 = vunpack.c.l.b16 %v3704
        %v3737 = vunpack.c.l.b16 %v3705
        %v3738 = vpack.c.b16 %v3723, %v3722
        %v3739 = vpack.c.b16 %v3725, %v3724
        %v3740 = vpack.c.b16 %v3727, %v3726
        %v3741 = vpack.c.b16 %v3729, %v3728
        %v3742 = vpack.c.b16 %v3731, %v3730
        %v3743 = vpack.c.b16 %v3733, %v3732
        %v3744 = vpack.c.b16 %v3735, %v3734
        %v3745 = vpack.c.b16 %v3737, %v3736
        %3754 = vmatpush.bf16.msra.mxu0 %v3745
        %3755 = vmatpush.bf16.msra.mxu0 %v3744
        %3756 = vmatpush.bf16.msra.mxu0 %v3743
        %3757 = vmatpush.bf16.msra.mxu0 %v3742
        %3758 = vmatpush.bf16.msra.mxu0 %v3741
        %3759 = vmatpush.bf16.msra.mxu0 %v3740
        %3760 = vmatpush.bf16.msra.mxu0 %v3739
        %3761 = vmatpush.bf16.msra.mxu0 %v3738
        %3762 = vmatmul.bf16.gmra.mxu0 %v3682
        %v3763 = vpop.f32.mrf.mxu0
        %v3764 = vadd.f32 0.0, %v3763
        %v3765 = vpop.f32.mrf.mxu0
        %v3766 = vadd.f32 0.0, %v3765
        %3767 = vmatmul.bf16.gmra.mxu0 %v3683
        %v3768 = vpop.f32.mrf.mxu0
        %v3769 = vadd.f32 0.0, %v3768
        %v3770 = vpop.f32.mrf.mxu0
        %v3771 = vadd.f32 0.0, %v3770
        %3772 = vmatmul.bf16.gmra.mxu0 %v3684
        %v3773 = vpop.f32.mrf.mxu0
        %v3774 = vadd.f32 0.0, %v3773
        %v3775 = vpop.f32.mrf.mxu0
        %v3776 = vadd.f32 0.0, %v3775
        %3777 = vmatmul.bf16.gmra.mxu0 %v3685
        %v3778 = vpop.f32.mrf.mxu0
        %v3779 = vadd.f32 0.0, %v3778
        %v3780 = vpop.f32.mrf.mxu0
        %v3781 = vadd.f32 0.0, %v3780
        %3782 = vmatmul.bf16.gmra.mxu0 %v3686
        %v3783 = vpop.f32.mrf.mxu0
        %v3784 = vadd.f32 0.0, %v3783
        %v3785 = vpop.f32.mrf.mxu0
        %v3786 = vadd.f32 0.0, %v3785
        %3787 = vmatmul.bf16.gmra.mxu0 %v3687
        %v3788 = vpop.f32.mrf.mxu0
        %v3789 = vadd.f32 0.0, %v3788
        %v3790 = vpop.f32.mrf.mxu0
        %v3791 = vadd.f32 0.0, %v3790
        %3792 = vmatmul.bf16.gmra.mxu0 %v3688
        %v3793 = vpop.f32.mrf.mxu0
        %v3794 = vadd.f32 0.0, %v3793
        %v3795 = vpop.f32.mrf.mxu0
        %3796 = vdwg.mxu0
        %v3813 = vunpack.c.l.b16 %v3653
        %v3814 = vunpack.c.l.b16 %v3654
        %v3815 = vunpack.c.l.b16 %v3655
        %v3816 = vunpack.c.l.b16 %v3656
        %v3817 = vunpack.c.l.b16 %v3657
        %v3818 = vunpack.c.l.b16 %v3658
        %v3819 = vunpack.c.l.b16 %v3659
        %v3820 = vunpack.c.l.b16 %v3660
        %v3821 = vunpack.c.l.b16 %v3661
        %v3822 = vunpack.c.l.b16 %v3662
        %v3823 = vunpack.c.l.b16 %v3663
        %v3824 = vunpack.c.l.b16 %v3664
        %v3825 = vunpack.c.l.b16 %v3665
        %v3826 = vunpack.c.l.b16 %v3666
        %v3827 = vunpack.c.l.b16 %v3667
        %v3828 = vunpack.c.l.b16 %v3668
        %v3829 = vpack.c.b16 %v3814, %v3813
        %v3830 = vpack.c.b16 %v3816, %v3815
        %v3831 = vpack.c.b16 %v3818, %v3817
        %v3832 = vpack.c.b16 %v3820, %v3819
        %v3833 = vpack.c.b16 %v3822, %v3821
        %v3834 = vpack.c.b16 %v3824, %v3823
        %v3835 = vpack.c.b16 %v3826, %v3825
        %v3836 = vpack.c.b16 %v3828, %v3827
        %3845 = vmatpush.bf16.msra.mxu0 %v3836
        %3846 = vmatpush.bf16.msra.mxu0 %v3835
        %3847 = vmatpush.bf16.msra.mxu0 %v3834
        %3848 = vmatpush.bf16.msra.mxu0 %v3833
        %3849 = vmatpush.bf16.msra.mxu0 %v3832
        %3850 = vmatpush.bf16.msra.mxu0 %v3831
        %3851 = vmatpush.bf16.msra.mxu0 %v3830
        %3852 = vmatpush.bf16.msra.mxu0 %v3829
        %3853 = vmatmul.bf16.gmra.mxu0 %v3646
        %v3854 = vpop.f32.mrf.mxu0
        %v3855 = vadd.f32 %v3764, %v3854
        %v3856 = vpop.f32.mrf.mxu0
        %v3857 = vadd.f32 %v3766, %v3856
        %3858 = vmatmul.bf16.gmra.mxu0 %v3647
        %v3859 = vpop.f32.mrf.mxu0
        %v3860 = vadd.f32 %v3769, %v3859
        %v3861 = vpop.f32.mrf.mxu0
        %v3862 = vadd.f32 %v3771, %v3861
        %3863 = vmatmul.bf16.gmra.mxu0 %v3648
        %v3864 = vpop.f32.mrf.mxu0
        %v3865 = vadd.f32 %v3774, %v3864
        %v3866 = vpop.f32.mrf.mxu0
        %v3867 = vadd.f32 %v3776, %v3866
        %3868 = vmatmul.bf16.gmra.mxu0 %v3649
        %v3869 = vpop.f32.mrf.mxu0
        %v3870 = vadd.f32 %v3779, %v3869
        %v3871 = vpop.f32.mrf.mxu0
        %v3872 = vadd.f32 %v3781, %v3871
        %3873 = vmatmul.bf16.gmra.mxu0 %v3650
        %v3874 = vpop.f32.mrf.mxu0
        %v3875 = vadd.f32 %v3784, %v3874
        %v3876 = vpop.f32.mrf.mxu0
        %v3877 = vadd.f32 %v3786, %v3876
        %3878 = vmatmul.bf16.gmra.mxu0 %v3651
        %v3879 = vpop.f32.mrf.mxu0
        %v3880 = vadd.f32 %v3789, %v3879
        %v3881 = vpop.f32.mrf.mxu0
        %v3882 = vadd.f32 %v3791, %v3881
        %3883 = vmatmul.bf16.gmra.mxu0 %v3652
        %v3884 = vpop.f32.mrf.mxu0
        %v3885 = vadd.f32 %v3794, %v3884
        %v3886 = vpop.f32.mrf.mxu0
        %3887 = vdwg.mxu0
        %v3888 = vld [vmem:[#allocation2 + $0xa] sm:$0xff]
        %v3889 = vld [vmem:[#allocation2 + $0x12] sm:$0xff]
        %v3890 = vld [vmem:[#allocation2 + $0x1a] sm:$0xff]
        %v3891 = vld [vmem:[#allocation2 + $0x22] sm:$0xff]
        %v3892 = vld [vmem:[#allocation2 + $0x2a] sm:$0xff]
        %v3893 = vld [vmem:[#allocation2 + $0x32] sm:$0xff]
        %v3894 = vld [vmem:[#allocation2 + $0x3a] sm:$0xff]
        %v3895 = vld [vmem:[#allocation2 + $0x42] sm:$0xff]
        %v3896 = vld [vmem:[#allocation2 + $0x4a] sm:$0xff]
        %v3897 = vld [vmem:[#allocation2 + $0x52] sm:$0xff]
        %v3898 = vld [vmem:[#allocation2 + $0x5a] sm:$0xff]
        %v3899 = vld [vmem:[#allocation2 + $0x62] sm:$0xff]
        %v3900 = vld [vmem:[#allocation2 + $0x6a] sm:$0xf]
        %v3901 = vpack.c.bf16 %v3889, %v3888
        %v3902 = vpack.c.bf16 %v3891, %v3890
        %v3903 = vpack.c.bf16 %v3893, %v3892
        %v3904 = vpack.c.bf16 %v3895, %v3894
        %v3905 = vpack.c.bf16 %v3897, %v3896
        %v3906 = vpack.c.bf16 %v3899, %v3898
        %v3907 = vpack.c.bf16 %v3900, %v3900
        %s3908 = scalar_lea.vmem [#allocation5], 128
        %v3909 = vld [vmem:[%s3908] sm:$0xf]
        %v3910 = vld [vmem:[%s3908 + $0x4] sm:$0xf]
        %v3911 = vld [vmem:[%s3908 + $0x8] sm:$0xf]
        %v3912 = vld [vmem:[%s3908 + $0xc] sm:$0xf]
        %v3913 = vld [vmem:[%s3908 + $0x10] sm:$0xf]
        %v3914 = vld [vmem:[%s3908 + $0x14] sm:$0xf]
        %v3915 = vld [vmem:[%s3908 + $0x18] sm:$0xf]
        %v3916 = vld [vmem:[%s3908 + $0x1c] sm:$0xf]
        %v3917 = vld [vmem:[%s3908 + $0x20] sm:$0xf]
        %v3918 = vld [vmem:[%s3908 + $0x24] sm:$0xf]
        %v3919 = vld [vmem:[%s3908 + $0x28] sm:$0xf]
        %v3920 = vld [vmem:[%s3908 + $0x2c] sm:$0xf]
        %v3921 = vld [vmem:[%s3908 + $0x30] sm:$0xf]
        %v3922 = vld [vmem:[%s3908 + $0x34] sm:$0xf]
        %v3923 = vld [vmem:[%s3908 + $0x38] sm:$0xf]
        %v3924 = vld [vmem:[%s3908 + $0x3c] sm:$0xf]
        %v3941 = vunpack.c.l.b16 %v3909
        %v3942 = vunpack.c.l.b16 %v3910
        %v3943 = vunpack.c.l.b16 %v3911
        %v3944 = vunpack.c.l.b16 %v3912
        %v3945 = vunpack.c.l.b16 %v3913
        %v3946 = vunpack.c.l.b16 %v3914
        %v3947 = vunpack.c.l.b16 %v3915
        %v3948 = vunpack.c.l.b16 %v3916
        %v3949 = vunpack.c.l.b16 %v3917
        %v3950 = vunpack.c.l.b16 %v3918
        %v3951 = vunpack.c.l.b16 %v3919
        %v3952 = vunpack.c.l.b16 %v3920
        %v3953 = vunpack.c.l.b16 %v3921
        %v3954 = vunpack.c.l.b16 %v3922
        %v3955 = vunpack.c.l.b16 %v3923
        %v3956 = vunpack.c.l.b16 %v3924
        %v3957 = vpack.c.b16 %v3942, %v3941
        %v3958 = vpack.c.b16 %v3944, %v3943
        %v3959 = vpack.c.b16 %v3946, %v3945
        %v3960 = vpack.c.b16 %v3948, %v3947
        %v3961 = vpack.c.b16 %v3950, %v3949
        %v3962 = vpack.c.b16 %v3952, %v3951
        %v3963 = vpack.c.b16 %v3954, %v3953
        %v3964 = vpack.c.b16 %v3956, %v3955
        %3973 = vmatpush.bf16.msra.mxu0 %v3964
        %3974 = vmatpush.bf16.msra.mxu0 %v3963
        %3975 = vmatpush.bf16.msra.mxu0 %v3962
        %3976 = vmatpush.bf16.msra.mxu0 %v3961
        %3977 = vmatpush.bf16.msra.mxu0 %v3960
        %3978 = vmatpush.bf16.msra.mxu0 %v3959
        %3979 = vmatpush.bf16.msra.mxu0 %v3958
        %3980 = vmatpush.bf16.msra.mxu0 %v3957
        %3981 = vmatmul.bf16.gmra.mxu0 %v3901
        %v3982 = vpop.f32.mrf.mxu0
        %v3983 = vadd.f32 0.0, %v3982
        %v3984 = vpop.f32.mrf.mxu0
        %v3985 = vadd.f32 0.0, %v3984
        %3986 = vmatmul.bf16.gmra.mxu0 %v3902
        %v3987 = vpop.f32.mrf.mxu0
        %v3988 = vadd.f32 0.0, %v3987
        %v3989 = vpop.f32.mrf.mxu0
        %v3990 = vadd.f32 0.0, %v3989
        %3991 = vmatmul.bf16.gmra.mxu0 %v3903
        %v3992 = vpop.f32.mrf.mxu0
        %v3993 = vadd.f32 0.0, %v3992
        %v3994 = vpop.f32.mrf.mxu0
        %v3995 = vadd.f32 0.0, %v3994
        %3996 = vmatmul.bf16.gmra.mxu0 %v3904
        %v3997 = vpop.f32.mrf.mxu0
        %v3998 = vadd.f32 0.0, %v3997
        %v3999 = vpop.f32.mrf.mxu0
        %v4000 = vadd.f32 0.0, %v3999
        %4001 = vmatmul.bf16.gmra.mxu0 %v3905
        %v4002 = vpop.f32.mrf.mxu0
        %v4003 = vadd.f32 0.0, %v4002
        %v4004 = vpop.f32.mrf.mxu0
        %v4005 = vadd.f32 0.0, %v4004
        %4006 = vmatmul.bf16.gmra.mxu0 %v3906
        %v4007 = vpop.f32.mrf.mxu0
        %v4008 = vadd.f32 0.0, %v4007
        %v4009 = vpop.f32.mrf.mxu0
        %v4010 = vadd.f32 0.0, %v4009
        %4011 = vmatmul.bf16.gmra.mxu0 %v3907
        %v4012 = vpop.f32.mrf.mxu0
        %v4013 = vadd.f32 0.0, %v4012
        %v4014 = vpop.f32.mrf.mxu0
        %4015 = vdwg.mxu0
        %v4016 = vadd.f32 %v3855, %v3983
        %v4017 = vadd.f32 %v3857, %v3985
        %v4018 = vadd.f32 %v3860, %v3988
        %v4019 = vadd.f32 %v3862, %v3990
        %v4020 = vadd.f32 %v3865, %v3993
        %v4021 = vadd.f32 %v3867, %v3995
        %v4022 = vadd.f32 %v3870, %v3998
        %v4023 = vadd.f32 %v3872, %v4000
        %v4024 = vadd.f32 %v3875, %v4003
        %v4025 = vadd.f32 %v3877, %v4005
        %v4026 = vadd.f32 %v3880, %v4008
        %v4027 = vadd.f32 %v3882, %v4010
        %v4028 = vadd.f32 %v3885, %v4013
        %v4029 = vld [vmem:[#allocation2 + $0x12] sm:$0xff]
        %v4030 = vld [vmem:[#allocation2 + $0x1a] sm:$0xff]
        %v4031 = vld [vmem:[#allocation2 + $0x22] sm:$0xff]
        %v4032 = vld [vmem:[#allocation2 + $0x2a] sm:$0xff]
        %v4033 = vld [vmem:[#allocation2 + $0x32] sm:$0xff]
        %v4034 = vld [vmem:[#allocation2 + $0x3a] sm:$0xff]
        %v4035 = vld [vmem:[#allocation2 + $0x42] sm:$0xff]
        %v4036 = vld [vmem:[#allocation2 + $0x4a] sm:$0xff]
        %v4037 = vld [vmem:[#allocation2 + $0x52] sm:$0xff]
        %v4038 = vld [vmem:[#allocation2 + $0x5a] sm:$0xff]
        %v4039 = vld [vmem:[#allocation2 + $0x62] sm:$0xff]
        %v4040 = vld [vmem:[#allocation2 + $0x6a] sm:$0xff]
        %v4041 = vld [vmem:[#allocation2 + $0x72] sm:$0xf]
        %v4042 = vpack.c.bf16 %v4030, %v4029
        %v4043 = vpack.c.bf16 %v4032, %v4031
        %v4044 = vpack.c.bf16 %v4034, %v4033
        %v4045 = vpack.c.bf16 %v4036, %v4035
        %v4046 = vpack.c.bf16 %v4038, %v4037
        %v4047 = vpack.c.bf16 %v4040, %v4039
        %v4048 = vpack.c.bf16 %v4041, %v4041
        %s4049 = scalar_lea.vmem [#allocation5], 192
        %v4050 = vld [vmem:[%s4049] sm:$0xf]
        %v4051 = vld [vmem:[%s4049 + $0x4] sm:$0xf]
        %v4052 = vld [vmem:[%s4049 + $0x8] sm:$0xf]
        %v4053 = vld [vmem:[%s4049 + $0xc] sm:$0xf]
        %v4054 = vld [vmem:[%s4049 + $0x10] sm:$0xf]
        %v4055 = vld [vmem:[%s4049 + $0x14] sm:$0xf]
        %v4056 = vld [vmem:[%s4049 + $0x18] sm:$0xf]
        %v4057 = vld [vmem:[%s4049 + $0x1c] sm:$0xf]
        %v4058 = vld [vmem:[%s4049 + $0x20] sm:$0xf]
        %v4059 = vld [vmem:[%s4049 + $0x24] sm:$0xf]
        %v4060 = vld [vmem:[%s4049 + $0x28] sm:$0xf]
        %v4061 = vld [vmem:[%s4049 + $0x2c] sm:$0xf]
        %v4062 = vld [vmem:[%s4049 + $0x30] sm:$0xf]
        %v4063 = vld [vmem:[%s4049 + $0x34] sm:$0xf]
        %v4064 = vld [vmem:[%s4049 + $0x38] sm:$0xf]
        %v4065 = vld [vmem:[%s4049 + $0x3c] sm:$0xf]
        %v4082 = vunpack.c.l.b16 %v4050
        %v4083 = vunpack.c.l.b16 %v4051
        %v4084 = vunpack.c.l.b16 %v4052
        %v4085 = vunpack.c.l.b16 %v4053
        %v4086 = vunpack.c.l.b16 %v4054
        %v4087 = vunpack.c.l.b16 %v4055
        %v4088 = vunpack.c.l.b16 %v4056
        %v4089 = vunpack.c.l.b16 %v4057
        %v4090 = vunpack.c.l.b16 %v4058
        %v4091 = vunpack.c.l.b16 %v4059
        %v4092 = vunpack.c.l.b16 %v4060
        %v4093 = vunpack.c.l.b16 %v4061
        %v4094 = vunpack.c.l.b16 %v4062
        %v4095 = vunpack.c.l.b16 %v4063
        %v4096 = vunpack.c.l.b16 %v4064
        %v4097 = vunpack.c.l.b16 %v4065
        %v4098 = vpack.c.b16 %v4083, %v4082
        %v4099 = vpack.c.b16 %v4085, %v4084
        %v4100 = vpack.c.b16 %v4087, %v4086
        %v4101 = vpack.c.b16 %v4089, %v4088
        %v4102 = vpack.c.b16 %v4091, %v4090
        %v4103 = vpack.c.b16 %v4093, %v4092
        %v4104 = vpack.c.b16 %v4095, %v4094
        %v4105 = vpack.c.b16 %v4097, %v4096
        %4114 = vmatpush.bf16.msra.mxu0 %v4105
        %4115 = vmatpush.bf16.msra.mxu0 %v4104
        %4116 = vmatpush.bf16.msra.mxu0 %v4103
        %4117 = vmatpush.bf16.msra.mxu0 %v4102
        %4118 = vmatpush.bf16.msra.mxu0 %v4101
        %4119 = vmatpush.bf16.msra.mxu0 %v4100
        %4120 = vmatpush.bf16.msra.mxu0 %v4099
        %4121 = vmatpush.bf16.msra.mxu0 %v4098
        %4122 = vmatmul.bf16.gmra.mxu0 %v4042
        %v4123 = vpop.f32.mrf.mxu0
        %v4124 = vadd.f32 0.0, %v4123
        %v4125 = vpop.f32.mrf.mxu0
        %v4126 = vadd.f32 0.0, %v4125
        %4127 = vmatmul.bf16.gmra.mxu0 %v4043
        %v4128 = vpop.f32.mrf.mxu0
        %v4129 = vadd.f32 0.0, %v4128
        %v4130 = vpop.f32.mrf.mxu0
        %v4131 = vadd.f32 0.0, %v4130
        %4132 = vmatmul.bf16.gmra.mxu0 %v4044
        %v4133 = vpop.f32.mrf.mxu0
        %v4134 = vadd.f32 0.0, %v4133
        %v4135 = vpop.f32.mrf.mxu0
        %v4136 = vadd.f32 0.0, %v4135
        %4137 = vmatmul.bf16.gmra.mxu0 %v4045
        %v4138 = vpop.f32.mrf.mxu0
        %v4139 = vadd.f32 0.0, %v4138
        %v4140 = vpop.f32.mrf.mxu0
        %v4141 = vadd.f32 0.0, %v4140
        %4142 = vmatmul.bf16.gmra.mxu0 %v4046
        %v4143 = vpop.f32.mrf.mxu0
        %v4144 = vadd.f32 0.0, %v4143
        %v4145 = vpop.f32.mrf.mxu0
        %v4146 = vadd.f32 0.0, %v4145
        %4147 = vmatmul.bf16.gmra.mxu0 %v4047
        %v4148 = vpop.f32.mrf.mxu0
        %v4149 = vadd.f32 0.0, %v4148
        %v4150 = vpop.f32.mrf.mxu0
        %v4151 = vadd.f32 0.0, %v4150
        %4152 = vmatmul.bf16.gmra.mxu0 %v4048
        %v4153 = vpop.f32.mrf.mxu0
        %v4154 = vadd.f32 0.0, %v4153
        %v4155 = vpop.f32.mrf.mxu0
        %4156 = vdwg.mxu0
        %v4157 = vadd.f32 %v4016, %v4124
        %v4158 = vadd.f32 %v4017, %v4126
        %v4159 = vadd.f32 %v4018, %v4129
        %v4160 = vadd.f32 %v4019, %v4131
        %v4161 = vadd.f32 %v4020, %v4134
        %v4162 = vadd.f32 %v4021, %v4136
        %v4163 = vadd.f32 %v4022, %v4139
        %v4164 = vadd.f32 %v4023, %v4141
        %v4165 = vadd.f32 %v4024, %v4144
        %v4166 = vadd.f32 %v4025, %v4146
        %v4167 = vadd.f32 %v4026, %v4149
        %v4168 = vadd.f32 %v4027, %v4151
        %v4169 = vadd.f32 %v4028, %v4154
        %v4170 = vld [vmem:[#allocation2 + $0x13] sm:$0xff]
        %v4171 = vld [vmem:[#allocation2 + $0x1b] sm:$0xff]
        %v4172 = vld [vmem:[#allocation2 + $0x23] sm:$0xff]
        %v4173 = vld [vmem:[#allocation2 + $0x2b] sm:$0xff]
        %v4174 = vld [vmem:[#allocation2 + $0x33] sm:$0xff]
        %v4175 = vld [vmem:[#allocation2 + $0x3b] sm:$0xff]
        %v4176 = vld [vmem:[#allocation2 + $0x43] sm:$0xff]
        %v4177 = vld [vmem:[#allocation2 + $0x4b] sm:$0xff]
        %v4178 = vld [vmem:[#allocation2 + $0x53] sm:$0xff]
        %v4179 = vld [vmem:[#allocation2 + $0x5b] sm:$0xff]
        %v4180 = vld [vmem:[#allocation2 + $0x63] sm:$0xff]
        %v4181 = vld [vmem:[#allocation2 + $0x6b] sm:$0xff]
        %v4182 = vld [vmem:[#allocation2 + $0x73] sm:$0xf]
        %v4183 = vpack.c.bf16 %v4171, %v4170
        %v4184 = vpack.c.bf16 %v4173, %v4172
        %v4185 = vpack.c.bf16 %v4175, %v4174
        %v4186 = vpack.c.bf16 %v4177, %v4176
        %v4187 = vpack.c.bf16 %v4179, %v4178
        %v4188 = vpack.c.bf16 %v4181, %v4180
        %v4189 = vpack.c.bf16 %v4182, %v4182
        %s4190 = scalar_lea.vmem [#allocation5], 256
        %v4191 = vld [vmem:[%s4190] sm:$0xf]
        %v4192 = vld [vmem:[%s4190 + $0x4] sm:$0xf]
        %v4193 = vld [vmem:[%s4190 + $0x8] sm:$0xf]
        %v4194 = vld [vmem:[%s4190 + $0xc] sm:$0xf]
        %v4195 = vld [vmem:[%s4190 + $0x10] sm:$0xf]
        %v4196 = vld [vmem:[%s4190 + $0x14] sm:$0xf]
        %v4197 = vld [vmem:[%s4190 + $0x18] sm:$0xf]
        %v4198 = vld [vmem:[%s4190 + $0x1c] sm:$0xf]
        %v4199 = vld [vmem:[%s4190 + $0x20] sm:$0xf]
        %v4200 = vld [vmem:[%s4190 + $0x24] sm:$0xf]
        %v4201 = vld [vmem:[%s4190 + $0x28] sm:$0xf]
        %v4202 = vld [vmem:[%s4190 + $0x2c] sm:$0xf]
        %v4203 = vld [vmem:[%s4190 + $0x30] sm:$0xf]
        %v4204 = vld [vmem:[%s4190 + $0x34] sm:$0xf]
        %v4205 = vld [vmem:[%s4190 + $0x38] sm:$0xf]
        %v4206 = vld [vmem:[%s4190 + $0x3c] sm:$0xf]
        %v4223 = vunpack.c.l.b16 %v4191
        %v4224 = vunpack.c.l.b16 %v4192
        %v4225 = vunpack.c.l.b16 %v4193
        %v4226 = vunpack.c.l.b16 %v4194
        %v4227 = vunpack.c.l.b16 %v4195
        %v4228 = vunpack.c.l.b16 %v4196
        %v4229 = vunpack.c.l.b16 %v4197
        %v4230 = vunpack.c.l.b16 %v4198
        %v4231 = vunpack.c.l.b16 %v4199
        %v4232 = vunpack.c.l.b16 %v4200
        %v4233 = vunpack.c.l.b16 %v4201
        %v4234 = vunpack.c.l.b16 %v4202
        %v4235 = vunpack.c.l.b16 %v4203
        %v4236 = vunpack.c.l.b16 %v4204
        %v4237 = vunpack.c.l.b16 %v4205
        %v4238 = vunpack.c.l.b16 %v4206
        %v4239 = vpack.c.b16 %v4224, %v4223
        %v4240 = vpack.c.b16 %v4226, %v4225
        %v4241 = vpack.c.b16 %v4228, %v4227
        %v4242 = vpack.c.b16 %v4230, %v4229
        %v4243 = vpack.c.b16 %v4232, %v4231
        %v4244 = vpack.c.b16 %v4234, %v4233
        %v4245 = vpack.c.b16 %v4236, %v4235
        %v4246 = vpack.c.b16 %v4238, %v4237
        %4255 = vmatpush.bf16.msra.mxu0 %v4246
        %4256 = vmatpush.bf16.msra.mxu0 %v4245
        %4257 = vmatpush.bf16.msra.mxu0 %v4244
        %4258 = vmatpush.bf16.msra.mxu0 %v4243
        %4259 = vmatpush.bf16.msra.mxu0 %v4242
        %4260 = vmatpush.bf16.msra.mxu0 %v4241
        %4261 = vmatpush.bf16.msra.mxu0 %v4240
        %4262 = vmatpush.bf16.msra.mxu0 %v4239
        %4263 = vmatmul.bf16.gmra.mxu0 %v4183
        %v4264 = vpop.f32.mrf.mxu0
        %v4265 = vadd.f32 0.0, %v4264
        %v4266 = vpop.f32.mrf.mxu0
        %v4267 = vadd.f32 0.0, %v4266
        %4268 = vmatmul.bf16.gmra.mxu0 %v4184
        %v4269 = vpop.f32.mrf.mxu0
        %v4270 = vadd.f32 0.0, %v4269
        %v4271 = vpop.f32.mrf.mxu0
        %v4272 = vadd.f32 0.0, %v4271
        %4273 = vmatmul.bf16.gmra.mxu0 %v4185
        %v4274 = vpop.f32.mrf.mxu0
        %v4275 = vadd.f32 0.0, %v4274
        %v4276 = vpop.f32.mrf.mxu0
        %v4277 = vadd.f32 0.0, %v4276
        %4278 = vmatmul.bf16.gmra.mxu0 %v4186
        %v4279 = vpop.f32.mrf.mxu0
        %v4280 = vadd.f32 0.0, %v4279
        %v4281 = vpop.f32.mrf.mxu0
        %v4282 = vadd.f32 0.0, %v4281
        %4283 = vmatmul.bf16.gmra.mxu0 %v4187
        %v4284 = vpop.f32.mrf.mxu0
        %v4285 = vadd.f32 0.0, %v4284
        %v4286 = vpop.f32.mrf.mxu0
        %v4287 = vadd.f32 0.0, %v4286
        %4288 = vmatmul.bf16.gmra.mxu0 %v4188
        %v4289 = vpop.f32.mrf.mxu0
        %v4290 = vadd.f32 0.0, %v4289
        %v4291 = vpop.f32.mrf.mxu0
        %v4292 = vadd.f32 0.0, %v4291
        %4293 = vmatmul.bf16.gmra.mxu0 %v4189
        %v4294 = vpop.f32.mrf.mxu0
        %v4295 = vadd.f32 0.0, %v4294
        %v4296 = vpop.f32.mrf.mxu0
        %4297 = vdwg.mxu0
        %v4298 = vadd.f32 %v4157, %v4265
        %v4299 = vadd.f32 %v4158, %v4267
        %v4300 = vadd.f32 %v4159, %v4270
        %v4301 = vadd.f32 %v4160, %v4272
        %v4302 = vadd.f32 %v4161, %v4275
        %v4303 = vadd.f32 %v4162, %v4277
        %v4304 = vadd.f32 %v4163, %v4280
        %v4305 = vadd.f32 %v4164, %v4282
        %v4306 = vadd.f32 %v4165, %v4285
        %v4307 = vadd.f32 %v4166, %v4287
        %v4308 = vadd.f32 %v4167, %v4290
        %v4309 = vadd.f32 %v4168, %v4292
        %v4310 = vadd.f32 %v4169, %v4295
        %v4311 = vld [vmem:[#allocation2 + $0x14] sm:$0xff]
        %v4312 = vld [vmem:[#allocation2 + $0x1c] sm:$0xff]
        %v4313 = vld [vmem:[#allocation2 + $0x24] sm:$0xff]
        %v4314 = vld [vmem:[#allocation2 + $0x2c] sm:$0xff]
        %v4315 = vld [vmem:[#allocation2 + $0x34] sm:$0xff]
        %v4316 = vld [vmem:[#allocation2 + $0x3c] sm:$0xff]
        %v4317 = vld [vmem:[#allocation2 + $0x44] sm:$0xff]
        %v4318 = vld [vmem:[#allocation2 + $0x4c] sm:$0xff]
        %v4319 = vld [vmem:[#allocation2 + $0x54] sm:$0xff]
        %v4320 = vld [vmem:[#allocation2 + $0x5c] sm:$0xff]
        %v4321 = vld [vmem:[#allocation2 + $0x64] sm:$0xff]
        %v4322 = vld [vmem:[#allocation2 + $0x6c] sm:$0xff]
        %v4323 = vld [vmem:[#allocation2 + $0x74] sm:$0xf]
        %v4324 = vpack.c.bf16 %v4312, %v4311
        %v4325 = vpack.c.bf16 %v4314, %v4313
        %v4326 = vpack.c.bf16 %v4316, %v4315
        %v4327 = vpack.c.bf16 %v4318, %v4317
        %v4328 = vpack.c.bf16 %v4320, %v4319
        %v4329 = vpack.c.bf16 %v4322, %v4321
        %v4330 = vpack.c.bf16 %v4323, %v4323
        %s4331 = scalar_lea.vmem [#allocation5], 320
        %v4332 = vld [vmem:[%s4331] sm:$0xf]
        %v4333 = vld [vmem:[%s4331 + $0x4] sm:$0xf]
        %v4334 = vld [vmem:[%s4331 + $0x8] sm:$0xf]
        %v4335 = vld [vmem:[%s4331 + $0xc] sm:$0xf]
        %v4336 = vld [vmem:[%s4331 + $0x10] sm:$0xf]
        %v4337 = vld [vmem:[%s4331 + $0x14] sm:$0xf]
        %v4338 = vld [vmem:[%s4331 + $0x18] sm:$0xf]
        %v4339 = vld [vmem:[%s4331 + $0x1c] sm:$0xf]
        %v4340 = vld [vmem:[%s4331 + $0x20] sm:$0xf]
        %v4341 = vld [vmem:[%s4331 + $0x24] sm:$0xf]
        %v4342 = vld [vmem:[%s4331 + $0x28] sm:$0xf]
        %v4343 = vld [vmem:[%s4331 + $0x2c] sm:$0xf]
        %v4344 = vld [vmem:[%s4331 + $0x30] sm:$0xf]
        %v4345 = vld [vmem:[%s4331 + $0x34] sm:$0xf]
        %v4346 = vld [vmem:[%s4331 + $0x38] sm:$0xf]
        %v4347 = vld [vmem:[%s4331 + $0x3c] sm:$0xf]
        %v4364 = vunpack.c.l.b16 %v4332
        %v4365 = vunpack.c.l.b16 %v4333
        %v4366 = vunpack.c.l.b16 %v4334
        %v4367 = vunpack.c.l.b16 %v4335
        %v4368 = vunpack.c.l.b16 %v4336
        %v4369 = vunpack.c.l.b16 %v4337
        %v4370 = vunpack.c.l.b16 %v4338
        %v4371 = vunpack.c.l.b16 %v4339
        %v4372 = vunpack.c.l.b16 %v4340
        %v4373 = vunpack.c.l.b16 %v4341
        %v4374 = vunpack.c.l.b16 %v4342
        %v4375 = vunpack.c.l.b16 %v4343
        %v4376 = vunpack.c.l.b16 %v4344
        %v4377 = vunpack.c.l.b16 %v4345
        %v4378 = vunpack.c.l.b16 %v4346
        %v4379 = vunpack.c.l.b16 %v4347
        %v4380 = vpack.c.b16 %v4365, %v4364
        %v4381 = vpack.c.b16 %v4367, %v4366
        %v4382 = vpack.c.b16 %v4369, %v4368
        %v4383 = vpack.c.b16 %v4371, %v4370
        %v4384 = vpack.c.b16 %v4373, %v4372
        %v4385 = vpack.c.b16 %v4375, %v4374
        %v4386 = vpack.c.b16 %v4377, %v4376
        %v4387 = vpack.c.b16 %v4379, %v4378
        %4396 = vmatpush.bf16.msra.mxu0 %v4387
        %4397 = vmatpush.bf16.msra.mxu0 %v4386
        %4398 = vmatpush.bf16.msra.mxu0 %v4385
        %4399 = vmatpush.bf16.msra.mxu0 %v4384
        %4400 = vmatpush.bf16.msra.mxu0 %v4383
        %4401 = vmatpush.bf16.msra.mxu0 %v4382
        %4402 = vmatpush.bf16.msra.mxu0 %v4381
        %4403 = vmatpush.bf16.msra.mxu0 %v4380
        %4404 = vmatmul.bf16.gmra.mxu0 %v4324
        %v4405 = vpop.f32.mrf.mxu0
        %v4406 = vadd.f32 0.0, %v4405
        %v4407 = vpop.f32.mrf.mxu0
        %v4408 = vadd.f32 0.0, %v4407
        %4409 = vmatmul.bf16.gmra.mxu0 %v4325
        %v4410 = vpop.f32.mrf.mxu0
        %v4411 = vadd.f32 0.0, %v4410
        %v4412 = vpop.f32.mrf.mxu0
        %v4413 = vadd.f32 0.0, %v4412
        %4414 = vmatmul.bf16.gmra.mxu0 %v4326
        %v4415 = vpop.f32.mrf.mxu0
        %v4416 = vadd.f32 0.0, %v4415
        %v4417 = vpop.f32.mrf.mxu0
        %v4418 = vadd.f32 0.0, %v4417
        %4419 = vmatmul.bf16.gmra.mxu0 %v4327
        %v4420 = vpop.f32.mrf.mxu0
        %v4421 = vadd.f32 0.0, %v4420
        %v4422 = vpop.f32.mrf.mxu0
        %v4423 = vadd.f32 0.0, %v4422
        %4424 = vmatmul.bf16.gmra.mxu0 %v4328
        %v4425 = vpop.f32.mrf.mxu0
        %v4426 = vadd.f32 0.0, %v4425
        %v4427 = vpop.f32.mrf.mxu0
        %v4428 = vadd.f32 0.0, %v4427
        %4429 = vmatmul.bf16.gmra.mxu0 %v4329
        %v4430 = vpop.f32.mrf.mxu0
        %v4431 = vadd.f32 0.0, %v4430
        %v4432 = vpop.f32.mrf.mxu0
        %v4433 = vadd.f32 0.0, %v4432
        %4434 = vmatmul.bf16.gmra.mxu0 %v4330
        %v4435 = vpop.f32.mrf.mxu0
        %v4436 = vadd.f32 0.0, %v4435
        %v4437 = vpop.f32.mrf.mxu0
        %4438 = vdwg.mxu0
        %v4439 = vadd.f32 %v4298, %v4406
        %v4440 = vadd.f32 %v4299, %v4408
        %v4441 = vadd.f32 %v4300, %v4411
        %v4442 = vadd.f32 %v4301, %v4413
        %v4443 = vadd.f32 %v4302, %v4416
        %v4444 = vadd.f32 %v4303, %v4418
        %v4445 = vadd.f32 %v4304, %v4421
        %v4446 = vadd.f32 %v4305, %v4423
        %v4447 = vadd.f32 %v4306, %v4426
        %v4448 = vadd.f32 %v4307, %v4428
        %v4449 = vadd.f32 %v4308, %v4431
        %v4450 = vadd.f32 %v4309, %v4433
        %v4451 = vadd.f32 %v4310, %v4436
        %v4452 = vld [vmem:[#allocation2 + $0x1c] sm:$0xff]
        %v4453 = vld [vmem:[#allocation2 + $0x24] sm:$0xff]
        %v4454 = vld [vmem:[#allocation2 + $0x2c] sm:$0xff]
        %v4455 = vld [vmem:[#allocation2 + $0x34] sm:$0xff]
        %v4456 = vld [vmem:[#allocation2 + $0x3c] sm:$0xff]
        %v4457 = vld [vmem:[#allocation2 + $0x44] sm:$0xff]
        %v4458 = vld [vmem:[#allocation2 + $0x4c] sm:$0xff]
        %v4459 = vld [vmem:[#allocation2 + $0x54] sm:$0xff]
        %v4460 = vld [vmem:[#allocation2 + $0x5c] sm:$0xff]
        %v4461 = vld [vmem:[#allocation2 + $0x64] sm:$0xff]
        %v4462 = vld [vmem:[#allocation2 + $0x6c] sm:$0xff]
        %v4463 = vld [vmem:[#allocation2 + $0x74] sm:$0xff]
        %v4464 = vld [vmem:[#allocation2 + $0x7c] sm:$0xf]
        %v4465 = vpack.c.bf16 %v4453, %v4452
        %v4466 = vpack.c.bf16 %v4455, %v4454
        %v4467 = vpack.c.bf16 %v4457, %v4456
        %v4468 = vpack.c.bf16 %v4459, %v4458
        %v4469 = vpack.c.bf16 %v4461, %v4460
        %v4470 = vpack.c.bf16 %v4463, %v4462
        %v4471 = vpack.c.bf16 %v4464, %v4464
        %s4472 = scalar_lea.vmem [#allocation5], 384
        %v4473 = vld [vmem:[%s4472] sm:$0xf]
        %v4474 = vld [vmem:[%s4472 + $0x4] sm:$0xf]
        %v4475 = vld [vmem:[%s4472 + $0x8] sm:$0xf]
        %v4476 = vld [vmem:[%s4472 + $0xc] sm:$0xf]
        %v4477 = vld [vmem:[%s4472 + $0x10] sm:$0xf]
        %v4478 = vld [vmem:[%s4472 + $0x14] sm:$0xf]
        %v4479 = vld [vmem:[%s4472 + $0x18] sm:$0xf]
        %v4480 = vld [vmem:[%s4472 + $0x1c] sm:$0xf]
        %v4481 = vld [vmem:[%s4472 + $0x20] sm:$0xf]
        %v4482 = vld [vmem:[%s4472 + $0x24] sm:$0xf]
        %v4483 = vld [vmem:[%s4472 + $0x28] sm:$0xf]
        %v4484 = vld [vmem:[%s4472 + $0x2c] sm:$0xf]
        %v4485 = vld [vmem:[%s4472 + $0x30] sm:$0xf]
        %v4486 = vld [vmem:[%s4472 + $0x34] sm:$0xf]
        %v4487 = vld [vmem:[%s4472 + $0x38] sm:$0xf]
        %v4488 = vld [vmem:[%s4472 + $0x3c] sm:$0xf]
        %v4505 = vunpack.c.l.b16 %v4473
        %v4506 = vunpack.c.l.b16 %v4474
        %v4507 = vunpack.c.l.b16 %v4475
        %v4508 = vunpack.c.l.b16 %v4476
        %v4509 = vunpack.c.l.b16 %v4477
        %v4510 = vunpack.c.l.b16 %v4478
        %v4511 = vunpack.c.l.b16 %v4479
        %v4512 = vunpack.c.l.b16 %v4480
        %v4513 = vunpack.c.l.b16 %v4481
        %v4514 = vunpack.c.l.b16 %v4482
        %v4515 = vunpack.c.l.b16 %v4483
        %v4516 = vunpack.c.l.b16 %v4484
        %v4517 = vunpack.c.l.b16 %v4485
        %v4518 = vunpack.c.l.b16 %v4486
        %v4519 = vunpack.c.l.b16 %v4487
        %v4520 = vunpack.c.l.b16 %v4488
        %v4521 = vpack.c.b16 %v4506, %v4505
        %v4522 = vpack.c.b16 %v4508, %v4507
        %v4523 = vpack.c.b16 %v4510, %v4509
        %v4524 = vpack.c.b16 %v4512, %v4511
        %v4525 = vpack.c.b16 %v4514, %v4513
        %v4526 = vpack.c.b16 %v4516, %v4515
        %v4527 = vpack.c.b16 %v4518, %v4517
        %v4528 = vpack.c.b16 %v4520, %v4519
        %4537 = vmatpush.bf16.msra.mxu0 %v4528
        %4538 = vmatpush.bf16.msra.mxu0 %v4527
        %4539 = vmatpush.bf16.msra.mxu0 %v4526
        %4540 = vmatpush.bf16.msra.mxu0 %v4525
        %4541 = vmatpush.bf16.msra.mxu0 %v4524
        %4542 = vmatpush.bf16.msra.mxu0 %v4523
        %4543 = vmatpush.bf16.msra.mxu0 %v4522
        %4544 = vmatpush.bf16.msra.mxu0 %v4521
        %4545 = vmatmul.bf16.gmra.mxu0 %v4465
        %v4546 = vpop.f32.mrf.mxu0
        %v4547 = vadd.f32 0.0, %v4546
        %v4548 = vpop.f32.mrf.mxu0
        %v4549 = vadd.f32 0.0, %v4548
        %4550 = vmatmul.bf16.gmra.mxu0 %v4466
        %v4551 = vpop.f32.mrf.mxu0
        %v4552 = vadd.f32 0.0, %v4551
        %v4553 = vpop.f32.mrf.mxu0
        %v4554 = vadd.f32 0.0, %v4553
        %4555 = vmatmul.bf16.gmra.mxu0 %v4467
        %v4556 = vpop.f32.mrf.mxu0
        %v4557 = vadd.f32 0.0, %v4556
        %v4558 = vpop.f32.mrf.mxu0
        %v4559 = vadd.f32 0.0, %v4558
        %4560 = vmatmul.bf16.gmra.mxu0 %v4468
        %v4561 = vpop.f32.mrf.mxu0
        %v4562 = vadd.f32 0.0, %v4561
        %v4563 = vpop.f32.mrf.mxu0
        %v4564 = vadd.f32 0.0, %v4563
        %4565 = vmatmul.bf16.gmra.mxu0 %v4469
        %v4566 = vpop.f32.mrf.mxu0
        %v4567 = vadd.f32 0.0, %v4566
        %v4568 = vpop.f32.mrf.mxu0
        %v4569 = vadd.f32 0.0, %v4568
        %4570 = vmatmul.bf16.gmra.mxu0 %v4470
        %v4571 = vpop.f32.mrf.mxu0
        %v4572 = vadd.f32 0.0, %v4571
        %v4573 = vpop.f32.mrf.mxu0
        %v4574 = vadd.f32 0.0, %v4573
        %4575 = vmatmul.bf16.gmra.mxu0 %v4471
        %v4576 = vpop.f32.mrf.mxu0
        %v4577 = vadd.f32 0.0, %v4576
        %v4578 = vpop.f32.mrf.mxu0
        %4579 = vdwg.mxu0
        %v4580 = vadd.f32 %v4439, %v4547
        %v4581 = vadd.f32 %v4440, %v4549
        %v4582 = vadd.f32 %v4441, %v4552
        %v4583 = vadd.f32 %v4442, %v4554
        %v4584 = vadd.f32 %v4443, %v4557
        %v4585 = vadd.f32 %v4444, %v4559
        %v4586 = vadd.f32 %v4445, %v4562
        %v4587 = vadd.f32 %v4446, %v4564
        %v4588 = vadd.f32 %v4447, %v4567
        %v4589 = vadd.f32 %v4448, %v4569
        %v4590 = vadd.f32 %v4449, %v4572
        %v4591 = vadd.f32 %v4450, %v4574
        %v4592 = vadd.f32 %v4451, %v4577
        %v4593 = vld [vmem:[#allocation2 + $0x1d] sm:$0xff]
        %v4594 = vld [vmem:[#allocation2 + $0x25] sm:$0xff]
        %v4595 = vld [vmem:[#allocation2 + $0x2d] sm:$0xff]
        %v4596 = vld [vmem:[#allocation2 + $0x35] sm:$0xff]
        %v4597 = vld [vmem:[#allocation2 + $0x3d] sm:$0xff]
        %v4598 = vld [vmem:[#allocation2 + $0x45] sm:$0xff]
        %v4599 = vld [vmem:[#allocation2 + $0x4d] sm:$0xff]
        %v4600 = vld [vmem:[#allocation2 + $0x55] sm:$0xff]
        %v4601 = vld [vmem:[#allocation2 + $0x5d] sm:$0xff]
        %v4602 = vld [vmem:[#allocation2 + $0x65] sm:$0xff]
        %v4603 = vld [vmem:[#allocation2 + $0x6d] sm:$0xff]
        %v4604 = vld [vmem:[#allocation2 + $0x75] sm:$0xff]
        %v4605 = vld [vmem:[#allocation2 + $0x7d] sm:$0xf]
        %v4606 = vpack.c.bf16 %v4594, %v4593
        %v4607 = vpack.c.bf16 %v4596, %v4595
        %v4608 = vpack.c.bf16 %v4598, %v4597
        %v4609 = vpack.c.bf16 %v4600, %v4599
        %v4610 = vpack.c.bf16 %v4602, %v4601
        %v4611 = vpack.c.bf16 %v4604, %v4603
        %v4612 = vpack.c.bf16 %v4605, %v4605
        %s4613 = scalar_lea.vmem [#allocation5], 448
        %v4614 = vld [vmem:[%s4613] sm:$0xf]
        %v4615 = vld [vmem:[%s4613 + $0x4] sm:$0xf]
        %v4616 = vld [vmem:[%s4613 + $0x8] sm:$0xf]
        %v4617 = vld [vmem:[%s4613 + $0xc] sm:$0xf]
        %v4618 = vld [vmem:[%s4613 + $0x10] sm:$0xf]
        %v4619 = vld [vmem:[%s4613 + $0x14] sm:$0xf]
        %v4620 = vld [vmem:[%s4613 + $0x18] sm:$0xf]
        %v4621 = vld [vmem:[%s4613 + $0x1c] sm:$0xf]
        %v4622 = vld [vmem:[%s4613 + $0x20] sm:$0xf]
        %v4623 = vld [vmem:[%s4613 + $0x24] sm:$0xf]
        %v4624 = vld [vmem:[%s4613 + $0x28] sm:$0xf]
        %v4625 = vld [vmem:[%s4613 + $0x2c] sm:$0xf]
        %v4626 = vld [vmem:[%s4613 + $0x30] sm:$0xf]
        %v4627 = vld [vmem:[%s4613 + $0x34] sm:$0xf]
        %v4628 = vld [vmem:[%s4613 + $0x38] sm:$0xf]
        %v4629 = vld [vmem:[%s4613 + $0x3c] sm:$0xf]
        %v4646 = vunpack.c.l.b16 %v4614
        %v4647 = vunpack.c.l.b16 %v4615
        %v4648 = vunpack.c.l.b16 %v4616
        %v4649 = vunpack.c.l.b16 %v4617
        %v4650 = vunpack.c.l.b16 %v4618
        %v4651 = vunpack.c.l.b16 %v4619
        %v4652 = vunpack.c.l.b16 %v4620
        %v4653 = vunpack.c.l.b16 %v4621
        %v4654 = vunpack.c.l.b16 %v4622
        %v4655 = vunpack.c.l.b16 %v4623
        %v4656 = vunpack.c.l.b16 %v4624
        %v4657 = vunpack.c.l.b16 %v4625
        %v4658 = vunpack.c.l.b16 %v4626
        %v4659 = vunpack.c.l.b16 %v4627
        %v4660 = vunpack.c.l.b16 %v4628
        %v4661 = vunpack.c.l.b16 %v4629
        %v4662 = vpack.c.b16 %v4647, %v4646
        %v4663 = vpack.c.b16 %v4649, %v4648
        %v4664 = vpack.c.b16 %v4651, %v4650
        %v4665 = vpack.c.b16 %v4653, %v4652
        %v4666 = vpack.c.b16 %v4655, %v4654
        %v4667 = vpack.c.b16 %v4657, %v4656
        %v4668 = vpack.c.b16 %v4659, %v4658
        %v4669 = vpack.c.b16 %v4661, %v4660
        %4678 = vmatpush.bf16.msra.mxu0 %v4669
        %4679 = vmatpush.bf16.msra.mxu0 %v4668
        %4680 = vmatpush.bf16.msra.mxu0 %v4667
        %4681 = vmatpush.bf16.msra.mxu0 %v4666
        %4682 = vmatpush.bf16.msra.mxu0 %v4665
        %4683 = vmatpush.bf16.msra.mxu0 %v4664
        %4684 = vmatpush.bf16.msra.mxu0 %v4663
        %4685 = vmatpush.bf16.msra.mxu0 %v4662
        %4686 = vmatmul.bf16.gmra.mxu0 %v4606
        %v4687 = vpop.f32.mrf.mxu0
        %v4688 = vadd.f32 0.0, %v4687
        %v4689 = vpop.f32.mrf.mxu0
        %v4690 = vadd.f32 0.0, %v4689
        %4691 = vmatmul.bf16.gmra.mxu0 %v4607
        %v4692 = vpop.f32.mrf.mxu0
        %v4693 = vadd.f32 0.0, %v4692
        %v4694 = vpop.f32.mrf.mxu0
        %v4695 = vadd.f32 0.0, %v4694
        %4696 = vmatmul.bf16.gmra.mxu0 %v4608
        %v4697 = vpop.f32.mrf.mxu0
        %v4698 = vadd.f32 0.0, %v4697
        %v4699 = vpop.f32.mrf.mxu0
        %v4700 = vadd.f32 0.0, %v4699
        %4701 = vmatmul.bf16.gmra.mxu0 %v4609
        %v4702 = vpop.f32.mrf.mxu0
        %v4703 = vadd.f32 0.0, %v4702
        %v4704 = vpop.f32.mrf.mxu0
        %v4705 = vadd.f32 0.0, %v4704
        %4706 = vmatmul.bf16.gmra.mxu0 %v4610
        %v4707 = vpop.f32.mrf.mxu0
        %v4708 = vadd.f32 0.0, %v4707
        %v4709 = vpop.f32.mrf.mxu0
        %v4710 = vadd.f32 0.0, %v4709
        %4711 = vmatmul.bf16.gmra.mxu0 %v4611
        %v4712 = vpop.f32.mrf.mxu0
        %v4713 = vadd.f32 0.0, %v4712
        %v4714 = vpop.f32.mrf.mxu0
        %v4715 = vadd.f32 0.0, %v4714
        %4716 = vmatmul.bf16.gmra.mxu0 %v4612
        %v4717 = vpop.f32.mrf.mxu0
        %v4718 = vadd.f32 0.0, %v4717
        %v4719 = vpop.f32.mrf.mxu0
        %4720 = vdwg.mxu0
        %v4721 = vadd.f32 %v4580, %v4688
        %v4722 = vadd.f32 %v4581, %v4690
        %v4723 = vadd.f32 %v4582, %v4693
        %v4724 = vadd.f32 %v4583, %v4695
        %v4725 = vadd.f32 %v4584, %v4698
        %v4726 = vadd.f32 %v4585, %v4700
        %v4727 = vadd.f32 %v4586, %v4703
        %v4728 = vadd.f32 %v4587, %v4705
        %v4729 = vadd.f32 %v4588, %v4708
        %v4730 = vadd.f32 %v4589, %v4710
        %v4731 = vadd.f32 %v4590, %v4713
        %v4732 = vadd.f32 %v4591, %v4715
        %v4733 = vadd.f32 %v4592, %v4718
        %v4734 = vld [vmem:[#allocation2 + $0x1e] sm:$0xff]
        %v4735 = vld [vmem:[#allocation2 + $0x26] sm:$0xff]
        %v4736 = vld [vmem:[#allocation2 + $0x2e] sm:$0xff]
        %v4737 = vld [vmem:[#allocation2 + $0x36] sm:$0xff]
        %v4738 = vld [vmem:[#allocation2 + $0x3e] sm:$0xff]
        %v4739 = vld [vmem:[#allocation2 + $0x46] sm:$0xff]
        %v4740 = vld [vmem:[#allocation2 + $0x4e] sm:$0xff]
        %v4741 = vld [vmem:[#allocation2 + $0x56] sm:$0xff]
        %v4742 = vld [vmem:[#allocation2 + $0x5e] sm:$0xff]
        %v4743 = vld [vmem:[#allocation2 + $0x66] sm:$0xff]
        %v4744 = vld [vmem:[#allocation2 + $0x6e] sm:$0xff]
        %v4745 = vld [vmem:[#allocation2 + $0x76] sm:$0xff]
        %v4746 = vld [vmem:[#allocation2 + $0x7e] sm:$0xf]
        %v4747 = vpack.c.bf16 %v4735, %v4734
        %v4748 = vpack.c.bf16 %v4737, %v4736
        %v4749 = vpack.c.bf16 %v4739, %v4738
        %v4750 = vpack.c.bf16 %v4741, %v4740
        %v4751 = vpack.c.bf16 %v4743, %v4742
        %v4752 = vpack.c.bf16 %v4745, %v4744
        %v4753 = vpack.c.bf16 %v4746, %v4746
        %s4754 = scalar_lea.vmem [#allocation5], 512
        %v4755 = vld [vmem:[%s4754] sm:$0xf]
        %v4756 = vld [vmem:[%s4754 + $0x4] sm:$0xf]
        %v4757 = vld [vmem:[%s4754 + $0x8] sm:$0xf]
        %v4758 = vld [vmem:[%s4754 + $0xc] sm:$0xf]
        %v4759 = vld [vmem:[%s4754 + $0x10] sm:$0xf]
        %v4760 = vld [vmem:[%s4754 + $0x14] sm:$0xf]
        %v4761 = vld [vmem:[%s4754 + $0x18] sm:$0xf]
        %v4762 = vld [vmem:[%s4754 + $0x1c] sm:$0xf]
        %v4763 = vld [vmem:[%s4754 + $0x20] sm:$0xf]
        %v4764 = vld [vmem:[%s4754 + $0x24] sm:$0xf]
        %v4765 = vld [vmem:[%s4754 + $0x28] sm:$0xf]
        %v4766 = vld [vmem:[%s4754 + $0x2c] sm:$0xf]
        %v4767 = vld [vmem:[%s4754 + $0x30] sm:$0xf]
        %v4768 = vld [vmem:[%s4754 + $0x34] sm:$0xf]
        %v4769 = vld [vmem:[%s4754 + $0x38] sm:$0xf]
        %v4770 = vld [vmem:[%s4754 + $0x3c] sm:$0xf]
        %v4787 = vunpack.c.l.b16 %v4755
        %v4788 = vunpack.c.l.b16 %v4756
        %v4789 = vunpack.c.l.b16 %v4757
        %v4790 = vunpack.c.l.b16 %v4758
        %v4791 = vunpack.c.l.b16 %v4759
        %v4792 = vunpack.c.l.b16 %v4760
        %v4793 = vunpack.c.l.b16 %v4761
        %v4794 = vunpack.c.l.b16 %v4762
        %v4795 = vunpack.c.l.b16 %v4763
        %v4796 = vunpack.c.l.b16 %v4764
        %v4797 = vunpack.c.l.b16 %v4765
        %v4798 = vunpack.c.l.b16 %v4766
        %v4799 = vunpack.c.l.b16 %v4767
        %v4800 = vunpack.c.l.b16 %v4768
        %v4801 = vunpack.c.l.b16 %v4769
        %v4802 = vunpack.c.l.b16 %v4770
        %v4803 = vpack.c.b16 %v4788, %v4787
        %v4804 = vpack.c.b16 %v4790, %v4789
        %v4805 = vpack.c.b16 %v4792, %v4791
        %v4806 = vpack.c.b16 %v4794, %v4793
        %v4807 = vpack.c.b16 %v4796, %v4795
        %v4808 = vpack.c.b16 %v4798, %v4797
        %v4809 = vpack.c.b16 %v4800, %v4799
        %v4810 = vpack.c.b16 %v4802, %v4801
        %4819 = vmatpush.bf16.msra.mxu0 %v4810
        %4820 = vmatpush.bf16.msra.mxu0 %v4809
        %4821 = vmatpush.bf16.msra.mxu0 %v4808
        %4822 = vmatpush.bf16.msra.mxu0 %v4807
        %4823 = vmatpush.bf16.msra.mxu0 %v4806
        %4824 = vmatpush.bf16.msra.mxu0 %v4805
        %4825 = vmatpush.bf16.msra.mxu0 %v4804
        %4826 = vmatpush.bf16.msra.mxu0 %v4803
        %4827 = vmatmul.bf16.gmra.mxu0 %v4747
        %v4828 = vpop.f32.mrf.mxu0
        %v4829 = vadd.f32 0.0, %v4828
        %v4830 = vpop.f32.mrf.mxu0
        %v4831 = vadd.f32 0.0, %v4830
        %4832 = vmatmul.bf16.gmra.mxu0 %v4748
        %v4833 = vpop.f32.mrf.mxu0
        %v4834 = vadd.f32 0.0, %v4833
        %v4835 = vpop.f32.mrf.mxu0
        %v4836 = vadd.f32 0.0, %v4835
        %4837 = vmatmul.bf16.gmra.mxu0 %v4749
        %v4838 = vpop.f32.mrf.mxu0
        %v4839 = vadd.f32 0.0, %v4838
        %v4840 = vpop.f32.mrf.mxu0
        %v4841 = vadd.f32 0.0, %v4840
        %4842 = vmatmul.bf16.gmra.mxu0 %v4750
        %v4843 = vpop.f32.mrf.mxu0
        %v4844 = vadd.f32 0.0, %v4843
        %v4845 = vpop.f32.mrf.mxu0
        %v4846 = vadd.f32 0.0, %v4845
        %4847 = vmatmul.bf16.gmra.mxu0 %v4751
        %v4848 = vpop.f32.mrf.mxu0
        %v4849 = vadd.f32 0.0, %v4848
        %v4850 = vpop.f32.mrf.mxu0
        %v4851 = vadd.f32 0.0, %v4850
        %4852 = vmatmul.bf16.gmra.mxu0 %v4752
        %v4853 = vpop.f32.mrf.mxu0
        %v4854 = vadd.f32 0.0, %v4853
        %v4855 = vpop.f32.mrf.mxu0
        %v4856 = vadd.f32 0.0, %v4855
        %4857 = vmatmul.bf16.gmra.mxu0 %v4753
        %v4858 = vpop.f32.mrf.mxu0
        %v4859 = vadd.f32 0.0, %v4858
        %v4860 = vpop.f32.mrf.mxu0
        %4861 = vdwg.mxu0
        %v4862 = vadd.f32 %v4721, %v4829
        %v4863 = vadd.f32 %v4722, %v4831
        %v4864 = vadd.f32 %v4723, %v4834
        %v4865 = vadd.f32 %v4724, %v4836
        %v4866 = vadd.f32 %v4725, %v4839
        %v4867 = vadd.f32 %v4726, %v4841
        %v4868 = vadd.f32 %v4727, %v4844
        %v4869 = vadd.f32 %v4728, %v4846
        %v4870 = vadd.f32 %v4729, %v4849
        %v4871 = vadd.f32 %v4730, %v4851
        %v4872 = vadd.f32 %v4731, %v4854
        %v4873 = vadd.f32 %v4732, %v4856
        %v4874 = vadd.f32 %v4733, %v4859
        %v4875 = vld [vmem:[%s4] sm:$0x1]
        %v4877 = vperm.slane %v4875, 0
        %v4879 = vadd.f32 %v4862, %v4877
        %v4880 = vadd.f32 %v4863, %v4877
        %v4881 = vadd.f32 %v4864, %v4877
        %v4882 = vadd.f32 %v4865, %v4877
        %v4883 = vadd.f32 %v4866, %v4877
        %v4884 = vadd.f32 %v4867, %v4877
        %v4885 = vadd.f32 %v4868, %v4877
        %v4886 = vadd.f32 %v4869, %v4877
        %v4887 = vadd.f32 %v4870, %v4877
        %v4888 = vadd.f32 %v4871, %v4877
        %v4889 = vadd.f32 %v4872, %v4877
        %v4890 = vadd.f32 %v4873, %v4877
        %v4891 = vadd.f32 %v4874, %v4877
        %v4892 = vmax.f32 %v4879, 0.0
        %v4893 = vmax.f32 %v4880, 0.0
        %v4894 = vmax.f32 %v4881, 0.0
        %v4895 = vmax.f32 %v4882, 0.0
        %v4896 = vmax.f32 %v4883, 0.0
        %v4897 = vmax.f32 %v4884, 0.0
        %v4898 = vmax.f32 %v4885, 0.0
        %v4899 = vmax.f32 %v4886, 0.0
        %v4900 = vmax.f32 %v4887, 0.0
        %v4901 = vmax.f32 %v4888, 0.0
        %v4902 = vmax.f32 %v4889, 0.0
        %v4903 = vmax.f32 %v4890, 0.0
        %v4904 = vmax.f32 %v4891, 0.0
        %4905 = vst [vmem:[#allocation3] sm:$0xff] %v4892
        %4906 = vst [vmem:[#allocation3 + $0x8] sm:$0xff] %v4893
        %4907 = vst [vmem:[#allocation3 + $0x10] sm:$0xff] %v4894
        %4908 = vst [vmem:[#allocation3 + $0x18] sm:$0xff] %v4895
        %4909 = vst [vmem:[#allocation3 + $0x20] sm:$0xff] %v4896
        %4910 = vst [vmem:[#allocation3 + $0x28] sm:$0xff] %v4897
        %4911 = vst [vmem:[#allocation3 + $0x30] sm:$0xff] %v4898
        %4912 = vst [vmem:[#allocation3 + $0x38] sm:$0xff] %v4899
        %4913 = vst [vmem:[#allocation3 + $0x40] sm:$0xff] %v4900
        %4914 = vst [vmem:[#allocation3 + $0x48] sm:$0xff] %v4901
        %4915 = vst [vmem:[#allocation3 + $0x50] sm:$0xff] %v4902
        %4916 = vst [vmem:[#allocation3 + $0x58] sm:$0xff] %v4903
        %4917 = vst [vmem:[#allocation3 + $0x60] sm:$0xf] %v4904
        %4918 = vst [vmem:[#allocation2 + $0x13] sm:$0xff] 0.0
        %4919 = vst [vmem:[#allocation2 + $0x1b] sm:$0xff] 0.0
        %4920 = vst [vmem:[#allocation2 + $0x23] sm:$0xff] 0.0
        %4921 = vst [vmem:[#allocation2 + $0x2b] sm:$0xff] 0.0
        %4922 = vst [vmem:[#allocation2 + $0x33] sm:$0xff] 0.0
        %4923 = vst [vmem:[#allocation2 + $0x3b] sm:$0xff] 0.0
        %4924 = vst [vmem:[#allocation2 + $0x43] sm:$0xff] 0.0
        %4925 = vst [vmem:[#allocation2 + $0x4b] sm:$0xff] 0.0
        %4926 = vst [vmem:[#allocation2 + $0x53] sm:$0xff] 0.0
        %4927 = vst [vmem:[#allocation2 + $0x5b] sm:$0xff] 0.0
        %4928 = vst [vmem:[#allocation2 + $0x63] sm:$0xff] 0.0
        %4929 = vst [vmem:[#allocation2 + $0x6b] sm:$0xff] 0.0
        %4930 = vst [vmem:[#allocation2 + $0x73] sm:$0xf] 0.0
        %v4931 = vld [vmem:[#allocation3 + $0xb] sm:$0xff]
        %4932 = vst [vmem:[#allocation2 + $0x1e] sm:$0xff] %v4931
        %v4933 = vld [vmem:[#allocation3 + $0x15] sm:$0xff]
        %4934 = vst [vmem:[#allocation2 + $0x28] sm:$0xff] %v4933
        %v4935 = vld [vmem:[#allocation3 + $0x1f] sm:$0xff]
        %4936 = vst [vmem:[#allocation2 + $0x32] sm:$0xff] %v4935
        %v4937 = vld [vmem:[#allocation3 + $0x29] sm:$0xff]
        %4938 = vst [vmem:[#allocation2 + $0x3c] sm:$0xff] %v4937
        %v4939 = vld [vmem:[#allocation3 + $0x33] sm:$0xff]
        %4940 = vst [vmem:[#allocation2 + $0x46] sm:$0xff] %v4939
        %v4941 = vld [vmem:[#allocation3 + $0x3d] sm:$0xff]
        %4942 = vst [vmem:[#allocation2 + $0x50] sm:$0xff] %v4941
        %v4943 = vld [vmem:[#allocation3 + $0x47] sm:$0xff]
        %4944 = vst [vmem:[#allocation2 + $0x5a] sm:$0xff] %v4943
        %v4945 = vld [vmem:[#allocation3 + $0x51] sm:$0xff]
        %4946 = vst [vmem:[#allocation2 + $0x64] sm:$0xff] %v4945
        %v4947 = vld [vmem:[#allocation2 + $0x8] sm:$0xff]
        %v4948 = vld [vmem:[#allocation2 + $0x10] sm:$0xff]
        %v4949 = vld [vmem:[#allocation2 + $0x18] sm:$0xff]
        %v4950 = vld [vmem:[#allocation2 + $0x20] sm:$0xff]
        %v4951 = vld [vmem:[#allocation2 + $0x28] sm:$0xff]
        %v4952 = vld [vmem:[#allocation2 + $0x30] sm:$0xff]
        %v4953 = vld [vmem:[#allocation2 + $0x38] sm:$0xff]
        %v4954 = vld [vmem:[#allocation2 + $0x40] sm:$0xff]
        %v4955 = vld [vmem:[#allocation2 + $0x48] sm:$0xff]
        %v4956 = vld [vmem:[#allocation2 + $0x50] sm:$0xff]
        %v4957 = vld [vmem:[#allocation2 + $0x58] sm:$0xff]
        %v4958 = vld [vmem:[#allocation2 + $0x60] sm:$0xff]
        %v4959 = vld [vmem:[#allocation2 + $0x68] sm:$0xf]
        %v4960 = vpack.c.bf16 %v4948, %v4947
        %v4961 = vpack.c.bf16 %v4950, %v4949
        %v4962 = vpack.c.bf16 %v4952, %v4951
        %v4963 = vpack.c.bf16 %v4954, %v4953
        %v4964 = vpack.c.bf16 %v4956, %v4955
        %v4965 = vpack.c.bf16 %v4958, %v4957
        %v4966 = vpack.c.bf16 %v4959, %v4959
        %v4967 = vld [vmem:[#allocation8] sm:$0xf]
        %v4968 = vld [vmem:[#allocation8 + $0x4] sm:$0xf]
        %v4969 = vld [vmem:[#allocation8 + $0x8] sm:$0xf]
        %v4970 = vld [vmem:[#allocation8 + $0xc] sm:$0xf]
        %v4971 = vld [vmem:[#allocation8 + $0x10] sm:$0xf]
        %v4972 = vld [vmem:[#allocation8 + $0x14] sm:$0xf]
        %v4973 = vld [vmem:[#allocation8 + $0x18] sm:$0xf]
        %v4974 = vld [vmem:[#allocation8 + $0x1c] sm:$0xf]
        %v4975 = vld [vmem:[#allocation8 + $0x20] sm:$0xf]
        %v4976 = vld [vmem:[#allocation8 + $0x24] sm:$0xf]
        %v4977 = vld [vmem:[#allocation8 + $0x28] sm:$0xf]
        %v4978 = vld [vmem:[#allocation8 + $0x2c] sm:$0xf]
        %v4979 = vld [vmem:[#allocation8 + $0x30] sm:$0xf]
        %v4980 = vld [vmem:[#allocation8 + $0x34] sm:$0xf]
        %v4981 = vld [vmem:[#allocation8 + $0x38] sm:$0xf]
        %v4982 = vld [vmem:[#allocation8 + $0x3c] sm:$0xf]
        %v4983 = vld [vmem:[#allocation2 + $0x9] sm:$0xff]
        %v4984 = vld [vmem:[#allocation2 + $0x11] sm:$0xff]
        %v4985 = vld [vmem:[#allocation2 + $0x19] sm:$0xff]
        %v4986 = vld [vmem:[#allocation2 + $0x21] sm:$0xff]
        %v4987 = vld [vmem:[#allocation2 + $0x29] sm:$0xff]
        %v4988 = vld [vmem:[#allocation2 + $0x31] sm:$0xff]
        %v4989 = vld [vmem:[#allocation2 + $0x39] sm:$0xff]
        %v4990 = vld [vmem:[#allocation2 + $0x41] sm:$0xff]
        %v4991 = vld [vmem:[#allocation2 + $0x49] sm:$0xff]
        %v4992 = vld [vmem:[#allocation2 + $0x51] sm:$0xff]
        %v4993 = vld [vmem:[#allocation2 + $0x59] sm:$0xff]
        %v4994 = vld [vmem:[#allocation2 + $0x61] sm:$0xff]
        %v4995 = vld [vmem:[#allocation2 + $0x69] sm:$0xf]
        %v4996 = vpack.c.bf16 %v4984, %v4983
        %v4997 = vpack.c.bf16 %v4986, %v4985
        %v4998 = vpack.c.bf16 %v4988, %v4987
        %v4999 = vpack.c.bf16 %v4990, %v4989
        %v5000 = vpack.c.bf16 %v4992, %v4991
        %v5001 = vpack.c.bf16 %v4994, %v4993
        %v5002 = vpack.c.bf16 %v4995, %v4995
        %s5003 = scalar_lea.vmem [#allocation8], 64
        %v5004 = vld [vmem:[%s5003] sm:$0xf]
        %v5005 = vld [vmem:[%s5003 + $0x4] sm:$0xf]
        %v5006 = vld [vmem:[%s5003 + $0x8] sm:$0xf]
        %v5007 = vld [vmem:[%s5003 + $0xc] sm:$0xf]
        %v5008 = vld [vmem:[%s5003 + $0x10] sm:$0xf]
        %v5009 = vld [vmem:[%s5003 + $0x14] sm:$0xf]
        %v5010 = vld [vmem:[%s5003 + $0x18] sm:$0xf]
        %v5011 = vld [vmem:[%s5003 + $0x1c] sm:$0xf]
        %v5012 = vld [vmem:[%s5003 + $0x20] sm:$0xf]
        %v5013 = vld [vmem:[%s5003 + $0x24] sm:$0xf]
        %v5014 = vld [vmem:[%s5003 + $0x28] sm:$0xf]
        %v5015 = vld [vmem:[%s5003 + $0x2c] sm:$0xf]
        %v5016 = vld [vmem:[%s5003 + $0x30] sm:$0xf]
        %v5017 = vld [vmem:[%s5003 + $0x34] sm:$0xf]
        %v5018 = vld [vmem:[%s5003 + $0x38] sm:$0xf]
        %v5019 = vld [vmem:[%s5003 + $0x3c] sm:$0xf]
        %v5036 = vunpack.c.l.b16 %v5004
        %v5037 = vunpack.c.l.b16 %v5005
        %v5038 = vunpack.c.l.b16 %v5006
        %v5039 = vunpack.c.l.b16 %v5007
        %v5040 = vunpack.c.l.b16 %v5008
        %v5041 = vunpack.c.l.b16 %v5009
        %v5042 = vunpack.c.l.b16 %v5010
        %v5043 = vunpack.c.l.b16 %v5011
        %v5044 = vunpack.c.l.b16 %v5012
        %v5045 = vunpack.c.l.b16 %v5013
        %v5046 = vunpack.c.l.b16 %v5014
        %v5047 = vunpack.c.l.b16 %v5015
        %v5048 = vunpack.c.l.b16 %v5016
        %v5049 = vunpack.c.l.b16 %v5017
        %v5050 = vunpack.c.l.b16 %v5018
        %v5051 = vunpack.c.l.b16 %v5019
        %v5052 = vpack.c.b16 %v5037, %v5036
        %v5053 = vpack.c.b16 %v5039, %v5038
        %v5054 = vpack.c.b16 %v5041, %v5040
        %v5055 = vpack.c.b16 %v5043, %v5042
        %v5056 = vpack.c.b16 %v5045, %v5044
        %v5057 = vpack.c.b16 %v5047, %v5046
        %v5058 = vpack.c.b16 %v5049, %v5048
        %v5059 = vpack.c.b16 %v5051, %v5050
        %5068 = vmatpush.bf16.msra.mxu0 %v5059
        %5069 = vmatpush.bf16.msra.mxu0 %v5058
        %5070 = vmatpush.bf16.msra.mxu0 %v5057
        %5071 = vmatpush.bf16.msra.mxu0 %v5056
        %5072 = vmatpush.bf16.msra.mxu0 %v5055
        %5073 = vmatpush.bf16.msra.mxu0 %v5054
        %5074 = vmatpush.bf16.msra.mxu0 %v5053
        %5075 = vmatpush.bf16.msra.mxu0 %v5052
        %5076 = vmatmul.bf16.gmra.mxu0 %v4996
        %v5077 = vpop.f32.mrf.mxu0
        %v5078 = vadd.f32 0.0, %v5077
        %v5079 = vpop.f32.mrf.mxu0
        %v5080 = vadd.f32 0.0, %v5079
        %5081 = vmatmul.bf16.gmra.mxu0 %v4997
        %v5082 = vpop.f32.mrf.mxu0
        %v5083 = vadd.f32 0.0, %v5082
        %v5084 = vpop.f32.mrf.mxu0
        %v5085 = vadd.f32 0.0, %v5084
        %5086 = vmatmul.bf16.gmra.mxu0 %v4998
        %v5087 = vpop.f32.mrf.mxu0
        %v5088 = vadd.f32 0.0, %v5087
        %v5089 = vpop.f32.mrf.mxu0
        %v5090 = vadd.f32 0.0, %v5089
        %5091 = vmatmul.bf16.gmra.mxu0 %v4999
        %v5092 = vpop.f32.mrf.mxu0
        %v5093 = vadd.f32 0.0, %v5092
        %v5094 = vpop.f32.mrf.mxu0
        %v5095 = vadd.f32 0.0, %v5094
        %5096 = vmatmul.bf16.gmra.mxu0 %v5000
        %v5097 = vpop.f32.mrf.mxu0
        %v5098 = vadd.f32 0.0, %v5097
        %v5099 = vpop.f32.mrf.mxu0
        %v5100 = vadd.f32 0.0, %v5099
        %5101 = vmatmul.bf16.gmra.mxu0 %v5001
        %v5102 = vpop.f32.mrf.mxu0
        %v5103 = vadd.f32 0.0, %v5102
        %v5104 = vpop.f32.mrf.mxu0
        %v5105 = vadd.f32 0.0, %v5104
        %5106 = vmatmul.bf16.gmra.mxu0 %v5002
        %v5107 = vpop.f32.mrf.mxu0
        %v5108 = vadd.f32 0.0, %v5107
        %v5109 = vpop.f32.mrf.mxu0
        %5110 = vdwg.mxu0
        %v5127 = vunpack.c.l.b16 %v4967
        %v5128 = vunpack.c.l.b16 %v4968
        %v5129 = vunpack.c.l.b16 %v4969
        %v5130 = vunpack.c.l.b16 %v4970
        %v5131 = vunpack.c.l.b16 %v4971
        %v5132 = vunpack.c.l.b16 %v4972
        %v5133 = vunpack.c.l.b16 %v4973
        %v5134 = vunpack.c.l.b16 %v4974
        %v5135 = vunpack.c.l.b16 %v4975
        %v5136 = vunpack.c.l.b16 %v4976
        %v5137 = vunpack.c.l.b16 %v4977
        %v5138 = vunpack.c.l.b16 %v4978
        %v5139 = vunpack.c.l.b16 %v4979
        %v5140 = vunpack.c.l.b16 %v4980
        %v5141 = vunpack.c.l.b16 %v4981
        %v5142 = vunpack.c.l.b16 %v4982
        %v5143 = vpack.c.b16 %v5128, %v5127
        %v5144 = vpack.c.b16 %v5130, %v5129
        %v5145 = vpack.c.b16 %v5132, %v5131
        %v5146 = vpack.c.b16 %v5134, %v5133
        %v5147 = vpack.c.b16 %v5136, %v5135
        %v5148 = vpack.c.b16 %v5138, %v5137
        %v5149 = vpack.c.b16 %v5140, %v5139
        %v5150 = vpack.c.b16 %v5142, %v5141
        %5159 = vmatpush.bf16.msra.mxu0 %v5150
        %5160 = vmatpush.bf16.msra.mxu0 %v5149
        %5161 = vmatpush.bf16.msra.mxu0 %v5148
        %5162 = vmatpush.bf16.msra.mxu0 %v5147
        %5163 = vmatpush.bf16.msra.mxu0 %v5146
        %5164 = vmatpush.bf16.msra.mxu0 %v5145
        %5165 = vmatpush.bf16.msra.mxu0 %v5144
        %5166 = vmatpush.bf16.msra.mxu0 %v5143
        %5167 = vmatmul.bf16.gmra.mxu0 %v4960
        %v5168 = vpop.f32.mrf.mxu0
        %v5169 = vadd.f32 %v5078, %v5168
        %v5170 = vpop.f32.mrf.mxu0
        %v5171 = vadd.f32 %v5080, %v5170
        %5172 = vmatmul.bf16.gmra.mxu0 %v4961
        %v5173 = vpop.f32.mrf.mxu0
        %v5174 = vadd.f32 %v5083, %v5173
        %v5175 = vpop.f32.mrf.mxu0
        %v5176 = vadd.f32 %v5085, %v5175
        %5177 = vmatmul.bf16.gmra.mxu0 %v4962
        %v5178 = vpop.f32.mrf.mxu0
        %v5179 = vadd.f32 %v5088, %v5178
        %v5180 = vpop.f32.mrf.mxu0
        %v5181 = vadd.f32 %v5090, %v5180
        %5182 = vmatmul.bf16.gmra.mxu0 %v4963
        %v5183 = vpop.f32.mrf.mxu0
        %v5184 = vadd.f32 %v5093, %v5183
        %v5185 = vpop.f32.mrf.mxu0
        %v5186 = vadd.f32 %v5095, %v5185
        %5187 = vmatmul.bf16.gmra.mxu0 %v4964
        %v5188 = vpop.f32.mrf.mxu0
        %v5189 = vadd.f32 %v5098, %v5188
        %v5190 = vpop.f32.mrf.mxu0
        %v5191 = vadd.f32 %v5100, %v5190
        %5192 = vmatmul.bf16.gmra.mxu0 %v4965
        %v5193 = vpop.f32.mrf.mxu0
        %v5194 = vadd.f32 %v5103, %v5193
        %v5195 = vpop.f32.mrf.mxu0
        %v5196 = vadd.f32 %v5105, %v5195
        %5197 = vmatmul.bf16.gmra.mxu0 %v4966
        %v5198 = vpop.f32.mrf.mxu0
        %v5199 = vadd.f32 %v5108, %v5198
        %v5200 = vpop.f32.mrf.mxu0
        %5201 = vdwg.mxu0
        %v5202 = vld [vmem:[#allocation2 + $0xa] sm:$0xff]
        %v5203 = vld [vmem:[#allocation2 + $0x12] sm:$0xff]
        %v5204 = vld [vmem:[#allocation2 + $0x1a] sm:$0xff]
        %v5205 = vld [vmem:[#allocation2 + $0x22] sm:$0xff]
        %v5206 = vld [vmem:[#allocation2 + $0x2a] sm:$0xff]
        %v5207 = vld [vmem:[#allocation2 + $0x32] sm:$0xff]
        %v5208 = vld [vmem:[#allocation2 + $0x3a] sm:$0xff]
        %v5209 = vld [vmem:[#allocation2 + $0x42] sm:$0xff]
        %v5210 = vld [vmem:[#allocation2 + $0x4a] sm:$0xff]
        %v5211 = vld [vmem:[#allocation2 + $0x52] sm:$0xff]
        %v5212 = vld [vmem:[#allocation2 + $0x5a] sm:$0xff]
        %v5213 = vld [vmem:[#allocation2 + $0x62] sm:$0xff]
        %v5214 = vld [vmem:[#allocation2 + $0x6a] sm:$0xf]
        %v5215 = vpack.c.bf16 %v5203, %v5202
        %v5216 = vpack.c.bf16 %v5205, %v5204
        %v5217 = vpack.c.bf16 %v5207, %v5206
        %v5218 = vpack.c.bf16 %v5209, %v5208
        %v5219 = vpack.c.bf16 %v5211, %v5210
        %v5220 = vpack.c.bf16 %v5213, %v5212
        %v5221 = vpack.c.bf16 %v5214, %v5214
        %s5222 = scalar_lea.vmem [#allocation8], 128
        %v5223 = vld [vmem:[%s5222] sm:$0xf]
        %v5224 = vld [vmem:[%s5222 + $0x4] sm:$0xf]
        %v5225 = vld [vmem:[%s5222 + $0x8] sm:$0xf]
        %v5226 = vld [vmem:[%s5222 + $0xc] sm:$0xf]
        %v5227 = vld [vmem:[%s5222 + $0x10] sm:$0xf]
        %v5228 = vld [vmem:[%s5222 + $0x14] sm:$0xf]
        %v5229 = vld [vmem:[%s5222 + $0x18] sm:$0xf]
        %v5230 = vld [vmem:[%s5222 + $0x1c] sm:$0xf]
        %v5231 = vld [vmem:[%s5222 + $0x20] sm:$0xf]
        %v5232 = vld [vmem:[%s5222 + $0x24] sm:$0xf]
        %v5233 = vld [vmem:[%s5222 + $0x28] sm:$0xf]
        %v5234 = vld [vmem:[%s5222 + $0x2c] sm:$0xf]
        %v5235 = vld [vmem:[%s5222 + $0x30] sm:$0xf]
        %v5236 = vld [vmem:[%s5222 + $0x34] sm:$0xf]
        %v5237 = vld [vmem:[%s5222 + $0x38] sm:$0xf]
        %v5238 = vld [vmem:[%s5222 + $0x3c] sm:$0xf]
        %v5255 = vunpack.c.l.b16 %v5223
        %v5256 = vunpack.c.l.b16 %v5224
        %v5257 = vunpack.c.l.b16 %v5225
        %v5258 = vunpack.c.l.b16 %v5226
        %v5259 = vunpack.c.l.b16 %v5227
        %v5260 = vunpack.c.l.b16 %v5228
        %v5261 = vunpack.c.l.b16 %v5229
        %v5262 = vunpack.c.l.b16 %v5230
        %v5263 = vunpack.c.l.b16 %v5231
        %v5264 = vunpack.c.l.b16 %v5232
        %v5265 = vunpack.c.l.b16 %v5233
        %v5266 = vunpack.c.l.b16 %v5234
        %v5267 = vunpack.c.l.b16 %v5235
        %v5268 = vunpack.c.l.b16 %v5236
        %v5269 = vunpack.c.l.b16 %v5237
        %v5270 = vunpack.c.l.b16 %v5238
        %v5271 = vpack.c.b16 %v5256, %v5255
        %v5272 = vpack.c.b16 %v5258, %v5257
        %v5273 = vpack.c.b16 %v5260, %v5259
        %v5274 = vpack.c.b16 %v5262, %v5261
        %v5275 = vpack.c.b16 %v5264, %v5263
        %v5276 = vpack.c.b16 %v5266, %v5265
        %v5277 = vpack.c.b16 %v5268, %v5267
        %v5278 = vpack.c.b16 %v5270, %v5269
        %5287 = vmatpush.bf16.msra.mxu0 %v5278
        %5288 = vmatpush.bf16.msra.mxu0 %v5277
        %5289 = vmatpush.bf16.msra.mxu0 %v5276
        %5290 = vmatpush.bf16.msra.mxu0 %v5275
        %5291 = vmatpush.bf16.msra.mxu0 %v5274
        %5292 = vmatpush.bf16.msra.mxu0 %v5273
        %5293 = vmatpush.bf16.msra.mxu0 %v5272
        %5294 = vmatpush.bf16.msra.mxu0 %v5271
        %5295 = vmatmul.bf16.gmra.mxu0 %v5215
        %v5296 = vpop.f32.mrf.mxu0
        %v5297 = vadd.f32 0.0, %v5296
        %v5298 = vpop.f32.mrf.mxu0
        %v5299 = vadd.f32 0.0, %v5298
        %5300 = vmatmul.bf16.gmra.mxu0 %v5216
        %v5301 = vpop.f32.mrf.mxu0
        %v5302 = vadd.f32 0.0, %v5301
        %v5303 = vpop.f32.mrf.mxu0
        %v5304 = vadd.f32 0.0, %v5303
        %5305 = vmatmul.bf16.gmra.mxu0 %v5217
        %v5306 = vpop.f32.mrf.mxu0
        %v5307 = vadd.f32 0.0, %v5306
        %v5308 = vpop.f32.mrf.mxu0
        %v5309 = vadd.f32 0.0, %v5308
        %5310 = vmatmul.bf16.gmra.mxu0 %v5218
        %v5311 = vpop.f32.mrf.mxu0
        %v5312 = vadd.f32 0.0, %v5311
        %v5313 = vpop.f32.mrf.mxu0
        %v5314 = vadd.f32 0.0, %v5313
        %5315 = vmatmul.bf16.gmra.mxu0 %v5219
        %v5316 = vpop.f32.mrf.mxu0
        %v5317 = vadd.f32 0.0, %v5316
        %v5318 = vpop.f32.mrf.mxu0
        %v5319 = vadd.f32 0.0, %v5318
        %5320 = vmatmul.bf16.gmra.mxu0 %v5220
        %v5321 = vpop.f32.mrf.mxu0
        %v5322 = vadd.f32 0.0, %v5321
        %v5323 = vpop.f32.mrf.mxu0
        %v5324 = vadd.f32 0.0, %v5323
        %5325 = vmatmul.bf16.gmra.mxu0 %v5221
        %v5326 = vpop.f32.mrf.mxu0
        %v5327 = vadd.f32 0.0, %v5326
        %v5328 = vpop.f32.mrf.mxu0
        %5329 = vdwg.mxu0
        %v5330 = vadd.f32 %v5169, %v5297
        %v5331 = vadd.f32 %v5171, %v5299
        %v5332 = vadd.f32 %v5174, %v5302
        %v5333 = vadd.f32 %v5176, %v5304
        %v5334 = vadd.f32 %v5179, %v5307
        %v5335 = vadd.f32 %v5181, %v5309
        %v5336 = vadd.f32 %v5184, %v5312
        %v5337 = vadd.f32 %v5186, %v5314
        %v5338 = vadd.f32 %v5189, %v5317
        %v5339 = vadd.f32 %v5191, %v5319
        %v5340 = vadd.f32 %v5194, %v5322
        %v5341 = vadd.f32 %v5196, %v5324
        %v5342 = vadd.f32 %v5199, %v5327
        %v5343 = vld [vmem:[#allocation2 + $0x12] sm:$0xff]
        %v5344 = vld [vmem:[#allocation2 + $0x1a] sm:$0xff]
        %v5345 = vld [vmem:[#allocation2 + $0x22] sm:$0xff]
        %v5346 = vld [vmem:[#allocation2 + $0x2a] sm:$0xff]
        %v5347 = vld [vmem:[#allocation2 + $0x32] sm:$0xff]
        %v5348 = vld [vmem:[#allocation2 + $0x3a] sm:$0xff]
        %v5349 = vld [vmem:[#allocation2 + $0x42] sm:$0xff]
        %v5350 = vld [vmem:[#allocation2 + $0x4a] sm:$0xff]
        %v5351 = vld [vmem:[#allocation2 + $0x52] sm:$0xff]
        %v5352 = vld [vmem:[#allocation2 + $0x5a] sm:$0xff]
        %v5353 = vld [vmem:[#allocation2 + $0x62] sm:$0xff]
        %v5354 = vld [vmem:[#allocation2 + $0x6a] sm:$0xff]
        %v5355 = vld [vmem:[#allocation2 + $0x72] sm:$0xf]
        %v5356 = vpack.c.bf16 %v5344, %v5343
        %v5357 = vpack.c.bf16 %v5346, %v5345
        %v5358 = vpack.c.bf16 %v5348, %v5347
        %v5359 = vpack.c.bf16 %v5350, %v5349
        %v5360 = vpack.c.bf16 %v5352, %v5351
        %v5361 = vpack.c.bf16 %v5354, %v5353
        %v5362 = vpack.c.bf16 %v5355, %v5355
        %s5363 = scalar_lea.vmem [#allocation8], 192
        %v5364 = vld [vmem:[%s5363] sm:$0xf]
        %v5365 = vld [vmem:[%s5363 + $0x4] sm:$0xf]
        %v5366 = vld [vmem:[%s5363 + $0x8] sm:$0xf]
        %v5367 = vld [vmem:[%s5363 + $0xc] sm:$0xf]
        %v5368 = vld [vmem:[%s5363 + $0x10] sm:$0xf]
        %v5369 = vld [vmem:[%s5363 + $0x14] sm:$0xf]
        %v5370 = vld [vmem:[%s5363 + $0x18] sm:$0xf]
        %v5371 = vld [vmem:[%s5363 + $0x1c] sm:$0xf]
        %v5372 = vld [vmem:[%s5363 + $0x20] sm:$0xf]
        %v5373 = vld [vmem:[%s5363 + $0x24] sm:$0xf]
        %v5374 = vld [vmem:[%s5363 + $0x28] sm:$0xf]
        %v5375 = vld [vmem:[%s5363 + $0x2c] sm:$0xf]
        %v5376 = vld [vmem:[%s5363 + $0x30] sm:$0xf]
        %v5377 = vld [vmem:[%s5363 + $0x34] sm:$0xf]
        %v5378 = vld [vmem:[%s5363 + $0x38] sm:$0xf]
        %v5379 = vld [vmem:[%s5363 + $0x3c] sm:$0xf]
        %v5396 = vunpack.c.l.b16 %v5364
        %v5397 = vunpack.c.l.b16 %v5365
        %v5398 = vunpack.c.l.b16 %v5366
        %v5399 = vunpack.c.l.b16 %v5367
        %v5400 = vunpack.c.l.b16 %v5368
        %v5401 = vunpack.c.l.b16 %v5369
        %v5402 = vunpack.c.l.b16 %v5370
        %v5403 = vunpack.c.l.b16 %v5371
        %v5404 = vunpack.c.l.b16 %v5372
        %v5405 = vunpack.c.l.b16 %v5373
        %v5406 = vunpack.c.l.b16 %v5374
        %v5407 = vunpack.c.l.b16 %v5375
        %v5408 = vunpack.c.l.b16 %v5376
        %v5409 = vunpack.c.l.b16 %v5377
        %v5410 = vunpack.c.l.b16 %v5378
        %v5411 = vunpack.c.l.b16 %v5379
        %v5412 = vpack.c.b16 %v5397, %v5396
        %v5413 = vpack.c.b16 %v5399, %v5398
        %v5414 = vpack.c.b16 %v5401, %v5400
        %v5415 = vpack.c.b16 %v5403, %v5402
        %v5416 = vpack.c.b16 %v5405, %v5404
        %v5417 = vpack.c.b16 %v5407, %v5406
        %v5418 = vpack.c.b16 %v5409, %v5408
        %v5419 = vpack.c.b16 %v5411, %v5410
        %5428 = vmatpush.bf16.msra.mxu0 %v5419
        %5429 = vmatpush.bf16.msra.mxu0 %v5418
        %5430 = vmatpush.bf16.msra.mxu0 %v5417
        %5431 = vmatpush.bf16.msra.mxu0 %v5416
        %5432 = vmatpush.bf16.msra.mxu0 %v5415
        %5433 = vmatpush.bf16.msra.mxu0 %v5414
        %5434 = vmatpush.bf16.msra.mxu0 %v5413
        %5435 = vmatpush.bf16.msra.mxu0 %v5412
        %5436 = vmatmul.bf16.gmra.mxu0 %v5356
        %v5437 = vpop.f32.mrf.mxu0
        %v5438 = vadd.f32 0.0, %v5437
        %v5439 = vpop.f32.mrf.mxu0
        %v5440 = vadd.f32 0.0, %v5439
        %5441 = vmatmul.bf16.gmra.mxu0 %v5357
        %v5442 = vpop.f32.mrf.mxu0
        %v5443 = vadd.f32 0.0, %v5442
        %v5444 = vpop.f32.mrf.mxu0
        %v5445 = vadd.f32 0.0, %v5444
        %5446 = vmatmul.bf16.gmra.mxu0 %v5358
        %v5447 = vpop.f32.mrf.mxu0
        %v5448 = vadd.f32 0.0, %v5447
        %v5449 = vpop.f32.mrf.mxu0
        %v5450 = vadd.f32 0.0, %v5449
        %5451 = vmatmul.bf16.gmra.mxu0 %v5359
        %v5452 = vpop.f32.mrf.mxu0
        %v5453 = vadd.f32 0.0, %v5452
        %v5454 = vpop.f32.mrf.mxu0
        %v5455 = vadd.f32 0.0, %v5454
        %5456 = vmatmul.bf16.gmra.mxu0 %v5360
        %v5457 = vpop.f32.mrf.mxu0
        %v5458 = vadd.f32 0.0, %v5457
        %v5459 = vpop.f32.mrf.mxu0
        %v5460 = vadd.f32 0.0, %v5459
        %5461 = vmatmul.bf16.gmra.mxu0 %v5361
        %v5462 = vpop.f32.mrf.mxu0
        %v5463 = vadd.f32 0.0, %v5462
        %v5464 = vpop.f32.mrf.mxu0
        %v5465 = vadd.f32 0.0, %v5464
        %5466 = vmatmul.bf16.gmra.mxu0 %v5362
        %v5467 = vpop.f32.mrf.mxu0
        %v5468 = vadd.f32 0.0, %v5467
        %v5469 = vpop.f32.mrf.mxu0
        %5470 = vdwg.mxu0
        %v5471 = vadd.f32 %v5330, %v5438
        %v5472 = vadd.f32 %v5331, %v5440
        %v5473 = vadd.f32 %v5332, %v5443
        %v5474 = vadd.f32 %v5333, %v5445
        %v5475 = vadd.f32 %v5334, %v5448
        %v5476 = vadd.f32 %v5335, %v5450
        %v5477 = vadd.f32 %v5336, %v5453
        %v5478 = vadd.f32 %v5337, %v5455
        %v5479 = vadd.f32 %v5338, %v5458
        %v5480 = vadd.f32 %v5339, %v5460
        %v5481 = vadd.f32 %v5340, %v5463
        %v5482 = vadd.f32 %v5341, %v5465
        %v5483 = vadd.f32 %v5342, %v5468
        %v5484 = vld [vmem:[#allocation2 + $0x13] sm:$0xff]
        %v5485 = vld [vmem:[#allocation2 + $0x1b] sm:$0xff]
        %v5486 = vld [vmem:[#allocation2 + $0x23] sm:$0xff]
        %v5487 = vld [vmem:[#allocation2 + $0x2b] sm:$0xff]
        %v5488 = vld [vmem:[#allocation2 + $0x33] sm:$0xff]
        %v5489 = vld [vmem:[#allocation2 + $0x3b] sm:$0xff]
        %v5490 = vld [vmem:[#allocation2 + $0x43] sm:$0xff]
        %v5491 = vld [vmem:[#allocation2 + $0x4b] sm:$0xff]
        %v5492 = vld [vmem:[#allocation2 + $0x53] sm:$0xff]
        %v5493 = vld [vmem:[#allocation2 + $0x5b] sm:$0xff]
        %v5494 = vld [vmem:[#allocation2 + $0x63] sm:$0xff]
        %v5495 = vld [vmem:[#allocation2 + $0x6b] sm:$0xff]
        %v5496 = vld [vmem:[#allocation2 + $0x73] sm:$0xf]
        %v5497 = vpack.c.bf16 %v5485, %v5484
        %v5498 = vpack.c.bf16 %v5487, %v5486
        %v5499 = vpack.c.bf16 %v5489, %v5488
        %v5500 = vpack.c.bf16 %v5491, %v5490
        %v5501 = vpack.c.bf16 %v5493, %v5492
        %v5502 = vpack.c.bf16 %v5495, %v5494
        %v5503 = vpack.c.bf16 %v5496, %v5496
        %s5504 = scalar_lea.vmem [#allocation8], 256
        %v5505 = vld [vmem:[%s5504] sm:$0xf]
        %v5506 = vld [vmem:[%s5504 + $0x4] sm:$0xf]
        %v5507 = vld [vmem:[%s5504 + $0x8] sm:$0xf]
        %v5508 = vld [vmem:[%s5504 + $0xc] sm:$0xf]
        %v5509 = vld [vmem:[%s5504 + $0x10] sm:$0xf]
        %v5510 = vld [vmem:[%s5504 + $0x14] sm:$0xf]
        %v5511 = vld [vmem:[%s5504 + $0x18] sm:$0xf]
        %v5512 = vld [vmem:[%s5504 + $0x1c] sm:$0xf]
        %v5513 = vld [vmem:[%s5504 + $0x20] sm:$0xf]
        %v5514 = vld [vmem:[%s5504 + $0x24] sm:$0xf]
        %v5515 = vld [vmem:[%s5504 + $0x28] sm:$0xf]
        %v5516 = vld [vmem:[%s5504 + $0x2c] sm:$0xf]
        %v5517 = vld [vmem:[%s5504 + $0x30] sm:$0xf]
        %v5518 = vld [vmem:[%s5504 + $0x34] sm:$0xf]
        %v5519 = vld [vmem:[%s5504 + $0x38] sm:$0xf]
        %v5520 = vld [vmem:[%s5504 + $0x3c] sm:$0xf]
        %v5537 = vunpack.c.l.b16 %v5505
        %v5538 = vunpack.c.l.b16 %v5506
        %v5539 = vunpack.c.l.b16 %v5507
        %v5540 = vunpack.c.l.b16 %v5508
        %v5541 = vunpack.c.l.b16 %v5509
        %v5542 = vunpack.c.l.b16 %v5510
        %v5543 = vunpack.c.l.b16 %v5511
        %v5544 = vunpack.c.l.b16 %v5512
        %v5545 = vunpack.c.l.b16 %v5513
        %v5546 = vunpack.c.l.b16 %v5514
        %v5547 = vunpack.c.l.b16 %v5515
        %v5548 = vunpack.c.l.b16 %v5516
        %v5549 = vunpack.c.l.b16 %v5517
        %v5550 = vunpack.c.l.b16 %v5518
        %v5551 = vunpack.c.l.b16 %v5519
        %v5552 = vunpack.c.l.b16 %v5520
        %v5553 = vpack.c.b16 %v5538, %v5537
        %v5554 = vpack.c.b16 %v5540, %v5539
        %v5555 = vpack.c.b16 %v5542, %v5541
        %v5556 = vpack.c.b16 %v5544, %v5543
        %v5557 = vpack.c.b16 %v5546, %v5545
        %v5558 = vpack.c.b16 %v5548, %v5547
        %v5559 = vpack.c.b16 %v5550, %v5549
        %v5560 = vpack.c.b16 %v5552, %v5551
        %5569 = vmatpush.bf16.msra.mxu0 %v5560
        %5570 = vmatpush.bf16.msra.mxu0 %v5559
        %5571 = vmatpush.bf16.msra.mxu0 %v5558
        %5572 = vmatpush.bf16.msra.mxu0 %v5557
        %5573 = vmatpush.bf16.msra.mxu0 %v5556
        %5574 = vmatpush.bf16.msra.mxu0 %v5555
        %5575 = vmatpush.bf16.msra.mxu0 %v5554
        %5576 = vmatpush.bf16.msra.mxu0 %v5553
        %5577 = vmatmul.bf16.gmra.mxu0 %v5497
        %v5578 = vpop.f32.mrf.mxu0
        %v5579 = vadd.f32 0.0, %v5578
        %v5580 = vpop.f32.mrf.mxu0
        %v5581 = vadd.f32 0.0, %v5580
        %5582 = vmatmul.bf16.gmra.mxu0 %v5498
        %v5583 = vpop.f32.mrf.mxu0
        %v5584 = vadd.f32 0.0, %v5583
        %v5585 = vpop.f32.mrf.mxu0
        %v5586 = vadd.f32 0.0, %v5585
        %5587 = vmatmul.bf16.gmra.mxu0 %v5499
        %v5588 = vpop.f32.mrf.mxu0
        %v5589 = vadd.f32 0.0, %v5588
        %v5590 = vpop.f32.mrf.mxu0
        %v5591 = vadd.f32 0.0, %v5590
        %5592 = vmatmul.bf16.gmra.mxu0 %v5500
        %v5593 = vpop.f32.mrf.mxu0
        %v5594 = vadd.f32 0.0, %v5593
        %v5595 = vpop.f32.mrf.mxu0
        %v5596 = vadd.f32 0.0, %v5595
        %5597 = vmatmul.bf16.gmra.mxu0 %v5501
        %v5598 = vpop.f32.mrf.mxu0
        %v5599 = vadd.f32 0.0, %v5598
        %v5600 = vpop.f32.mrf.mxu0
        %v5601 = vadd.f32 0.0, %v5600
        %5602 = vmatmul.bf16.gmra.mxu0 %v5502
        %v5603 = vpop.f32.mrf.mxu0
        %v5604 = vadd.f32 0.0, %v5603
        %v5605 = vpop.f32.mrf.mxu0
        %v5606 = vadd.f32 0.0, %v5605
        %5607 = vmatmul.bf16.gmra.mxu0 %v5503
        %v5608 = vpop.f32.mrf.mxu0
        %v5609 = vadd.f32 0.0, %v5608
        %v5610 = vpop.f32.mrf.mxu0
        %5611 = vdwg.mxu0
        %v5612 = vadd.f32 %v5471, %v5579
        %v5613 = vadd.f32 %v5472, %v5581
        %v5614 = vadd.f32 %v5473, %v5584
        %v5615 = vadd.f32 %v5474, %v5586
        %v5616 = vadd.f32 %v5475, %v5589
        %v5617 = vadd.f32 %v5476, %v5591
        %v5618 = vadd.f32 %v5477, %v5594
        %v5619 = vadd.f32 %v5478, %v5596
        %v5620 = vadd.f32 %v5479, %v5599
        %v5621 = vadd.f32 %v5480, %v5601
        %v5622 = vadd.f32 %v5481, %v5604
        %v5623 = vadd.f32 %v5482, %v5606
        %v5624 = vadd.f32 %v5483, %v5609
        %v5625 = vld [vmem:[#allocation2 + $0x14] sm:$0xff]
        %v5626 = vld [vmem:[#allocation2 + $0x1c] sm:$0xff]
        %v5627 = vld [vmem:[#allocation2 + $0x24] sm:$0xff]
        %v5628 = vld [vmem:[#allocation2 + $0x2c] sm:$0xff]
        %v5629 = vld [vmem:[#allocation2 + $0x34] sm:$0xff]
        %v5630 = vld [vmem:[#allocation2 + $0x3c] sm:$0xff]
        %v5631 = vld [vmem:[#allocation2 + $0x44] sm:$0xff]
        %v5632 = vld [vmem:[#allocation2 + $0x4c] sm:$0xff]
        %v5633 = vld [vmem:[#allocation2 + $0x54] sm:$0xff]
        %v5634 = vld [vmem:[#allocation2 + $0x5c] sm:$0xff]
        %v5635 = vld [vmem:[#allocation2 + $0x64] sm:$0xff]
        %v5636 = vld [vmem:[#allocation2 + $0x6c] sm:$0xff]
        %v5637 = vld [vmem:[#allocation2 + $0x74] sm:$0xf]
        %v5638 = vpack.c.bf16 %v5626, %v5625
        %v5639 = vpack.c.bf16 %v5628, %v5627
        %v5640 = vpack.c.bf16 %v5630, %v5629
        %v5641 = vpack.c.bf16 %v5632, %v5631
        %v5642 = vpack.c.bf16 %v5634, %v5633
        %v5643 = vpack.c.bf16 %v5636, %v5635
        %v5644 = vpack.c.bf16 %v5637, %v5637
        %s5645 = scalar_lea.vmem [#allocation8], 320
        %v5646 = vld [vmem:[%s5645] sm:$0xf]
        %v5647 = vld [vmem:[%s5645 + $0x4] sm:$0xf]
        %v5648 = vld [vmem:[%s5645 + $0x8] sm:$0xf]
        %v5649 = vld [vmem:[%s5645 + $0xc] sm:$0xf]
        %v5650 = vld [vmem:[%s5645 + $0x10] sm:$0xf]
        %v5651 = vld [vmem:[%s5645 + $0x14] sm:$0xf]
        %v5652 = vld [vmem:[%s5645 + $0x18] sm:$0xf]
        %v5653 = vld [vmem:[%s5645 + $0x1c] sm:$0xf]
        %v5654 = vld [vmem:[%s5645 + $0x20] sm:$0xf]
        %v5655 = vld [vmem:[%s5645 + $0x24] sm:$0xf]
        %v5656 = vld [vmem:[%s5645 + $0x28] sm:$0xf]
        %v5657 = vld [vmem:[%s5645 + $0x2c] sm:$0xf]
        %v5658 = vld [vmem:[%s5645 + $0x30] sm:$0xf]
        %v5659 = vld [vmem:[%s5645 + $0x34] sm:$0xf]
        %v5660 = vld [vmem:[%s5645 + $0x38] sm:$0xf]
        %v5661 = vld [vmem:[%s5645 + $0x3c] sm:$0xf]
        %v5678 = vunpack.c.l.b16 %v5646
        %v5679 = vunpack.c.l.b16 %v5647
        %v5680 = vunpack.c.l.b16 %v5648
        %v5681 = vunpack.c.l.b16 %v5649
        %v5682 = vunpack.c.l.b16 %v5650
        %v5683 = vunpack.c.l.b16 %v5651
        %v5684 = vunpack.c.l.b16 %v5652
        %v5685 = vunpack.c.l.b16 %v5653
        %v5686 = vunpack.c.l.b16 %v5654
        %v5687 = vunpack.c.l.b16 %v5655
        %v5688 = vunpack.c.l.b16 %v5656
        %v5689 = vunpack.c.l.b16 %v5657
        %v5690 = vunpack.c.l.b16 %v5658
        %v5691 = vunpack.c.l.b16 %v5659
        %v5692 = vunpack.c.l.b16 %v5660
        %v5693 = vunpack.c.l.b16 %v5661
        %v5694 = vpack.c.b16 %v5679, %v5678
        %v5695 = vpack.c.b16 %v5681, %v5680
        %v5696 = vpack.c.b16 %v5683, %v5682
        %v5697 = vpack.c.b16 %v5685, %v5684
        %v5698 = vpack.c.b16 %v5687, %v5686
        %v5699 = vpack.c.b16 %v5689, %v5688
        %v5700 = vpack.c.b16 %v5691, %v5690
        %v5701 = vpack.c.b16 %v5693, %v5692
        %5710 = vmatpush.bf16.msra.mxu0 %v5701
        %5711 = vmatpush.bf16.msra.mxu0 %v5700
        %5712 = vmatpush.bf16.msra.mxu0 %v5699
        %5713 = vmatpush.bf16.msra.mxu0 %v5698
        %5714 = vmatpush.bf16.msra.mxu0 %v5697
        %5715 = vmatpush.bf16.msra.mxu0 %v5696
        %5716 = vmatpush.bf16.msra.mxu0 %v5695
        %5717 = vmatpush.bf16.msra.mxu0 %v5694
        %5718 = vmatmul.bf16.gmra.mxu0 %v5638
        %v5719 = vpop.f32.mrf.mxu0
        %v5720 = vadd.f32 0.0, %v5719
        %v5721 = vpop.f32.mrf.mxu0
        %v5722 = vadd.f32 0.0, %v5721
        %5723 = vmatmul.bf16.gmra.mxu0 %v5639
        %v5724 = vpop.f32.mrf.mxu0
        %v5725 = vadd.f32 0.0, %v5724
        %v5726 = vpop.f32.mrf.mxu0
        %v5727 = vadd.f32 0.0, %v5726
        %5728 = vmatmul.bf16.gmra.mxu0 %v5640
        %v5729 = vpop.f32.mrf.mxu0
        %v5730 = vadd.f32 0.0, %v5729
        %v5731 = vpop.f32.mrf.mxu0
        %v5732 = vadd.f32 0.0, %v5731
        %5733 = vmatmul.bf16.gmra.mxu0 %v5641
        %v5734 = vpop.f32.mrf.mxu0
        %v5735 = vadd.f32 0.0, %v5734
        %v5736 = vpop.f32.mrf.mxu0
        %v5737 = vadd.f32 0.0, %v5736
        %5738 = vmatmul.bf16.gmra.mxu0 %v5642
        %v5739 = vpop.f32.mrf.mxu0
        %v5740 = vadd.f32 0.0, %v5739
        %v5741 = vpop.f32.mrf.mxu0
        %v5742 = vadd.f32 0.0, %v5741
        %5743 = vmatmul.bf16.gmra.mxu0 %v5643
        %v5744 = vpop.f32.mrf.mxu0
        %v5745 = vadd.f32 0.0, %v5744
        %v5746 = vpop.f32.mrf.mxu0
        %v5747 = vadd.f32 0.0, %v5746
        %5748 = vmatmul.bf16.gmra.mxu0 %v5644
        %v5749 = vpop.f32.mrf.mxu0
        %v5750 = vadd.f32 0.0, %v5749
        %v5751 = vpop.f32.mrf.mxu0
        %5752 = vdwg.mxu0
        %v5753 = vadd.f32 %v5612, %v5720
        %v5754 = vadd.f32 %v5613, %v5722
        %v5755 = vadd.f32 %v5614, %v5725
        %v5756 = vadd.f32 %v5615, %v5727
        %v5757 = vadd.f32 %v5616, %v5730
        %v5758 = vadd.f32 %v5617, %v5732
        %v5759 = vadd.f32 %v5618, %v5735
        %v5760 = vadd.f32 %v5619, %v5737
        %v5761 = vadd.f32 %v5620, %v5740
        %v5762 = vadd.f32 %v5621, %v5742
        %v5763 = vadd.f32 %v5622, %v5745
        %v5764 = vadd.f32 %v5623, %v5747
        %v5765 = vadd.f32 %v5624, %v5750
        %v5766 = vld [vmem:[#allocation2 + $0x1c] sm:$0xff]
        %v5767 = vld [vmem:[#allocation2 + $0x24] sm:$0xff]
        %v5768 = vld [vmem:[#allocation2 + $0x2c] sm:$0xff]
        %v5769 = vld [vmem:[#allocation2 + $0x34] sm:$0xff]
        %v5770 = vld [vmem:[#allocation2 + $0x3c] sm:$0xff]
        %v5771 = vld [vmem:[#allocation2 + $0x44] sm:$0xff]
        %v5772 = vld [vmem:[#allocation2 + $0x4c] sm:$0xff]
        %v5773 = vld [vmem:[#allocation2 + $0x54] sm:$0xff]
        %v5774 = vld [vmem:[#allocation2 + $0x5c] sm:$0xff]
        %v5775 = vld [vmem:[#allocation2 + $0x64] sm:$0xff]
        %v5776 = vld [vmem:[#allocation2 + $0x6c] sm:$0xff]
        %v5777 = vld [vmem:[#allocation2 + $0x74] sm:$0xff]
        %v5778 = vld [vmem:[#allocation2 + $0x7c] sm:$0xf]
        %v5779 = vpack.c.bf16 %v5767, %v5766
        %v5780 = vpack.c.bf16 %v5769, %v5768
        %v5781 = vpack.c.bf16 %v5771, %v5770
        %v5782 = vpack.c.bf16 %v5773, %v5772
        %v5783 = vpack.c.bf16 %v5775, %v5774
        %v5784 = vpack.c.bf16 %v5777, %v5776
        %v5785 = vpack.c.bf16 %v5778, %v5778
        %s5786 = scalar_lea.vmem [#allocation8], 384
        %v5787 = vld [vmem:[%s5786] sm:$0xf]
        %v5788 = vld [vmem:[%s5786 + $0x4] sm:$0xf]
        %v5789 = vld [vmem:[%s5786 + $0x8] sm:$0xf]
        %v5790 = vld [vmem:[%s5786 + $0xc] sm:$0xf]
        %v5791 = vld [vmem:[%s5786 + $0x10] sm:$0xf]
        %v5792 = vld [vmem:[%s5786 + $0x14] sm:$0xf]
        %v5793 = vld [vmem:[%s5786 + $0x18] sm:$0xf]
        %v5794 = vld [vmem:[%s5786 + $0x1c] sm:$0xf]
        %v5795 = vld [vmem:[%s5786 + $0x20] sm:$0xf]
        %v5796 = vld [vmem:[%s5786 + $0x24] sm:$0xf]
        %v5797 = vld [vmem:[%s5786 + $0x28] sm:$0xf]
        %v5798 = vld [vmem:[%s5786 + $0x2c] sm:$0xf]
        %v5799 = vld [vmem:[%s5786 + $0x30] sm:$0xf]
        %v5800 = vld [vmem:[%s5786 + $0x34] sm:$0xf]
        %v5801 = vld [vmem:[%s5786 + $0x38] sm:$0xf]
        %v5802 = vld [vmem:[%s5786 + $0x3c] sm:$0xf]
        %v5819 = vunpack.c.l.b16 %v5787
        %v5820 = vunpack.c.l.b16 %v5788
        %v5821 = vunpack.c.l.b16 %v5789
        %v5822 = vunpack.c.l.b16 %v5790
        %v5823 = vunpack.c.l.b16 %v5791
        %v5824 = vunpack.c.l.b16 %v5792
        %v5825 = vunpack.c.l.b16 %v5793
        %v5826 = vunpack.c.l.b16 %v5794
        %v5827 = vunpack.c.l.b16 %v5795
        %v5828 = vunpack.c.l.b16 %v5796
        %v5829 = vunpack.c.l.b16 %v5797
        %v5830 = vunpack.c.l.b16 %v5798
        %v5831 = vunpack.c.l.b16 %v5799
        %v5832 = vunpack.c.l.b16 %v5800
        %v5833 = vunpack.c.l.b16 %v5801
        %v5834 = vunpack.c.l.b16 %v5802
        %v5835 = vpack.c.b16 %v5820, %v5819
        %v5836 = vpack.c.b16 %v5822, %v5821
        %v5837 = vpack.c.b16 %v5824, %v5823
        %v5838 = vpack.c.b16 %v5826, %v5825
        %v5839 = vpack.c.b16 %v5828, %v5827
        %v5840 = vpack.c.b16 %v5830, %v5829
        %v5841 = vpack.c.b16 %v5832, %v5831
        %v5842 = vpack.c.b16 %v5834, %v5833
        %5851 = vmatpush.bf16.msra.mxu0 %v5842
        %5852 = vmatpush.bf16.msra.mxu0 %v5841
        %5853 = vmatpush.bf16.msra.mxu0 %v5840
        %5854 = vmatpush.bf16.msra.mxu0 %v5839
        %5855 = vmatpush.bf16.msra.mxu0 %v5838
        %5856 = vmatpush.bf16.msra.mxu0 %v5837
        %5857 = vmatpush.bf16.msra.mxu0 %v5836
        %5858 = vmatpush.bf16.msra.mxu0 %v5835
        %5859 = vmatmul.bf16.gmra.mxu0 %v5779
        %v5860 = vpop.f32.mrf.mxu0
        %v5861 = vadd.f32 0.0, %v5860
        %v5862 = vpop.f32.mrf.mxu0
        %v5863 = vadd.f32 0.0, %v5862
        %5864 = vmatmul.bf16.gmra.mxu0 %v5780
        %v5865 = vpop.f32.mrf.mxu0
        %v5866 = vadd.f32 0.0, %v5865
        %v5867 = vpop.f32.mrf.mxu0
        %v5868 = vadd.f32 0.0, %v5867
        %5869 = vmatmul.bf16.gmra.mxu0 %v5781
        %v5870 = vpop.f32.mrf.mxu0
        %v5871 = vadd.f32 0.0, %v5870
        %v5872 = vpop.f32.mrf.mxu0
        %v5873 = vadd.f32 0.0, %v5872
        %5874 = vmatmul.bf16.gmra.mxu0 %v5782
        %v5875 = vpop.f32.mrf.mxu0
        %v5876 = vadd.f32 0.0, %v5875
        %v5877 = vpop.f32.mrf.mxu0
        %v5878 = vadd.f32 0.0, %v5877
        %5879 = vmatmul.bf16.gmra.mxu0 %v5783
        %v5880 = vpop.f32.mrf.mxu0
        %v5881 = vadd.f32 0.0, %v5880
        %v5882 = vpop.f32.mrf.mxu0
        %v5883 = vadd.f32 0.0, %v5882
        %5884 = vmatmul.bf16.gmra.mxu0 %v5784
        %v5885 = vpop.f32.mrf.mxu0
        %v5886 = vadd.f32 0.0, %v5885
        %v5887 = vpop.f32.mrf.mxu0
        %v5888 = vadd.f32 0.0, %v5887
        %5889 = vmatmul.bf16.gmra.mxu0 %v5785
        %v5890 = vpop.f32.mrf.mxu0
        %v5891 = vadd.f32 0.0, %v5890
        %v5892 = vpop.f32.mrf.mxu0
        %5893 = vdwg.mxu0
        %v5894 = vadd.f32 %v5753, %v5861
        %v5895 = vadd.f32 %v5754, %v5863
        %v5896 = vadd.f32 %v5755, %v5866
        %v5897 = vadd.f32 %v5756, %v5868
        %v5898 = vadd.f32 %v5757, %v5871
        %v5899 = vadd.f32 %v5758, %v5873
        %v5900 = vadd.f32 %v5759, %v5876
        %v5901 = vadd.f32 %v5760, %v5878
        %v5902 = vadd.f32 %v5761, %v5881
        %v5903 = vadd.f32 %v5762, %v5883
        %v5904 = vadd.f32 %v5763, %v5886
        %v5905 = vadd.f32 %v5764, %v5888
        %v5906 = vadd.f32 %v5765, %v5891
        %v5907 = vld [vmem:[#allocation2 + $0x1d] sm:$0xff]
        %v5908 = vld [vmem:[#allocation2 + $0x25] sm:$0xff]
        %v5909 = vld [vmem:[#allocation2 + $0x2d] sm:$0xff]
        %v5910 = vld [vmem:[#allocation2 + $0x35] sm:$0xff]
        %v5911 = vld [vmem:[#allocation2 + $0x3d] sm:$0xff]
        %v5912 = vld [vmem:[#allocation2 + $0x45] sm:$0xff]
        %v5913 = vld [vmem:[#allocation2 + $0x4d] sm:$0xff]
        %v5914 = vld [vmem:[#allocation2 + $0x55] sm:$0xff]
        %v5915 = vld [vmem:[#allocation2 + $0x5d] sm:$0xff]
        %v5916 = vld [vmem:[#allocation2 + $0x65] sm:$0xff]
        %v5917 = vld [vmem:[#allocation2 + $0x6d] sm:$0xff]
        %v5918 = vld [vmem:[#allocation2 + $0x75] sm:$0xff]
        %v5919 = vld [vmem:[#allocation2 + $0x7d] sm:$0xf]
        %v5920 = vpack.c.bf16 %v5908, %v5907
        %v5921 = vpack.c.bf16 %v5910, %v5909
        %v5922 = vpack.c.bf16 %v5912, %v5911
        %v5923 = vpack.c.bf16 %v5914, %v5913
        %v5924 = vpack.c.bf16 %v5916, %v5915
        %v5925 = vpack.c.bf16 %v5918, %v5917
        %v5926 = vpack.c.bf16 %v5919, %v5919
        %s5927 = scalar_lea.vmem [#allocation8], 448
        %v5928 = vld [vmem:[%s5927] sm:$0xf]
        %v5929 = vld [vmem:[%s5927 + $0x4] sm:$0xf]
        %v5930 = vld [vmem:[%s5927 + $0x8] sm:$0xf]
        %v5931 = vld [vmem:[%s5927 + $0xc] sm:$0xf]
        %v5932 = vld [vmem:[%s5927 + $0x10] sm:$0xf]
        %v5933 = vld [vmem:[%s5927 + $0x14] sm:$0xf]
        %v5934 = vld [vmem:[%s5927 + $0x18] sm:$0xf]
        %v5935 = vld [vmem:[%s5927 + $0x1c] sm:$0xf]
        %v5936 = vld [vmem:[%s5927 + $0x20] sm:$0xf]
        %v5937 = vld [vmem:[%s5927 + $0x24] sm:$0xf]
        %v5938 = vld [vmem:[%s5927 + $0x28] sm:$0xf]
        %v5939 = vld [vmem:[%s5927 + $0x2c] sm:$0xf]
        %v5940 = vld [vmem:[%s5927 + $0x30] sm:$0xf]
        %v5941 = vld [vmem:[%s5927 + $0x34] sm:$0xf]
        %v5942 = vld [vmem:[%s5927 + $0x38] sm:$0xf]
        %v5943 = vld [vmem:[%s5927 + $0x3c] sm:$0xf]
        %v5960 = vunpack.c.l.b16 %v5928
        %v5961 = vunpack.c.l.b16 %v5929
        %v5962 = vunpack.c.l.b16 %v5930
        %v5963 = vunpack.c.l.b16 %v5931
        %v5964 = vunpack.c.l.b16 %v5932
        %v5965 = vunpack.c.l.b16 %v5933
        %v5966 = vunpack.c.l.b16 %v5934
        %v5967 = vunpack.c.l.b16 %v5935
        %v5968 = vunpack.c.l.b16 %v5936
        %v5969 = vunpack.c.l.b16 %v5937
        %v5970 = vunpack.c.l.b16 %v5938
        %v5971 = vunpack.c.l.b16 %v5939
        %v5972 = vunpack.c.l.b16 %v5940
        %v5973 = vunpack.c.l.b16 %v5941
        %v5974 = vunpack.c.l.b16 %v5942
        %v5975 = vunpack.c.l.b16 %v5943
        %v5976 = vpack.c.b16 %v5961, %v5960
        %v5977 = vpack.c.b16 %v5963, %v5962
        %v5978 = vpack.c.b16 %v5965, %v5964
        %v5979 = vpack.c.b16 %v5967, %v5966
        %v5980 = vpack.c.b16 %v5969, %v5968
        %v5981 = vpack.c.b16 %v5971, %v5970
        %v5982 = vpack.c.b16 %v5973, %v5972
        %v5983 = vpack.c.b16 %v5975, %v5974
        %5992 = vmatpush.bf16.msra.mxu0 %v5983
        %5993 = vmatpush.bf16.msra.mxu0 %v5982
        %5994 = vmatpush.bf16.msra.mxu0 %v5981
        %5995 = vmatpush.bf16.msra.mxu0 %v5980
        %5996 = vmatpush.bf16.msra.mxu0 %v5979
        %5997 = vmatpush.bf16.msra.mxu0 %v5978
        %5998 = vmatpush.bf16.msra.mxu0 %v5977
        %5999 = vmatpush.bf16.msra.mxu0 %v5976
        %6000 = vmatmul.bf16.gmra.mxu0 %v5920
        %v6001 = vpop.f32.mrf.mxu0
        %v6002 = vadd.f32 0.0, %v6001
        %v6003 = vpop.f32.mrf.mxu0
        %v6004 = vadd.f32 0.0, %v6003
        %6005 = vmatmul.bf16.gmra.mxu0 %v5921
        %v6006 = vpop.f32.mrf.mxu0
        %v6007 = vadd.f32 0.0, %v6006
        %v6008 = vpop.f32.mrf.mxu0
        %v6009 = vadd.f32 0.0, %v6008
        %6010 = vmatmul.bf16.gmra.mxu0 %v5922
        %v6011 = vpop.f32.mrf.mxu0
        %v6012 = vadd.f32 0.0, %v6011
        %v6013 = vpop.f32.mrf.mxu0
        %v6014 = vadd.f32 0.0, %v6013
        %6015 = vmatmul.bf16.gmra.mxu0 %v5923
        %v6016 = vpop.f32.mrf.mxu0
        %v6017 = vadd.f32 0.0, %v6016
        %v6018 = vpop.f32.mrf.mxu0
        %v6019 = vadd.f32 0.0, %v6018
        %6020 = vmatmul.bf16.gmra.mxu0 %v5924
        %v6021 = vpop.f32.mrf.mxu0
        %v6022 = vadd.f32 0.0, %v6021
        %v6023 = vpop.f32.mrf.mxu0
        %v6024 = vadd.f32 0.0, %v6023
        %6025 = vmatmul.bf16.gmra.mxu0 %v5925
        %v6026 = vpop.f32.mrf.mxu0
        %v6027 = vadd.f32 0.0, %v6026
        %v6028 = vpop.f32.mrf.mxu0
        %v6029 = vadd.f32 0.0, %v6028
        %6030 = vmatmul.bf16.gmra.mxu0 %v5926
        %v6031 = vpop.f32.mrf.mxu0
        %v6032 = vadd.f32 0.0, %v6031
        %v6033 = vpop.f32.mrf.mxu0
        %6034 = vdwg.mxu0
        %v6035 = vadd.f32 %v5894, %v6002
        %v6036 = vadd.f32 %v5895, %v6004
        %v6037 = vadd.f32 %v5896, %v6007
        %v6038 = vadd.f32 %v5897, %v6009
        %v6039 = vadd.f32 %v5898, %v6012
        %v6040 = vadd.f32 %v5899, %v6014
        %v6041 = vadd.f32 %v5900, %v6017
        %v6042 = vadd.f32 %v5901, %v6019
        %v6043 = vadd.f32 %v5902, %v6022
        %v6044 = vadd.f32 %v5903, %v6024
        %v6045 = vadd.f32 %v5904, %v6027
        %v6046 = vadd.f32 %v5905, %v6029
        %v6047 = vadd.f32 %v5906, %v6032
        %v6048 = vld [vmem:[#allocation2 + $0x1e] sm:$0xff]
        %v6049 = vld [vmem:[#allocation2 + $0x26] sm:$0xff]
        %v6050 = vld [vmem:[#allocation2 + $0x2e] sm:$0xff]
        %v6051 = vld [vmem:[#allocation2 + $0x36] sm:$0xff]
        %v6052 = vld [vmem:[#allocation2 + $0x3e] sm:$0xff]
        %v6053 = vld [vmem:[#allocation2 + $0x46] sm:$0xff]
        %v6054 = vld [vmem:[#allocation2 + $0x4e] sm:$0xff]
        %v6055 = vld [vmem:[#allocation2 + $0x56] sm:$0xff]
        %v6056 = vld [vmem:[#allocation2 + $0x5e] sm:$0xff]
        %v6057 = vld [vmem:[#allocation2 + $0x66] sm:$0xff]
        %v6058 = vld [vmem:[#allocation2 + $0x6e] sm:$0xff]
        %v6059 = vld [vmem:[#allocation2 + $0x76] sm:$0xff]
        %v6060 = vld [vmem:[#allocation2 + $0x7e] sm:$0xf]
        %v6061 = vpack.c.bf16 %v6049, %v6048
        %v6062 = vpack.c.bf16 %v6051, %v6050
        %v6063 = vpack.c.bf16 %v6053, %v6052
        %v6064 = vpack.c.bf16 %v6055, %v6054
        %v6065 = vpack.c.bf16 %v6057, %v6056
        %v6066 = vpack.c.bf16 %v6059, %v6058
        %v6067 = vpack.c.bf16 %v6060, %v6060
        %s6068 = scalar_lea.vmem [#allocation8], 512
        %v6069 = vld [vmem:[%s6068] sm:$0xf]
        %v6070 = vld [vmem:[%s6068 + $0x4] sm:$0xf]
        %v6071 = vld [vmem:[%s6068 + $0x8] sm:$0xf]
        %v6072 = vld [vmem:[%s6068 + $0xc] sm:$0xf]
        %v6073 = vld [vmem:[%s6068 + $0x10] sm:$0xf]
        %v6074 = vld [vmem:[%s6068 + $0x14] sm:$0xf]
        %v6075 = vld [vmem:[%s6068 + $0x18] sm:$0xf]
        %v6076 = vld [vmem:[%s6068 + $0x1c] sm:$0xf]
        %v6077 = vld [vmem:[%s6068 + $0x20] sm:$0xf]
        %v6078 = vld [vmem:[%s6068 + $0x24] sm:$0xf]
        %v6079 = vld [vmem:[%s6068 + $0x28] sm:$0xf]
        %v6080 = vld [vmem:[%s6068 + $0x2c] sm:$0xf]
        %v6081 = vld [vmem:[%s6068 + $0x30] sm:$0xf]
        %v6082 = vld [vmem:[%s6068 + $0x34] sm:$0xf]
        %v6083 = vld [vmem:[%s6068 + $0x38] sm:$0xf]
        %v6084 = vld [vmem:[%s6068 + $0x3c] sm:$0xf]
        %v6101 = vunpack.c.l.b16 %v6069
        %v6102 = vunpack.c.l.b16 %v6070
        %v6103 = vunpack.c.l.b16 %v6071
        %v6104 = vunpack.c.l.b16 %v6072
        %v6105 = vunpack.c.l.b16 %v6073
        %v6106 = vunpack.c.l.b16 %v6074
        %v6107 = vunpack.c.l.b16 %v6075
        %v6108 = vunpack.c.l.b16 %v6076
        %v6109 = vunpack.c.l.b16 %v6077
        %v6110 = vunpack.c.l.b16 %v6078
        %v6111 = vunpack.c.l.b16 %v6079
        %v6112 = vunpack.c.l.b16 %v6080
        %v6113 = vunpack.c.l.b16 %v6081
        %v6114 = vunpack.c.l.b16 %v6082
        %v6115 = vunpack.c.l.b16 %v6083
        %v6116 = vunpack.c.l.b16 %v6084
        %v6117 = vpack.c.b16 %v6102, %v6101
        %v6118 = vpack.c.b16 %v6104, %v6103
        %v6119 = vpack.c.b16 %v6106, %v6105
        %v6120 = vpack.c.b16 %v6108, %v6107
        %v6121 = vpack.c.b16 %v6110, %v6109
        %v6122 = vpack.c.b16 %v6112, %v6111
        %v6123 = vpack.c.b16 %v6114, %v6113
        %v6124 = vpack.c.b16 %v6116, %v6115
        %6133 = vmatpush.bf16.msra.mxu0 %v6124
        %6134 = vmatpush.bf16.msra.mxu0 %v6123
        %6135 = vmatpush.bf16.msra.mxu0 %v6122
        %6136 = vmatpush.bf16.msra.mxu0 %v6121
        %6137 = vmatpush.bf16.msra.mxu0 %v6120
        %6138 = vmatpush.bf16.msra.mxu0 %v6119
        %6139 = vmatpush.bf16.msra.mxu0 %v6118
        %6140 = vmatpush.bf16.msra.mxu0 %v6117
        %6141 = vmatmul.bf16.gmra.mxu0 %v6061
        %v6142 = vpop.f32.mrf.mxu0
        %v6143 = vadd.f32 0.0, %v6142
        %v6144 = vpop.f32.mrf.mxu0
        %v6145 = vadd.f32 0.0, %v6144
        %6146 = vmatmul.bf16.gmra.mxu0 %v6062
        %v6147 = vpop.f32.mrf.mxu0
        %v6148 = vadd.f32 0.0, %v6147
        %v6149 = vpop.f32.mrf.mxu0
        %v6150 = vadd.f32 0.0, %v6149
        %6151 = vmatmul.bf16.gmra.mxu0 %v6063
        %v6152 = vpop.f32.mrf.mxu0
        %v6153 = vadd.f32 0.0, %v6152
        %v6154 = vpop.f32.mrf.mxu0
        %v6155 = vadd.f32 0.0, %v6154
        %6156 = vmatmul.bf16.gmra.mxu0 %v6064
        %v6157 = vpop.f32.mrf.mxu0
        %v6158 = vadd.f32 0.0, %v6157
        %v6159 = vpop.f32.mrf.mxu0
        %v6160 = vadd.f32 0.0, %v6159
        %6161 = vmatmul.bf16.gmra.mxu0 %v6065
        %v6162 = vpop.f32.mrf.mxu0
        %v6163 = vadd.f32 0.0, %v6162
        %v6164 = vpop.f32.mrf.mxu0
        %v6165 = vadd.f32 0.0, %v6164
        %6166 = vmatmul.bf16.gmra.mxu0 %v6066
        %v6167 = vpop.f32.mrf.mxu0
        %v6168 = vadd.f32 0.0, %v6167
        %v6169 = vpop.f32.mrf.mxu0
        %v6170 = vadd.f32 0.0, %v6169
        %6171 = vmatmul.bf16.gmra.mxu0 %v6067
        %v6172 = vpop.f32.mrf.mxu0
        %v6173 = vadd.f32 0.0, %v6172
        %v6174 = vpop.f32.mrf.mxu0
        %6175 = vdwg.mxu0
        %v6176 = vadd.f32 %v6035, %v6143
        %v6177 = vadd.f32 %v6036, %v6145
        %v6178 = vadd.f32 %v6037, %v6148
        %v6179 = vadd.f32 %v6038, %v6150
        %v6180 = vadd.f32 %v6039, %v6153
        %v6181 = vadd.f32 %v6040, %v6155
        %v6182 = vadd.f32 %v6041, %v6158
        %v6183 = vadd.f32 %v6042, %v6160
        %v6184 = vadd.f32 %v6043, %v6163
        %v6185 = vadd.f32 %v6044, %v6165
        %v6186 = vadd.f32 %v6045, %v6168
        %v6187 = vadd.f32 %v6046, %v6170
        %v6188 = vadd.f32 %v6047, %v6173
        %v6189 = vld [vmem:[%s6] sm:$0x1]
        %v6191 = vperm.slane %v6189, 0
        %v6193 = vadd.f32 %v6176, %v6191
        %v6194 = vadd.f32 %v6177, %v6191
        %v6195 = vadd.f32 %v6178, %v6191
        %v6196 = vadd.f32 %v6179, %v6191
        %v6197 = vadd.f32 %v6180, %v6191
        %v6198 = vadd.f32 %v6181, %v6191
        %v6199 = vadd.f32 %v6182, %v6191
        %v6200 = vadd.f32 %v6183, %v6191
        %v6201 = vadd.f32 %v6184, %v6191
        %v6202 = vadd.f32 %v6185, %v6191
        %v6203 = vadd.f32 %v6186, %v6191
        %v6204 = vadd.f32 %v6187, %v6191
        %v6205 = vadd.f32 %v6188, %v6191
        %v6206 = vmax.f32 %v6193, 0.0
        %v6207 = vmax.f32 %v6194, 0.0
        %v6208 = vmax.f32 %v6195, 0.0
        %v6209 = vmax.f32 %v6196, 0.0
        %v6210 = vmax.f32 %v6197, 0.0
        %v6211 = vmax.f32 %v6198, 0.0
        %v6212 = vmax.f32 %v6199, 0.0
        %v6213 = vmax.f32 %v6200, 0.0
        %v6214 = vmax.f32 %v6201, 0.0
        %v6215 = vmax.f32 %v6202, 0.0
        %v6216 = vmax.f32 %v6203, 0.0
        %v6217 = vmax.f32 %v6204, 0.0
        %v6218 = vmax.f32 %v6205, 0.0
        %6219 = vst [vmem:[#allocation3] sm:$0xff] %v6206
        %6220 = vst [vmem:[#allocation3 + $0x8] sm:$0xff] %v6207
        %6221 = vst [vmem:[#allocation3 + $0x10] sm:$0xff] %v6208
        %6222 = vst [vmem:[#allocation3 + $0x18] sm:$0xff] %v6209
        %6223 = vst [vmem:[#allocation3 + $0x20] sm:$0xff] %v6210
        %6224 = vst [vmem:[#allocation3 + $0x28] sm:$0xff] %v6211
        %6225 = vst [vmem:[#allocation3 + $0x30] sm:$0xff] %v6212
        %6226 = vst [vmem:[#allocation3 + $0x38] sm:$0xff] %v6213
        %6227 = vst [vmem:[#allocation3 + $0x40] sm:$0xff] %v6214
        %6228 = vst [vmem:[#allocation3 + $0x48] sm:$0xff] %v6215
        %6229 = vst [vmem:[#allocation3 + $0x50] sm:$0xff] %v6216
        %6230 = vst [vmem:[#allocation3 + $0x58] sm:$0xff] %v6217
        %6231 = vst [vmem:[#allocation3 + $0x60] sm:$0xf] %v6218
        %6232 = vst [vmem:[#allocation2 + $0x13] sm:$0xff] 0.0
        %6233 = vst [vmem:[#allocation2 + $0x1b] sm:$0xff] 0.0
        %6234 = vst [vmem:[#allocation2 + $0x23] sm:$0xff] 0.0
        %6235 = vst [vmem:[#allocation2 + $0x2b] sm:$0xff] 0.0
        %6236 = vst [vmem:[#allocation2 + $0x33] sm:$0xf] 0.0
        %v6237 = vld [vmem:[#allocation3] sm:$0xff]
        %v6238 = vld [vmem:[#allocation3 + $0x8] sm:$0xff]
        %v6239 = vld [vmem:[#allocation3 + $0x10] sm:$0xff]
        %v6240 = vld [vmem:[#allocation3 + $0x18] sm:$0xff]
        %v6241 = vld [vmem:[#allocation3 + $0x20] sm:$0xff]
        %v6242 = vld [vmem:[#allocation3 + $0x28] sm:$0xff]
        %v6243 = vld [vmem:[#allocation3 + $0x30] sm:$0xff]
        %v6244 = vld [vmem:[#allocation3 + $0x38] sm:$0xff]
        %v6245 = vld [vmem:[#allocation3 + $0x40] sm:$0xff]
        %v6246 = vld [vmem:[#allocation3 + $0x48] sm:$0xff]
        %v6247 = vld [vmem:[#allocation3 + $0x50] sm:$0xff]
        %v6248 = vld [vmem:[#allocation3 + $0x58] sm:$0x3]
        %v6249 = vld [vmem:[#allocation3 + $0xa] sm:$0xff]
        %v6250 = vld [vmem:[#allocation3 + $0x12] sm:$0xff]
        %v6251 = vld [vmem:[#allocation3 + $0x1a] sm:$0xff]
        %v6252 = vld [vmem:[#allocation3 + $0x22] sm:$0xff]
        %v6253 = vld [vmem:[#allocation3 + $0x2a] sm:$0xff]
        %v6254 = vld [vmem:[#allocation3 + $0x32] sm:$0xff]
        %v6255 = vld [vmem:[#allocation3 + $0x3a] sm:$0xff]
        %v6256 = vld [vmem:[#allocation3 + $0x42] sm:$0xff]
        %v6257 = vld [vmem:[#allocation3 + $0x4a] sm:$0xff]
        %v6258 = vld [vmem:[#allocation3 + $0x52] sm:$0xff]
        %v6259 = vld [vmem:[#allocation3 + $0x5a] sm:$0xff]
        %v6260 = vld [vmem:[#allocation3 + $0x62] sm:$0x3]
        %v6261 = vmax.f32 %v6237, %v6249
        %v6262 = vmax.f32 %v6238, %v6250
        %v6263 = vmax.f32 %v6239, %v6251
        %v6264 = vmax.f32 %v6240, %v6252
        %v6265 = vmax.f32 %v6241, %v6253
        %v6266 = vmax.f32 %v6242, %v6254
        %v6267 = vmax.f32 %v6243, %v6255
        %v6268 = vmax.f32 %v6244, %v6256
        %v6269 = vmax.f32 %v6245, %v6257
        %v6270 = vmax.f32 %v6246, %v6258
        %v6271 = vmax.f32 %v6247, %v6259
        %v6272 = vmax.f32 %v6248, %v6260
        %6273 = vst [vmem:[#allocation4] sm:$0xff] %v6261
        %6274 = vst [vmem:[#allocation4 + $0x8] sm:$0xff] %v6262
        %6275 = vst [vmem:[#allocation4 + $0x10] sm:$0xff] %v6263
        %6276 = vst [vmem:[#allocation4 + $0x18] sm:$0xff] %v6264
        %6277 = vst [vmem:[#allocation4 + $0x20] sm:$0xff] %v6265
        %6278 = vst [vmem:[#allocation4 + $0x28] sm:$0xff] %v6266
        %6279 = vst [vmem:[#allocation4 + $0x30] sm:$0xff] %v6267
        %6280 = vst [vmem:[#allocation4 + $0x38] sm:$0xff] %v6268
        %6281 = vst [vmem:[#allocation4 + $0x40] sm:$0xff] %v6269
        %6282 = vst [vmem:[#allocation4 + $0x48] sm:$0xff] %v6270
        %6283 = vst [vmem:[#allocation4 + $0x50] sm:$0xff] %v6271
        %6284 = vst [vmem:[#allocation4 + $0x58] sm:$0x3] %v6272
        %v6285 = vld [vmem:[#allocation4 + $0xb] sm:$0x1]
        %v6286 = vld [vmem:[#allocation4 + $0xc] sm:$0x1]
        %v6287 = vmax.f32 %v6285, %v6286
        %6288 = vst [vmem:[#allocation2 + $0x1a] sm:$0x1] %v6287
        %v6289 = vld [vmem:[#allocation4 + $0xd] sm:$0x1]
        %v6290 = vld [vmem:[#allocation4 + $0xe] sm:$0x1]
        %v6291 = vmax.f32 %v6289, %v6290
        %6292 = vst [vmem:[#allocation2 + $0x1b] sm:$0x1] %v6291
        %v6293 = vld [vmem:[#allocation4 + $0xf] sm:$0x1]
        %v6294 = vld [vmem:[#allocation4 + $0x10] sm:$0x1]
        %v6295 = vmax.f32 %v6293, %v6294
        %6296 = vst [vmem:[#allocation2 + $0x1c] sm:$0x1] %v6295
        %v6297 = vld [vmem:[#allocation4 + $0x11] sm:$0x1]
        %v6298 = vld [vmem:[#allocation4 + $0x12] sm:$0x1]
        %v6299 = vmax.f32 %v6297, %v6298
        %6300 = vst [vmem:[#allocation2 + $0x1d] sm:$0x1] %v6299
        %v6301 = vld [vmem:[#allocation4 + $0x1f] sm:$0x1]
        %v6302 = vld [vmem:[#allocation4 + $0x20] sm:$0x1]
        %v6303 = vmax.f32 %v6301, %v6302
        %6304 = vst [vmem:[#allocation2 + $0x20] sm:$0x1] %v6303
        %v6305 = vld [vmem:[#allocation4 + $0x21] sm:$0x1]
        %v6306 = vld [vmem:[#allocation4 + $0x22] sm:$0x1]
        %v6307 = vmax.f32 %v6305, %v6306
        %6308 = vst [vmem:[#allocation2 + $0x21] sm:$0x1] %v6307
        %v6309 = vld [vmem:[#allocation4 + $0x23] sm:$0x1]
        %v6310 = vld [vmem:[#allocation4 + $0x24] sm:$0x1]
        %v6311 = vmax.f32 %v6309, %v6310
        %6312 = vst [vmem:[#allocation2 + $0x22] sm:$0x1] %v6311
        %v6313 = vld [vmem:[#allocation4 + $0x25] sm:$0x1]
        %v6314 = vld [vmem:[#allocation4 + $0x26] sm:$0x1]
        %v6315 = vmax.f32 %v6313, %v6314
        %6316 = vst [vmem:[#allocation2 + $0x23] sm:$0x1] %v6315
        %v6317 = vld [vmem:[#allocation4 + $0x33] sm:$0x1]
        %v6318 = vld [vmem:[#allocation4 + $0x34] sm:$0x1]
        %v6319 = vmax.f32 %v6317, %v6318
        %6320 = vst [vmem:[#allocation2 + $0x26] sm:$0x1] %v6319
        %v6321 = vld [vmem:[#allocation4 + $0x35] sm:$0x1]
        %v6322 = vld [vmem:[#allocation4 + $0x36] sm:$0x1]
        %v6323 = vmax.f32 %v6321, %v6322
        %6324 = vst [vmem:[#allocation2 + $0x27] sm:$0x1] %v6323
        %v6325 = vld [vmem:[#allocation4 + $0x37] sm:$0x1]
        %v6326 = vld [vmem:[#allocation4 + $0x38] sm:$0x1]
        %v6327 = vmax.f32 %v6325, %v6326
        %6328 = vst [vmem:[#allocation2 + $0x28] sm:$0x1] %v6327
        %v6329 = vld [vmem:[#allocation4 + $0x39] sm:$0x1]
        %v6330 = vld [vmem:[#allocation4 + $0x3a] sm:$0x1]
        %v6331 = vmax.f32 %v6329, %v6330
        %6332 = vst [vmem:[#allocation2 + $0x29] sm:$0x1] %v6331
        %v6333 = vld [vmem:[#allocation4 + $0x47] sm:$0x1]
        %v6334 = vld [vmem:[#allocation4 + $0x48] sm:$0x1]
        %v6335 = vmax.f32 %v6333, %v6334
        %6336 = vst [vmem:[#allocation2 + $0x2c] sm:$0x1] %v6335
        %v6337 = vld [vmem:[#allocation4 + $0x49] sm:$0x1]
        %v6338 = vld [vmem:[#allocation4 + $0x4a] sm:$0x1]
        %v6339 = vmax.f32 %v6337, %v6338
        %6340 = vst [vmem:[#allocation2 + $0x2d] sm:$0x1] %v6339
        %v6341 = vld [vmem:[#allocation4 + $0x4b] sm:$0x1]
        %v6342 = vld [vmem:[#allocation4 + $0x4c] sm:$0x1]
        %v6343 = vmax.f32 %v6341, %v6342
        %6344 = vst [vmem:[#allocation2 + $0x2e] sm:$0x1] %v6343
        %v6345 = vld [vmem:[#allocation4 + $0x4d] sm:$0x1]
        %v6346 = vld [vmem:[#allocation4 + $0x4e] sm:$0x1]
        %v6347 = vmax.f32 %v6345, %v6346
        %6348 = vst [vmem:[#allocation2 + $0x2f] sm:$0x1] %v6347
        %v6349 = vld [vmem:[#allocation2 + $0xc] sm:$0xff]
        %v6350 = vld [vmem:[#allocation2 + $0x14] sm:$0xff]
        %v6351 = vld [vmem:[#allocation2 + $0x1c] sm:$0xff]
        %v6352 = vld [vmem:[#allocation2 + $0x24] sm:$0xff]
        %v6353 = vld [vmem:[#allocation2 + $0x2c] sm:$0xf]
        %v6354 = vpack.c.bf16 %v6350, %v6349
        %v6355 = vpack.c.bf16 %v6352, %v6351
        %v6356 = vpack.c.bf16 %v6353, %v6353
        %v6357 = vld [vmem:[#allocation10] sm:$0xf]
        %v6358 = vld [vmem:[#allocation10 + $0x4] sm:$0xf]
        %v6359 = vld [vmem:[#allocation10 + $0x8] sm:$0xf]
        %v6360 = vld [vmem:[#allocation10 + $0xc] sm:$0xf]
        %v6361 = vld [vmem:[#allocation10 + $0x10] sm:$0xf]
        %v6362 = vld [vmem:[#allocation10 + $0x14] sm:$0xf]
        %v6363 = vld [vmem:[#allocation10 + $0x18] sm:$0xf]
        %v6364 = vld [vmem:[#allocation10 + $0x1c] sm:$0xf]
        %v6365 = vld [vmem:[#allocation10 + $0x20] sm:$0xf]
        %v6366 = vld [vmem:[#allocation10 + $0x24] sm:$0xf]
        %v6367 = vld [vmem:[#allocation10 + $0x28] sm:$0xf]
        %v6368 = vld [vmem:[#allocation10 + $0x2c] sm:$0xf]
        %v6369 = vld [vmem:[#allocation10 + $0x30] sm:$0xf]
        %v6370 = vld [vmem:[#allocation10 + $0x34] sm:$0xf]
        %v6371 = vld [vmem:[#allocation10 + $0x38] sm:$0xf]
        %v6372 = vld [vmem:[#allocation10 + $0x3c] sm:$0xf]
        %v6373 = vld [vmem:[#allocation2 + $0xd] sm:$0xff]
        %v6374 = vld [vmem:[#allocation2 + $0x15] sm:$0xff]
        %v6375 = vld [vmem:[#allocation2 + $0x1d] sm:$0xff]
        %v6376 = vld [vmem:[#allocation2 + $0x25] sm:$0xff]
        %v6377 = vld [vmem:[#allocation2 + $0x2d] sm:$0xf]
        %v6378 = vpack.c.bf16 %v6374, %v6373
        %v6379 = vpack.c.bf16 %v6376, %v6375
        %v6380 = vpack.c.bf16 %v6377, %v6377
        %s6381 = scalar_lea.vmem [#allocation10], 64
        %v6382 = vld [vmem:[%s6381] sm:$0xf]
        %v6383 = vld [vmem:[%s6381 + $0x4] sm:$0xf]
        %v6384 = vld [vmem:[%s6381 + $0x8] sm:$0xf]
        %v6385 = vld [vmem:[%s6381 + $0xc] sm:$0xf]
        %v6386 = vld [vmem:[%s6381 + $0x10] sm:$0xf]
        %v6387 = vld [vmem:[%s6381 + $0x14] sm:$0xf]
        %v6388 = vld [vmem:[%s6381 + $0x18] sm:$0xf]
        %v6389 = vld [vmem:[%s6381 + $0x1c] sm:$0xf]
        %v6390 = vld [vmem:[%s6381 + $0x20] sm:$0xf]
        %v6391 = vld [vmem:[%s6381 + $0x24] sm:$0xf]
        %v6392 = vld [vmem:[%s6381 + $0x28] sm:$0xf]
        %v6393 = vld [vmem:[%s6381 + $0x2c] sm:$0xf]
        %v6394 = vld [vmem:[%s6381 + $0x30] sm:$0xf]
        %v6395 = vld [vmem:[%s6381 + $0x34] sm:$0xf]
        %v6396 = vld [vmem:[%s6381 + $0x38] sm:$0xf]
        %v6397 = vld [vmem:[%s6381 + $0x3c] sm:$0xf]
        %v6414 = vunpack.c.l.b16 %v6382
        %v6415 = vunpack.c.l.b16 %v6383
        %v6416 = vunpack.c.l.b16 %v6384
        %v6417 = vunpack.c.l.b16 %v6385
        %v6418 = vunpack.c.l.b16 %v6386
        %v6419 = vunpack.c.l.b16 %v6387
        %v6420 = vunpack.c.l.b16 %v6388
        %v6421 = vunpack.c.l.b16 %v6389
        %v6422 = vunpack.c.l.b16 %v6390
        %v6423 = vunpack.c.l.b16 %v6391
        %v6424 = vunpack.c.l.b16 %v6392
        %v6425 = vunpack.c.l.b16 %v6393
        %v6426 = vunpack.c.l.b16 %v6394
        %v6427 = vunpack.c.l.b16 %v6395
        %v6428 = vunpack.c.l.b16 %v6396
        %v6429 = vunpack.c.l.b16 %v6397
        %v6430 = vpack.c.b16 %v6415, %v6414
        %v6431 = vpack.c.b16 %v6417, %v6416
        %v6432 = vpack.c.b16 %v6419, %v6418
        %v6433 = vpack.c.b16 %v6421, %v6420
        %v6434 = vpack.c.b16 %v6423, %v6422
        %v6435 = vpack.c.b16 %v6425, %v6424
        %v6436 = vpack.c.b16 %v6427, %v6426
        %v6437 = vpack.c.b16 %v6429, %v6428
        %6446 = vmatpush.bf16.msra.mxu0 %v6437
        %6447 = vmatpush.bf16.msra.mxu0 %v6436
        %6448 = vmatpush.bf16.msra.mxu0 %v6435
        %6449 = vmatpush.bf16.msra.mxu0 %v6434
        %6450 = vmatpush.bf16.msra.mxu0 %v6433
        %6451 = vmatpush.bf16.msra.mxu0 %v6432
        %6452 = vmatpush.bf16.msra.mxu0 %v6431
        %6453 = vmatpush.bf16.msra.mxu0 %v6430
        %6454 = vmatmul.bf16.gmra.mxu0 %v6378
        %v6455 = vpop.f32.mrf.mxu0
        %v6456 = vadd.f32 0.0, %v6455
        %v6457 = vpop.f32.mrf.mxu0
        %v6458 = vadd.f32 0.0, %v6457
        %6459 = vmatmul.bf16.gmra.mxu0 %v6379
        %v6460 = vpop.f32.mrf.mxu0
        %v6461 = vadd.f32 0.0, %v6460
        %v6462 = vpop.f32.mrf.mxu0
        %v6463 = vadd.f32 0.0, %v6462
        %6464 = vmatmul.bf16.gmra.mxu0 %v6380
        %v6465 = vpop.f32.mrf.mxu0
        %v6466 = vadd.f32 0.0, %v6465
        %v6467 = vpop.f32.mrf.mxu0
        %6468 = vdwg.mxu0
        %v6485 = vunpack.c.l.b16 %v6357
        %v6486 = vunpack.c.l.b16 %v6358
        %v6487 = vunpack.c.l.b16 %v6359
        %v6488 = vunpack.c.l.b16 %v6360
        %v6489 = vunpack.c.l.b16 %v6361
        %v6490 = vunpack.c.l.b16 %v6362
        %v6491 = vunpack.c.l.b16 %v6363
        %v6492 = vunpack.c.l.b16 %v6364
        %v6493 = vunpack.c.l.b16 %v6365
        %v6494 = vunpack.c.l.b16 %v6366
        %v6495 = vunpack.c.l.b16 %v6367
        %v6496 = vunpack.c.l.b16 %v6368
        %v6497 = vunpack.c.l.b16 %v6369
        %v6498 = vunpack.c.l.b16 %v6370
        %v6499 = vunpack.c.l.b16 %v6371
        %v6500 = vunpack.c.l.b16 %v6372
        %v6501 = vpack.c.b16 %v6486, %v6485
        %v6502 = vpack.c.b16 %v6488, %v6487
        %v6503 = vpack.c.b16 %v6490, %v6489
        %v6504 = vpack.c.b16 %v6492, %v6491
        %v6505 = vpack.c.b16 %v6494, %v6493
        %v6506 = vpack.c.b16 %v6496, %v6495
        %v6507 = vpack.c.b16 %v6498, %v6497
        %v6508 = vpack.c.b16 %v6500, %v6499
        %6517 = vmatpush.bf16.msra.mxu0 %v6508
        %6518 = vmatpush.bf16.msra.mxu0 %v6507
        %6519 = vmatpush.bf16.msra.mxu0 %v6506
        %6520 = vmatpush.bf16.msra.mxu0 %v6505
        %6521 = vmatpush.bf16.msra.mxu0 %v6504
        %6522 = vmatpush.bf16.msra.mxu0 %v6503
        %6523 = vmatpush.bf16.msra.mxu0 %v6502
        %6524 = vmatpush.bf16.msra.mxu0 %v6501
        %6525 = vmatmul.bf16.gmra.mxu0 %v6354
        %v6526 = vpop.f32.mrf.mxu0
        %v6527 = vadd.f32 %v6456, %v6526
        %v6528 = vpop.f32.mrf.mxu0
        %v6529 = vadd.f32 %v6458, %v6528
        %6530 = vmatmul.bf16.gmra.mxu0 %v6355
        %v6531 = vpop.f32.mrf.mxu0
        %v6532 = vadd.f32 %v6461, %v6531
        %v6533 = vpop.f32.mrf.mxu0
        %v6534 = vadd.f32 %v6463, %v6533
        %6535 = vmatmul.bf16.gmra.mxu0 %v6356
        %v6536 = vpop.f32.mrf.mxu0
        %v6537 = vadd.f32 %v6466, %v6536
        %v6538 = vpop.f32.mrf.mxu0
        %6539 = vdwg.mxu0
        %v6540 = vld [vmem:[#allocation2 + $0xe] sm:$0xff]
        %v6541 = vld [vmem:[#allocation2 + $0x16] sm:$0xff]
        %v6542 = vld [vmem:[#allocation2 + $0x1e] sm:$0xff]
        %v6543 = vld [vmem:[#allocation2 + $0x26] sm:$0xff]
        %v6544 = vld [vmem:[#allocation2 + $0x2e] sm:$0xf]
        %v6545 = vpack.c.bf16 %v6541, %v6540
        %v6546 = vpack.c.bf16 %v6543, %v6542
        %v6547 = vpack.c.bf16 %v6544, %v6544
        %s6548 = scalar_lea.vmem [#allocation10], 128
        %v6549 = vld [vmem:[%s6548] sm:$0xf]
        %v6550 = vld [vmem:[%s6548 + $0x4] sm:$0xf]
        %v6551 = vld [vmem:[%s6548 + $0x8] sm:$0xf]
        %v6552 = vld [vmem:[%s6548 + $0xc] sm:$0xf]
        %v6553 = vld [vmem:[%s6548 + $0x10] sm:$0xf]
        %v6554 = vld [vmem:[%s6548 + $0x14] sm:$0xf]
        %v6555 = vld [vmem:[%s6548 + $0x18] sm:$0xf]
        %v6556 = vld [vmem:[%s6548 + $0x1c] sm:$0xf]
        %v6557 = vld [vmem:[%s6548 + $0x20] sm:$0xf]
        %v6558 = vld [vmem:[%s6548 + $0x24] sm:$0xf]
        %v6559 = vld [vmem:[%s6548 + $0x28] sm:$0xf]
        %v6560 = vld [vmem:[%s6548 + $0x2c] sm:$0xf]
        %v6561 = vld [vmem:[%s6548 + $0x30] sm:$0xf]
        %v6562 = vld [vmem:[%s6548 + $0x34] sm:$0xf]
        %v6563 = vld [vmem:[%s6548 + $0x38] sm:$0xf]
        %v6564 = vld [vmem:[%s6548 + $0x3c] sm:$0xf]
        %v6581 = vunpack.c.l.b16 %v6549
        %v6582 = vunpack.c.l.b16 %v6550
        %v6583 = vunpack.c.l.b16 %v6551
        %v6584 = vunpack.c.l.b16 %v6552
        %v6585 = vunpack.c.l.b16 %v6553
        %v6586 = vunpack.c.l.b16 %v6554
        %v6587 = vunpack.c.l.b16 %v6555
        %v6588 = vunpack.c.l.b16 %v6556
        %v6589 = vunpack.c.l.b16 %v6557
        %v6590 = vunpack.c.l.b16 %v6558
        %v6591 = vunpack.c.l.b16 %v6559
        %v6592 = vunpack.c.l.b16 %v6560
        %v6593 = vunpack.c.l.b16 %v6561
        %v6594 = vunpack.c.l.b16 %v6562
        %v6595 = vunpack.c.l.b16 %v6563
        %v6596 = vunpack.c.l.b16 %v6564
        %v6597 = vpack.c.b16 %v6582, %v6581
        %v6598 = vpack.c.b16 %v6584, %v6583
        %v6599 = vpack.c.b16 %v6586, %v6585
        %v6600 = vpack.c.b16 %v6588, %v6587
        %v6601 = vpack.c.b16 %v6590, %v6589
        %v6602 = vpack.c.b16 %v6592, %v6591
        %v6603 = vpack.c.b16 %v6594, %v6593
        %v6604 = vpack.c.b16 %v6596, %v6595
        %6613 = vmatpush.bf16.msra.mxu0 %v6604
        %6614 = vmatpush.bf16.msra.mxu0 %v6603
        %6615 = vmatpush.bf16.msra.mxu0 %v6602
        %6616 = vmatpush.bf16.msra.mxu0 %v6601
        %6617 = vmatpush.bf16.msra.mxu0 %v6600
        %6618 = vmatpush.bf16.msra.mxu0 %v6599
        %6619 = vmatpush.bf16.msra.mxu0 %v6598
        %6620 = vmatpush.bf16.msra.mxu0 %v6597
        %6621 = vmatmul.bf16.gmra.mxu0 %v6545
        %v6622 = vpop.f32.mrf.mxu0
        %v6623 = vadd.f32 0.0, %v6622
        %v6624 = vpop.f32.mrf.mxu0
        %v6625 = vadd.f32 0.0, %v6624
        %6626 = vmatmul.bf16.gmra.mxu0 %v6546
        %v6627 = vpop.f32.mrf.mxu0
        %v6628 = vadd.f32 0.0, %v6627
        %v6629 = vpop.f32.mrf.mxu0
        %v6630 = vadd.f32 0.0, %v6629
        %6631 = vmatmul.bf16.gmra.mxu0 %v6547
        %v6632 = vpop.f32.mrf.mxu0
        %v6633 = vadd.f32 0.0, %v6632
        %v6634 = vpop.f32.mrf.mxu0
        %6635 = vdwg.mxu0
        %v6636 = vadd.f32 %v6527, %v6623
        %v6637 = vadd.f32 %v6529, %v6625
        %v6638 = vadd.f32 %v6532, %v6628
        %v6639 = vadd.f32 %v6534, %v6630
        %v6640 = vadd.f32 %v6537, %v6633
        %v6641 = vld [vmem:[#allocation2 + $0x12] sm:$0xff]
        %v6642 = vld [vmem:[#allocation2 + $0x1a] sm:$0xff]
        %v6643 = vld [vmem:[#allocation2 + $0x22] sm:$0xff]
        %v6644 = vld [vmem:[#allocation2 + $0x2a] sm:$0xff]
        %v6645 = vld [vmem:[#allocation2 + $0x32] sm:$0xf]
        %v6646 = vpack.c.bf16 %v6642, %v6641
        %v6647 = vpack.c.bf16 %v6644, %v6643
        %v6648 = vpack.c.bf16 %v6645, %v6645
        %s6649 = scalar_lea.vmem [#allocation10], 192
        %v6650 = vld [vmem:[%s6649] sm:$0xf]
        %v6651 = vld [vmem:[%s6649 + $0x4] sm:$0xf]
        %v6652 = vld [vmem:[%s6649 + $0x8] sm:$0xf]
        %v6653 = vld [vmem:[%s6649 + $0xc] sm:$0xf]
        %v6654 = vld [vmem:[%s6649 + $0x10] sm:$0xf]
        %v6655 = vld [vmem:[%s6649 + $0x14] sm:$0xf]
        %v6656 = vld [vmem:[%s6649 + $0x18] sm:$0xf]
        %v6657 = vld [vmem:[%s6649 + $0x1c] sm:$0xf]
        %v6658 = vld [vmem:[%s6649 + $0x20] sm:$0xf]
        %v6659 = vld [vmem:[%s6649 + $0x24] sm:$0xf]
        %v6660 = vld [vmem:[%s6649 + $0x28] sm:$0xf]
        %v6661 = vld [vmem:[%s6649 + $0x2c] sm:$0xf]
        %v6662 = vld [vmem:[%s6649 + $0x30] sm:$0xf]
        %v6663 = vld [vmem:[%s6649 + $0x34] sm:$0xf]
        %v6664 = vld [vmem:[%s6649 + $0x38] sm:$0xf]
        %v6665 = vld [vmem:[%s6649 + $0x3c] sm:$0xf]
        %v6682 = vunpack.c.l.b16 %v6650
        %v6683 = vunpack.c.l.b16 %v6651
        %v6684 = vunpack.c.l.b16 %v6652
        %v6685 = vunpack.c.l.b16 %v6653
        %v6686 = vunpack.c.l.b16 %v6654
        %v6687 = vunpack.c.l.b16 %v6655
        %v6688 = vunpack.c.l.b16 %v6656
        %v6689 = vunpack.c.l.b16 %v6657
        %v6690 = vunpack.c.l.b16 %v6658
        %v6691 = vunpack.c.l.b16 %v6659
        %v6692 = vunpack.c.l.b16 %v6660
        %v6693 = vunpack.c.l.b16 %v6661
        %v6694 = vunpack.c.l.b16 %v6662
        %v6695 = vunpack.c.l.b16 %v6663
        %v6696 = vunpack.c.l.b16 %v6664
        %v6697 = vunpack.c.l.b16 %v6665
        %v6698 = vpack.c.b16 %v6683, %v6682
        %v6699 = vpack.c.b16 %v6685, %v6684
        %v6700 = vpack.c.b16 %v6687, %v6686
        %v6701 = vpack.c.b16 %v6689, %v6688
        %v6702 = vpack.c.b16 %v6691, %v6690
        %v6703 = vpack.c.b16 %v6693, %v6692
        %v6704 = vpack.c.b16 %v6695, %v6694
        %v6705 = vpack.c.b16 %v6697, %v6696
        %6714 = vmatpush.bf16.msra.mxu0 %v6705
        %6715 = vmatpush.bf16.msra.mxu0 %v6704
        %6716 = vmatpush.bf16.msra.mxu0 %v6703
        %6717 = vmatpush.bf16.msra.mxu0 %v6702
        %6718 = vmatpush.bf16.msra.mxu0 %v6701
        %6719 = vmatpush.bf16.msra.mxu0 %v6700
        %6720 = vmatpush.bf16.msra.mxu0 %v6699
        %6721 = vmatpush.bf16.msra.mxu0 %v6698
        %6722 = vmatmul.bf16.gmra.mxu0 %v6646
        %v6723 = vpop.f32.mrf.mxu0
        %v6724 = vadd.f32 0.0, %v6723
        %v6725 = vpop.f32.mrf.mxu0
        %v6726 = vadd.f32 0.0, %v6725
        %6727 = vmatmul.bf16.gmra.mxu0 %v6647
        %v6728 = vpop.f32.mrf.mxu0
        %v6729 = vadd.f32 0.0, %v6728
        %v6730 = vpop.f32.mrf.mxu0
        %v6731 = vadd.f32 0.0, %v6730
        %6732 = vmatmul.bf16.gmra.mxu0 %v6648
        %v6733 = vpop.f32.mrf.mxu0
        %v6734 = vadd.f32 0.0, %v6733
        %v6735 = vpop.f32.mrf.mxu0
        %6736 = vdwg.mxu0
        %v6737 = vadd.f32 %v6636, %v6724
        %v6738 = vadd.f32 %v6637, %v6726
        %v6739 = vadd.f32 %v6638, %v6729
        %v6740 = vadd.f32 %v6639, %v6731
        %v6741 = vadd.f32 %v6640, %v6734
        %v6742 = vld [vmem:[#allocation2 + $0x13] sm:$0xff]
        %v6743 = vld [vmem:[#allocation2 + $0x1b] sm:$0xff]
        %v6744 = vld [vmem:[#allocation2 + $0x23] sm:$0xff]
        %v6745 = vld [vmem:[#allocation2 + $0x2b] sm:$0xff]
        %v6746 = vld [vmem:[#allocation2 + $0x33] sm:$0xf]
        %v6747 = vpack.c.bf16 %v6743, %v6742
        %v6748 = vpack.c.bf16 %v6745, %v6744
        %v6749 = vpack.c.bf16 %v6746, %v6746
        %s6750 = scalar_lea.vmem [#allocation10], 256
        %v6751 = vld [vmem:[%s6750] sm:$0xf]
        %v6752 = vld [vmem:[%s6750 + $0x4] sm:$0xf]
        %v6753 = vld [vmem:[%s6750 + $0x8] sm:$0xf]
        %v6754 = vld [vmem:[%s6750 + $0xc] sm:$0xf]
        %v6755 = vld [vmem:[%s6750 + $0x10] sm:$0xf]
        %v6756 = vld [vmem:[%s6750 + $0x14] sm:$0xf]
        %v6757 = vld [vmem:[%s6750 + $0x18] sm:$0xf]
        %v6758 = vld [vmem:[%s6750 + $0x1c] sm:$0xf]
        %v6759 = vld [vmem:[%s6750 + $0x20] sm:$0xf]
        %v6760 = vld [vmem:[%s6750 + $0x24] sm:$0xf]
        %v6761 = vld [vmem:[%s6750 + $0x28] sm:$0xf]
        %v6762 = vld [vmem:[%s6750 + $0x2c] sm:$0xf]
        %v6763 = vld [vmem:[%s6750 + $0x30] sm:$0xf]
        %v6764 = vld [vmem:[%s6750 + $0x34] sm:$0xf]
        %v6765 = vld [vmem:[%s6750 + $0x38] sm:$0xf]
        %v6766 = vld [vmem:[%s6750 + $0x3c] sm:$0xf]
        %v6783 = vunpack.c.l.b16 %v6751
        %v6784 = vunpack.c.l.b16 %v6752
        %v6785 = vunpack.c.l.b16 %v6753
        %v6786 = vunpack.c.l.b16 %v6754
        %v6787 = vunpack.c.l.b16 %v6755
        %v6788 = vunpack.c.l.b16 %v6756
        %v6789 = vunpack.c.l.b16 %v6757
        %v6790 = vunpack.c.l.b16 %v6758
        %v6791 = vunpack.c.l.b16 %v6759
        %v6792 = vunpack.c.l.b16 %v6760
        %v6793 = vunpack.c.l.b16 %v6761
        %v6794 = vunpack.c.l.b16 %v6762
        %v6795 = vunpack.c.l.b16 %v6763
        %v6796 = vunpack.c.l.b16 %v6764
        %v6797 = vunpack.c.l.b16 %v6765
        %v6798 = vunpack.c.l.b16 %v6766
        %v6799 = vpack.c.b16 %v6784, %v6783
        %v6800 = vpack.c.b16 %v6786, %v6785
        %v6801 = vpack.c.b16 %v6788, %v6787
        %v6802 = vpack.c.b16 %v6790, %v6789
        %v6803 = vpack.c.b16 %v6792, %v6791
        %v6804 = vpack.c.b16 %v6794, %v6793
        %v6805 = vpack.c.b16 %v6796, %v6795
        %v6806 = vpack.c.b16 %v6798, %v6797
        %6815 = vmatpush.bf16.msra.mxu0 %v6806
        %6816 = vmatpush.bf16.msra.mxu0 %v6805
        %6817 = vmatpush.bf16.msra.mxu0 %v6804
        %6818 = vmatpush.bf16.msra.mxu0 %v6803
        %6819 = vmatpush.bf16.msra.mxu0 %v6802
        %6820 = vmatpush.bf16.msra.mxu0 %v6801
        %6821 = vmatpush.bf16.msra.mxu0 %v6800
        %6822 = vmatpush.bf16.msra.mxu0 %v6799
        %6823 = vmatmul.bf16.gmra.mxu0 %v6747
        %v6824 = vpop.f32.mrf.mxu0
        %v6825 = vadd.f32 0.0, %v6824
        %v6826 = vpop.f32.mrf.mxu0
        %v6827 = vadd.f32 0.0, %v6826
        %6828 = vmatmul.bf16.gmra.mxu0 %v6748
        %v6829 = vpop.f32.mrf.mxu0
        %v6830 = vadd.f32 0.0, %v6829
        %v6831 = vpop.f32.mrf.mxu0
        %v6832 = vadd.f32 0.0, %v6831
        %6833 = vmatmul.bf16.gmra.mxu0 %v6749
        %v6834 = vpop.f32.mrf.mxu0
        %v6835 = vadd.f32 0.0, %v6834
        %v6836 = vpop.f32.mrf.mxu0
        %6837 = vdwg.mxu0
        %v6838 = vadd.f32 %v6737, %v6825
        %v6839 = vadd.f32 %v6738, %v6827
        %v6840 = vadd.f32 %v6739, %v6830
        %v6841 = vadd.f32 %v6740, %v6832
        %v6842 = vadd.f32 %v6741, %v6835
        %v6843 = vld [vmem:[#allocation2 + $0x14] sm:$0xff]
        %v6844 = vld [vmem:[#allocation2 + $0x1c] sm:$0xff]
        %v6845 = vld [vmem:[#allocation2 + $0x24] sm:$0xff]
        %v6846 = vld [vmem:[#allocation2 + $0x2c] sm:$0xff]
        %v6847 = vld [vmem:[#allocation2 + $0x34] sm:$0xf]
        %v6848 = vpack.c.bf16 %v6844, %v6843
        %v6849 = vpack.c.bf16 %v6846, %v6845
        %v6850 = vpack.c.bf16 %v6847, %v6847
        %s6851 = scalar_lea.vmem [#allocation10], 320
        %v6852 = vld [vmem:[%s6851] sm:$0xf]
        %v6853 = vld [vmem:[%s6851 + $0x4] sm:$0xf]
        %v6854 = vld [vmem:[%s6851 + $0x8] sm:$0xf]
        %v6855 = vld [vmem:[%s6851 + $0xc] sm:$0xf]
        %v6856 = vld [vmem:[%s6851 + $0x10] sm:$0xf]
        %v6857 = vld [vmem:[%s6851 + $0x14] sm:$0xf]
        %v6858 = vld [vmem:[%s6851 + $0x18] sm:$0xf]
        %v6859 = vld [vmem:[%s6851 + $0x1c] sm:$0xf]
        %v6860 = vld [vmem:[%s6851 + $0x20] sm:$0xf]
        %v6861 = vld [vmem:[%s6851 + $0x24] sm:$0xf]
        %v6862 = vld [vmem:[%s6851 + $0x28] sm:$0xf]
        %v6863 = vld [vmem:[%s6851 + $0x2c] sm:$0xf]
        %v6864 = vld [vmem:[%s6851 + $0x30] sm:$0xf]
        %v6865 = vld [vmem:[%s6851 + $0x34] sm:$0xf]
        %v6866 = vld [vmem:[%s6851 + $0x38] sm:$0xf]
        %v6867 = vld [vmem:[%s6851 + $0x3c] sm:$0xf]
        %v6884 = vunpack.c.l.b16 %v6852
        %v6885 = vunpack.c.l.b16 %v6853
        %v6886 = vunpack.c.l.b16 %v6854
        %v6887 = vunpack.c.l.b16 %v6855
        %v6888 = vunpack.c.l.b16 %v6856
        %v6889 = vunpack.c.l.b16 %v6857
        %v6890 = vunpack.c.l.b16 %v6858
        %v6891 = vunpack.c.l.b16 %v6859
        %v6892 = vunpack.c.l.b16 %v6860
        %v6893 = vunpack.c.l.b16 %v6861
        %v6894 = vunpack.c.l.b16 %v6862
        %v6895 = vunpack.c.l.b16 %v6863
        %v6896 = vunpack.c.l.b16 %v6864
        %v6897 = vunpack.c.l.b16 %v6865
        %v6898 = vunpack.c.l.b16 %v6866
        %v6899 = vunpack.c.l.b16 %v6867
        %v6900 = vpack.c.b16 %v6885, %v6884
        %v6901 = vpack.c.b16 %v6887, %v6886
        %v6902 = vpack.c.b16 %v6889, %v6888
        %v6903 = vpack.c.b16 %v6891, %v6890
        %v6904 = vpack.c.b16 %v6893, %v6892
        %v6905 = vpack.c.b16 %v6895, %v6894
        %v6906 = vpack.c.b16 %v6897, %v6896
        %v6907 = vpack.c.b16 %v6899, %v6898
        %6916 = vmatpush.bf16.msra.mxu0 %v6907
        %6917 = vmatpush.bf16.msra.mxu0 %v6906
        %6918 = vmatpush.bf16.msra.mxu0 %v6905
        %6919 = vmatpush.bf16.msra.mxu0 %v6904
        %6920 = vmatpush.bf16.msra.mxu0 %v6903
        %6921 = vmatpush.bf16.msra.mxu0 %v6902
        %6922 = vmatpush.bf16.msra.mxu0 %v6901
        %6923 = vmatpush.bf16.msra.mxu0 %v6900
        %6924 = vmatmul.bf16.gmra.mxu0 %v6848
        %v6925 = vpop.f32.mrf.mxu0
        %v6926 = vadd.f32 0.0, %v6925
        %v6927 = vpop.f32.mrf.mxu0
        %v6928 = vadd.f32 0.0, %v6927
        %6929 = vmatmul.bf16.gmra.mxu0 %v6849
        %v6930 = vpop.f32.mrf.mxu0
        %v6931 = vadd.f32 0.0, %v6930
        %v6932 = vpop.f32.mrf.mxu0
        %v6933 = vadd.f32 0.0, %v6932
        %6934 = vmatmul.bf16.gmra.mxu0 %v6850
        %v6935 = vpop.f32.mrf.mxu0
        %v6936 = vadd.f32 0.0, %v6935
        %v6937 = vpop.f32.mrf.mxu0
        %6938 = vdwg.mxu0
        %v6939 = vadd.f32 %v6838, %v6926
        %v6940 = vadd.f32 %v6839, %v6928
        %v6941 = vadd.f32 %v6840, %v6931
        %v6942 = vadd.f32 %v6841, %v6933
        %v6943 = vadd.f32 %v6842, %v6936
        %v6944 = vld [vmem:[#allocation2 + $0x18] sm:$0xff]
        %v6945 = vld [vmem:[#allocation2 + $0x20] sm:$0xff]
        %v6946 = vld [vmem:[#allocation2 + $0x28] sm:$0xff]
        %v6947 = vld [vmem:[#allocation2 + $0x30] sm:$0xff]
        %v6948 = vld [vmem:[#allocation2 + $0x38] sm:$0xf]
        %v6949 = vpack.c.bf16 %v6945, %v6944
        %v6950 = vpack.c.bf16 %v6947, %v6946
        %v6951 = vpack.c.bf16 %v6948, %v6948
        %s6952 = scalar_lea.vmem [#allocation10], 384
        %v6953 = vld [vmem:[%s6952] sm:$0xf]
        %v6954 = vld [vmem:[%s6952 + $0x4] sm:$0xf]
        %v6955 = vld [vmem:[%s6952 + $0x8] sm:$0xf]
        %v6956 = vld [vmem:[%s6952 + $0xc] sm:$0xf]
        %v6957 = vld [vmem:[%s6952 + $0x10] sm:$0xf]
        %v6958 = vld [vmem:[%s6952 + $0x14] sm:$0xf]
        %v6959 = vld [vmem:[%s6952 + $0x18] sm:$0xf]
        %v6960 = vld [vmem:[%s6952 + $0x1c] sm:$0xf]
        %v6961 = vld [vmem:[%s6952 + $0x20] sm:$0xf]
        %v6962 = vld [vmem:[%s6952 + $0x24] sm:$0xf]
        %v6963 = vld [vmem:[%s6952 + $0x28] sm:$0xf]
        %v6964 = vld [vmem:[%s6952 + $0x2c] sm:$0xf]
        %v6965 = vld [vmem:[%s6952 + $0x30] sm:$0xf]
        %v6966 = vld [vmem:[%s6952 + $0x34] sm:$0xf]
        %v6967 = vld [vmem:[%s6952 + $0x38] sm:$0xf]
        %v6968 = vld [vmem:[%s6952 + $0x3c] sm:$0xf]
        %v6985 = vunpack.c.l.b16 %v6953
        %v6986 = vunpack.c.l.b16 %v6954
        %v6987 = vunpack.c.l.b16 %v6955
        %v6988 = vunpack.c.l.b16 %v6956
        %v6989 = vunpack.c.l.b16 %v6957
        %v6990 = vunpack.c.l.b16 %v6958
        %v6991 = vunpack.c.l.b16 %v6959
        %v6992 = vunpack.c.l.b16 %v6960
        %v6993 = vunpack.c.l.b16 %v6961
        %v6994 = vunpack.c.l.b16 %v6962
        %v6995 = vunpack.c.l.b16 %v6963
        %v6996 = vunpack.c.l.b16 %v6964
        %v6997 = vunpack.c.l.b16 %v6965
        %v6998 = vunpack.c.l.b16 %v6966
        %v6999 = vunpack.c.l.b16 %v6967
        %v7000 = vunpack.c.l.b16 %v6968
        %v7001 = vpack.c.b16 %v6986, %v6985
        %v7002 = vpack.c.b16 %v6988, %v6987
        %v7003 = vpack.c.b16 %v6990, %v6989
        %v7004 = vpack.c.b16 %v6992, %v6991
        %v7005 = vpack.c.b16 %v6994, %v6993
        %v7006 = vpack.c.b16 %v6996, %v6995
        %v7007 = vpack.c.b16 %v6998, %v6997
        %v7008 = vpack.c.b16 %v7000, %v6999
        %7017 = vmatpush.bf16.msra.mxu0 %v7008
        %7018 = vmatpush.bf16.msra.mxu0 %v7007
        %7019 = vmatpush.bf16.msra.mxu0 %v7006
        %7020 = vmatpush.bf16.msra.mxu0 %v7005
        %7021 = vmatpush.bf16.msra.mxu0 %v7004
        %7022 = vmatpush.bf16.msra.mxu0 %v7003
        %7023 = vmatpush.bf16.msra.mxu0 %v7002
        %7024 = vmatpush.bf16.msra.mxu0 %v7001
        %7025 = vmatmul.bf16.gmra.mxu0 %v6949
        %v7026 = vpop.f32.mrf.mxu0
        %v7027 = vadd.f32 0.0, %v7026
        %v7028 = vpop.f32.mrf.mxu0
        %v7029 = vadd.f32 0.0, %v7028
        %7030 = vmatmul.bf16.gmra.mxu0 %v6950
        %v7031 = vpop.f32.mrf.mxu0
        %v7032 = vadd.f32 0.0, %v7031
        %v7033 = vpop.f32.mrf.mxu0
        %v7034 = vadd.f32 0.0, %v7033
        %7035 = vmatmul.bf16.gmra.mxu0 %v6951
        %v7036 = vpop.f32.mrf.mxu0
        %v7037 = vadd.f32 0.0, %v7036
        %v7038 = vpop.f32.mrf.mxu0
        %7039 = vdwg.mxu0
        %v7040 = vadd.f32 %v6939, %v7027
        %v7041 = vadd.f32 %v6940, %v7029
        %v7042 = vadd.f32 %v6941, %v7032
        %v7043 = vadd.f32 %v6942, %v7034
        %v7044 = vadd.f32 %v6943, %v7037
        %v7045 = vld [vmem:[#allocation2 + $0x19] sm:$0xff]
        %v7046 = vld [vmem:[#allocation2 + $0x21] sm:$0xff]
        %v7047 = vld [vmem:[#allocation2 + $0x29] sm:$0xff]
        %v7048 = vld [vmem:[#allocation2 + $0x31] sm:$0xff]
        %v7049 = vld [vmem:[#allocation2 + $0x39] sm:$0xf]
        %v7050 = vpack.c.bf16 %v7046, %v7045
        %v7051 = vpack.c.bf16 %v7048, %v7047
        %v7052 = vpack.c.bf16 %v7049, %v7049
        %s7053 = scalar_lea.vmem [#allocation10], 448
        %v7054 = vld [vmem:[%s7053] sm:$0xf]
        %v7055 = vld [vmem:[%s7053 + $0x4] sm:$0xf]
        %v7056 = vld [vmem:[%s7053 + $0x8] sm:$0xf]
        %v7057 = vld [vmem:[%s7053 + $0xc] sm:$0xf]
        %v7058 = vld [vmem:[%s7053 + $0x10] sm:$0xf]
        %v7059 = vld [vmem:[%s7053 + $0x14] sm:$0xf]
        %v7060 = vld [vmem:[%s7053 + $0x18] sm:$0xf]
        %v7061 = vld [vmem:[%s7053 + $0x1c] sm:$0xf]
        %v7062 = vld [vmem:[%s7053 + $0x20] sm:$0xf]
        %v7063 = vld [vmem:[%s7053 + $0x24] sm:$0xf]
        %v7064 = vld [vmem:[%s7053 + $0x28] sm:$0xf]
        %v7065 = vld [vmem:[%s7053 + $0x2c] sm:$0xf]
        %v7066 = vld [vmem:[%s7053 + $0x30] sm:$0xf]
        %v7067 = vld [vmem:[%s7053 + $0x34] sm:$0xf]
        %v7068 = vld [vmem:[%s7053 + $0x38] sm:$0xf]
        %v7069 = vld [vmem:[%s7053 + $0x3c] sm:$0xf]
        %v7086 = vunpack.c.l.b16 %v7054
        %v7087 = vunpack.c.l.b16 %v7055
        %v7088 = vunpack.c.l.b16 %v7056
        %v7089 = vunpack.c.l.b16 %v7057
        %v7090 = vunpack.c.l.b16 %v7058
        %v7091 = vunpack.c.l.b16 %v7059
        %v7092 = vunpack.c.l.b16 %v7060
        %v7093 = vunpack.c.l.b16 %v7061
        %v7094 = vunpack.c.l.b16 %v7062
        %v7095 = vunpack.c.l.b16 %v7063
        %v7096 = vunpack.c.l.b16 %v7064
        %v7097 = vunpack.c.l.b16 %v7065
        %v7098 = vunpack.c.l.b16 %v7066
        %v7099 = vunpack.c.l.b16 %v7067
        %v7100 = vunpack.c.l.b16 %v7068
        %v7101 = vunpack.c.l.b16 %v7069
        %v7102 = vpack.c.b16 %v7087, %v7086
        %v7103 = vpack.c.b16 %v7089, %v7088
        %v7104 = vpack.c.b16 %v7091, %v7090
        %v7105 = vpack.c.b16 %v7093, %v7092
        %v7106 = vpack.c.b16 %v7095, %v7094
        %v7107 = vpack.c.b16 %v7097, %v7096
        %v7108 = vpack.c.b16 %v7099, %v7098
        %v7109 = vpack.c.b16 %v7101, %v7100
        %7118 = vmatpush.bf16.msra.mxu0 %v7109
        %7119 = vmatpush.bf16.msra.mxu0 %v7108
        %7120 = vmatpush.bf16.msra.mxu0 %v7107
        %7121 = vmatpush.bf16.msra.mxu0 %v7106
        %7122 = vmatpush.bf16.msra.mxu0 %v7105
        %7123 = vmatpush.bf16.msra.mxu0 %v7104
        %7124 = vmatpush.bf16.msra.mxu0 %v7103
        %7125 = vmatpush.bf16.msra.mxu0 %v7102
        %7126 = vmatmul.bf16.gmra.mxu0 %v7050
        %v7127 = vpop.f32.mrf.mxu0
        %v7128 = vadd.f32 0.0, %v7127
        %v7129 = vpop.f32.mrf.mxu0
        %v7130 = vadd.f32 0.0, %v7129
        %7131 = vmatmul.bf16.gmra.mxu0 %v7051
        %v7132 = vpop.f32.mrf.mxu0
        %v7133 = vadd.f32 0.0, %v7132
        %v7134 = vpop.f32.mrf.mxu0
        %v7135 = vadd.f32 0.0, %v7134
        %7136 = vmatmul.bf16.gmra.mxu0 %v7052
        %v7137 = vpop.f32.mrf.mxu0
        %v7138 = vadd.f32 0.0, %v7137
        %v7139 = vpop.f32.mrf.mxu0
        %7140 = vdwg.mxu0
        %v7141 = vadd.f32 %v7040, %v7128
        %v7142 = vadd.f32 %v7041, %v7130
        %v7143 = vadd.f32 %v7042, %v7133
        %v7144 = vadd.f32 %v7043, %v7135
        %v7145 = vadd.f32 %v7044, %v7138
        %v7146 = vld [vmem:[#allocation2 + $0x1a] sm:$0xff]
        %v7147 = vld [vmem:[#allocation2 + $0x22] sm:$0xff]
        %v7148 = vld [vmem:[#allocation2 + $0x2a] sm:$0xff]
        %v7149 = vld [vmem:[#allocation2 + $0x32] sm:$0xff]
        %v7150 = vld [vmem:[#allocation2 + $0x3a] sm:$0xf]
        %v7151 = vpack.c.bf16 %v7147, %v7146
        %v7152 = vpack.c.bf16 %v7149, %v7148
        %v7153 = vpack.c.bf16 %v7150, %v7150
        %s7154 = scalar_lea.vmem [#allocation10], 512
        %v7155 = vld [vmem:[%s7154] sm:$0xf]
        %v7156 = vld [vmem:[%s7154 + $0x4] sm:$0xf]
        %v7157 = vld [vmem:[%s7154 + $0x8] sm:$0xf]
        %v7158 = vld [vmem:[%s7154 + $0xc] sm:$0xf]
        %v7159 = vld [vmem:[%s7154 + $0x10] sm:$0xf]
        %v7160 = vld [vmem:[%s7154 + $0x14] sm:$0xf]
        %v7161 = vld [vmem:[%s7154 + $0x18] sm:$0xf]
        %v7162 = vld [vmem:[%s7154 + $0x1c] sm:$0xf]
        %v7163 = vld [vmem:[%s7154 + $0x20] sm:$0xf]
        %v7164 = vld [vmem:[%s7154 + $0x24] sm:$0xf]
        %v7165 = vld [vmem:[%s7154 + $0x28] sm:$0xf]
        %v7166 = vld [vmem:[%s7154 + $0x2c] sm:$0xf]
        %v7167 = vld [vmem:[%s7154 + $0x30] sm:$0xf]
        %v7168 = vld [vmem:[%s7154 + $0x34] sm:$0xf]
        %v7169 = vld [vmem:[%s7154 + $0x38] sm:$0xf]
        %v7170 = vld [vmem:[%s7154 + $0x3c] sm:$0xf]
        %v7187 = vunpack.c.l.b16 %v7155
        %v7188 = vunpack.c.l.b16 %v7156
        %v7189 = vunpack.c.l.b16 %v7157
        %v7190 = vunpack.c.l.b16 %v7158
        %v7191 = vunpack.c.l.b16 %v7159
        %v7192 = vunpack.c.l.b16 %v7160
        %v7193 = vunpack.c.l.b16 %v7161
        %v7194 = vunpack.c.l.b16 %v7162
        %v7195 = vunpack.c.l.b16 %v7163
        %v7196 = vunpack.c.l.b16 %v7164
        %v7197 = vunpack.c.l.b16 %v7165
        %v7198 = vunpack.c.l.b16 %v7166
        %v7199 = vunpack.c.l.b16 %v7167
        %v7200 = vunpack.c.l.b16 %v7168
        %v7201 = vunpack.c.l.b16 %v7169
        %v7202 = vunpack.c.l.b16 %v7170
        %v7203 = vpack.c.b16 %v7188, %v7187
        %v7204 = vpack.c.b16 %v7190, %v7189
        %v7205 = vpack.c.b16 %v7192, %v7191
        %v7206 = vpack.c.b16 %v7194, %v7193
        %v7207 = vpack.c.b16 %v7196, %v7195
        %v7208 = vpack.c.b16 %v7198, %v7197
        %v7209 = vpack.c.b16 %v7200, %v7199
        %v7210 = vpack.c.b16 %v7202, %v7201
        %7219 = vmatpush.bf16.msra.mxu0 %v7210
        %7220 = vmatpush.bf16.msra.mxu0 %v7209
        %7221 = vmatpush.bf16.msra.mxu0 %v7208
        %7222 = vmatpush.bf16.msra.mxu0 %v7207
        %7223 = vmatpush.bf16.msra.mxu0 %v7206
        %7224 = vmatpush.bf16.msra.mxu0 %v7205
        %7225 = vmatpush.bf16.msra.mxu0 %v7204
        %7226 = vmatpush.bf16.msra.mxu0 %v7203
        %7227 = vmatmul.bf16.gmra.mxu0 %v7151
        %v7228 = vpop.f32.mrf.mxu0
        %v7229 = vadd.f32 0.0, %v7228
        %v7230 = vpop.f32.mrf.mxu0
        %v7231 = vadd.f32 0.0, %v7230
        %7232 = vmatmul.bf16.gmra.mxu0 %v7152
        %v7233 = vpop.f32.mrf.mxu0
        %v7234 = vadd.f32 0.0, %v7233
        %v7235 = vpop.f32.mrf.mxu0
        %v7236 = vadd.f32 0.0, %v7235
        %7237 = vmatmul.bf16.gmra.mxu0 %v7153
        %v7238 = vpop.f32.mrf.mxu0
        %v7239 = vadd.f32 0.0, %v7238
        %v7240 = vpop.f32.mrf.mxu0
        %7241 = vdwg.mxu0
        %v7242 = vadd.f32 %v7141, %v7229
        %v7243 = vadd.f32 %v7142, %v7231
        %v7244 = vadd.f32 %v7143, %v7234
        %v7245 = vadd.f32 %v7144, %v7236
        %v7246 = vadd.f32 %v7145, %v7239
        %v7247 = vld [vmem:[%s8] sm:$0x1]
        %v7249 = vperm.slane %v7247, 0
        %v7251 = vadd.f32 %v7242, %v7249
        %v7252 = vadd.f32 %v7243, %v7249
        %v7253 = vadd.f32 %v7244, %v7249
        %v7254 = vadd.f32 %v7245, %v7249
        %v7255 = vadd.f32 %v7246, %v7249
        %v7256 = vmax.f32 %v7251, 0.0
        %v7257 = vmax.f32 %v7252, 0.0
        %v7258 = vmax.f32 %v7253, 0.0
        %v7259 = vmax.f32 %v7254, 0.0
        %v7260 = vmax.f32 %v7255, 0.0
        %7261 = vst [vmem:[#allocation3] sm:$0xff] %v7256
        %7262 = vst [vmem:[#allocation3 + $0x8] sm:$0xff] %v7257
        %7263 = vst [vmem:[#allocation3 + $0x10] sm:$0xff] %v7258
        %7264 = vst [vmem:[#allocation3 + $0x18] sm:$0xff] %v7259
        %7265 = vst [vmem:[#allocation3 + $0x20] sm:$0xf] %v7260
        %v7266 = vld [vmem:[#allocation3] sm:$0xff]
        %v7267 = vld [vmem:[#allocation3 + $0x8] sm:$0xff]
        %v7268 = vld [vmem:[#allocation3 + $0x10] sm:$0xff]
        %v7269 = vld [vmem:[#allocation3 + $0x18] sm:$0x3f]
        %v7270 = vld [vmem:[#allocation3 + $0x6] sm:$0xff]
        %v7271 = vld [vmem:[#allocation3 + $0xe] sm:$0xff]
        %v7272 = vld [vmem:[#allocation3 + $0x16] sm:$0xff]
        %v7273 = vld [vmem:[#allocation3 + $0x1e] sm:$0x3f]
        %v7274 = vmax.f32 %v7266, %v7270
        %v7275 = vmax.f32 %v7267, %v7271
        %v7276 = vmax.f32 %v7268, %v7272
        %v7277 = vmax.f32 %v7269, %v7273
        %7278 = vst [vmem:[#allocation4] sm:$0xff] %v7274
        %7279 = vst [vmem:[#allocation4 + $0x8] sm:$0xff] %v7275
        %7280 = vst [vmem:[#allocation4 + $0x10] sm:$0xff] %v7276
        %7281 = vst [vmem:[#allocation4 + $0x18] sm:$0x3f] %v7277
        %v7282 = vld [vmem:[#allocation4 + $0x7] sm:$0x1]
        %v7283 = vld [vmem:[#allocation4 + $0x8] sm:$0x1]
        %v7284 = vmax.f32 %v7282, %v7283
        %v7285 = vld [vmem:[#allocation4 + $0x9] sm:$0x1]
        %v7286 = vld [vmem:[#allocation4 + $0xa] sm:$0x1]
        %v7287 = vmax.f32 %v7285, %v7286
        %v7288 = vld [vmem:[#allocation4 + $0x13] sm:$0x1]
        %v7289 = vld [vmem:[#allocation4 + $0x14] sm:$0x1]
        %v7290 = vmax.f32 %v7288, %v7289
        %v7291 = vld [vmem:[#allocation4 + $0x15] sm:$0x1]
        %v7292 = vld [vmem:[#allocation4 + $0x16] sm:$0x1]
        %v7293 = vmax.f32 %v7291, %v7292
        %v7294 = vld [vmem:[%s10] sm:$0x1]
        %v7295 = vpack.c.bf16 %v7284, %v7284
        %v7296 = vld [vmem:[#allocation11] sm:$0xf]
        %v7297 = vld [vmem:[#allocation11 + $0x4] sm:$0xf]
        %v7298 = vld [vmem:[#allocation11 + $0x8] sm:$0xf]
        %v7299 = vld [vmem:[#allocation11 + $0xc] sm:$0xf]
        %v7300 = vld [vmem:[#allocation11 + $0x10] sm:$0xf]
        %v7301 = vld [vmem:[#allocation11 + $0x14] sm:$0xf]
        %v7302 = vld [vmem:[#allocation11 + $0x18] sm:$0xf]
        %v7303 = vld [vmem:[#allocation11 + $0x1c] sm:$0xf]
        %v7304 = vld [vmem:[#allocation11 + $0x20] sm:$0xf]
        %v7305 = vld [vmem:[#allocation11 + $0x24] sm:$0xf]
        %v7306 = vld [vmem:[#allocation11 + $0x28] sm:$0xf]
        %v7307 = vld [vmem:[#allocation11 + $0x2c] sm:$0xf]
        %v7308 = vld [vmem:[#allocation11 + $0x30] sm:$0xf]
        %v7309 = vld [vmem:[#allocation11 + $0x34] sm:$0xf]
        %v7310 = vld [vmem:[#allocation11 + $0x38] sm:$0xf]
        %v7311 = vld [vmem:[#allocation11 + $0x3c] sm:$0xf]
        %v7328 = vunpack.c.l.b16 %v7296
        %v7329 = vunpack.c.l.b16 %v7297
        %v7330 = vunpack.c.l.b16 %v7298
        %v7331 = vunpack.c.l.b16 %v7299
        %v7332 = vunpack.c.l.b16 %v7300
        %v7333 = vunpack.c.l.b16 %v7301
        %v7334 = vunpack.c.l.b16 %v7302
        %v7335 = vunpack.c.l.b16 %v7303
        %v7336 = vunpack.c.l.b16 %v7304
        %v7337 = vunpack.c.l.b16 %v7305
        %v7338 = vunpack.c.l.b16 %v7306
        %v7339 = vunpack.c.l.b16 %v7307
        %v7340 = vunpack.c.l.b16 %v7308
        %v7341 = vunpack.c.l.b16 %v7309
        %v7342 = vunpack.c.l.b16 %v7310
        %v7343 = vunpack.c.l.b16 %v7311
        %v7344 = vpack.c.b16 %v7329, %v7328
        %v7345 = vpack.c.b16 %v7331, %v7330
        %v7346 = vpack.c.b16 %v7333, %v7332
        %v7347 = vpack.c.b16 %v7335, %v7334
        %v7348 = vpack.c.b16 %v7337, %v7336
        %v7349 = vpack.c.b16 %v7339, %v7338
        %v7350 = vpack.c.b16 %v7341, %v7340
        %v7351 = vpack.c.b16 %v7343, %v7342
        %7360 = vmatpush.bf16.msra.mxu0 %v7351
        %7361 = vmatpush.bf16.msra.mxu0 %v7350
        %7362 = vmatpush.bf16.msra.mxu0 %v7349
        %7363 = vmatpush.bf16.msra.mxu0 %v7348
        %7364 = vmatpush.bf16.msra.mxu0 %v7347
        %7365 = vmatpush.bf16.msra.mxu0 %v7346
        %7366 = vmatpush.bf16.msra.mxu0 %v7345
        %7367 = vmatpush.bf16.msra.mxu0 %v7344
        %7368 = vmatmul.bf16.gmra.mxu0 %v7295
        %v7369 = vpop.f32.mrf.mxu0
        %v7370 = vadd.f32 0.0, %v7369
        %v7371 = vpop.f32.mrf.mxu0
        %7372 = vdwg.mxu0
        %v7373 = vadd.f32 %v7294, %v7370
        %v7374 = vpack.c.bf16 %v7287, %v7287
        %s7375 = scalar_lea.vmem [#allocation11], 64
        %v7376 = vld [vmem:[%s7375] sm:$0xf]
        %v7377 = vld [vmem:[%s7375 + $0x4] sm:$0xf]
        %v7378 = vld [vmem:[%s7375 + $0x8] sm:$0xf]
        %v7379 = vld [vmem:[%s7375 + $0xc] sm:$0xf]
        %v7380 = vld [vmem:[%s7375 + $0x10] sm:$0xf]
        %v7381 = vld [vmem:[%s7375 + $0x14] sm:$0xf]
        %v7382 = vld [vmem:[%s7375 + $0x18] sm:$0xf]
        %v7383 = vld [vmem:[%s7375 + $0x1c] sm:$0xf]
        %v7384 = vld [vmem:[%s7375 + $0x20] sm:$0xf]
        %v7385 = vld [vmem:[%s7375 + $0x24] sm:$0xf]
        %v7386 = vld [vmem:[%s7375 + $0x28] sm:$0xf]
        %v7387 = vld [vmem:[%s7375 + $0x2c] sm:$0xf]
        %v7388 = vld [vmem:[%s7375 + $0x30] sm:$0xf]
        %v7389 = vld [vmem:[%s7375 + $0x34] sm:$0xf]
        %v7390 = vld [vmem:[%s7375 + $0x38] sm:$0xf]
        %v7391 = vld [vmem:[%s7375 + $0x3c] sm:$0xf]
        %v7408 = vunpack.c.l.b16 %v7376
        %v7409 = vunpack.c.l.b16 %v7377
        %v7410 = vunpack.c.l.b16 %v7378
        %v7411 = vunpack.c.l.b16 %v7379
        %v7412 = vunpack.c.l.b16 %v7380
        %v7413 = vunpack.c.l.b16 %v7381
        %v7414 = vunpack.c.l.b16 %v7382
        %v7415 = vunpack.c.l.b16 %v7383
        %v7416 = vunpack.c.l.b16 %v7384
        %v7417 = vunpack.c.l.b16 %v7385
        %v7418 = vunpack.c.l.b16 %v7386
        %v7419 = vunpack.c.l.b16 %v7387
        %v7420 = vunpack.c.l.b16 %v7388
        %v7421 = vunpack.c.l.b16 %v7389
        %v7422 = vunpack.c.l.b16 %v7390
        %v7423 = vunpack.c.l.b16 %v7391
        %v7424 = vpack.c.b16 %v7409, %v7408
        %v7425 = vpack.c.b16 %v7411, %v7410
        %v7426 = vpack.c.b16 %v7413, %v7412
        %v7427 = vpack.c.b16 %v7415, %v7414
        %v7428 = vpack.c.b16 %v7417, %v7416
        %v7429 = vpack.c.b16 %v7419, %v7418
        %v7430 = vpack.c.b16 %v7421, %v7420
        %v7431 = vpack.c.b16 %v7423, %v7422
        %7440 = vmatpush.bf16.msra.mxu0 %v7431
        %7441 = vmatpush.bf16.msra.mxu0 %v7430
        %7442 = vmatpush.bf16.msra.mxu0 %v7429
        %7443 = vmatpush.bf16.msra.mxu0 %v7428
        %7444 = vmatpush.bf16.msra.mxu0 %v7427
        %7445 = vmatpush.bf16.msra.mxu0 %v7426
        %7446 = vmatpush.bf16.msra.mxu0 %v7425
        %7447 = vmatpush.bf16.msra.mxu0 %v7424
        %7448 = vmatmul.bf16.gmra.mxu0 %v7374
        %v7449 = vpop.f32.mrf.mxu0
        %v7450 = vadd.f32 0.0, %v7449
        %v7451 = vpop.f32.mrf.mxu0
        %7452 = vdwg.mxu0
        %v7453 = vadd.f32 %v7373, %v7450
        %v7454 = vpack.c.bf16 %v7290, %v7290
        %s7455 = scalar_lea.vmem [#allocation11], 128
        %v7456 = vld [vmem:[%s7455] sm:$0xf]
        %v7457 = vld [vmem:[%s7455 + $0x4] sm:$0xf]
        %v7458 = vld [vmem:[%s7455 + $0x8] sm:$0xf]
        %v7459 = vld [vmem:[%s7455 + $0xc] sm:$0xf]
        %v7460 = vld [vmem:[%s7455 + $0x10] sm:$0xf]
        %v7461 = vld [vmem:[%s7455 + $0x14] sm:$0xf]
        %v7462 = vld [vmem:[%s7455 + $0x18] sm:$0xf]
        %v7463 = vld [vmem:[%s7455 + $0x1c] sm:$0xf]
        %v7464 = vld [vmem:[%s7455 + $0x20] sm:$0xf]
        %v7465 = vld [vmem:[%s7455 + $0x24] sm:$0xf]
        %v7466 = vld [vmem:[%s7455 + $0x28] sm:$0xf]
        %v7467 = vld [vmem:[%s7455 + $0x2c] sm:$0xf]
        %v7468 = vld [vmem:[%s7455 + $0x30] sm:$0xf]
        %v7469 = vld [vmem:[%s7455 + $0x34] sm:$0xf]
        %v7470 = vld [vmem:[%s7455 + $0x38] sm:$0xf]
        %v7471 = vld [vmem:[%s7455 + $0x3c] sm:$0xf]
        %v7488 = vunpack.c.l.b16 %v7456
        %v7489 = vunpack.c.l.b16 %v7457
        %v7490 = vunpack.c.l.b16 %v7458
        %v7491 = vunpack.c.l.b16 %v7459
        %v7492 = vunpack.c.l.b16 %v7460
        %v7493 = vunpack.c.l.b16 %v7461
        %v7494 = vunpack.c.l.b16 %v7462
        %v7495 = vunpack.c.l.b16 %v7463
        %v7496 = vunpack.c.l.b16 %v7464
        %v7497 = vunpack.c.l.b16 %v7465
        %v7498 = vunpack.c.l.b16 %v7466
        %v7499 = vunpack.c.l.b16 %v7467
        %v7500 = vunpack.c.l.b16 %v7468
        %v7501 = vunpack.c.l.b16 %v7469
        %v7502 = vunpack.c.l.b16 %v7470
        %v7503 = vunpack.c.l.b16 %v7471
        %v7504 = vpack.c.b16 %v7489, %v7488
        %v7505 = vpack.c.b16 %v7491, %v7490
        %v7506 = vpack.c.b16 %v7493, %v7492
        %v7507 = vpack.c.b16 %v7495, %v7494
        %v7508 = vpack.c.b16 %v7497, %v7496
        %v7509 = vpack.c.b16 %v7499, %v7498
        %v7510 = vpack.c.b16 %v7501, %v7500
        %v7511 = vpack.c.b16 %v7503, %v7502
        %7520 = vmatpush.bf16.msra.mxu0 %v7511
        %7521 = vmatpush.bf16.msra.mxu0 %v7510
        %7522 = vmatpush.bf16.msra.mxu0 %v7509
        %7523 = vmatpush.bf16.msra.mxu0 %v7508
        %7524 = vmatpush.bf16.msra.mxu0 %v7507
        %7525 = vmatpush.bf16.msra.mxu0 %v7506
        %7526 = vmatpush.bf16.msra.mxu0 %v7505
        %7527 = vmatpush.bf16.msra.mxu0 %v7504
        %7528 = vmatmul.bf16.gmra.mxu0 %v7454
        %v7529 = vpop.f32.mrf.mxu0
        %v7530 = vadd.f32 0.0, %v7529
        %v7531 = vpop.f32.mrf.mxu0
        %7532 = vdwg.mxu0
        %v7533 = vadd.f32 %v7453, %v7530
        %v7534 = vpack.c.bf16 %v7293, %v7293
        %s7535 = scalar_lea.vmem [#allocation11], 192
        %v7536 = vld [vmem:[%s7535] sm:$0xf]
        %v7537 = vld [vmem:[%s7535 + $0x4] sm:$0xf]
        %v7538 = vld [vmem:[%s7535 + $0x8] sm:$0xf]
        %v7539 = vld [vmem:[%s7535 + $0xc] sm:$0xf]
        %v7540 = vld [vmem:[%s7535 + $0x10] sm:$0xf]
        %v7541 = vld [vmem:[%s7535 + $0x14] sm:$0xf]
        %v7542 = vld [vmem:[%s7535 + $0x18] sm:$0xf]
        %v7543 = vld [vmem:[%s7535 + $0x1c] sm:$0xf]
        %v7544 = vld [vmem:[%s7535 + $0x20] sm:$0xf]
        %v7545 = vld [vmem:[%s7535 + $0x24] sm:$0xf]
        %v7546 = vld [vmem:[%s7535 + $0x28] sm:$0xf]
        %v7547 = vld [vmem:[%s7535 + $0x2c] sm:$0xf]
        %v7548 = vld [vmem:[%s7535 + $0x30] sm:$0xf]
        %v7549 = vld [vmem:[%s7535 + $0x34] sm:$0xf]
        %v7550 = vld [vmem:[%s7535 + $0x38] sm:$0xf]
        %v7551 = vld [vmem:[%s7535 + $0x3c] sm:$0xf]
        %v7568 = vunpack.c.l.b16 %v7536
        %v7569 = vunpack.c.l.b16 %v7537
        %v7570 = vunpack.c.l.b16 %v7538
        %v7571 = vunpack.c.l.b16 %v7539
        %v7572 = vunpack.c.l.b16 %v7540
        %v7573 = vunpack.c.l.b16 %v7541
        %v7574 = vunpack.c.l.b16 %v7542
        %v7575 = vunpack.c.l.b16 %v7543
        %v7576 = vunpack.c.l.b16 %v7544
        %v7577 = vunpack.c.l.b16 %v7545
        %v7578 = vunpack.c.l.b16 %v7546
        %v7579 = vunpack.c.l.b16 %v7547
        %v7580 = vunpack.c.l.b16 %v7548
        %v7581 = vunpack.c.l.b16 %v7549
        %v7582 = vunpack.c.l.b16 %v7550
        %v7583 = vunpack.c.l.b16 %v7551
        %v7584 = vpack.c.b16 %v7569, %v7568
        %v7585 = vpack.c.b16 %v7571, %v7570
        %v7586 = vpack.c.b16 %v7573, %v7572
        %v7587 = vpack.c.b16 %v7575, %v7574
        %v7588 = vpack.c.b16 %v7577, %v7576
        %v7589 = vpack.c.b16 %v7579, %v7578
        %v7590 = vpack.c.b16 %v7581, %v7580
        %v7591 = vpack.c.b16 %v7583, %v7582
        %7600 = vmatpush.bf16.msra.mxu0 %v7591
        %7601 = vmatpush.bf16.msra.mxu0 %v7590
        %7602 = vmatpush.bf16.msra.mxu0 %v7589
        %7603 = vmatpush.bf16.msra.mxu0 %v7588
        %7604 = vmatpush.bf16.msra.mxu0 %v7587
        %7605 = vmatpush.bf16.msra.mxu0 %v7586
        %7606 = vmatpush.bf16.msra.mxu0 %v7585
        %7607 = vmatpush.bf16.msra.mxu0 %v7584
        %7608 = vmatmul.bf16.gmra.mxu0 %v7534
        %v7609 = vpop.f32.mrf.mxu0
        %v7610 = vadd.f32 0.0, %v7609
        %v7611 = vpop.f32.mrf.mxu0
        %7612 = vdwg.mxu0
        %v7613 = vadd.f32 %v7533, %v7610
        %v7614 = vmax.f32 %v7613, 0.0
        %v7615 = vpack.c.bf16 %v7614, %v7614
        %v7616 = vld [vmem:[%s11] sm:$0xf]
        %v7617 = vld [vmem:[%s11 + $0x4] sm:$0xf]
        %v7618 = vld [vmem:[%s11 + $0x8] sm:$0xf]
        %v7619 = vld [vmem:[%s11 + $0xc] sm:$0xf]
        %v7620 = vld [vmem:[%s11 + $0x10] sm:$0xf]
        %v7621 = vld [vmem:[%s11 + $0x14] sm:$0xf]
        %v7622 = vld [vmem:[%s11 + $0x18] sm:$0xf]
        %v7623 = vld [vmem:[%s11 + $0x1c] sm:$0xf]
        %v7624 = vld [vmem:[%s11 + $0x20] sm:$0xf]
        %v7625 = vld [vmem:[%s11 + $0x24] sm:$0xf]
        %v7626 = vld [vmem:[%s11 + $0x28] sm:$0xf]
        %v7627 = vld [vmem:[%s11 + $0x2c] sm:$0xf]
        %v7628 = vld [vmem:[%s11 + $0x30] sm:$0xf]
        %v7629 = vld [vmem:[%s11 + $0x34] sm:$0xf]
        %v7630 = vld [vmem:[%s11 + $0x38] sm:$0xf]
        %v7631 = vld [vmem:[%s11 + $0x3c] sm:$0xf]
        %v7632 = vld [vmem:[%s12] sm:$0x1]
        %v7649 = vunpack.c.l.b16 %v7616
        %v7650 = vunpack.c.l.b16 %v7617
        %v7651 = vunpack.c.l.b16 %v7618
        %v7652 = vunpack.c.l.b16 %v7619
        %v7653 = vunpack.c.l.b16 %v7620
        %v7654 = vunpack.c.l.b16 %v7621
        %v7655 = vunpack.c.l.b16 %v7622
        %v7656 = vunpack.c.l.b16 %v7623
        %v7657 = vunpack.c.l.b16 %v7624
        %v7658 = vunpack.c.l.b16 %v7625
        %v7659 = vunpack.c.l.b16 %v7626
        %v7660 = vunpack.c.l.b16 %v7627
        %v7661 = vunpack.c.l.b16 %v7628
        %v7662 = vunpack.c.l.b16 %v7629
        %v7663 = vunpack.c.l.b16 %v7630
        %v7664 = vunpack.c.l.b16 %v7631
        %v7665 = vpack.c.b16 %v7650, %v7649
        %v7666 = vpack.c.b16 %v7652, %v7651
        %v7667 = vpack.c.b16 %v7654, %v7653
        %v7668 = vpack.c.b16 %v7656, %v7655
        %v7669 = vpack.c.b16 %v7658, %v7657
        %v7670 = vpack.c.b16 %v7660, %v7659
        %v7671 = vpack.c.b16 %v7662, %v7661
        %v7672 = vpack.c.b16 %v7664, %v7663
        %7681 = vmatpush.bf16.msra.mxu0 %v7672
        %7682 = vmatpush.bf16.msra.mxu0 %v7671
        %7683 = vmatpush.bf16.msra.mxu0 %v7670
        %7684 = vmatpush.bf16.msra.mxu0 %v7669
        %7685 = vmatpush.bf16.msra.mxu0 %v7668
        %7686 = vmatpush.bf16.msra.mxu0 %v7667
        %7687 = vmatpush.bf16.msra.mxu0 %v7666
        %7688 = vmatpush.bf16.msra.mxu0 %v7665
        %7689 = vmatmul.bf16.gmra.mxu0 %v7615
        %v7690 = vpop.f32.mrf.mxu0
        %v7691 = vadd.f32 %v7632, %v7690
        %v7692 = vpop.f32.mrf.mxu0
        %7693 = vdwg.mxu0
        %7694 = vst [vmem:[%s499] sm:$0x1] %v7691
        %s7695 = sand.u32 %s316, 1
        %s7696 = scalar_lea.sflag [#allocation7], %s7695
        %s7697 = sand.u32 %s316, 1
        %s7698 = scalar_lea.vmem [#allocation13], %s7697
        // Predicated region
        $region89: #{cnn_usps_forward.1} parent=71 // pred_check
          %p7699 = pneg %p326
        $region90: #{cnn_usps_forward.1} parent=71 // pred_check_branch
          %7701 = sbr.rel (%p7699) target = $region92
        $region91: #{cnn_usps_forward.1} parent=71 // pred_region
          %7703 = vsyncadd %s7696, 0
          %s7704 = scalar_lea.hbm %s13, %s30
          %s7706 = sshll.u32 %s7698, 4
          %s7707 = int_to_ptr.vmem [resolvable:$true] %s7706
          %s7708 = sshll.u32 %s7704, 4
          %s7709 = int_to_ptr.hbm [resolvable:$true] %s7708
          %7711 = dma.vmem_to_hbm [thread:$0]  %s7707, 16, %s7709, %s7696
        $region92: #{cnn_usps_forward.1} parent=71 // pred_fallthru
          _
      $region72: #{cnn_usps_forward.1} parent=5 // pred_fallthru
        _
      %p7712 = scmp.le.s32.totalorder 2, %s25
      // Predicated region
      $region93: #{cnn_usps_forward.1} parent=5 // pred_check
        %p7713 = pneg %p7712
      $region94: #{cnn_usps_forward.1} parent=5 // pred_check_branch
        %7715 = sbr.rel (%p7713) target = $region96
      $region95: #{cnn_usps_forward.1} parent=5 // pred_region
        %s7716 = ssub.s32 %s25, 2
        // Predicated region
        $region97: #{cnn_usps_forward.1} parent=95 // pred_check
          %p7717 = pneg %p332
        $region98: #{cnn_usps_forward.1} parent=95 // pred_check_branch
          %7719 = sbr.rel (%p7717) target = $region100
        $region99: #{cnn_usps_forward.1} parent=95 // pred_region
          %s7720 = sand.u32 %s317, 1
          %s7721 = scalar_lea.sflag [#allocation7], %s7720
          %s7722 = sand.u32 %s317, 1
          %s7723 = scalar_lea.vmem [#allocation13], %s7722
          %7725 = dma.done %s7721, 16
        $region100: #{cnn_usps_forward.1} parent=95 // pred_fallthru
          _
      $region96: #{cnn_usps_forward.1} parent=5 // pred_fallthru
        _
    $region6: #{cnn_usps_forward.1} parent=1 // loop_footer
      %s29 = sadd.s32 1, %s25
    $region7: #{cnn_usps_forward.1} parent=1 // loop_footer_branch
      %24 = sbr.rel target = $region3
    $region8: #{cnn_usps_forward.1} parent=1 // loop_exit
      _
    %7726 = vsyncpa [#allocation6], 1
    %s7727 = scalar_lea.sflag [#allocation6], 1
    %7728 = vsyncpa %s7727, 1
    %7729 = vsyncpa [#allocation9], 1
    %7730 = vsyncpa [#allocation12], 1
    %7731 = vsyncpa [#allocation7], 1
    %s7732 = scalar_lea.sflag [#allocation7], 1
    %7733 = vsyncpa %s7732, 1

</llo_original>
